<compile_context>
chip_gen: v7x
topology: tpu7x:2x2x1
jax: 0.10.0
libtpu: 0.0.40
codegen_flags: <defaults>
</compile_context>

<pallas_src>
import functools

import jax
import jax.numpy as jnp
from jax import lax
from jax.experimental import pallas as pl
from jax.experimental.pallas import tpu as pltpu

EPS = 1e-5
_VMEM_LIMIT = 48 * 1024 * 1024          # safe on v5e/v6e (128 MiB) and v7x (64 MiB)
_GEMM_VMEM_BUDGET = 40 * 1024 * 1024    # per-step footprint target for the GEMM
_EW_TILE_BYTES = 4 * 1024 * 1024        # per-tile byte budget for elementwise kernels


def _rup(v, m):
    return ((v + m - 1) // m) * m


def _pad_rows(x, mp):
    m = x.shape[0]
    if mp == m:
        return x
    return jnp.concatenate(
        [x, jnp.zeros((mp - m,) + x.shape[1:], x.dtype)], axis=0)


def _pick_tm(m, cap=512):
    """Row-tile size: a divisor of rup(M,8) so no row-pad copy is needed for
    realistic shapes; split in two when possible so both v7x TCs get work."""
    mp8 = _rup(m, 8)
    if mp8 <= cap:
        if mp8 >= 256 and mp8 % 32 == 0:
            return mp8 // 2, mp8
        return mp8, mp8
    for tm in (cap, 512, 384, 256, 192, 128, 64):
        if tm <= cap and mp8 % tm == 0:
            return tm, mp8
    return 256, _rup(m, 256)


def _ew_cap(c):
    return max(64, min(1024, _EW_TILE_BYTES // (2 * c)))


# ----------------------------------------------------------------------------
# Pallas kernels
# ----------------------------------------------------------------------------
def _gemm_kernel(*refs, n_pairs, prologue, has_bias, relu, stats, valid_m, tm):
    """y = sum_p A_p @ B_p with fused prologue (BN affine+ReLU of the producer
    applied to A) and epilogue (bias / ReLU / BN batch statistics)."""
    i = 0
    a_refs = refs[i:i + n_pairs]; i += n_pairs
    b_refs = refs[i:i + n_pairs]; i += n_pairs
    if prologue:
        ps_ref, pt_ref = refs[i], refs[i + 1]; i += 2
    if has_bias:
        bias_ref = refs[i]; i += 1
    o_ref = refs[i]; i += 1
    if stats:
        sum_ref, sq_ref = refs[i], refs[i + 1]

    def load_a(p):
        a = a_refs[p][...]
        if prologue:
            a = a.astype(jnp.float32) * ps_ref[...] + pt_ref[...]
            a = jnp.maximum(a, 0.0)
            if valid_m is not None:
                # zero the zero-padded rows (the shift would otherwise leak
                # relu(shift) into them and corrupt the BN statistics).
                row = (pl.program_id(0) * tm
                       + lax.broadcasted_iota(jnp.int32, (a.shape[0], 1), 0))
                a = jnp.where(row < valid_m, a, 0.0)
            a = a.astype(jnp.bfloat16)
        return a

    acc = jnp.dot(load_a(0), b_refs[0][...], preferred_element_type=jnp.float32)
    for p in range(1, n_pairs):
        acc = acc + jnp.dot(load_a(p), b_refs[p][...],
                            preferred_element_type=jnp.float32)
    if has_bias:
        acc = acc + bias_ref[...]
    if relu:
        acc = jnp.maximum(acc, 0.0)
    o_ref[...] = acc.astype(o_ref.dtype)
    if stats:
        s = jnp.sum(acc, axis=0, keepdims=True)
        q = jnp.sum(acc * acc, axis=0, keepdims=True)
        # broadcast to an (8, Np) slab so the block obeys the (8,128) rule.
        sum_ref[...] = jnp.broadcast_to(s, sum_ref.shape)
        sq_ref[...] = jnp.broadcast_to(q, sq_ref.shape)


def _affine_act_kernel(y_ref, s_ref, t_ref, o_ref, *, relu):
    o = y_ref[...].astype(jnp.float32) * s_ref[...] + t_ref[...]
    if relu:
        o = jnp.maximum(o, 0.0)
    o_ref[...] = o.astype(o_ref.dtype)


def _affine2_add_relu_kernel(y_ref, r_ref, sy_ref, ty_ref, sr_ref, tr_ref, o_ref):
    o = (y_ref[...].astype(jnp.float32) * sy_ref[...] + ty_ref[...]
         + r_ref[...].astype(jnp.float32) * sr_ref[...] + tr_ref[...])
    o_ref[...] = jnp.maximum(o, 0.0).astype(o_ref.dtype)


def _max9_kernel(x_ref, o_ref):
    m = x_ref[0]
    for i in range(1, 9):
        m = jnp.maximum(m, x_ref[i])
    o_ref[...] = m


# ----------------------------------------------------------------------------
# Pallas wrappers
# ----------------------------------------------------------------------------
def mxu_gemm(a_list, b_list, *, bias=None, relu=False, prologue=None,
             stats=False, out_dtype=jnp.bfloat16, tm_cap=512):
    """out = sum_p a_p @ b_p (bf16 x bf16 -> f32 accumulate).

    prologue=(scale, shift): A0 := relu(A0*scale + shift) (producer's BN
    affine fused in; single-pair only).  bias/relu: fused epilogue.
    stats: also return per-column sum and sum-of-squares over the M rows.
    """
    n_pairs = len(a_list)
    assert len(b_list) == n_pairs
    assert prologue is None or n_pairs == 1
    M = a_list[0].shape[0]
    Np = b_list[0].shape[1]
    ks = [a.shape[1] for a in a_list]

    tm, Mp = _pick_tm(M, tm_cap)
    out_bytes = jnp.dtype(out_dtype).itemsize

    def foot(t):
        f = 2 * 2 * (t * sum(ks) + sum(ks) * Np) + 2 * t * Np * out_bytes
        if stats:
            f += 2 * 2 * 8 * Np * 4
        return f

    while tm > 64 and foot(tm) > _GEMM_VMEM_BUDGET and Mp % (tm // 2) == 0:
        tm //= 2
    gm = Mp // tm

    a_ops = [_pad_rows(a.astype(jnp.bfloat16), Mp) for a in a_list]
    b_ops = [b.astype(jnp.bfloat16) for b in b_list]

    in_specs = ([pl.BlockSpec((tm, k), lambda i: (i, 0)) for k in ks]
                + [pl.BlockSpec((k, Np), lambda i: (0, 0)) for k in ks])
    operands = a_ops + b_ops
    if prologue is not None:
        s, t = prologue
        operands += [s.reshape(1, ks[0]).astype(jnp.float32),
                     t.reshape(1, ks[0]).astype(jnp.float32)]
        in_specs += [pl.BlockSpec((1, ks[0]), lambda i: (0, 0)),
                     pl.BlockSpec((1, ks[0]), lambda i: (0, 0))]
    has_bias = bias is not None
    if has_bias:
        operands.append(bias.reshape(1, Np).astype(jnp.float32))
        in_specs.append(pl.BlockSpec((1, Np), lambda i: (0, 0)))

    out_shapes = [jax.ShapeDtypeStruct((Mp, Np), out_dtype)]
    out_specs = [pl.BlockSpec((tm, Np), lambda i: (i, 0))]
    if stats:
        out_shapes += [jax.ShapeDtypeStruct((gm * 8, Np), jnp.float32)] * 2
        out_specs += [pl.BlockSpec((8, Np), lambda i: (i, 0)),
                      pl.BlockSpec((8, Np), lambda i: (i, 0))]

    valid_m = M if (prologue is not None and Mp != M) else None
    kernel = functools.partial(
        _gemm_kernel, n_pairs=n_pairs, prologue=prologue is not None,
        has_bias=has_bias, relu=relu, stats=stats, valid_m=valid_m, tm=tm)

    cost = pl.CostEstimate(
        flops=2 * Mp * sum(ks) * Np, transcendentals=0,
        bytes_accessed=(Mp * sum(ks) + sum(k * Np for k in ks)) * 2
        + Mp * Np * out_bytes)

    res = pl.pallas_call(
        kernel,
        out_shape=tuple(out_shapes) if stats else out_shapes[0],
        grid_spec=pltpu.PrefetchScalarGridSpec(
            num_scalar_prefetch=0,
            grid=(gm,),
            in_specs=in_specs,
            out_specs=out_specs if stats else out_specs[0]),
        compiler_params=pltpu.CompilerParams(
            dimension_semantics=("parallel",),
            vmem_limit_bytes=_VMEM_LIMIT),
        cost_estimate=cost,
    )(*operands)

    if stats:
        out, ps, pq = res
        # each tile wrote its partial sum to 8 identical rows -> sum * 1/8
        csum = jnp.sum(ps, axis=0) * 0.125
        csq = jnp.sum(pq, axis=0) * 0.125
        return out[:M], csum, csq
    return res[:M]


def affine_act(y, scale, shift, *, relu):
    """y * scale[col] + shift[col] (+ReLU), bf16 out, tiled over rows."""
    M, C = y.shape
    tm, Mp = _pick_tm(M, _ew_cap(C))
    yp = _pad_rows(y, Mp)
    out = pl.pallas_call(
        functools.partial(_affine_act_kernel, relu=relu),
        out_shape=jax.ShapeDtypeStruct((Mp, C), jnp.bfloat16),
        grid_spec=pltpu.PrefetchScalarGridSpec(
            num_scalar_prefetch=0,
            grid=(Mp // tm,),
            in_specs=[pl.BlockSpec((tm, C), lambda i: (i, 0)),
                      pl.BlockSpec((1, C), lambda i: (0, 0)),
                      pl.BlockSpec((1, C), lambda i: (0, 0))],
            out_specs=pl.BlockSpec((tm, C), lambda i: (i, 0))),
        compiler_params=pltpu.CompilerParams(
            dimension_semantics=("parallel",),
            vmem_limit_bytes=_VMEM_LIMIT),
    )(yp, scale.reshape(1, C).astype(jnp.float32),
      shift.reshape(1, C).astype(jnp.float32))
    return out[:M]


def affine2_add_relu(y, r, sy, ty, sr, tr):
    """relu(y*sy + ty + r*sr + tr) — fused BN affine + residual join, bf16 out."""
    M, C = y.shape
    tm, Mp = _pick_tm(M, _ew_cap(C))
    yp = _pad_rows(y, Mp)
    rp = _pad_rows(r, Mp)
    vecs = [v.reshape(1, C).astype(jnp.float32) for v in (sy, ty, sr, tr)]
    out = pl.pallas_call(
        _affine2_add_relu_kernel,
        out_shape=jax.ShapeDtypeStruct((Mp, C), jnp.bfloat16),
        grid_spec=pltpu.PrefetchScalarGridSpec(
            num_scalar_prefetch=0,
            grid=(Mp // tm,),
            in_specs=[pl.BlockSpec((tm, C), lambda i: (i, 0)),
                      pl.BlockSpec((tm, C), lambda i: (i, 0)),
                      pl.BlockSpec((1, C), lambda i: (0, 0)),
                      pl.BlockSpec((1, C), lambda i: (0, 0)),
                      pl.BlockSpec((1, C), lambda i: (0, 0)),
                      pl.BlockSpec((1, C), lambda i: (0, 0))],
            out_specs=pl.BlockSpec((tm, C), lambda i: (i, 0))),
        compiler_params=pltpu.CompilerParams(
            dimension_semantics=("parallel",),
            vmem_limit_bytes=_VMEM_LIMIT),
    )(yp, rp, *vecs)
    return out[:M]


def maxpool_3x3_s2_p1(x):
    """nn.MaxPool2d(kernel_size=3, stride=2, padding=1) on an NHWC bf16 tensor."""
    N, H, W, C = x.shape
    xp = jnp.pad(x, ((0, 0), (1, 1), (1, 1), (0, 0)),
                 constant_values=-jnp.inf)
    Ho = (H + 2 - 3) // 2 + 1
    Wo = (W + 2 - 3) // 2 + 1
    taps = [xp[:, di:di + 2 * (Ho - 1) + 1:2, dj:dj + 2 * (Wo - 1) + 1:2, :]
            for di in range(3) for dj in range(3)]
    M = N * Ho * Wo
    stk = jnp.stack(taps, axis=0).reshape(9, M, C)
    tm, Mp = _pick_tm(M, _ew_cap(C))
    if Mp != M:
        stk = jnp.concatenate(
            [stk, jnp.zeros((9, Mp - M, C), stk.dtype)], axis=1)
    out = pl.pallas_call(
        _max9_kernel,
        out_shape=jax.ShapeDtypeStruct((Mp, C), jnp.bfloat16),
        grid_spec=pltpu.PrefetchScalarGridSpec(
            num_scalar_prefetch=0,
            grid=(Mp // tm,),
            in_specs=[pl.BlockSpec((9, tm, C), lambda i: (0, i, 0))],
            out_specs=pl.BlockSpec((tm, C), lambda i: (i, 0))),
        compiler_params=pltpu.CompilerParams(
            dimension_semantics=("parallel",),
            vmem_limit_bytes=_VMEM_LIMIT),
    )(stk)
    return out[:M].reshape(N, Ho, Wo, C)


# ----------------------------------------------------------------------------
# Layers (NHWC bf16 glue in JAX; GEMM / BN / activation fused in Pallas)
# ----------------------------------------------------------------------------
def _im2col_nhwc(x, k, stride, pad):
    # TODO(synk): shifted strided windows are not expressible with a rectangular
    # BlockSpec index_map, so im2col for 3x3 convs stays explicit in XLA (bf16).
    N, H, W, C = x.shape
    xp = jnp.pad(x, ((0, 0), (pad, pad), (pad, pad), (0, 0)))
    Ho = (H + 2 * pad - k) // stride + 1
    Wo = (W + 2 * pad - k) // stride + 1
    cols = []
    for di in range(k):
        for dj in range(k):
            cols.append(xp[:, di:di + stride * (Ho - 1) + 1:stride,
                           dj:dj + stride * (Wo - 1) + 1:stride, :])
    patches = jnp.stack(cols, axis=3)                 # (N, Ho, Wo, k*k, C)
    return patches.reshape(N * Ho * Wo, k * k * C), Ho, Wo


def _bn_scale_shift(csum, csq, count, gamma, beta):
    mean = csum / count
    var = jnp.maximum(csq / count - mean * mean, 0.0)
    inv = lax.rsqrt(var + EPS)
    scale = gamma * inv
    shift = beta - mean * scale
    return scale, shift


def conv2d(x, p, stride, padding, *, norm, relu, defer_affine=False,
           prologue=None):
    """CBR2d on an NHWC bf16 activation (channel dims padded to 128).

    prologue=(scale, shift): the producing layer's BN affine+ReLU fused into
    this GEMM (1x1 convs only; their input needs no spatial zero padding).
    norm='bnorm': BN batch statistics come fused out of the GEMM; with
    defer_affine the (raw 2D output, scale, shift, out_shape) is returned so
    the caller can fuse the affine downstream.
    """
    N, H, W, Cin = x.shape
    k = p['k']
    Coutp = p['wm'].shape[1]
    if k == 1 and padding == 0:
        xs = x if stride == 1 else x[:, ::stride, ::stride, :]
        Ho, Wo = xs.shape[1], xs.shape[2]
        a = xs.reshape(N * Ho * Wo, Cin)
    else:
        assert prologue is None  # zero padding lives in post-BN space
        a, Ho, Wo = _im2col_nhwc(x, k, stride, padding)
    M = N * Ho * Wo

    if norm == 'bnorm':
        # conv bias is cancelled exactly by the BN mean subtraction -> skipped.
        y2d, csum, csq = mxu_gemm([a], [p['wm']], stats=True, prologue=prologue)
        scale, shift = _bn_scale_shift(csum, csq, M, p['gamma'], p['beta'])
        if defer_affine:
            return y2d, scale, shift, (N, Ho, Wo, Coutp)
        y2d = affine_act(y2d, scale, shift, relu=bool(relu))
        return y2d.reshape(N, Ho, Wo, Coutp)

    out_dtype = p.get('out_dtype', jnp.bfloat16)
    y2d = mxu_gemm([a], [p['wm']], bias=p['bias'], relu=bool(relu),
                   prologue=prologue, out_dtype=out_dtype)
    return y2d.reshape(N, Ho, Wo, Coutp)


def deconv2d_bn_relu(x, p, *, defer_affine=False):
    """DECBR2d: ConvTranspose2d(k=3, s=2, p=1, output_padding=1) + BN (+ReLU),
    as 4 sub-pixel phase GEMMs on the un-dilated input (no zero stuffing).
    Each phase is a single multi-(A,B) GEMM (no K-concatenation copies) and
    phase outputs are written straight into their interleaved slots."""
    N, H, W, Cin = x.shape
    Coutp = p['taps'][(1, 1)].shape[1]
    xpad = jnp.pad(x, ((0, 0), (0, 1), (0, 1), (0, 0)))
    x_r = xpad[:, :H, 1:W + 1, :]                     # (i,   j+1)
    x_d = xpad[:, 1:H + 1, :W, :]                     # (i+1, j  )
    x_dr = xpad[:, 1:H + 1, 1:W + 1, :]               # (i+1, j+1)
    M = N * H * W

    def flat(t):
        return t.reshape(M, Cin)

    phases = [
        ([flat(x)], [(1, 1)]),                                       # (even,even)
        ([flat(x_r), flat(x)], [(1, 0), (1, 2)]),                    # (even,odd)
        ([flat(x_d), flat(x)], [(0, 1), (2, 1)]),                    # (odd,even)
        ([flat(x_dr), flat(x_d), flat(x_r), flat(x)],
         [(0, 0), (0, 2), (2, 0), (2, 2)]),                          # (odd,odd)
    ]
    ys, csum, csq = [], 0.0, 0.0
    for a_list, taps in phases:
        b_list = [p['taps'][t] for t in taps]
        y, s, q = mxu_gemm(a_list, b_list, stats=True)  # deconv bias cancels in BN
        ys.append(y.reshape(N, H, W, Coutp))
        csum = csum + s
        csq = csq + q
    scale, shift = _bn_scale_shift(csum, csq, 4.0 * M, p['gamma'], p['beta'])

    # write each phase into its strided slot of an (N,H,2,W,2,C) buffer so the
    # (N,2H,2W,C) view is a free reshape (no stack/transpose HBM pass).
    out6 = jnp.zeros((N, H, 2, W, 2, Coutp), jnp.bfloat16)
    for idx, y in enumerate(ys):
        a, b = idx // 2, idx % 2
        out6 = out6.at[:, :, a, :, b, :].set(y)
    out = out6.reshape(N, 2 * H, 2 * W, Coutp)

    if defer_affine:
        return out, scale, shift
    out2d = affine_act(out.reshape(4 * M, Coutp), scale, shift, relu=True)
    return out2d.reshape(N, 2 * H, 2 * W, Coutp)


def bottleneck_block(x, blk):
    stride = blk['stride']
    N, H, W, Cin = x.shape
    # 1x1 reduce (BN+ReLU applied now: its consumer is a spatially padded 3x3)
    y1 = conv2d(x, blk['c1'], 1, 0, norm='bnorm', relu=True)
    # 3x3 (stride); its BN affine+ReLU is deferred into the 1x1-expand prologue
    y2, s2, t2, shp2 = conv2d(y1, blk['c2'], stride, 1, norm='bnorm',
                              relu=True, defer_affine=True)
    y2 = y2.reshape(shp2)
    # 1x1 expand with the c2 affine+ReLU fused as a prologue; its own BN affine
    # is deferred into the residual join.
    y3, s3, t3, shp3 = conv2d(y2, blk['c3'], 1, 0, norm='bnorm', relu=False,
                              defer_affine=True, prologue=(s2, t2))
    if 'sc' in blk:
        r, sr, tr, _ = conv2d(x, blk['sc'], stride, 0, norm='bnorm',
                              relu=False, defer_affine=True)          # projection
    else:
        r = x.reshape(-1, Cin)
        sr = jnp.ones((Cin,), jnp.float32)
        tr = jnp.zeros((Cin,), jnp.float32)
    out2d = affine2_add_relu(y3, r, s3, t3, sr, tr)                   # fused join
    return out2d.reshape(shp3)


# ----------------------------------------------------------------------------
# Parameter construction (deterministic, padded/GEMM-ready) and forward pass
# ----------------------------------------------------------------------------
def init_params(key, in_channels, out_channels, nker=8, num_layers=50):
    arch_settings = {18: (True, (2, 2, 2, 2), 3), 34: (True, (3, 4, 6, 3), 3),
                     50: (False, (3, 4, 6, 3), 3), 101: (False, (3, 4, 23, 3), 3),
                     152: (False, (3, 8, 36, 3), 3)}
    is_basic, spec, num_dec = arch_settings[num_layers]
    # TODO(synk): basic-block (ResNet-18/34) path not implemented; only bottleneck.
    assert not is_basic

    keys = iter(jax.random.split(key, 512))

    def cp(c):                       # lane-dense padded channel count (>=128)
        return _rup(c, 128)

    def conv_p(cin, cout, k, bn, pad_cin=True, out_dtype=None):
        w = 0.05 * jax.random.normal(next(keys), (cout, cin, k, k), jnp.float32)
        b = 0.01 * jax.random.normal(next(keys), (cout,), jnp.float32)
        cinp = cp(cin) if pad_cin else cin
        coutp = cp(cout)
        wm = jnp.zeros((k, k, cinp, coutp), jnp.float32)
        wm = wm.at[:, :, :cin, :cout].set(jnp.transpose(w, (2, 3, 1, 0)))
        p = {'k': k, 'wm': wm.reshape(k * k * cinp, coutp).astype(jnp.bfloat16)}
        if bn:
            # conv bias is mathematically cancelled by the BN mean subtraction
            p['gamma'] = jnp.zeros((coutp,), jnp.float32).at[:cout].set(1.0)
            p['beta'] = jnp.zeros((coutp,), jnp.float32)
        else:
            p['bias'] = jnp.zeros((1, coutp), jnp.float32).at[0, :cout].set(b)
        if out_dtype is not None:
            p['out_dtype'] = out_dtype
        return p

    def deconv_p(cin, cout, k, bn):
        w = 0.05 * jax.random.normal(next(keys), (cin, cout, k, k), jnp.float32)
        cinp, coutp = cp(cin), cp(cout)
        taps = {}
        for kh in range(k):
            for kw in range(k):
                t = jnp.zeros((cinp, coutp), jnp.float32)
                taps[(kh, kw)] = (
                    t.at[:cin, :cout].set(w[:, :, kh, kw]).astype(jnp.bfloat16))
        assert bn
        return {'taps': taps,
                'gamma': jnp.zeros((coutp,), jnp.float32).at[:cout].set(1.0),
                'beta': jnp.zeros((coutp,), jnp.float32)}

    res = []
    base = nker
    for i, nblk in enumerate(spec):
        for j in range(nblk):
            stride = 1 if i == 0 else (2 if j == 0 else 1)
            base = nker * (2 ** i)
            mult = 4 if j > 0 else (1 if i == 0 else 2)
            cin = base * mult
            cout = base * 4
            blk = {'stride': stride,
                   'c1': conv_p(cin, base, 1, True),
                   'c2': conv_p(base, base, 3, True),
                   'c3': conv_p(base, cout, 1, True)}
            if stride != 1 or cin != cout:
                blk['sc'] = conv_p(cin, cout, 1, True)
            res.append(blk)

    dec_out = 4 * nker
    dec = []
    for i in range(num_dec):
        cin = 4 * base if i == 0 else dec_out
        dec.append(deconv_p(cin, dec_out, 3, True))

    return {'enc': conv_p(in_channels, nker, 3, False, pad_cin=False),
            'res': res,
            'dec': dec,
            'fc': conv_p(dec_out, out_channels, 1, False, out_dtype=jnp.float32),
            'out_channels': out_channels}


def pose_resnet_forward(x, params):
    # single NCHW -> NHWC transpose + bf16 cast at the model boundary
    x = jnp.transpose(x, (0, 2, 3, 1)).astype(jnp.bfloat16)
    # enc: CBR2d(in, nker, k3, s2, p1, norm=None, relu=0.0) -> bias+ReLU fused
    x = conv2d(x, params['enc'], 2, 1, norm=None, relu=True)
    # maxpool k3 s2 p1
    x = maxpool_3x3_s2_p1(x)
    # residual bottleneck stages
    for blk in params['res']:
        x = bottleneck_block(x, blk)
    # decoder: DECBR2d(k3, s2, p1, output_padding=1) + BN + ReLU
    dec = params['dec']
    for d in dec[:-1]:
        x = deconv2d_bn_relu(x, d)
    # the last decoder's BN affine + ReLU is fused into the fc GEMM prologue
    x, s, t = deconv2d_bn_relu(x, dec[-1], defer_affine=True)
    # fc: plain 1x1 conv (norm=None, relu=None), f32 out
    x = conv2d(x, params['fc'], 1, 0, norm=None, relu=False, prologue=(s, t))
    # drop the channel padding, NHWC -> NCHW once at the output
    x = x[..., :params['out_channels']].astype(jnp.float32)
    return jnp.transpose(x, (0, 3, 1, 2))


if __name__ == "__main__":
    key = jax.random.PRNGKey(0)
    kp, kx = jax.random.split(key)

    in_channels, out_channels, nker = 4, 4, 8
    params = init_params(kp, in_channels, out_channels, nker=nker, num_layers=50)

    x = jax.random.normal(kx, (2, in_channels, 16, 16), jnp.float32)

    fwd = jax.jit(functools.partial(pose_resnet_forward, params=params))
    y = jax.block_until_ready(fwd(x))

    assert y.shape == (2, out_channels, 8, 8), y.shape
    assert bool(jnp.all(jnp.isfinite(y)))
    print("KERNEL_OK")
</pallas_src>

<mosaic_0001>
module attributes {stable_mosaic.version = 11 : i64} {
  func.func @_gemm_kernel(%arg0: i32, %arg1: memref<128x36xbf16, #tpu.memory_space<vmem>>, %arg2: memref<36x128xbf16, #tpu.memory_space<vmem>>, %arg3: memref<1x128xf32, #tpu.memory_space<vmem>>, %arg4: memref<128x128xbf16, #tpu.memory_space<vmem>>) attributes {dimension_semantics = [#tpu.dimension_semantics<parallel>], iteration_bounds = array<i64: 1>, scalar_prefetch = 0 : i64, scratch_operands = 0 : i64, tpu.core_type = #tpu.core_type<tc>, window_params = [{transform_indices = @transform_0, window_bounds = array<i64: 128, 36>}, {pipeline_mode = #tpu.pipeline_mode<synchronous>, transform_indices = @transform_1, window_bounds = array<i64: 36, 128>}, {pipeline_mode = #tpu.pipeline_mode<synchronous>, transform_indices = @transform_2, window_bounds = array<i64: 1, 128>}, {transform_indices = @transform_3, window_bounds = array<i64: 128, 128>}]} {
    %c0 = arith.constant 0 : index
    %c0_0 = arith.constant 0 : index
    %0 = vector.load %arg1[%c0, %c0_0] : memref<128x36xbf16, #tpu.memory_space<vmem>>, vector<128x36xbf16>
    %c0_1 = arith.constant 0 : index
    %c0_2 = arith.constant 0 : index
    %1 = vector.load %arg2[%c0_1, %c0_2] : memref<36x128xbf16, #tpu.memory_space<vmem>>, vector<36x128xbf16>
    %cst = arith.constant dense<0.000000e+00> : vector<128x128xf32>
    %2 = tpu.matmul %0, %1, %cst {dimension_numbers = #tpu.dot_dimension_numbers<[1], [0], [0], [1], [0, 0, 1, 1], [], []>} : vector<128x36xbf16>, vector<36x128xbf16>, vector<128x128xf32> -> vector<128x128xf32>
    %c0_3 = arith.constant 0 : index
    %c0_4 = arith.constant 0 : index
    %3 = vector.load %arg3[%c0_3, %c0_4] : memref<1x128xf32, #tpu.memory_space<vmem>>, vector<1x128xf32>
    %4 = vector.broadcast %3 : vector<1x128xf32> to vector<128x128xf32>
    %5 = arith.addf %2, %4 : vector<128x128xf32>
    %cst_5 = arith.constant 0.000000e+00 : f32
    %6 = vector.broadcast %cst_5 : f32 to vector<128x128xf32>
    %7 = arith.maximumf %5, %6 : vector<128x128xf32>
    %8 = arith.truncf %7 : vector<128x128xf32> to vector<128x128xbf16>
    %c0_6 = arith.constant 0 : index
    %c0_7 = arith.constant 0 : index
    %9 = vector.load %arg4[%c0_6, %c0_7] : memref<128x128xbf16, #tpu.memory_space<vmem>>, vector<128x128xbf16>
    tpu.vector_store %arg4[%c0_6, %c0_7], %8 {strides = array<i32>} : memref<128x128xbf16, #tpu.memory_space<vmem>>, vector<128x128xbf16>,
    return
  }
  func.func @transform_0(%arg0: i32) -> (i32, i32) {
    %c0_i32 = arith.constant 0 : i32
    %c0_i32_0 = arith.constant 0 : i32
    return %arg0, %c0_i32 : i32, i32
  }
  func.func @transform_1(%arg0: i32) -> (i32, i32) {
    %c0_i32 = arith.constant 0 : i32
    %c0_i32_0 = arith.constant 0 : i32
    %c0_i32_1 = arith.constant 0 : i32
    return %c0_i32, %c0_i32_0 : i32, i32
  }
  func.func @transform_2(%arg0: i32) -> (i32, i32) {
    %c0_i32 = arith.constant 0 : i32
    %c0_i32_0 = arith.constant 0 : i32
    %c0_i32_1 = arith.constant 0 : i32
    return %c0_i32, %c0_i32_0 : i32, i32
  }
  func.func @transform_3(%arg0: i32) -> (i32, i32) {
    %c0_i32 = arith.constant 0 : i32
    %c0_i32_0 = arith.constant 0 : i32
    return %arg0, %c0_i32 : i32, i32
  }
}

module attributes {stable_mosaic.version = 11 : i64} {
  func.func @_max9_kernel(%arg0: i32, %arg1: memref<9x32x128xbf16, #tpu.memory_space<vmem>>, %arg2: memref<32x128xbf16, #tpu.memory_space<vmem>>) attributes {dimension_semantics = [#tpu.dimension_semantics<parallel>], iteration_bounds = array<i64: 1>, scalar_prefetch = 0 : i64, scratch_operands = 0 : i64, tpu.core_type = #tpu.core_type<tc>, window_params = [{transform_indices = @transform_0, window_bounds = array<i64: 9, 32, 128>}, {transform_indices = @transform_1, window_bounds = array<i64: 32, 128>}]} {
    %c0 = arith.constant 0 : index
    %c0_0 = arith.constant 0 : index
    %c0_1 = arith.constant 0 : index
    %0 = vector.load %arg1[%c0, %c0_0, %c0_1] : memref<9x32x128xbf16, #tpu.memory_space<vmem>>, vector<1x32x128xbf16>
    %1 = vector.shape_cast %0 : vector<1x32x128xbf16> to vector<32x128xbf16>
    %c1 = arith.constant 1 : index
    %c0_2 = arith.constant 0 : index
    %c0_3 = arith.constant 0 : index
    %2 = vector.load %arg1[%c1, %c0_2, %c0_3] : memref<9x32x128xbf16, #tpu.memory_space<vmem>>, vector<1x32x128xbf16>
    %3 = vector.shape_cast %2 : vector<1x32x128xbf16> to vector<32x128xbf16>
    %4 = arith.maximumf %1, %3 : vector<32x128xbf16>
    %c2 = arith.constant 2 : index
    %c0_4 = arith.constant 0 : index
    %c0_5 = arith.constant 0 : index
    %5 = vector.load %arg1[%c2, %c0_4, %c0_5] : memref<9x32x128xbf16, #tpu.memory_space<vmem>>, vector<1x32x128xbf16>
    %6 = vector.shape_cast %5 : vector<1x32x128xbf16> to vector<32x128xbf16>
    %7 = arith.maximumf %4, %6 : vector<32x128xbf16>
    %c3 = arith.constant 3 : index
    %c0_6 = arith.constant 0 : index
    %c0_7 = arith.constant 0 : index
    %8 = vector.load %arg1[%c3, %c0_6, %c0_7] : memref<9x32x128xbf16, #tpu.memory_space<vmem>>, vector<1x32x128xbf16>
    %9 = vector.shape_cast %8 : vector<1x32x128xbf16> to vector<32x128xbf16>
    %10 = arith.maximumf %7, %9 : vector<32x128xbf16>
    %c4 = arith.constant 4 : index
    %c0_8 = arith.constant 0 : index
    %c0_9 = arith.constant 0 : index
    %11 = vector.load %arg1[%c4, %c0_8, %c0_9] : memref<9x32x128xbf16, #tpu.memory_space<vmem>>, vector<1x32x128xbf16>
    %12 = vector.shape_cast %11 : vector<1x32x128xbf16> to vector<32x128xbf16>
    %13 = arith.maximumf %10, %12 : vector<32x128xbf16>
    %c5 = arith.constant 5 : index
    %c0_10 = arith.constant 0 : index
    %c0_11 = arith.constant 0 : index
    %14 = vector.load %arg1[%c5, %c0_10, %c0_11] : memref<9x32x128xbf16, #tpu.memory_space<vmem>>, vector<1x32x128xbf16>
    %15 = vector.shape_cast %14 : vector<1x32x128xbf16> to vector<32x128xbf16>
    %16 = arith.maximumf %13, %15 : vector<32x128xbf16>
    %c6 = arith.constant 6 : index
    %c0_12 = arith.constant 0 : index
    %c0_13 = arith.constant 0 : index
    %17 = vector.load %arg1[%c6, %c0_12, %c0_13] : memref<9x32x128xbf16, #tpu.memory_space<vmem>>, vector<1x32x128xbf16>
    %18 = vector.shape_cast %17 : vector<1x32x128xbf16> to vector<32x128xbf16>
    %19 = arith.maximumf %16, %18 : vector<32x128xbf16>
    %c7 = arith.constant 7 : index
    %c0_14 = arith.constant 0 : index
    %c0_15 = arith.constant 0 : index
    %20 = vector.load %arg1[%c7, %c0_14, %c0_15] : memref<9x32x128xbf16, #tpu.memory_space<vmem>>, vector<1x32x128xbf16>
    %21 = vector.shape_cast %20 : vector<1x32x128xbf16> to vector<32x128xbf16>
    %22 = arith.maximumf %19, %21 : vector<32x128xbf16>
    %c8 = arith.constant 8 : index
    %c0_16 = arith.constant 0 : index
    %c0_17 = arith.constant 0 : index
    %23 = vector.load %arg1[%c8, %c0_16, %c0_17] : memref<9x32x128xbf16, #tpu.memory_space<vmem>>, vector<1x32x128xbf16>
    %24 = vector.shape_cast %23 : vector<1x32x128xbf16> to vector<32x128xbf16>
    %25 = arith.maximumf %22, %24 : vector<32x128xbf16>
    %c0_18 = arith.constant 0 : index
    %c0_19 = arith.constant 0 : index
    %26 = vector.load %arg2[%c0_18, %c0_19] : memref<32x128xbf16, #tpu.memory_space<vmem>>, vector<32x128xbf16>
    tpu.vector_store %arg2[%c0_18, %c0_19], %25 {strides = array<i32>} : memref<32x128xbf16, #tpu.memory_space<vmem>>, vector<32x128xbf16>,
    return
  }
  func.func @transform_0(%arg0: i32) -> (i32, i32, i32) {
    %c0_i32 = arith.constant 0 : i32
    %c0_i32_0 = arith.constant 0 : i32
    %c0_i32_1 = arith.constant 0 : i32
    return %c0_i32, %arg0, %c0_i32_0 : i32, i32, i32
  }
  func.func @transform_1(%arg0: i32) -> (i32, i32) {
    %c0_i32 = arith.constant 0 : i32
    %c0_i32_0 = arith.constant 0 : i32
    return %arg0, %c0_i32 : i32, i32
  }
}

module attributes {stable_mosaic.version = 11 : i64} {
  func.func @_gemm_kernel(%arg0: i32, %arg1: memref<32x128xbf16, #tpu.memory_space<vmem>>, %arg2: memref<128x128xbf16, #tpu.memory_space<vmem>>, %arg3: memref<32x128xbf16, #tpu.memory_space<vmem>>, %arg4: memref<8x128xf32, #tpu.memory_space<vmem>>, %arg5: memref<8x128xf32, #tpu.memory_space<vmem>>) attributes {dimension_semantics = [#tpu.dimension_semantics<parallel>], iteration_bounds = array<i64: 1>, scalar_prefetch = 0 : i64, scratch_operands = 0 : i64, tpu.core_type = #tpu.core_type<tc>, window_params = [{transform_indices = @transform_0, window_bounds = array<i64: 32, 128>}, {pipeline_mode = #tpu.pipeline_mode<synchronous>, transform_indices = @transform_1, window_bounds = array<i64: 128, 128>}, {transform_indices = @transform_2, window_bounds = array<i64: 32, 128>}, {transform_indices = @transform_3, window_bounds = array<i64: 8, 128>}, {transform_indices = @transform_4, window_bounds = array<i64: 8, 128>}]} {
    %c0 = arith.constant 0 : index
    %c0_0 = arith.constant 0 : index
    %0 = vector.load %arg1[%c0, %c0_0] : memref<32x128xbf16, #tpu.memory_space<vmem>>, vector<32x128xbf16>
    %c0_1 = arith.constant 0 : index
    %c0_2 = arith.constant 0 : index
    %1 = vector.load %arg2[%c0_1, %c0_2] : memref<128x128xbf16, #tpu.memory_space<vmem>>, vector<128x128xbf16>
    %cst = arith.constant dense<0.000000e+00> : vector<32x128xf32>
    %2 = tpu.matmul %0, %1, %cst {dimension_numbers = #tpu.dot_dimension_numbers<[1], [0], [0], [1], [0, 0, 1, 1], [], []>} : vector<32x128xbf16>, vector<128x128xbf16>, vector<32x128xf32> -> vector<32x128xf32>
    %3 = arith.truncf %2 : vector<32x128xf32> to vector<32x128xbf16>
    %c0_3 = arith.constant 0 : index
    %c0_4 = arith.constant 0 : index
    %4 = vector.load %arg3[%c0_3, %c0_4] : memref<32x128xbf16, #tpu.memory_space<vmem>>, vector<32x128xbf16>
    tpu.vector_store %arg3[%c0_3, %c0_4], %3 {strides = array<i32>} : memref<32x128xbf16, #tpu.memory_space<vmem>>, vector<32x128xbf16>,
    %cst_5 = arith.constant dense<0.000000e+00> : vector<128xf32>
    %5 = vector.multi_reduction <add>, %2, %cst_5 [0] : vector<32x128xf32> to vector<128xf32>
    %6 = vector.shape_cast %5 : vector<128xf32> to vector<1x128xf32>
    %7 = arith.mulf %2, %2 : vector<32x128xf32>
    %cst_6 = arith.constant dense<0.000000e+00> : vector<128xf32>
    %8 = vector.multi_reduction <add>, %7, %cst_6 [0] : vector<32x128xf32> to vector<128xf32>
    %9 = vector.shape_cast %8 : vector<128xf32> to vector<1x128xf32>
    %10 = vector.shape_cast %6 : vector<1x128xf32> to vector<1x128xf32>
    %11 = vector.broadcast %10 : vector<1x128xf32> to vector<8x128xf32>
    %c0_7 = arith.constant 0 : index
    %c0_8 = arith.constant 0 : index
    %12 = vector.load %arg4[%c0_7, %c0_8] : memref<8x128xf32, #tpu.memory_space<vmem>>, vector<8x128xf32>
    tpu.vector_store %arg4[%c0_7, %c0_8], %11 {strides = array<i32>} : memref<8x128xf32, #tpu.memory_space<vmem>>, vector<8x128xf32>,
    %13 = vector.shape_cast %9 : vector<1x128xf32> to vector<1x128xf32>
    %14 = vector.broadcast %13 : vector<1x128xf32> to vector<8x128xf32>
    %c0_9 = arith.constant 0 : index
    %c0_10 = arith.constant 0 : index
    %15 = vector.load %arg5[%c0_9, %c0_10] : memref<8x128xf32, #tpu.memory_space<vmem>>, vector<8x128xf32>
    tpu.vector_store %arg5[%c0_9, %c0_10], %14 {strides = array<i32>} : memref<8x128xf32, #tpu.memory_space<vmem>>, vector<8x128xf32>,
    return
  }
  func.func @transform_0(%arg0: i32) -> (i32, i32) {
    %c0_i32 = arith.constant 0 : i32
    %c0_i32_0 = arith.constant 0 : i32
    return %arg0, %c0_i32 : i32, i32
  }
  func.func @transform_1(%arg0: i32) -> (i32, i32) {
    %c0_i32 = arith.constant 0 : i32
    %c0_i32_0 = arith.constant 0 : i32
    %c0_i32_1 = arith.constant 0 : i32
    return %c0_i32, %c0_i32_0 : i32, i32
  }
  func.func @transform_2(%arg0: i32) -> (i32, i32) {
    %c0_i32 = arith.constant 0 : i32
    %c0_i32_0 = arith.constant 0 : i32
    return %arg0, %c0_i32 : i32, i32
  }
  func.func @transform_3(%arg0: i32) -> (i32, i32) {
    %c0_i32 = arith.constant 0 : i32
    %c0_i32_0 = arith.constant 0 : i32
    return %arg0, %c0_i32 : i32, i32
  }
  func.func @transform_4(%arg0: i32) -> (i32, i32) {
    %c0_i32 = arith.constant 0 : i32
    %c0_i32_0 = arith.constant 0 : i32
    return %arg0, %c0_i32 : i32, i32
  }
}

module attributes {stable_mosaic.version = 11 : i64} {
  func.func @_affine_act_kernel(%arg0: i32, %arg1: memref<32x128xbf16, #tpu.memory_space<vmem>>, %arg2: memref<1x128xf32, #tpu.memory_space<vmem>>, %arg3: memref<1x128xf32, #tpu.memory_space<vmem>>, %arg4: memref<32x128xbf16, #tpu.memory_space<vmem>>) attributes {dimension_semantics = [#tpu.dimension_semantics<parallel>], iteration_bounds = array<i64: 1>, scalar_prefetch = 0 : i64, scratch_operands = 0 : i64, tpu.core_type = #tpu.core_type<tc>, window_params = [{transform_indices = @transform_0, window_bounds = array<i64: 32, 128>}, {pipeline_mode = #tpu.pipeline_mode<synchronous>, transform_indices = @transform_1, window_bounds = array<i64: 1, 128>}, {pipeline_mode = #tpu.pipeline_mode<synchronous>, transform_indices = @transform_2, window_bounds = array<i64: 1, 128>}, {transform_indices = @transform_3, window_bounds = array<i64: 32, 128>}]} {
    %c0 = arith.constant 0 : index
    %c0_0 = arith.constant 0 : index
    %0 = vector.load %arg1[%c0, %c0_0] : memref<32x128xbf16, #tpu.memory_space<vmem>>, vector<32x128xbf16>
    %1 = arith.extf %0 : vector<32x128xbf16> to vector<32x128xf32>
    %c0_1 = arith.constant 0 : index
    %c0_2 = arith.constant 0 : index
    %2 = vector.load %arg2[%c0_1, %c0_2] : memref<1x128xf32, #tpu.memory_space<vmem>>, vector<1x128xf32>
    %3 = vector.broadcast %2 : vector<1x128xf32> to vector<32x128xf32>
    %4 = arith.mulf %1, %3 : vector<32x128xf32>
    %c0_3 = arith.constant 0 : index
    %c0_4 = arith.constant 0 : index
    %5 = vector.load %arg3[%c0_3, %c0_4] : memref<1x128xf32, #tpu.memory_space<vmem>>, vector<1x128xf32>
    %6 = vector.broadcast %5 : vector<1x128xf32> to vector<32x128xf32>
    %7 = arith.addf %4, %6 : vector<32x128xf32>
    %cst = arith.constant 0.000000e+00 : f32
    %8 = vector.broadcast %cst : f32 to vector<32x128xf32>
    %9 = arith.maximumf %7, %8 : vector<32x128xf32>
    %10 = arith.truncf %9 : vector<32x128xf32> to vector<32x128xbf16>
    %c0_5 = arith.constant 0 : index
    %c0_6 = arith.constant 0 : index
    %11 = vector.load %arg4[%c0_5, %c0_6] : memref<32x128xbf16, #tpu.memory_space<vmem>>, vector<32x128xbf16>
    tpu.vector_store %arg4[%c0_5, %c0_6], %10 {strides = array<i32>} : memref<32x128xbf16, #tpu.memory_space<vmem>>, vector<32x128xbf16>,
    return
  }
  func.func @transform_0(%arg0: i32) -> (i32, i32) {
    %c0_i32 = arith.constant 0 : i32
    %c0_i32_0 = arith.constant 0 : i32
    return %arg0, %c0_i32 : i32, i32
  }
  func.func @transform_1(%arg0: i32) -> (i32, i32) {
    %c0_i32 = arith.constant 0 : i32
    %c0_i32_0 = arith.constant 0 : i32
    %c0_i32_1 = arith.constant 0 : i32
    return %c0_i32, %c0_i32_0 : i32, i32
  }
  func.func @transform_2(%arg0: i32) -> (i32, i32) {
    %c0_i32 = arith.constant 0 : i32
    %c0_i32_0 = arith.constant 0 : i32
    %c0_i32_1 = arith.constant 0 : i32
    return %c0_i32, %c0_i32_0 : i32, i32
  }
  func.func @transform_3(%arg0: i32) -> (i32, i32) {
    %c0_i32 = arith.constant 0 : i32
    %c0_i32_0 = arith.constant 0 : i32
    return %arg0, %c0_i32 : i32, i32
  }
}

module attributes {stable_mosaic.version = 11 : i64} {
  func.func @_affine2_add_relu_kernel(%arg0: i32, %arg1: memref<32x128xbf16, #tpu.memory_space<vmem>>, %arg2: memref<32x128xbf16, #tpu.memory_space<vmem>>, %arg3: memref<1x128xf32, #tpu.memory_space<vmem>>, %arg4: memref<1x128xf32, #tpu.memory_space<vmem>>, %arg5: memref<1x128xf32, #tpu.memory_space<vmem>>, %arg6: memref<1x128xf32, #tpu.memory_space<vmem>>, %arg7: memref<32x128xbf16, #tpu.memory_space<vmem>>) attributes {dimension_semantics = [#tpu.dimension_semantics<parallel>], iteration_bounds = array<i64: 1>, scalar_prefetch = 0 : i64, scratch_operands = 0 : i64, tpu.core_type = #tpu.core_type<tc>, window_params = [{transform_indices = @transform_0, window_bounds = array<i64: 32, 128>}, {transform_indices = @transform_1, window_bounds = array<i64: 32, 128>}, {pipeline_mode = #tpu.pipeline_mode<synchronous>, transform_indices = @transform_2, window_bounds = array<i64: 1, 128>}, {pipeline_mode = #tpu.pipeline_mode<synchronous>, transform_indices = @transform_3, window_bounds = array<i64: 1, 128>}, {pipeline_mode = #tpu.pipeline_mode<synchronous>, transform_indices = @transform_4, window_bounds = array<i64: 1, 128>}, {pipeline_mode = #tpu.pipeline_mode<synchronous>, transform_indices = @transform_5, window_bounds = array<i64: 1, 128>}, {transform_indices = @transform_6, window_bounds = array<i64: 32, 128>}]} {
    %c0 = arith.constant 0 : index
    %c0_0 = arith.constant 0 : index
    %0 = vector.load %arg1[%c0, %c0_0] : memref<32x128xbf16, #tpu.memory_space<vmem>>, vector<32x128xbf16>
    %1 = arith.extf %0 : vector<32x128xbf16> to vector<32x128xf32>
    %c0_1 = arith.constant 0 : index
    %c0_2 = arith.constant 0 : index
    %2 = vector.load %arg3[%c0_1, %c0_2] : memref<1x128xf32, #tpu.memory_space<vmem>>, vector<1x128xf32>
    %3 = vector.broadcast %2 : vector<1x128xf32> to vector<32x128xf32>
    %4 = arith.mulf %1, %3 : vector<32x128xf32>
    %c0_3 = arith.constant 0 : index
    %c0_4 = arith.constant 0 : index
    %5 = vector.load %arg4[%c0_3, %c0_4] : memref<1x128xf32, #tpu.memory_space<vmem>>, vector<1x128xf32>
    %6 = vector.broadcast %5 : vector<1x128xf32> to vector<32x128xf32>
    %7 = arith.addf %4, %6 : vector<32x128xf32>
    %c0_5 = arith.constant 0 : index
    %c0_6 = arith.constant 0 : index
    %8 = vector.load %arg2[%c0_5, %c0_6] : memref<32x128xbf16, #tpu.memory_space<vmem>>, vector<32x128xbf16>
    %9 = arith.extf %8 : vector<32x128xbf16> to vector<32x128xf32>
    %c0_7 = arith.constant 0 : index
    %c0_8 = arith.constant 0 : index
    %10 = vector.load %arg5[%c0_7, %c0_8] : memref<1x128xf32, #tpu.memory_space<vmem>>, vector<1x128xf32>
    %11 = vector.broadcast %10 : vector<1x128xf32> to vector<32x128xf32>
    %12 = arith.mulf %9, %11 : vector<32x128xf32>
    %13 = arith.addf %7, %12 : vector<32x128xf32>
    %c0_9 = arith.constant 0 : index
    %c0_10 = arith.constant 0 : index
    %14 = vector.load %arg6[%c0_9, %c0_10] : memref<1x128xf32, #tpu.memory_space<vmem>>, vector<1x128xf32>
    %15 = vector.broadcast %14 : vector<1x128xf32> to vector<32x128xf32>
    %16 = arith.addf %13, %15 : vector<32x128xf32>
    %cst = arith.constant 0.000000e+00 : f32
    %17 = vector.broadcast %cst : f32 to vector<32x128xf32>
    %18 = arith.maximumf %16, %17 : vector<32x128xf32>
    %19 = arith.truncf %18 : vector<32x128xf32> to vector<32x128xbf16>
    %c0_11 = arith.constant 0 : index
    %c0_12 = arith.constant 0 : index
    %20 = vector.load %arg7[%c0_11, %c0_12] : memref<32x128xbf16, #tpu.memory_space<vmem>>, vector<32x128xbf16>
    tpu.vector_store %arg7[%c0_11, %c0_12], %19 {strides = array<i32>} : memref<32x128xbf16, #tpu.memory_space<vmem>>, vector<32x128xbf16>,
    return
  }
  func.func @transform_0(%arg0: i32) -> (i32, i32) {
    %c0_i32 = arith.constant 0 : i32
    %c0_i32_0 = arith.constant 0 : i32
    return %arg0, %c0_i32 : i32, i32
  }
  func.func @transform_1(%arg0: i32) -> (i32, i32) {
    %c0_i32 = arith.constant 0 : i32
    %c0_i32_0 = arith.constant 0 : i32
    return %arg0, %c0_i32 : i32, i32
  }
  func.func @transform_2(%arg0: i32) -> (i32, i32) {
    %c0_i32 = arith.constant 0 : i32
    %c0_i32_0 = arith.constant 0 : i32
    %c0_i32_1 = arith.constant 0 : i32
    return %c0_i32, %c0_i32_0 : i32, i32
  }
  func.func @transform_3(%arg0: i32) -> (i32, i32) {
    %c0_i32 = arith.constant 0 : i32
    %c0_i32_0 = arith.constant 0 : i32
    %c0_i32_1 = arith.constant 0 : i32
    return %c0_i32, %c0_i32_0 : i32, i32
  }
  func.func @transform_4(%arg0: i32) -> (i32, i32) {
    %c0_i32 = arith.constant 0 : i32
    %c0_i32_0 = arith.constant 0 : i32
    %c0_i32_1 = arith.constant 0 : i32
    return %c0_i32, %c0_i32_0 : i32, i32
  }
  func.func @transform_5(%arg0: i32) -> (i32, i32) {
    %c0_i32 = arith.constant 0 : i32
    %c0_i32_0 = arith.constant 0 : i32
    %c0_i32_1 = arith.constant 0 : i32
    return %c0_i32, %c0_i32_0 : i32, i32
  }
  func.func @transform_6(%arg0: i32) -> (i32, i32) {
    %c0_i32 = arith.constant 0 : i32
    %c0_i32_0 = arith.constant 0 : i32
    return %arg0, %c0_i32 : i32, i32
  }
}

module attributes {stable_mosaic.version = 11 : i64} {
  func.func @_gemm_kernel(%arg0: i32, %arg1: memref<32x1152xbf16, #tpu.memory_space<vmem>>, %arg2: memref<1152x128xbf16, #tpu.memory_space<vmem>>, %arg3: memref<32x128xbf16, #tpu.memory_space<vmem>>, %arg4: memref<8x128xf32, #tpu.memory_space<vmem>>, %arg5: memref<8x128xf32, #tpu.memory_space<vmem>>) attributes {dimension_semantics = [#tpu.dimension_semantics<parallel>], iteration_bounds = array<i64: 1>, scalar_prefetch = 0 : i64, scratch_operands = 0 : i64, tpu.core_type = #tpu.core_type<tc>, window_params = [{transform_indices = @transform_0, window_bounds = array<i64: 32, 1152>}, {pipeline_mode = #tpu.pipeline_mode<synchronous>, transform_indices = @transform_1, window_bounds = array<i64: 1152, 128>}, {transform_indices = @transform_2, window_bounds = array<i64: 32, 128>}, {transform_indices = @transform_3, window_bounds = array<i64: 8, 128>}, {transform_indices = @transform_4, window_bounds = array<i64: 8, 128>}]} {
    %c0 = arith.constant 0 : index
    %c0_0 = arith.constant 0 : index
    %0 = vector.load %arg1[%c0, %c0_0] : memref<32x1152xbf16, #tpu.memory_space<vmem>>, vector<32x1152xbf16>
    %c0_1 = arith.constant 0 : index
    %c0_2 = arith.constant 0 : index
    %1 = vector.load %arg2[%c0_1, %c0_2] : memref<1152x128xbf16, #tpu.memory_space<vmem>>, vector<1152x128xbf16>
    %cst = arith.constant dense<0.000000e+00> : vector<32x128xf32>
    %2 = tpu.matmul %0, %1, %cst {dimension_numbers = #tpu.dot_dimension_numbers<[1], [0], [0], [1], [0, 0, 1, 1], [], []>} : vector<32x1152xbf16>, vector<1152x128xbf16>, vector<32x128xf32> -> vector<32x128xf32>
    %3 = arith.truncf %2 : vector<32x128xf32> to vector<32x128xbf16>
    %c0_3 = arith.constant 0 : index
    %c0_4 = arith.constant 0 : index
    %4 = vector.load %arg3[%c0_3, %c0_4] : memref<32x128xbf16, #tpu.memory_space<vmem>>, vector<32x128xbf16>
    tpu.vector_store %arg3[%c0_3, %c0_4], %3 {strides = array<i32>} : memref<32x128xbf16, #tpu.memory_space<vmem>>, vector<32x128xbf16>,
    %cst_5 = arith.constant dense<0.000000e+00> : vector<128xf32>
    %5 = vector.multi_reduction <add>, %2, %cst_5 [0] : vector<32x128xf32> to vector<128xf32>
    %6 = vector.shape_cast %5 : vector<128xf32> to vector<1x128xf32>
    %7 = arith.mulf %2, %2 : vector<32x128xf32>
    %cst_6 = arith.constant dense<0.000000e+00> : vector<128xf32>
    %8 = vector.multi_reduction <add>, %7, %cst_6 [0] : vector<32x128xf32> to vector<128xf32>
    %9 = vector.shape_cast %8 : vector<128xf32> to vector<1x128xf32>
    %10 = vector.shape_cast %6 : vector<1x128xf32> to vector<1x128xf32>
    %11 = vector.broadcast %10 : vector<1x128xf32> to vector<8x128xf32>
    %c0_7 = arith.constant 0 : index
    %c0_8 = arith.constant 0 : index
    %12 = vector.load %arg4[%c0_7, %c0_8] : memref<8x128xf32, #tpu.memory_space<vmem>>, vector<8x128xf32>
    tpu.vector_store %arg4[%c0_7, %c0_8], %11 {strides = array<i32>} : memref<8x128xf32, #tpu.memory_space<vmem>>, vector<8x128xf32>,
    %13 = vector.shape_cast %9 : vector<1x128xf32> to vector<1x128xf32>
    %14 = vector.broadcast %13 : vector<1x128xf32> to vector<8x128xf32>
    %c0_9 = arith.constant 0 : index
    %c0_10 = arith.constant 0 : index
    %15 = vector.load %arg5[%c0_9, %c0_10] : memref<8x128xf32, #tpu.memory_space<vmem>>, vector<8x128xf32>
    tpu.vector_store %arg5[%c0_9, %c0_10], %14 {strides = array<i32>} : memref<8x128xf32, #tpu.memory_space<vmem>>, vector<8x128xf32>,
    return
  }
  func.func @transform_0(%arg0: i32) -> (i32, i32) {
    %c0_i32 = arith.constant 0 : i32
    %c0_i32_0 = arith.constant 0 : i32
    return %arg0, %c0_i32 : i32, i32
  }
  func.func @transform_1(%arg0: i32) -> (i32, i32) {
    %c0_i32 = arith.constant 0 : i32
    %c0_i32_0 = arith.constant 0 : i32
    %c0_i32_1 = arith.constant 0 : i32
    return %c0_i32, %c0_i32_0 : i32, i32
  }
  func.func @transform_2(%arg0: i32) -> (i32, i32) {
    %c0_i32 = arith.constant 0 : i32
    %c0_i32_0 = arith.constant 0 : i32
    return %arg0, %c0_i32 : i32, i32
  }
  func.func @transform_3(%arg0: i32) -> (i32, i32) {
    %c0_i32 = arith.constant 0 : i32
    %c0_i32_0 = arith.constant 0 : i32
    return %arg0, %c0_i32 : i32, i32
  }
  func.func @transform_4(%arg0: i32) -> (i32, i32) {
    %c0_i32 = arith.constant 0 : i32
    %c0_i32_0 = arith.constant 0 : i32
    return %arg0, %c0_i32 : i32, i32
  }
}

module attributes {stable_mosaic.version = 11 : i64} {
  func.func @_gemm_kernel(%arg0: i32, %arg1: memref<32x128xbf16, #tpu.memory_space<vmem>>, %arg2: memref<128x128xbf16, #tpu.memory_space<vmem>>, %arg3: memref<1x128xf32, #tpu.memory_space<vmem>>, %arg4: memref<1x128xf32, #tpu.memory_space<vmem>>, %arg5: memref<32x128xbf16, #tpu.memory_space<vmem>>, %arg6: memref<8x128xf32, #tpu.memory_space<vmem>>, %arg7: memref<8x128xf32, #tpu.memory_space<vmem>>) attributes {dimension_semantics = [#tpu.dimension_semantics<parallel>], iteration_bounds = array<i64: 1>, scalar_prefetch = 0 : i64, scratch_operands = 0 : i64, tpu.core_type = #tpu.core_type<tc>, window_params = [{transform_indices = @transform_0, window_bounds = array<i64: 32, 128>}, {pipeline_mode = #tpu.pipeline_mode<synchronous>, transform_indices = @transform_1, window_bounds = array<i64: 128, 128>}, {pipeline_mode = #tpu.pipeline_mode<synchronous>, transform_indices = @transform_2, window_bounds = array<i64: 1, 128>}, {pipeline_mode = #tpu.pipeline_mode<synchronous>, transform_indices = @transform_3, window_bounds = array<i64: 1, 128>}, {transform_indices = @transform_4, window_bounds = array<i64: 32, 128>}, {transform_indices = @transform_5, window_bounds = array<i64: 8, 128>}, {transform_indices = @transform_6, window_bounds = array<i64: 8, 128>}]} {
    %c0 = arith.constant 0 : index
    %c0_0 = arith.constant 0 : index
    %0 = vector.load %arg1[%c0, %c0_0] : memref<32x128xbf16, #tpu.memory_space<vmem>>, vector<32x128xbf16>
    %1 = arith.extf %0 : vector<32x128xbf16> to vector<32x128xf32>
    %c0_1 = arith.constant 0 : index
    %c0_2 = arith.constant 0 : index
    %2 = vector.load %arg3[%c0_1, %c0_2] : memref<1x128xf32, #tpu.memory_space<vmem>>, vector<1x128xf32>
    %3 = vector.broadcast %2 : vector<1x128xf32> to vector<32x128xf32>
    %4 = arith.mulf %1, %3 : vector<32x128xf32>
    %c0_3 = arith.constant 0 : index
    %c0_4 = arith.constant 0 : index
    %5 = vector.load %arg4[%c0_3, %c0_4] : memref<1x128xf32, #tpu.memory_space<vmem>>, vector<1x128xf32>
    %6 = vector.broadcast %5 : vector<1x128xf32> to vector<32x128xf32>
    %7 = arith.addf %4, %6 : vector<32x128xf32>
    %cst = arith.constant 0.000000e+00 : f32
    %8 = vector.broadcast %cst : f32 to vector<32x128xf32>
    %9 = arith.maximumf %7, %8 : vector<32x128xf32>
    %10 = arith.truncf %9 : vector<32x128xf32> to vector<32x128xbf16>
    %c0_5 = arith.constant 0 : index
    %c0_6 = arith.constant 0 : index
    %11 = vector.load %arg2[%c0_5, %c0_6] : memref<128x128xbf16, #tpu.memory_space<vmem>>, vector<128x128xbf16>
    %cst_7 = arith.constant dense<0.000000e+00> : vector<32x128xf32>
    %12 = tpu.matmul %10, %11, %cst_7 {dimension_numbers = #tpu.dot_dimension_numbers<[1], [0], [0], [1], [0, 0, 1, 1], [], []>} : vector<32x128xbf16>, vector<128x128xbf16>, vector<32x128xf32> -> vector<32x128xf32>
    %13 = arith.truncf %12 : vector<32x128xf32> to vector<32x128xbf16>
    %c0_8 = arith.constant 0 : index
    %c0_9 = arith.constant 0 : index
    %14 = vector.load %arg5[%c0_8, %c0_9] : memref<32x128xbf16, #tpu.memory_space<vmem>>, vector<32x128xbf16>
    tpu.vector_store %arg5[%c0_8, %c0_9], %13 {strides = array<i32>} : memref<32x128xbf16, #tpu.memory_space<vmem>>, vector<32x128xbf16>,
    %cst_10 = arith.constant dense<0.000000e+00> : vector<128xf32>
    %15 = vector.multi_reduction <add>, %12, %cst_10 [0] : vector<32x128xf32> to vector<128xf32>
    %16 = vector.shape_cast %15 : vector<128xf32> to vector<1x128xf32>
    %17 = arith.mulf %12, %12 : vector<32x128xf32>
    %cst_11 = arith.constant dense<0.000000e+00> : vector<128xf32>
    %18 = vector.multi_reduction <add>, %17, %cst_11 [0] : vector<32x128xf32> to vector<128xf32>
    %19 = vector.shape_cast %18 : vector<128xf32> to vector<1x128xf32>
    %20 = vector.shape_cast %16 : vector<1x128xf32> to vector<1x128xf32>
    %21 = vector.broadcast %20 : vector<1x128xf32> to vector<8x128xf32>
    %c0_12 = arith.constant 0 : index
    %c0_13 = arith.constant 0 : index
    %22 = vector.load %arg6[%c0_12, %c0_13] : memref<8x128xf32, #tpu.memory_space<vmem>>, vector<8x128xf32>
    tpu.vector_store %arg6[%c0_12, %c0_13], %21 {strides = array<i32>} : memref<8x128xf32, #tpu.memory_space<vmem>>, vector<8x128xf32>,
    %23 = vector.shape_cast %19 : vector<1x128xf32> to vector<1x128xf32>
    %24 = vector.broadcast %23 : vector<1x128xf32> to vector<8x128xf32>
    %c0_14 = arith.constant 0 : index
    %c0_15 = arith.constant 0 : index
    %25 = vector.load %arg7[%c0_14, %c0_15] : memref<8x128xf32, #tpu.memory_space<vmem>>, vector<8x128xf32>
    tpu.vector_store %arg7[%c0_14, %c0_15], %24 {strides = array<i32>} : memref<8x128xf32, #tpu.memory_space<vmem>>, vector<8x128xf32>,
    return
  }
  func.func @transform_0(%arg0: i32) -> (i32, i32) {
    %c0_i32 = arith.constant 0 : i32
    %c0_i32_0 = arith.constant 0 : i32
    return %arg0, %c0_i32 : i32, i32
  }
  func.func @transform_1(%arg0: i32) -> (i32, i32) {
    %c0_i32 = arith.constant 0 : i32
    %c0_i32_0 = arith.constant 0 : i32
    %c0_i32_1 = arith.constant 0 : i32
    return %c0_i32, %c0_i32_0 : i32, i32
  }
  func.func @transform_2(%arg0: i32) -> (i32, i32) {
    %c0_i32 = arith.constant 0 : i32
    %c0_i32_0 = arith.constant 0 : i32
    %c0_i32_1 = arith.constant 0 : i32
    return %c0_i32, %c0_i32_0 : i32, i32
  }
  func.func @transform_3(%arg0: i32) -> (i32, i32) {
    %c0_i32 = arith.constant 0 : i32
    %c0_i32_0 = arith.constant 0 : i32
    %c0_i32_1 = arith.constant 0 : i32
    return %c0_i32, %c0_i32_0 : i32, i32
  }
  func.func @transform_4(%arg0: i32) -> (i32, i32) {
    %c0_i32 = arith.constant 0 : i32
    %c0_i32_0 = arith.constant 0 : i32
    return %arg0, %c0_i32 : i32, i32
  }
  func.func @transform_5(%arg0: i32) -> (i32, i32) {
    %c0_i32 = arith.constant 0 : i32
    %c0_i32_0 = arith.constant 0 : i32
    return %arg0, %c0_i32 : i32, i32
  }
  func.func @transform_6(%arg0: i32) -> (i32, i32) {
    %c0_i32 = arith.constant 0 : i32
    %c0_i32_0 = arith.constant 0 : i32
    return %arg0, %c0_i32 : i32, i32
  }
}

module attributes {stable_mosaic.version = 11 : i64} {
  func.func @_gemm_kernel(%arg0: i32, %arg1: memref<8x128xbf16, #tpu.memory_space<vmem>>, %arg2: memref<128x128xbf16, #tpu.memory_space<vmem>>, %arg3: memref<1x128xf32, #tpu.memory_space<vmem>>, %arg4: memref<1x128xf32, #tpu.memory_space<vmem>>, %arg5: memref<8x128xbf16, #tpu.memory_space<vmem>>, %arg6: memref<8x128xf32, #tpu.memory_space<vmem>>, %arg7: memref<8x128xf32, #tpu.memory_space<vmem>>) attributes {dimension_semantics = [#tpu.dimension_semantics<parallel>], iteration_bounds = array<i64: 1>, scalar_prefetch = 0 : i64, scratch_operands = 0 : i64, tpu.core_type = #tpu.core_type<tc>, window_params = [{transform_indices = @transform_0, window_bounds = array<i64: 8, 128>}, {pipeline_mode = #tpu.pipeline_mode<synchronous>, transform_indices = @transform_1, window_bounds = array<i64: 128, 128>}, {pipeline_mode = #tpu.pipeline_mode<synchronous>, transform_indices = @transform_2, window_bounds = array<i64: 1, 128>}, {pipeline_mode = #tpu.pipeline_mode<synchronous>, transform_indices = @transform_3, window_bounds = array<i64: 1, 128>}, {transform_indices = @transform_4, window_bounds = array<i64: 8, 128>}, {transform_indices = @transform_5, window_bounds = array<i64: 8, 128>}, {transform_indices = @transform_6, window_bounds = array<i64: 8, 128>}]} {
    %c0 = arith.constant 0 : index
    %c0_0 = arith.constant 0 : index
    %0 = vector.load %arg1[%c0, %c0_0] : memref<8x128xbf16, #tpu.memory_space<vmem>>, vector<8x128xbf16>
    %1 = arith.extf %0 : vector<8x128xbf16> to vector<8x128xf32>
    %c0_1 = arith.constant 0 : index
    %c0_2 = arith.constant 0 : index
    %2 = vector.load %arg3[%c0_1, %c0_2] : memref<1x128xf32, #tpu.memory_space<vmem>>, vector<1x128xf32>
    %3 = vector.broadcast %2 : vector<1x128xf32> to vector<8x128xf32>
    %4 = arith.mulf %1, %3 : vector<8x128xf32>
    %c0_3 = arith.constant 0 : index
    %c0_4 = arith.constant 0 : index
    %5 = vector.load %arg4[%c0_3, %c0_4] : memref<1x128xf32, #tpu.memory_space<vmem>>, vector<1x128xf32>
    %6 = vector.broadcast %5 : vector<1x128xf32> to vector<8x128xf32>
    %7 = arith.addf %4, %6 : vector<8x128xf32>
    %cst = arith.constant 0.000000e+00 : f32
    %8 = vector.broadcast %cst : f32 to vector<8x128xf32>
    %9 = arith.maximumf %7, %8 : vector<8x128xf32>
    %10 = arith.truncf %9 : vector<8x128xf32> to vector<8x128xbf16>
    %c0_5 = arith.constant 0 : index
    %c0_6 = arith.constant 0 : index
    %11 = vector.load %arg2[%c0_5, %c0_6] : memref<128x128xbf16, #tpu.memory_space<vmem>>, vector<128x128xbf16>
    %cst_7 = arith.constant dense<0.000000e+00> : vector<8x128xf32>
    %12 = tpu.matmul %10, %11, %cst_7 {dimension_numbers = #tpu.dot_dimension_numbers<[1], [0], [0], [1], [0, 0, 1, 1], [], []>} : vector<8x128xbf16>, vector<128x128xbf16>, vector<8x128xf32> -> vector<8x128xf32>
    %13 = arith.truncf %12 : vector<8x128xf32> to vector<8x128xbf16>
    %c0_8 = arith.constant 0 : index
    %c0_9 = arith.constant 0 : index
    %14 = vector.load %arg5[%c0_8, %c0_9] : memref<8x128xbf16, #tpu.memory_space<vmem>>, vector<8x128xbf16>
    tpu.vector_store %arg5[%c0_8, %c0_9], %13 {strides = array<i32>} : memref<8x128xbf16, #tpu.memory_space<vmem>>, vector<8x128xbf16>,
    %cst_10 = arith.constant dense<0.000000e+00> : vector<128xf32>
    %15 = vector.multi_reduction <add>, %12, %cst_10 [0] : vector<8x128xf32> to vector<128xf32>
    %16 = vector.shape_cast %15 : vector<128xf32> to vector<1x128xf32>
    %17 = arith.mulf %12, %12 : vector<8x128xf32>
    %cst_11 = arith.constant dense<0.000000e+00> : vector<128xf32>
    %18 = vector.multi_reduction <add>, %17, %cst_11 [0] : vector<8x128xf32> to vector<128xf32>
    %19 = vector.shape_cast %18 : vector<128xf32> to vector<1x128xf32>
    %20 = vector.shape_cast %16 : vector<1x128xf32> to vector<1x128xf32>
    %21 = vector.broadcast %20 : vector<1x128xf32> to vector<8x128xf32>
    %c0_12 = arith.constant 0 : index
    %c0_13 = arith.constant 0 : index
    %22 = vector.load %arg6[%c0_12, %c0_13] : memref<8x128xf32, #tpu.memory_space<vmem>>, vector<8x128xf32>
    tpu.vector_store %arg6[%c0_12, %c0_13], %21 {strides = array<i32>} : memref<8x128xf32, #tpu.memory_space<vmem>>, vector<8x128xf32>,
    %23 = vector.shape_cast %19 : vector<1x128xf32> to vector<1x128xf32>
    %24 = vector.broadcast %23 : vector<1x128xf32> to vector<8x128xf32>
    %c0_14 = arith.constant 0 : index
    %c0_15 = arith.constant 0 : index
    %25 = vector.load %arg7[%c0_14, %c0_15] : memref<8x128xf32, #tpu.memory_space<vmem>>, vector<8x128xf32>
    tpu.vector_store %arg7[%c0_14, %c0_15], %24 {strides = array<i32>} : memref<8x128xf32, #tpu.memory_space<vmem>>, vector<8x128xf32>,
    return
  }
  func.func @transform_0(%arg0: i32) -> (i32, i32) {
    %c0_i32 = arith.constant 0 : i32
    %c0_i32_0 = arith.constant 0 : i32
    return %arg0, %c0_i32 : i32, i32
  }
  func.func @transform_1(%arg0: i32) -> (i32, i32) {
    %c0_i32 = arith.constant 0 : i32
    %c0_i32_0 = arith.constant 0 : i32
    %c0_i32_1 = arith.constant 0 : i32
    return %c0_i32, %c0_i32_0 : i32, i32
  }
  func.func @transform_2(%arg0: i32) -> (i32, i32) {
    %c0_i32 = arith.constant 0 : i32
    %c0_i32_0 = arith.constant 0 : i32
    %c0_i32_1 = arith.constant 0 : i32
    return %c0_i32, %c0_i32_0 : i32, i32
  }
  func.func @transform_3(%arg0: i32) -> (i32, i32) {
    %c0_i32 = arith.constant 0 : i32
    %c0_i32_0 = arith.constant 0 : i32
    %c0_i32_1 = arith.constant 0 : i32
    return %c0_i32, %c0_i32_0 : i32, i32
  }
  func.func @transform_4(%arg0: i32) -> (i32, i32) {
    %c0_i32 = arith.constant 0 : i32
    %c0_i32_0 = arith.constant 0 : i32
    return %arg0, %c0_i32 : i32, i32
  }
  func.func @transform_5(%arg0: i32) -> (i32, i32) {
    %c0_i32 = arith.constant 0 : i32
    %c0_i32_0 = arith.constant 0 : i32
    return %arg0, %c0_i32 : i32, i32
  }
  func.func @transform_6(%arg0: i32) -> (i32, i32) {
    %c0_i32 = arith.constant 0 : i32
    %c0_i32_0 = arith.constant 0 : i32
    return %arg0, %c0_i32 : i32, i32
  }
}

module attributes {stable_mosaic.version = 11 : i64} {
  func.func @_gemm_kernel(%arg0: i32, %arg1: memref<8x1152xbf16, #tpu.memory_space<vmem>>, %arg2: memref<1152x128xbf16, #tpu.memory_space<vmem>>, %arg3: memref<8x128xbf16, #tpu.memory_space<vmem>>, %arg4: memref<8x128xf32, #tpu.memory_space<vmem>>, %arg5: memref<8x128xf32, #tpu.memory_space<vmem>>) attributes {dimension_semantics = [#tpu.dimension_semantics<parallel>], iteration_bounds = array<i64: 1>, scalar_prefetch = 0 : i64, scratch_operands = 0 : i64, tpu.core_type = #tpu.core_type<tc>, window_params = [{transform_indices = @transform_0, window_bounds = array<i64: 8, 1152>}, {pipeline_mode = #tpu.pipeline_mode<synchronous>, transform_indices = @transform_1, window_bounds = array<i64: 1152, 128>}, {transform_indices = @transform_2, window_bounds = array<i64: 8, 128>}, {transform_indices = @transform_3, window_bounds = array<i64: 8, 128>}, {transform_indices = @transform_4, window_bounds = array<i64: 8, 128>}]} {
    %c0 = arith.constant 0 : index
    %c0_0 = arith.constant 0 : index
    %0 = vector.load %arg1[%c0, %c0_0] : memref<8x1152xbf16, #tpu.memory_space<vmem>>, vector<8x1152xbf16>
    %c0_1 = arith.constant 0 : index
    %c0_2 = arith.constant 0 : index
    %1 = vector.load %arg2[%c0_1, %c0_2] : memref<1152x128xbf16, #tpu.memory_space<vmem>>, vector<1152x128xbf16>
    %cst = arith.constant dense<0.000000e+00> : vector<8x128xf32>
    %2 = tpu.matmul %0, %1, %cst {dimension_numbers = #tpu.dot_dimension_numbers<[1], [0], [0], [1], [0, 0, 1, 1], [], []>} : vector<8x1152xbf16>, vector<1152x128xbf16>, vector<8x128xf32> -> vector<8x128xf32>
    %3 = arith.truncf %2 : vector<8x128xf32> to vector<8x128xbf16>
    %c0_3 = arith.constant 0 : index
    %c0_4 = arith.constant 0 : index
    %4 = vector.load %arg3[%c0_3, %c0_4] : memref<8x128xbf16, #tpu.memory_space<vmem>>, vector<8x128xbf16>
    tpu.vector_store %arg3[%c0_3, %c0_4], %3 {strides = array<i32>} : memref<8x128xbf16, #tpu.memory_space<vmem>>, vector<8x128xbf16>,
    %cst_5 = arith.constant dense<0.000000e+00> : vector<128xf32>
    %5 = vector.multi_reduction <add>, %2, %cst_5 [0] : vector<8x128xf32> to vector<128xf32>
    %6 = vector.shape_cast %5 : vector<128xf32> to vector<1x128xf32>
    %7 = arith.mulf %2, %2 : vector<8x128xf32>
    %cst_6 = arith.constant dense<0.000000e+00> : vector<128xf32>
    %8 = vector.multi_reduction <add>, %7, %cst_6 [0] : vector<8x128xf32> to vector<128xf32>
    %9 = vector.shape_cast %8 : vector<128xf32> to vector<1x128xf32>
    %10 = vector.shape_cast %6 : vector<1x128xf32> to vector<1x128xf32>
    %11 = vector.broadcast %10 : vector<1x128xf32> to vector<8x128xf32>
    %c0_7 = arith.constant 0 : index
    %c0_8 = arith.constant 0 : index
    %12 = vector.load %arg4[%c0_7, %c0_8] : memref<8x128xf32, #tpu.memory_space<vmem>>, vector<8x128xf32>
    tpu.vector_store %arg4[%c0_7, %c0_8], %11 {strides = array<i32>} : memref<8x128xf32, #tpu.memory_space<vmem>>, vector<8x128xf32>,
    %13 = vector.shape_cast %9 : vector<1x128xf32> to vector<1x128xf32>
    %14 = vector.broadcast %13 : vector<1x128xf32> to vector<8x128xf32>
    %c0_9 = arith.constant 0 : index
    %c0_10 = arith.constant 0 : index
    %15 = vector.load %arg5[%c0_9, %c0_10] : memref<8x128xf32, #tpu.memory_space<vmem>>, vector<8x128xf32>
    tpu.vector_store %arg5[%c0_9, %c0_10], %14 {strides = array<i32>} : memref<8x128xf32, #tpu.memory_space<vmem>>, vector<8x128xf32>,
    return
  }
  func.func @transform_0(%arg0: i32) -> (i32, i32) {
    %c0_i32 = arith.constant 0 : i32
    %c0_i32_0 = arith.constant 0 : i32
    return %arg0, %c0_i32 : i32, i32
  }
  func.func @transform_1(%arg0: i32) -> (i32, i32) {
    %c0_i32 = arith.constant 0 : i32
    %c0_i32_0 = arith.constant 0 : i32
    %c0_i32_1 = arith.constant 0 : i32
    return %c0_i32, %c0_i32_0 : i32, i32
  }
  func.func @transform_2(%arg0: i32) -> (i32, i32) {
    %c0_i32 = arith.constant 0 : i32
    %c0_i32_0 = arith.constant 0 : i32
    return %arg0, %c0_i32 : i32, i32
  }
  func.func @transform_3(%arg0: i32) -> (i32, i32) {
    %c0_i32 = arith.constant 0 : i32
    %c0_i32_0 = arith.constant 0 : i32
    return %arg0, %c0_i32 : i32, i32
  }
  func.func @transform_4(%arg0: i32) -> (i32, i32) {
    %c0_i32 = arith.constant 0 : i32
    %c0_i32_0 = arith.constant 0 : i32
    return %arg0, %c0_i32 : i32, i32
  }
}

module attributes {stable_mosaic.version = 11 : i64} {
  func.func @_gemm_kernel(%arg0: i32, %arg1: memref<8x128xbf16, #tpu.memory_space<vmem>>, %arg2: memref<128x128xbf16, #tpu.memory_space<vmem>>, %arg3: memref<8x128xbf16, #tpu.memory_space<vmem>>, %arg4: memref<8x128xf32, #tpu.memory_space<vmem>>, %arg5: memref<8x128xf32, #tpu.memory_space<vmem>>) attributes {dimension_semantics = [#tpu.dimension_semantics<parallel>], iteration_bounds = array<i64: 1>, scalar_prefetch = 0 : i64, scratch_operands = 0 : i64, tpu.core_type = #tpu.core_type<tc>, window_params = [{transform_indices = @transform_0, window_bounds = array<i64: 8, 128>}, {pipeline_mode = #tpu.pipeline_mode<synchronous>, transform_indices = @transform_1, window_bounds = array<i64: 128, 128>}, {transform_indices = @transform_2, window_bounds = array<i64: 8, 128>}, {transform_indices = @transform_3, window_bounds = array<i64: 8, 128>}, {transform_indices = @transform_4, window_bounds = array<i64: 8, 128>}]} {
    %c0 = arith.constant 0 : index
    %c0_0 = arith.constant 0 : index
    %0 = vector.load %arg1[%c0, %c0_0] : memref<8x128xbf16, #tpu.memory_space<vmem>>, vector<8x128xbf16>
    %c0_1 = arith.constant 0 : index
    %c0_2 = arith.constant 0 : index
    %1 = vector.load %arg2[%c0_1, %c0_2] : memref<128x128xbf16, #tpu.memory_space<vmem>>, vector<128x128xbf16>
    %cst = arith.constant dense<0.000000e+00> : vector<8x128xf32>
    %2 = tpu.matmul %0, %1, %cst {dimension_numbers = #tpu.dot_dimension_numbers<[1], [0], [0], [1], [0, 0, 1, 1], [], []>} : vector<8x128xbf16>, vector<128x128xbf16>, vector<8x128xf32> -> vector<8x128xf32>
    %3 = arith.truncf %2 : vector<8x128xf32> to vector<8x128xbf16>
    %c0_3 = arith.constant 0 : index
    %c0_4 = arith.constant 0 : index
    %4 = vector.load %arg3[%c0_3, %c0_4] : memref<8x128xbf16, #tpu.memory_space<vmem>>, vector<8x128xbf16>
    tpu.vector_store %arg3[%c0_3, %c0_4], %3 {strides = array<i32>} : memref<8x128xbf16, #tpu.memory_space<vmem>>, vector<8x128xbf16>,
    %cst_5 = arith.constant dense<0.000000e+00> : vector<128xf32>
    %5 = vector.multi_reduction <add>, %2, %cst_5 [0] : vector<8x128xf32> to vector<128xf32>
    %6 = vector.shape_cast %5 : vector<128xf32> to vector<1x128xf32>
    %7 = arith.mulf %2, %2 : vector<8x128xf32>
    %cst_6 = arith.constant dense<0.000000e+00> : vector<128xf32>
    %8 = vector.multi_reduction <add>, %7, %cst_6 [0] : vector<8x128xf32> to vector<128xf32>
    %9 = vector.shape_cast %8 : vector<128xf32> to vector<1x128xf32>
    %10 = vector.shape_cast %6 : vector<1x128xf32> to vector<1x128xf32>
    %11 = vector.broadcast %10 : vector<1x128xf32> to vector<8x128xf32>
    %c0_7 = arith.constant 0 : index
    %c0_8 = arith.constant 0 : index
    %12 = vector.load %arg4[%c0_7, %c0_8] : memref<8x128xf32, #tpu.memory_space<vmem>>, vector<8x128xf32>
    tpu.vector_store %arg4[%c0_7, %c0_8], %11 {strides = array<i32>} : memref<8x128xf32, #tpu.memory_space<vmem>>, vector<8x128xf32>,
    %13 = vector.shape_cast %9 : vector<1x128xf32> to vector<1x128xf32>
    %14 = vector.broadcast %13 : vector<1x128xf32> to vector<8x128xf32>
    %c0_9 = arith.constant 0 : index
    %c0_10 = arith.constant 0 : index
    %15 = vector.load %arg5[%c0_9, %c0_10] : memref<8x128xf32, #tpu.memory_space<vmem>>, vector<8x128xf32>
    tpu.vector_store %arg5[%c0_9, %c0_10], %14 {strides = array<i32>} : memref<8x128xf32, #tpu.memory_space<vmem>>, vector<8x128xf32>,
    return
  }
  func.func @transform_0(%arg0: i32) -> (i32, i32) {
    %c0_i32 = arith.constant 0 : i32
    %c0_i32_0 = arith.constant 0 : i32
    return %arg0, %c0_i32 : i32, i32
  }
  func.func @transform_1(%arg0: i32) -> (i32, i32) {
    %c0_i32 = arith.constant 0 : i32
    %c0_i32_0 = arith.constant 0 : i32
    %c0_i32_1 = arith.constant 0 : i32
    return %c0_i32, %c0_i32_0 : i32, i32
  }
  func.func @transform_2(%arg0: i32) -> (i32, i32) {
    %c0_i32 = arith.constant 0 : i32
    %c0_i32_0 = arith.constant 0 : i32
    return %arg0, %c0_i32 : i32, i32
  }
  func.func @transform_3(%arg0: i32) -> (i32, i32) {
    %c0_i32 = arith.constant 0 : i32
    %c0_i32_0 = arith.constant 0 : i32
    return %arg0, %c0_i32 : i32, i32
  }
  func.func @transform_4(%arg0: i32) -> (i32, i32) {
    %c0_i32 = arith.constant 0 : i32
    %c0_i32_0 = arith.constant 0 : i32
    return %arg0, %c0_i32 : i32, i32
  }
}

module attributes {stable_mosaic.version = 11 : i64} {
  func.func @_affine2_add_relu_kernel(%arg0: i32, %arg1: memref<8x128xbf16, #tpu.memory_space<vmem>>, %arg2: memref<8x128xbf16, #tpu.memory_space<vmem>>, %arg3: memref<1x128xf32, #tpu.memory_space<vmem>>, %arg4: memref<1x128xf32, #tpu.memory_space<vmem>>, %arg5: memref<1x128xf32, #tpu.memory_space<vmem>>, %arg6: memref<1x128xf32, #tpu.memory_space<vmem>>, %arg7: memref<8x128xbf16, #tpu.memory_space<vmem>>) attributes {dimension_semantics = [#tpu.dimension_semantics<parallel>], iteration_bounds = array<i64: 1>, scalar_prefetch = 0 : i64, scratch_operands = 0 : i64, tpu.core_type = #tpu.core_type<tc>, window_params = [{transform_indices = @transform_0, window_bounds = array<i64: 8, 128>}, {transform_indices = @transform_1, window_bounds = array<i64: 8, 128>}, {pipeline_mode = #tpu.pipeline_mode<synchronous>, transform_indices = @transform_2, window_bounds = array<i64: 1, 128>}, {pipeline_mode = #tpu.pipeline_mode<synchronous>, transform_indices = @transform_3, window_bounds = array<i64: 1, 128>}, {pipeline_mode = #tpu.pipeline_mode<synchronous>, transform_indices = @transform_4, window_bounds = array<i64: 1, 128>}, {pipeline_mode = #tpu.pipeline_mode<synchronous>, transform_indices = @transform_5, window_bounds = array<i64: 1, 128>}, {transform_indices = @transform_6, window_bounds = array<i64: 8, 128>}]} {
    %c0 = arith.constant 0 : index
    %c0_0 = arith.constant 0 : index
    %0 = vector.load %arg1[%c0, %c0_0] : memref<8x128xbf16, #tpu.memory_space<vmem>>, vector<8x128xbf16>
    %1 = arith.extf %0 : vector<8x128xbf16> to vector<8x128xf32>
    %c0_1 = arith.constant 0 : index
    %c0_2 = arith.constant 0 : index
    %2 = vector.load %arg3[%c0_1, %c0_2] : memref<1x128xf32, #tpu.memory_space<vmem>>, vector<1x128xf32>
    %3 = vector.broadcast %2 : vector<1x128xf32> to vector<8x128xf32>
    %4 = arith.mulf %1, %3 : vector<8x128xf32>
    %c0_3 = arith.constant 0 : index
    %c0_4 = arith.constant 0 : index
    %5 = vector.load %arg4[%c0_3, %c0_4] : memref<1x128xf32, #tpu.memory_space<vmem>>, vector<1x128xf32>
    %6 = vector.broadcast %5 : vector<1x128xf32> to vector<8x128xf32>
    %7 = arith.addf %4, %6 : vector<8x128xf32>
    %c0_5 = arith.constant 0 : index
    %c0_6 = arith.constant 0 : index
    %8 = vector.load %arg2[%c0_5, %c0_6] : memref<8x128xbf16, #tpu.memory_space<vmem>>, vector<8x128xbf16>
    %9 = arith.extf %8 : vector<8x128xbf16> to vector<8x128xf32>
    %c0_7 = arith.constant 0 : index
    %c0_8 = arith.constant 0 : index
    %10 = vector.load %arg5[%c0_7, %c0_8] : memref<1x128xf32, #tpu.memory_space<vmem>>, vector<1x128xf32>
    %11 = vector.broadcast %10 : vector<1x128xf32> to vector<8x128xf32>
    %12 = arith.mulf %9, %11 : vector<8x128xf32>
    %13 = arith.addf %7, %12 : vector<8x128xf32>
    %c0_9 = arith.constant 0 : index
    %c0_10 = arith.constant 0 : index
    %14 = vector.load %arg6[%c0_9, %c0_10] : memref<1x128xf32, #tpu.memory_space<vmem>>, vector<1x128xf32>
    %15 = vector.broadcast %14 : vector<1x128xf32> to vector<8x128xf32>
    %16 = arith.addf %13, %15 : vector<8x128xf32>
    %cst = arith.constant 0.000000e+00 : f32
    %17 = vector.broadcast %cst : f32 to vector<8x128xf32>
    %18 = arith.maximumf %16, %17 : vector<8x128xf32>
    %19 = arith.truncf %18 : vector<8x128xf32> to vector<8x128xbf16>
    %c0_11 = arith.constant 0 : index
    %c0_12 = arith.constant 0 : index
    %20 = vector.load %arg7[%c0_11, %c0_12] : memref<8x128xbf16, #tpu.memory_space<vmem>>, vector<8x128xbf16>
    tpu.vector_store %arg7[%c0_11, %c0_12], %19 {strides = array<i32>} : memref<8x128xbf16, #tpu.memory_space<vmem>>, vector<8x128xbf16>,
    return
  }
  func.func @transform_0(%arg0: i32) -> (i32, i32) {
    %c0_i32 = arith.constant 0 : i32
    %c0_i32_0 = arith.constant 0 : i32
    return %arg0, %c0_i32 : i32, i32
  }
  func.func @transform_1(%arg0: i32) -> (i32, i32) {
    %c0_i32 = arith.constant 0 : i32
    %c0_i32_0 = arith.constant 0 : i32
    return %arg0, %c0_i32 : i32, i32
  }
  func.func @transform_2(%arg0: i32) -> (i32, i32) {
    %c0_i32 = arith.constant 0 : i32
    %c0_i32_0 = arith.constant 0 : i32
    %c0_i32_1 = arith.constant 0 : i32
    return %c0_i32, %c0_i32_0 : i32, i32
  }
  func.func @transform_3(%arg0: i32) -> (i32, i32) {
    %c0_i32 = arith.constant 0 : i32
    %c0_i32_0 = arith.constant 0 : i32
    %c0_i32_1 = arith.constant 0 : i32
    return %c0_i32, %c0_i32_0 : i32, i32
  }
  func.func @transform_4(%arg0: i32) -> (i32, i32) {
    %c0_i32 = arith.constant 0 : i32
    %c0_i32_0 = arith.constant 0 : i32
    %c0_i32_1 = arith.constant 0 : i32
    return %c0_i32, %c0_i32_0 : i32, i32
  }
  func.func @transform_5(%arg0: i32) -> (i32, i32) {
    %c0_i32 = arith.constant 0 : i32
    %c0_i32_0 = arith.constant 0 : i32
    %c0_i32_1 = arith.constant 0 : i32
    return %c0_i32, %c0_i32_0 : i32, i32
  }
  func.func @transform_6(%arg0: i32) -> (i32, i32) {
    %c0_i32 = arith.constant 0 : i32
    %c0_i32_0 = arith.constant 0 : i32
    return %arg0, %c0_i32 : i32, i32
  }
}

module attributes {stable_mosaic.version = 11 : i64} {
  func.func @_affine_act_kernel(%arg0: i32, %arg1: memref<8x128xbf16, #tpu.memory_space<vmem>>, %arg2: memref<1x128xf32, #tpu.memory_space<vmem>>, %arg3: memref<1x128xf32, #tpu.memory_space<vmem>>, %arg4: memref<8x128xbf16, #tpu.memory_space<vmem>>) attributes {dimension_semantics = [#tpu.dimension_semantics<parallel>], iteration_bounds = array<i64: 1>, scalar_prefetch = 0 : i64, scratch_operands = 0 : i64, tpu.core_type = #tpu.core_type<tc>, window_params = [{transform_indices = @transform_0, window_bounds = array<i64: 8, 128>}, {pipeline_mode = #tpu.pipeline_mode<synchronous>, transform_indices = @transform_1, window_bounds = array<i64: 1, 128>}, {pipeline_mode = #tpu.pipeline_mode<synchronous>, transform_indices = @transform_2, window_bounds = array<i64: 1, 128>}, {transform_indices = @transform_3, window_bounds = array<i64: 8, 128>}]} {
    %c0 = arith.constant 0 : index
    %c0_0 = arith.constant 0 : index
    %0 = vector.load %arg1[%c0, %c0_0] : memref<8x128xbf16, #tpu.memory_space<vmem>>, vector<8x128xbf16>
    %1 = arith.extf %0 : vector<8x128xbf16> to vector<8x128xf32>
    %c0_1 = arith.constant 0 : index
    %c0_2 = arith.constant 0 : index
    %2 = vector.load %arg2[%c0_1, %c0_2] : memref<1x128xf32, #tpu.memory_space<vmem>>, vector<1x128xf32>
    %3 = vector.broadcast %2 : vector<1x128xf32> to vector<8x128xf32>
    %4 = arith.mulf %1, %3 : vector<8x128xf32>
    %c0_3 = arith.constant 0 : index
    %c0_4 = arith.constant 0 : index
    %5 = vector.load %arg3[%c0_3, %c0_4] : memref<1x128xf32, #tpu.memory_space<vmem>>, vector<1x128xf32>
    %6 = vector.broadcast %5 : vector<1x128xf32> to vector<8x128xf32>
    %7 = arith.addf %4, %6 : vector<8x128xf32>
    %cst = arith.constant 0.000000e+00 : f32
    %8 = vector.broadcast %cst : f32 to vector<8x128xf32>
    %9 = arith.maximumf %7, %8 : vector<8x128xf32>
    %10 = arith.truncf %9 : vector<8x128xf32> to vector<8x128xbf16>
    %c0_5 = arith.constant 0 : index
    %c0_6 = arith.constant 0 : index
    %11 = vector.load %arg4[%c0_5, %c0_6] : memref<8x128xbf16, #tpu.memory_space<vmem>>, vector<8x128xbf16>
    tpu.vector_store %arg4[%c0_5, %c0_6], %10 {strides = array<i32>} : memref<8x128xbf16, #tpu.memory_space<vmem>>, vector<8x128xbf16>,
    return
  }
  func.func @transform_0(%arg0: i32) -> (i32, i32) {
    %c0_i32 = arith.constant 0 : i32
    %c0_i32_0 = arith.constant 0 : i32
    return %arg0, %c0_i32 : i32, i32
  }
  func.func @transform_1(%arg0: i32) -> (i32, i32) {
    %c0_i32 = arith.constant 0 : i32
    %c0_i32_0 = arith.constant 0 : i32
    %c0_i32_1 = arith.constant 0 : i32
    return %c0_i32, %c0_i32_0 : i32, i32
  }
  func.func @transform_2(%arg0: i32) -> (i32, i32) {
    %c0_i32 = arith.constant 0 : i32
    %c0_i32_0 = arith.constant 0 : i32
    %c0_i32_1 = arith.constant 0 : i32
    return %c0_i32, %c0_i32_0 : i32, i32
  }
  func.func @transform_3(%arg0: i32) -> (i32, i32) {
    %c0_i32 = arith.constant 0 : i32
    %c0_i32_0 = arith.constant 0 : i32
    return %arg0, %c0_i32 : i32, i32
  }
}

module attributes {stable_mosaic.version = 11 : i64} {
  func.func @_gemm_kernel(%arg0: i32, %arg1: memref<8x128xbf16, #tpu.memory_space<vmem>>, %arg2: memref<128x128xbf16, #tpu.memory_space<vmem>>, %arg3: memref<1x128xf32, #tpu.memory_space<vmem>>, %arg4: memref<1x128xf32, #tpu.memory_space<vmem>>, %arg5: memref<8x128xbf16, #tpu.memory_space<vmem>>, %arg6: memref<8x128xf32, #tpu.memory_space<vmem>>, %arg7: memref<8x128xf32, #tpu.memory_space<vmem>>) attributes {dimension_semantics = [#tpu.dimension_semantics<parallel>], iteration_bounds = array<i64: 1>, scalar_prefetch = 0 : i64, scratch_operands = 0 : i64, tpu.core_type = #tpu.core_type<tc>, window_params = [{transform_indices = @transform_0, window_bounds = array<i64: 8, 128>}, {pipeline_mode = #tpu.pipeline_mode<synchronous>, transform_indices = @transform_1, window_bounds = array<i64: 128, 128>}, {pipeline_mode = #tpu.pipeline_mode<synchronous>, transform_indices = @transform_2, window_bounds = array<i64: 1, 128>}, {pipeline_mode = #tpu.pipeline_mode<synchronous>, transform_indices = @transform_3, window_bounds = array<i64: 1, 128>}, {transform_indices = @transform_4, window_bounds = array<i64: 8, 128>}, {transform_indices = @transform_5, window_bounds = array<i64: 8, 128>}, {transform_indices = @transform_6, window_bounds = array<i64: 8, 128>}]} {
    %c0 = arith.constant 0 : index
    %c0_0 = arith.constant 0 : index
    %0 = vector.load %arg1[%c0, %c0_0] : memref<8x128xbf16, #tpu.memory_space<vmem>>, vector<8x128xbf16>
    %1 = arith.extf %0 : vector<8x128xbf16> to vector<8x128xf32>
    %c0_1 = arith.constant 0 : index
    %c0_2 = arith.constant 0 : index
    %2 = vector.load %arg3[%c0_1, %c0_2] : memref<1x128xf32, #tpu.memory_space<vmem>>, vector<1x128xf32>
    %3 = vector.broadcast %2 : vector<1x128xf32> to vector<8x128xf32>
    %4 = arith.mulf %1, %3 : vector<8x128xf32>
    %c0_3 = arith.constant 0 : index
    %c0_4 = arith.constant 0 : index
    %5 = vector.load %arg4[%c0_3, %c0_4] : memref<1x128xf32, #tpu.memory_space<vmem>>, vector<1x128xf32>
    %6 = vector.broadcast %5 : vector<1x128xf32> to vector<8x128xf32>
    %7 = arith.addf %4, %6 : vector<8x128xf32>
    %cst = arith.constant 0.000000e+00 : f32
    %8 = vector.broadcast %cst : f32 to vector<8x128xf32>
    %9 = arith.maximumf %7, %8 : vector<8x128xf32>
    %c8_i32 = arith.constant 8 : i32
    %10 = arith.muli %arg0, %c8_i32 : i32
    %11 = tpu.iota {dimensions = array<i32: 0>} : vector<8x1xi32>
    %12 = vector.broadcast %10 : i32 to vector<8x1xi32>
    %13 = arith.addi %12, %11 : vector<8x1xi32>
    %c2_i32 = arith.constant 2 : i32
    %14 = vector.broadcast %c2_i32 : i32 to vector<8x1xi32>
    %15 = arith.cmpi slt, %13, %14 : vector<8x1xi32>
    %cst_5 = arith.constant 0.000000e+00 : f32
    %16 = vector.shape_cast %15 : vector<8x1xi1> to vector<8x1xi1>
    %17 = vector.broadcast %16 : vector<8x1xi1> to vector<8x128xi1>
    %18 = vector.broadcast %cst_5 : f32 to vector<8x128xf32>
    %19 = arith.select %17, %9, %18 : vector<8x128xi1>, vector<8x128xf32>
    %20 = arith.truncf %19 : vector<8x128xf32> to vector<8x128xbf16>
    %c0_6 = arith.constant 0 : index
    %c0_7 = arith.constant 0 : index
    %21 = vector.load %arg2[%c0_6, %c0_7] : memref<128x128xbf16, #tpu.memory_space<vmem>>, vector<128x128xbf16>
    %cst_8 = arith.constant dense<0.000000e+00> : vector<8x128xf32>
    %22 = tpu.matmul %20, %21, %cst_8 {dimension_numbers = #tpu.dot_dimension_numbers<[1], [0], [0], [1], [0, 0, 1, 1], [], []>} : vector<8x128xbf16>, vector<128x128xbf16>, vector<8x128xf32> -> vector<8x128xf32>
    %23 = arith.truncf %22 : vector<8x128xf32> to vector<8x128xbf16>
    %c0_9 = arith.constant 0 : index
    %c0_10 = arith.constant 0 : index
    %24 = vector.load %arg5[%c0_9, %c0_10] : memref<8x128xbf16, #tpu.memory_space<vmem>>, vector<8x128xbf16>
    tpu.vector_store %arg5[%c0_9, %c0_10], %23 {strides = array<i32>} : memref<8x128xbf16, #tpu.memory_space<vmem>>, vector<8x128xbf16>,
    %cst_11 = arith.constant dense<0.000000e+00> : vector<128xf32>
    %25 = vector.multi_reduction <add>, %22, %cst_11 [0] : vector<8x128xf32> to vector<128xf32>
    %26 = vector.shape_cast %25 : vector<128xf32> to vector<1x128xf32>
    %27 = arith.mulf %22, %22 : vector<8x128xf32>
    %cst_12 = arith.constant dense<0.000000e+00> : vector<128xf32>
    %28 = vector.multi_reduction <add>, %27, %cst_12 [0] : vector<8x128xf32> to vector<128xf32>
    %29 = vector.shape_cast %28 : vector<128xf32> to vector<1x128xf32>
    %30 = vector.shape_cast %26 : vector<1x128xf32> to vector<1x128xf32>
    %31 = vector.broadcast %30 : vector<1x128xf32> to vector<8x128xf32>
    %c0_13 = arith.constant 0 : index
    %c0_14 = arith.constant 0 : index
    %32 = vector.load %arg6[%c0_13, %c0_14] : memref<8x128xf32, #tpu.memory_space<vmem>>, vector<8x128xf32>
    tpu.vector_store %arg6[%c0_13, %c0_14], %31 {strides = array<i32>} : memref<8x128xf32, #tpu.memory_space<vmem>>, vector<8x128xf32>,
    %33 = vector.shape_cast %29 : vector<1x128xf32> to vector<1x128xf32>
    %34 = vector.broadcast %33 : vector<1x128xf32> to vector<8x128xf32>
    %c0_15 = arith.constant 0 : index
    %c0_16 = arith.constant 0 : index
    %35 = vector.load %arg7[%c0_15, %c0_16] : memref<8x128xf32, #tpu.memory_space<vmem>>, vector<8x128xf32>
    tpu.vector_store %arg7[%c0_15, %c0_16], %34 {strides = array<i32>} : memref<8x128xf32, #tpu.memory_space<vmem>>, vector<8x128xf32>,
    return
  }
  func.func @transform_0(%arg0: i32) -> (i32, i32) {
    %c0_i32 = arith.constant 0 : i32
    %c0_i32_0 = arith.constant 0 : i32
    return %arg0, %c0_i32 : i32, i32
  }
  func.func @transform_1(%arg0: i32) -> (i32, i32) {
    %c0_i32 = arith.constant 0 : i32
    %c0_i32_0 = arith.constant 0 : i32
    %c0_i32_1 = arith.constant 0 : i32
    return %c0_i32, %c0_i32_0 : i32, i32
  }
  func.func @transform_2(%arg0: i32) -> (i32, i32) {
    %c0_i32 = arith.constant 0 : i32
    %c0_i32_0 = arith.constant 0 : i32
    %c0_i32_1 = arith.constant 0 : i32
    return %c0_i32, %c0_i32_0 : i32, i32
  }
  func.func @transform_3(%arg0: i32) -> (i32, i32) {
    %c0_i32 = arith.constant 0 : i32
    %c0_i32_0 = arith.constant 0 : i32
    %c0_i32_1 = arith.constant 0 : i32
    return %c0_i32, %c0_i32_0 : i32, i32
  }
  func.func @transform_4(%arg0: i32) -> (i32, i32) {
    %c0_i32 = arith.constant 0 : i32
    %c0_i32_0 = arith.constant 0 : i32
    return %arg0, %c0_i32 : i32, i32
  }
  func.func @transform_5(%arg0: i32) -> (i32, i32) {
    %c0_i32 = arith.constant 0 : i32
    %c0_i32_0 = arith.constant 0 : i32
    return %arg0, %c0_i32 : i32, i32
  }
  func.func @transform_6(%arg0: i32) -> (i32, i32) {
    %c0_i32 = arith.constant 0 : i32
    %c0_i32_0 = arith.constant 0 : i32
    return %arg0, %c0_i32 : i32, i32
  }
}

module attributes {stable_mosaic.version = 11 : i64} {
  func.func @_gemm_kernel(%arg0: i32, %arg1: memref<8x128xbf16, #tpu.memory_space<vmem>>, %arg2: memref<128x256xbf16, #tpu.memory_space<vmem>>, %arg3: memref<8x256xbf16, #tpu.memory_space<vmem>>, %arg4: memref<8x256xf32, #tpu.memory_space<vmem>>, %arg5: memref<8x256xf32, #tpu.memory_space<vmem>>) attributes {dimension_semantics = [#tpu.dimension_semantics<parallel>], iteration_bounds = array<i64: 1>, scalar_prefetch = 0 : i64, scratch_operands = 0 : i64, tpu.core_type = #tpu.core_type<tc>, window_params = [{transform_indices = @transform_0, window_bounds = array<i64: 8, 128>}, {pipeline_mode = #tpu.pipeline_mode<synchronous>, transform_indices = @transform_1, window_bounds = array<i64: 128, 256>}, {transform_indices = @transform_2, window_bounds = array<i64: 8, 256>}, {transform_indices = @transform_3, window_bounds = array<i64: 8, 256>}, {transform_indices = @transform_4, window_bounds = array<i64: 8, 256>}]} {
    %c0 = arith.constant 0 : index
    %c0_0 = arith.constant 0 : index
    %0 = vector.load %arg1[%c0, %c0_0] : memref<8x128xbf16, #tpu.memory_space<vmem>>, vector<8x128xbf16>
    %c0_1 = arith.constant 0 : index
    %c0_2 = arith.constant 0 : index
    %1 = vector.load %arg2[%c0_1, %c0_2] : memref<128x256xbf16, #tpu.memory_space<vmem>>, vector<128x256xbf16>
    %cst = arith.constant dense<0.000000e+00> : vector<8x256xf32>
    %2 = tpu.matmul %0, %1, %cst {dimension_numbers = #tpu.dot_dimension_numbers<[1], [0], [0], [1], [0, 0, 1, 1], [], []>} : vector<8x128xbf16>, vector<128x256xbf16>, vector<8x256xf32> -> vector<8x256xf32>
    %3 = arith.truncf %2 : vector<8x256xf32> to vector<8x256xbf16>
    %c0_3 = arith.constant 0 : index
    %c0_4 = arith.constant 0 : index
    %4 = vector.load %arg3[%c0_3, %c0_4] : memref<8x256xbf16, #tpu.memory_space<vmem>>, vector<8x256xbf16>
    tpu.vector_store %arg3[%c0_3, %c0_4], %3 {strides = array<i32>} : memref<8x256xbf16, #tpu.memory_space<vmem>>, vector<8x256xbf16>,
    %cst_5 = arith.constant dense<0.000000e+00> : vector<256xf32>
    %5 = vector.multi_reduction <add>, %2, %cst_5 [0] : vector<8x256xf32> to vector<256xf32>
    %6 = vector.shape_cast %5 : vector<256xf32> to vector<1x256xf32>
    %7 = arith.mulf %2, %2 : vector<8x256xf32>
    %cst_6 = arith.constant dense<0.000000e+00> : vector<256xf32>
    %8 = vector.multi_reduction <add>, %7, %cst_6 [0] : vector<8x256xf32> to vector<256xf32>
    %9 = vector.shape_cast %8 : vector<256xf32> to vector<1x256xf32>
    %10 = vector.shape_cast %6 : vector<1x256xf32> to vector<1x256xf32>
    %11 = vector.broadcast %10 : vector<1x256xf32> to vector<8x256xf32>
    %c0_7 = arith.constant 0 : index
    %c0_8 = arith.constant 0 : index
    %12 = vector.load %arg4[%c0_7, %c0_8] : memref<8x256xf32, #tpu.memory_space<vmem>>, vector<8x256xf32>
    tpu.vector_store %arg4[%c0_7, %c0_8], %11 {strides = array<i32>} : memref<8x256xf32, #tpu.memory_space<vmem>>, vector<8x256xf32>,
    %13 = vector.shape_cast %9 : vector<1x256xf32> to vector<1x256xf32>
    %14 = vector.broadcast %13 : vector<1x256xf32> to vector<8x256xf32>
    %c0_9 = arith.constant 0 : index
    %c0_10 = arith.constant 0 : index
    %15 = vector.load %arg5[%c0_9, %c0_10] : memref<8x256xf32, #tpu.memory_space<vmem>>, vector<8x256xf32>
    tpu.vector_store %arg5[%c0_9, %c0_10], %14 {strides = array<i32>} : memref<8x256xf32, #tpu.memory_space<vmem>>, vector<8x256xf32>,
    return
  }
  func.func @transform_0(%arg0: i32) -> (i32, i32) {
    %c0_i32 = arith.constant 0 : i32
    %c0_i32_0 = arith.constant 0 : i32
    return %arg0, %c0_i32 : i32, i32
  }
  func.func @transform_1(%arg0: i32) -> (i32, i32) {
    %c0_i32 = arith.constant 0 : i32
    %c0_i32_0 = arith.constant 0 : i32
    %c0_i32_1 = arith.constant 0 : i32
    return %c0_i32, %c0_i32_0 : i32, i32
  }
  func.func @transform_2(%arg0: i32) -> (i32, i32) {
    %c0_i32 = arith.constant 0 : i32
    %c0_i32_0 = arith.constant 0 : i32
    return %arg0, %c0_i32 : i32, i32
  }
  func.func @transform_3(%arg0: i32) -> (i32, i32) {
    %c0_i32 = arith.constant 0 : i32
    %c0_i32_0 = arith.constant 0 : i32
    return %arg0, %c0_i32 : i32, i32
  }
  func.func @transform_4(%arg0: i32) -> (i32, i32) {
    %c0_i32 = arith.constant 0 : i32
    %c0_i32_0 = arith.constant 0 : i32
    return %arg0, %c0_i32 : i32, i32
  }
}

module attributes {stable_mosaic.version = 11 : i64} {
  func.func @_affine2_add_relu_kernel(%arg0: i32, %arg1: memref<8x256xbf16, #tpu.memory_space<vmem>>, %arg2: memref<8x256xbf16, #tpu.memory_space<vmem>>, %arg3: memref<1x256xf32, #tpu.memory_space<vmem>>, %arg4: memref<1x256xf32, #tpu.memory_space<vmem>>, %arg5: memref<1x256xf32, #tpu.memory_space<vmem>>, %arg6: memref<1x256xf32, #tpu.memory_space<vmem>>, %arg7: memref<8x256xbf16, #tpu.memory_space<vmem>>) attributes {dimension_semantics = [#tpu.dimension_semantics<parallel>], iteration_bounds = array<i64: 1>, scalar_prefetch = 0 : i64, scratch_operands = 0 : i64, tpu.core_type = #tpu.core_type<tc>, window_params = [{transform_indices = @transform_0, window_bounds = array<i64: 8, 256>}, {transform_indices = @transform_1, window_bounds = array<i64: 8, 256>}, {pipeline_mode = #tpu.pipeline_mode<synchronous>, transform_indices = @transform_2, window_bounds = array<i64: 1, 256>}, {pipeline_mode = #tpu.pipeline_mode<synchronous>, transform_indices = @transform_3, window_bounds = array<i64: 1, 256>}, {pipeline_mode = #tpu.pipeline_mode<synchronous>, transform_indices = @transform_4, window_bounds = array<i64: 1, 256>}, {pipeline_mode = #tpu.pipeline_mode<synchronous>, transform_indices = @transform_5, window_bounds = array<i64: 1, 256>}, {transform_indices = @transform_6, window_bounds = array<i64: 8, 256>}]} {
    %c0 = arith.constant 0 : index
    %c0_0 = arith.constant 0 : index
    %0 = vector.load %arg1[%c0, %c0_0] : memref<8x256xbf16, #tpu.memory_space<vmem>>, vector<8x256xbf16>
    %1 = arith.extf %0 : vector<8x256xbf16> to vector<8x256xf32>
    %c0_1 = arith.constant 0 : index
    %c0_2 = arith.constant 0 : index
    %2 = vector.load %arg3[%c0_1, %c0_2] : memref<1x256xf32, #tpu.memory_space<vmem>>, vector<1x256xf32>
    %3 = vector.broadcast %2 : vector<1x256xf32> to vector<8x256xf32>
    %4 = arith.mulf %1, %3 : vector<8x256xf32>
    %c0_3 = arith.constant 0 : index
    %c0_4 = arith.constant 0 : index
    %5 = vector.load %arg4[%c0_3, %c0_4] : memref<1x256xf32, #tpu.memory_space<vmem>>, vector<1x256xf32>
    %6 = vector.broadcast %5 : vector<1x256xf32> to vector<8x256xf32>
    %7 = arith.addf %4, %6 : vector<8x256xf32>
    %c0_5 = arith.constant 0 : index
    %c0_6 = arith.constant 0 : index
    %8 = vector.load %arg2[%c0_5, %c0_6] : memref<8x256xbf16, #tpu.memory_space<vmem>>, vector<8x256xbf16>
    %9 = arith.extf %8 : vector<8x256xbf16> to vector<8x256xf32>
    %c0_7 = arith.constant 0 : index
    %c0_8 = arith.constant 0 : index
    %10 = vector.load %arg5[%c0_7, %c0_8] : memref<1x256xf32, #tpu.memory_space<vmem>>, vector<1x256xf32>
    %11 = vector.broadcast %10 : vector<1x256xf32> to vector<8x256xf32>
    %12 = arith.mulf %9, %11 : vector<8x256xf32>
    %13 = arith.addf %7, %12 : vector<8x256xf32>
    %c0_9 = arith.constant 0 : index
    %c0_10 = arith.constant 0 : index
    %14 = vector.load %arg6[%c0_9, %c0_10] : memref<1x256xf32, #tpu.memory_space<vmem>>, vector<1x256xf32>
    %15 = vector.broadcast %14 : vector<1x256xf32> to vector<8x256xf32>
    %16 = arith.addf %13, %15 : vector<8x256xf32>
    %cst = arith.constant 0.000000e+00 : f32
    %17 = vector.broadcast %cst : f32 to vector<8x256xf32>
    %18 = arith.maximumf %16, %17 : vector<8x256xf32>
    %19 = arith.truncf %18 : vector<8x256xf32> to vector<8x256xbf16>
    %c0_11 = arith.constant 0 : index
    %c0_12 = arith.constant 0 : index
    %20 = vector.load %arg7[%c0_11, %c0_12] : memref<8x256xbf16, #tpu.memory_space<vmem>>, vector<8x256xbf16>
    tpu.vector_store %arg7[%c0_11, %c0_12], %19 {strides = array<i32>} : memref<8x256xbf16, #tpu.memory_space<vmem>>, vector<8x256xbf16>,
    return
  }
  func.func @transform_0(%arg0: i32) -> (i32, i32) {
    %c0_i32 = arith.constant 0 : i32
    %c0_i32_0 = arith.constant 0 : i32
    return %arg0, %c0_i32 : i32, i32
  }
  func.func @transform_1(%arg0: i32) -> (i32, i32) {
    %c0_i32 = arith.constant 0 : i32
    %c0_i32_0 = arith.constant 0 : i32
    return %arg0, %c0_i32 : i32, i32
  }
  func.func @transform_2(%arg0: i32) -> (i32, i32) {
    %c0_i32 = arith.constant 0 : i32
    %c0_i32_0 = arith.constant 0 : i32
    %c0_i32_1 = arith.constant 0 : i32
    return %c0_i32, %c0_i32_0 : i32, i32
  }
  func.func @transform_3(%arg0: i32) -> (i32, i32) {
    %c0_i32 = arith.constant 0 : i32
    %c0_i32_0 = arith.constant 0 : i32
    %c0_i32_1 = arith.constant 0 : i32
    return %c0_i32, %c0_i32_0 : i32, i32
  }
  func.func @transform_4(%arg0: i32) -> (i32, i32) {
    %c0_i32 = arith.constant 0 : i32
    %c0_i32_0 = arith.constant 0 : i32
    %c0_i32_1 = arith.constant 0 : i32
    return %c0_i32, %c0_i32_0 : i32, i32
  }
  func.func @transform_5(%arg0: i32) -> (i32, i32) {
    %c0_i32 = arith.constant 0 : i32
    %c0_i32_0 = arith.constant 0 : i32
    %c0_i32_1 = arith.constant 0 : i32
    return %c0_i32, %c0_i32_0 : i32, i32
  }
  func.func @transform_6(%arg0: i32) -> (i32, i32) {
    %c0_i32 = arith.constant 0 : i32
    %c0_i32_0 = arith.constant 0 : i32
    return %arg0, %c0_i32 : i32, i32
  }
}

module attributes {stable_mosaic.version = 11 : i64} {
  func.func @_gemm_kernel(%arg0: i32, %arg1: memref<8x128xbf16, #tpu.memory_space<vmem>>, %arg2: memref<128x256xbf16, #tpu.memory_space<vmem>>, %arg3: memref<1x128xf32, #tpu.memory_space<vmem>>, %arg4: memref<1x128xf32, #tpu.memory_space<vmem>>, %arg5: memref<8x256xbf16, #tpu.memory_space<vmem>>, %arg6: memref<8x256xf32, #tpu.memory_space<vmem>>, %arg7: memref<8x256xf32, #tpu.memory_space<vmem>>) attributes {dimension_semantics = [#tpu.dimension_semantics<parallel>], iteration_bounds = array<i64: 1>, scalar_prefetch = 0 : i64, scratch_operands = 0 : i64, tpu.core_type = #tpu.core_type<tc>, window_params = [{transform_indices = @transform_0, window_bounds = array<i64: 8, 128>}, {pipeline_mode = #tpu.pipeline_mode<synchronous>, transform_indices = @transform_1, window_bounds = array<i64: 128, 256>}, {pipeline_mode = #tpu.pipeline_mode<synchronous>, transform_indices = @transform_2, window_bounds = array<i64: 1, 128>}, {pipeline_mode = #tpu.pipeline_mode<synchronous>, transform_indices = @transform_3, window_bounds = array<i64: 1, 128>}, {transform_indices = @transform_4, window_bounds = array<i64: 8, 256>}, {transform_indices = @transform_5, window_bounds = array<i64: 8, 256>}, {transform_indices = @transform_6, window_bounds = array<i64: 8, 256>}]} {
    %c0 = arith.constant 0 : index
    %c0_0 = arith.constant 0 : index
    %0 = vector.load %arg1[%c0, %c0_0] : memref<8x128xbf16, #tpu.memory_space<vmem>>, vector<8x128xbf16>
    %1 = arith.extf %0 : vector<8x128xbf16> to vector<8x128xf32>
    %c0_1 = arith.constant 0 : index
    %c0_2 = arith.constant 0 : index
    %2 = vector.load %arg3[%c0_1, %c0_2] : memref<1x128xf32, #tpu.memory_space<vmem>>, vector<1x128xf32>
    %3 = vector.broadcast %2 : vector<1x128xf32> to vector<8x128xf32>
    %4 = arith.mulf %1, %3 : vector<8x128xf32>
    %c0_3 = arith.constant 0 : index
    %c0_4 = arith.constant 0 : index
    %5 = vector.load %arg4[%c0_3, %c0_4] : memref<1x128xf32, #tpu.memory_space<vmem>>, vector<1x128xf32>
    %6 = vector.broadcast %5 : vector<1x128xf32> to vector<8x128xf32>
    %7 = arith.addf %4, %6 : vector<8x128xf32>
    %cst = arith.constant 0.000000e+00 : f32
    %8 = vector.broadcast %cst : f32 to vector<8x128xf32>
    %9 = arith.maximumf %7, %8 : vector<8x128xf32>
    %c8_i32 = arith.constant 8 : i32
    %10 = arith.muli %arg0, %c8_i32 : i32
    %11 = tpu.iota {dimensions = array<i32: 0>} : vector<8x1xi32>
    %12 = vector.broadcast %10 : i32 to vector<8x1xi32>
    %13 = arith.addi %12, %11 : vector<8x1xi32>
    %c2_i32 = arith.constant 2 : i32
    %14 = vector.broadcast %c2_i32 : i32 to vector<8x1xi32>
    %15 = arith.cmpi slt, %13, %14 : vector<8x1xi32>
    %cst_5 = arith.constant 0.000000e+00 : f32
    %16 = vector.shape_cast %15 : vector<8x1xi1> to vector<8x1xi1>
    %17 = vector.broadcast %16 : vector<8x1xi1> to vector<8x128xi1>
    %18 = vector.broadcast %cst_5 : f32 to vector<8x128xf32>
    %19 = arith.select %17, %9, %18 : vector<8x128xi1>, vector<8x128xf32>
    %20 = arith.truncf %19 : vector<8x128xf32> to vector<8x128xbf16>
    %c0_6 = arith.constant 0 : index
    %c0_7 = arith.constant 0 : index
    %21 = vector.load %arg2[%c0_6, %c0_7] : memref<128x256xbf16, #tpu.memory_space<vmem>>, vector<128x256xbf16>
    %cst_8 = arith.constant dense<0.000000e+00> : vector<8x256xf32>
    %22 = tpu.matmul %20, %21, %cst_8 {dimension_numbers = #tpu.dot_dimension_numbers<[1], [0], [0], [1], [0, 0, 1, 1], [], []>} : vector<8x128xbf16>, vector<128x256xbf16>, vector<8x256xf32> -> vector<8x256xf32>
    %23 = arith.truncf %22 : vector<8x256xf32> to vector<8x256xbf16>
    %c0_9 = arith.constant 0 : index
    %c0_10 = arith.constant 0 : index
    %24 = vector.load %arg5[%c0_9, %c0_10] : memref<8x256xbf16, #tpu.memory_space<vmem>>, vector<8x256xbf16>
    tpu.vector_store %arg5[%c0_9, %c0_10], %23 {strides = array<i32>} : memref<8x256xbf16, #tpu.memory_space<vmem>>, vector<8x256xbf16>,
    %cst_11 = arith.constant dense<0.000000e+00> : vector<256xf32>
    %25 = vector.multi_reduction <add>, %22, %cst_11 [0] : vector<8x256xf32> to vector<256xf32>
    %26 = vector.shape_cast %25 : vector<256xf32> to vector<1x256xf32>
    %27 = arith.mulf %22, %22 : vector<8x256xf32>
    %cst_12 = arith.constant dense<0.000000e+00> : vector<256xf32>
    %28 = vector.multi_reduction <add>, %27, %cst_12 [0] : vector<8x256xf32> to vector<256xf32>
    %29 = vector.shape_cast %28 : vector<256xf32> to vector<1x256xf32>
    %30 = vector.shape_cast %26 : vector<1x256xf32> to vector<1x256xf32>
    %31 = vector.broadcast %30 : vector<1x256xf32> to vector<8x256xf32>
    %c0_13 = arith.constant 0 : index
    %c0_14 = arith.constant 0 : index
    %32 = vector.load %arg6[%c0_13, %c0_14] : memref<8x256xf32, #tpu.memory_space<vmem>>, vector<8x256xf32>
    tpu.vector_store %arg6[%c0_13, %c0_14], %31 {strides = array<i32>} : memref<8x256xf32, #tpu.memory_space<vmem>>, vector<8x256xf32>,
    %33 = vector.shape_cast %29 : vector<1x256xf32> to vector<1x256xf32>
    %34 = vector.broadcast %33 : vector<1x256xf32> to vector<8x256xf32>
    %c0_15 = arith.constant 0 : index
    %c0_16 = arith.constant 0 : index
    %35 = vector.load %arg7[%c0_15, %c0_16] : memref<8x256xf32, #tpu.memory_space<vmem>>, vector<8x256xf32>
    tpu.vector_store %arg7[%c0_15, %c0_16], %34 {strides = array<i32>} : memref<8x256xf32, #tpu.memory_space<vmem>>, vector<8x256xf32>,
    return
  }
  func.func @transform_0(%arg0: i32) -> (i32, i32) {
    %c0_i32 = arith.constant 0 : i32
    %c0_i32_0 = arith.constant 0 : i32
    return %arg0, %c0_i32 : i32, i32
  }
  func.func @transform_1(%arg0: i32) -> (i32, i32) {
    %c0_i32 = arith.constant 0 : i32
    %c0_i32_0 = arith.constant 0 : i32
    %c0_i32_1 = arith.constant 0 : i32
    return %c0_i32, %c0_i32_0 : i32, i32
  }
  func.func @transform_2(%arg0: i32) -> (i32, i32) {
    %c0_i32 = arith.constant 0 : i32
    %c0_i32_0 = arith.constant 0 : i32
    %c0_i32_1 = arith.constant 0 : i32
    return %c0_i32, %c0_i32_0 : i32, i32
  }
  func.func @transform_3(%arg0: i32) -> (i32, i32) {
    %c0_i32 = arith.constant 0 : i32
    %c0_i32_0 = arith.constant 0 : i32
    %c0_i32_1 = arith.constant 0 : i32
    return %c0_i32, %c0_i32_0 : i32, i32
  }
  func.func @transform_4(%arg0: i32) -> (i32, i32) {
    %c0_i32 = arith.constant 0 : i32
    %c0_i32_0 = arith.constant 0 : i32
    return %arg0, %c0_i32 : i32, i32
  }
  func.func @transform_5(%arg0: i32) -> (i32, i32) {
    %c0_i32 = arith.constant 0 : i32
    %c0_i32_0 = arith.constant 0 : i32
    return %arg0, %c0_i32 : i32, i32
  }
  func.func @transform_6(%arg0: i32) -> (i32, i32) {
    %c0_i32 = arith.constant 0 : i32
    %c0_i32_0 = arith.constant 0 : i32
    return %arg0, %c0_i32 : i32, i32
  }
}

module attributes {stable_mosaic.version = 11 : i64} {
  func.func @_gemm_kernel(%arg0: i32, %arg1: memref<8x256xbf16, #tpu.memory_space<vmem>>, %arg2: memref<256x128xbf16, #tpu.memory_space<vmem>>, %arg3: memref<8x128xbf16, #tpu.memory_space<vmem>>, %arg4: memref<8x128xf32, #tpu.memory_space<vmem>>, %arg5: memref<8x128xf32, #tpu.memory_space<vmem>>) attributes {dimension_semantics = [#tpu.dimension_semantics<parallel>], iteration_bounds = array<i64: 1>, scalar_prefetch = 0 : i64, scratch_operands = 0 : i64, tpu.core_type = #tpu.core_type<tc>, window_params = [{transform_indices = @transform_0, window_bounds = array<i64: 8, 256>}, {pipeline_mode = #tpu.pipeline_mode<synchronous>, transform_indices = @transform_1, window_bounds = array<i64: 256, 128>}, {transform_indices = @transform_2, window_bounds = array<i64: 8, 128>}, {transform_indices = @transform_3, window_bounds = array<i64: 8, 128>}, {transform_indices = @transform_4, window_bounds = array<i64: 8, 128>}]} {
    %c0 = arith.constant 0 : index
    %c0_0 = arith.constant 0 : index
    %0 = vector.load %arg1[%c0, %c0_0] : memref<8x256xbf16, #tpu.memory_space<vmem>>, vector<8x256xbf16>
    %c0_1 = arith.constant 0 : index
    %c0_2 = arith.constant 0 : index
    %1 = vector.load %arg2[%c0_1, %c0_2] : memref<256x128xbf16, #tpu.memory_space<vmem>>, vector<256x128xbf16>
    %cst = arith.constant dense<0.000000e+00> : vector<8x128xf32>
    %2 = tpu.matmul %0, %1, %cst {dimension_numbers = #tpu.dot_dimension_numbers<[1], [0], [0], [1], [0, 0, 1, 1], [], []>} : vector<8x256xbf16>, vector<256x128xbf16>, vector<8x128xf32> -> vector<8x128xf32>
    %3 = arith.truncf %2 : vector<8x128xf32> to vector<8x128xbf16>
    %c0_3 = arith.constant 0 : index
    %c0_4 = arith.constant 0 : index
    %4 = vector.load %arg3[%c0_3, %c0_4] : memref<8x128xbf16, #tpu.memory_space<vmem>>, vector<8x128xbf16>
    tpu.vector_store %arg3[%c0_3, %c0_4], %3 {strides = array<i32>} : memref<8x128xbf16, #tpu.memory_space<vmem>>, vector<8x128xbf16>,
    %cst_5 = arith.constant dense<0.000000e+00> : vector<128xf32>
    %5 = vector.multi_reduction <add>, %2, %cst_5 [0] : vector<8x128xf32> to vector<128xf32>
    %6 = vector.shape_cast %5 : vector<128xf32> to vector<1x128xf32>
    %7 = arith.mulf %2, %2 : vector<8x128xf32>
    %cst_6 = arith.constant dense<0.000000e+00> : vector<128xf32>
    %8 = vector.multi_reduction <add>, %7, %cst_6 [0] : vector<8x128xf32> to vector<128xf32>
    %9 = vector.shape_cast %8 : vector<128xf32> to vector<1x128xf32>
    %10 = vector.shape_cast %6 : vector<1x128xf32> to vector<1x128xf32>
    %11 = vector.broadcast %10 : vector<1x128xf32> to vector<8x128xf32>
    %c0_7 = arith.constant 0 : index
    %c0_8 = arith.constant 0 : index
    %12 = vector.load %arg4[%c0_7, %c0_8] : memref<8x128xf32, #tpu.memory_space<vmem>>, vector<8x128xf32>
    tpu.vector_store %arg4[%c0_7, %c0_8], %11 {strides = array<i32>} : memref<8x128xf32, #tpu.memory_space<vmem>>, vector<8x128xf32>,
    %13 = vector.shape_cast %9 : vector<1x128xf32> to vector<1x128xf32>
    %14 = vector.broadcast %13 : vector<1x128xf32> to vector<8x128xf32>
    %c0_9 = arith.constant 0 : index
    %c0_10 = arith.constant 0 : index
    %15 = vector.load %arg5[%c0_9, %c0_10] : memref<8x128xf32, #tpu.memory_space<vmem>>, vector<8x128xf32>
    tpu.vector_store %arg5[%c0_9, %c0_10], %14 {strides = array<i32>} : memref<8x128xf32, #tpu.memory_space<vmem>>, vector<8x128xf32>,
    return
  }
  func.func @transform_0(%arg0: i32) -> (i32, i32) {
    %c0_i32 = arith.constant 0 : i32
    %c0_i32_0 = arith.constant 0 : i32
    return %arg0, %c0_i32 : i32, i32
  }
  func.func @transform_1(%arg0: i32) -> (i32, i32) {
    %c0_i32 = arith.constant 0 : i32
    %c0_i32_0 = arith.constant 0 : i32
    %c0_i32_1 = arith.constant 0 : i32
    return %c0_i32, %c0_i32_0 : i32, i32
  }
  func.func @transform_2(%arg0: i32) -> (i32, i32) {
    %c0_i32 = arith.constant 0 : i32
    %c0_i32_0 = arith.constant 0 : i32
    return %arg0, %c0_i32 : i32, i32
  }
  func.func @transform_3(%arg0: i32) -> (i32, i32) {
    %c0_i32 = arith.constant 0 : i32
    %c0_i32_0 = arith.constant 0 : i32
    return %arg0, %c0_i32 : i32, i32
  }
  func.func @transform_4(%arg0: i32) -> (i32, i32) {
    %c0_i32 = arith.constant 0 : i32
    %c0_i32_0 = arith.constant 0 : i32
    return %arg0, %c0_i32 : i32, i32
  }
}

module attributes {stable_mosaic.version = 11 : i64} {
  func.func @_gemm_kernel(%arg0: i32, %arg1: memref<8x256xbf16, #tpu.memory_space<vmem>>, %arg2: memref<8x256xbf16, #tpu.memory_space<vmem>>, %arg3: memref<256x128xbf16, #tpu.memory_space<vmem>>, %arg4: memref<256x128xbf16, #tpu.memory_space<vmem>>, %arg5: memref<8x128xbf16, #tpu.memory_space<vmem>>, %arg6: memref<8x128xf32, #tpu.memory_space<vmem>>, %arg7: memref<8x128xf32, #tpu.memory_space<vmem>>) attributes {dimension_semantics = [#tpu.dimension_semantics<parallel>], iteration_bounds = array<i64: 1>, scalar_prefetch = 0 : i64, scratch_operands = 0 : i64, tpu.core_type = #tpu.core_type<tc>, window_params = [{transform_indices = @transform_0, window_bounds = array<i64: 8, 256>}, {transform_indices = @transform_1, window_bounds = array<i64: 8, 256>}, {pipeline_mode = #tpu.pipeline_mode<synchronous>, transform_indices = @transform_2, window_bounds = array<i64: 256, 128>}, {pipeline_mode = #tpu.pipeline_mode<synchronous>, transform_indices = @transform_3, window_bounds = array<i64: 256, 128>}, {transform_indices = @transform_4, window_bounds = array<i64: 8, 128>}, {transform_indices = @transform_5, window_bounds = array<i64: 8, 128>}, {transform_indices = @transform_6, window_bounds = array<i64: 8, 128>}]} {
    %c0 = arith.constant 0 : index
    %c0_0 = arith.constant 0 : index
    %0 = vector.load %arg1[%c0, %c0_0] : memref<8x256xbf16, #tpu.memory_space<vmem>>, vector<8x256xbf16>
    %c0_1 = arith.constant 0 : index
    %c0_2 = arith.constant 0 : index
    %1 = vector.load %arg3[%c0_1, %c0_2] : memref<256x128xbf16, #tpu.memory_space<vmem>>, vector<256x128xbf16>
    %cst = arith.constant dense<0.000000e+00> : vector<8x128xf32>
    %2 = tpu.matmul %0, %1, %cst {dimension_numbers = #tpu.dot_dimension_numbers<[1], [0], [0], [1], [0, 0, 1, 1], [], []>} : vector<8x256xbf16>, vector<256x128xbf16>, vector<8x128xf32> -> vector<8x128xf32>
    %c0_3 = arith.constant 0 : index
    %c0_4 = arith.constant 0 : index
    %3 = vector.load %arg2[%c0_3, %c0_4] : memref<8x256xbf16, #tpu.memory_space<vmem>>, vector<8x256xbf16>
    %c0_5 = arith.constant 0 : index
    %c0_6 = arith.constant 0 : index
    %4 = vector.load %arg4[%c0_5, %c0_6] : memref<256x128xbf16, #tpu.memory_space<vmem>>, vector<256x128xbf16>
    %cst_7 = arith.constant dense<0.000000e+00> : vector<8x128xf32>
    %5 = tpu.matmul %3, %4, %cst_7 {dimension_numbers = #tpu.dot_dimension_numbers<[1], [0], [0], [1], [0, 0, 1, 1], [], []>} : vector<8x256xbf16>, vector<256x128xbf16>, vector<8x128xf32> -> vector<8x128xf32>
    %6 = arith.addf %2, %5 : vector<8x128xf32>
    %7 = arith.truncf %6 : vector<8x128xf32> to vector<8x128xbf16>
    %c0_8 = arith.constant 0 : index
    %c0_9 = arith.constant 0 : index
    %8 = vector.load %arg5[%c0_8, %c0_9] : memref<8x128xbf16, #tpu.memory_space<vmem>>, vector<8x128xbf16>
    tpu.vector_store %arg5[%c0_8, %c0_9], %7 {strides = array<i32>} : memref<8x128xbf16, #tpu.memory_space<vmem>>, vector<8x128xbf16>,
    %cst_10 = arith.constant dense<0.000000e+00> : vector<128xf32>
    %9 = vector.multi_reduction <add>, %6, %cst_10 [0] : vector<8x128xf32> to vector<128xf32>
    %10 = vector.shape_cast %9 : vector<128xf32> to vector<1x128xf32>
    %11 = arith.mulf %6, %6 : vector<8x128xf32>
    %cst_11 = arith.constant dense<0.000000e+00> : vector<128xf32>
    %12 = vector.multi_reduction <add>, %11, %cst_11 [0] : vector<8x128xf32> to vector<128xf32>
    %13 = vector.shape_cast %12 : vector<128xf32> to vector<1x128xf32>
    %14 = vector.shape_cast %10 : vector<1x128xf32> to vector<1x128xf32>
    %15 = vector.broadcast %14 : vector<1x128xf32> to vector<8x128xf32>
    %c0_12 = arith.constant 0 : index
    %c0_13 = arith.constant 0 : index
    %16 = vector.load %arg6[%c0_12, %c0_13] : memref<8x128xf32, #tpu.memory_space<vmem>>, vector<8x128xf32>
    tpu.vector_store %arg6[%c0_12, %c0_13], %15 {strides = array<i32>} : memref<8x128xf32, #tpu.memory_space<vmem>>, vector<8x128xf32>,
    %17 = vector.shape_cast %13 : vector<1x128xf32> to vector<1x128xf32>
    %18 = vector.broadcast %17 : vector<1x128xf32> to vector<8x128xf32>
    %c0_14 = arith.constant 0 : index
    %c0_15 = arith.constant 0 : index
    %19 = vector.load %arg7[%c0_14, %c0_15] : memref<8x128xf32, #tpu.memory_space<vmem>>, vector<8x128xf32>
    tpu.vector_store %arg7[%c0_14, %c0_15], %18 {strides = array<i32>} : memref<8x128xf32, #tpu.memory_space<vmem>>, vector<8x128xf32>,
    return
  }
  func.func @transform_0(%arg0: i32) -> (i32, i32) {
    %c0_i32 = arith.constant 0 : i32
    %c0_i32_0 = arith.constant 0 : i32
    return %arg0, %c0_i32 : i32, i32
  }
  func.func @transform_1(%arg0: i32) -> (i32, i32) {
    %c0_i32 = arith.constant 0 : i32
    %c0_i32_0 = arith.constant 0 : i32
    return %arg0, %c0_i32 : i32, i32
  }
  func.func @transform_2(%arg0: i32) -> (i32, i32) {
    %c0_i32 = arith.constant 0 : i32
    %c0_i32_0 = arith.constant 0 : i32
    %c0_i32_1 = arith.constant 0 : i32
    return %c0_i32, %c0_i32_0 : i32, i32
  }
  func.func @transform_3(%arg0: i32) -> (i32, i32) {
    %c0_i32 = arith.constant 0 : i32
    %c0_i32_0 = arith.constant 0 : i32
    %c0_i32_1 = arith.constant 0 : i32
    return %c0_i32, %c0_i32_0 : i32, i32
  }
  func.func @transform_4(%arg0: i32) -> (i32, i32) {
    %c0_i32 = arith.constant 0 : i32
    %c0_i32_0 = arith.constant 0 : i32
    return %arg0, %c0_i32 : i32, i32
  }
  func.func @transform_5(%arg0: i32) -> (i32, i32) {
    %c0_i32 = arith.constant 0 : i32
    %c0_i32_0 = arith.constant 0 : i32
    return %arg0, %c0_i32 : i32, i32
  }
  func.func @transform_6(%arg0: i32) -> (i32, i32) {
    %c0_i32 = arith.constant 0 : i32
    %c0_i32_0 = arith.constant 0 : i32
    return %arg0, %c0_i32 : i32, i32
  }
}

module attributes {stable_mosaic.version = 11 : i64} {
  func.func @_gemm_kernel(%arg0: i32, %arg1: memref<8x256xbf16, #tpu.memory_space<vmem>>, %arg2: memref<8x256xbf16, #tpu.memory_space<vmem>>, %arg3: memref<8x256xbf16, #tpu.memory_space<vmem>>, %arg4: memref<8x256xbf16, #tpu.memory_space<vmem>>, %arg5: memref<256x128xbf16, #tpu.memory_space<vmem>>, %arg6: memref<256x128xbf16, #tpu.memory_space<vmem>>, %arg7: memref<256x128xbf16, #tpu.memory_space<vmem>>, %arg8: memref<256x128xbf16, #tpu.memory_space<vmem>>, %arg9: memref<8x128xbf16, #tpu.memory_space<vmem>>, %arg10: memref<8x128xf32, #tpu.memory_space<vmem>>, %arg11: memref<8x128xf32, #tpu.memory_space<vmem>>) attributes {dimension_semantics = [#tpu.dimension_semantics<parallel>], iteration_bounds = array<i64: 1>, scalar_prefetch = 0 : i64, scratch_operands = 0 : i64, tpu.core_type = #tpu.core_type<tc>, window_params = [{transform_indices = @transform_0, window_bounds = array<i64: 8, 256>}, {transform_indices = @transform_1, window_bounds = array<i64: 8, 256>}, {transform_indices = @transform_2, window_bounds = array<i64: 8, 256>}, {transform_indices = @transform_3, window_bounds = array<i64: 8, 256>}, {pipeline_mode = #tpu.pipeline_mode<synchronous>, transform_indices = @transform_4, window_bounds = array<i64: 256, 128>}, {pipeline_mode = #tpu.pipeline_mode<synchronous>, transform_indices = @transform_5, window_bounds = array<i64: 256, 128>}, {pipeline_mode = #tpu.pipeline_mode<synchronous>, transform_indices = @transform_6, window_bounds = array<i64: 256, 128>}, {pipeline_mode = #tpu.pipeline_mode<synchronous>, transform_indices = @transform_7, window_bounds = array<i64: 256, 128>}, {transform_indices = @transform_8, window_bounds = array<i64: 8, 128>}, {transform_indices = @transform_9, window_bounds = array<i64: 8, 128>}, {transform_indices = @transform_10, window_bounds = array<i64: 8, 128>}]} {
    %c0 = arith.constant 0 : index
    %c0_0 = arith.constant 0 : index
    %0 = vector.load %arg1[%c0, %c0_0] : memref<8x256xbf16, #tpu.memory_space<vmem>>, vector<8x256xbf16>
    %c0_1 = arith.constant 0 : index
    %c0_2 = arith.constant 0 : index
    %1 = vector.load %arg5[%c0_1, %c0_2] : memref<256x128xbf16, #tpu.memory_space<vmem>>, vector<256x128xbf16>
    %cst = arith.constant dense<0.000000e+00> : vector<8x128xf32>
    %2 = tpu.matmul %0, %1, %cst {dimension_numbers = #tpu.dot_dimension_numbers<[1], [0], [0], [1], [0, 0, 1, 1], [], []>} : vector<8x256xbf16>, vector<256x128xbf16>, vector<8x128xf32> -> vector<8x128xf32>
    %c0_3 = arith.constant 0 : index
    %c0_4 = arith.constant 0 : index
    %3 = vector.load %arg2[%c0_3, %c0_4] : memref<8x256xbf16, #tpu.memory_space<vmem>>, vector<8x256xbf16>
    %c0_5 = arith.constant 0 : index
    %c0_6 = arith.constant 0 : index
    %4 = vector.load %arg6[%c0_5, %c0_6] : memref<256x128xbf16, #tpu.memory_space<vmem>>, vector<256x128xbf16>
    %cst_7 = arith.constant dense<0.000000e+00> : vector<8x128xf32>
    %5 = tpu.matmul %3, %4, %cst_7 {dimension_numbers = #tpu.dot_dimension_numbers<[1], [0], [0], [1], [0, 0, 1, 1], [], []>} : vector<8x256xbf16>, vector<256x128xbf16>, vector<8x128xf32> -> vector<8x128xf32>
    %6 = arith.addf %2, %5 : vector<8x128xf32>
    %c0_8 = arith.constant 0 : index
    %c0_9 = arith.constant 0 : index
    %7 = vector.load %arg3[%c0_8, %c0_9] : memref<8x256xbf16, #tpu.memory_space<vmem>>, vector<8x256xbf16>
    %c0_10 = arith.constant 0 : index
    %c0_11 = arith.constant 0 : index
    %8 = vector.load %arg7[%c0_10, %c0_11] : memref<256x128xbf16, #tpu.memory_space<vmem>>, vector<256x128xbf16>
    %cst_12 = arith.constant dense<0.000000e+00> : vector<8x128xf32>
    %9 = tpu.matmul %7, %8, %cst_12 {dimension_numbers = #tpu.dot_dimension_numbers<[1], [0], [0], [1], [0, 0, 1, 1], [], []>} : vector<8x256xbf16>, vector<256x128xbf16>, vector<8x128xf32> -> vector<8x128xf32>
    %10 = arith.addf %6, %9 : vector<8x128xf32>
    %c0_13 = arith.constant 0 : index
    %c0_14 = arith.constant 0 : index
    %11 = vector.load %arg4[%c0_13, %c0_14] : memref<8x256xbf16, #tpu.memory_space<vmem>>, vector<8x256xbf16>
    %c0_15 = arith.constant 0 : index
    %c0_16 = arith.constant 0 : index
    %12 = vector.load %arg8[%c0_15, %c0_16] : memref<256x128xbf16, #tpu.memory_space<vmem>>, vector<256x128xbf16>
    %cst_17 = arith.constant dense<0.000000e+00> : vector<8x128xf32>
    %13 = tpu.matmul %11, %12, %cst_17 {dimension_numbers = #tpu.dot_dimension_numbers<[1], [0], [0], [1], [0, 0, 1, 1], [], []>} : vector<8x256xbf16>, vector<256x128xbf16>, vector<8x128xf32> -> vector<8x128xf32>
    %14 = arith.addf %10, %13 : vector<8x128xf32>
    %15 = arith.truncf %14 : vector<8x128xf32> to vector<8x128xbf16>
    %c0_18 = arith.constant 0 : index
    %c0_19 = arith.constant 0 : index
    %16 = vector.load %arg9[%c0_18, %c0_19] : memref<8x128xbf16, #tpu.memory_space<vmem>>, vector<8x128xbf16>
    tpu.vector_store %arg9[%c0_18, %c0_19], %15 {strides = array<i32>} : memref<8x128xbf16, #tpu.memory_space<vmem>>, vector<8x128xbf16>,
    %cst_20 = arith.constant dense<0.000000e+00> : vector<128xf32>
    %17 = vector.multi_reduction <add>, %14, %cst_20 [0] : vector<8x128xf32> to vector<128xf32>
    %18 = vector.shape_cast %17 : vector<128xf32> to vector<1x128xf32>
    %19 = arith.mulf %14, %14 : vector<8x128xf32>
    %cst_21 = arith.constant dense<0.000000e+00> : vector<128xf32>
    %20 = vector.multi_reduction <add>, %19, %cst_21 [0] : vector<8x128xf32> to vector<128xf32>
    %21 = vector.shape_cast %20 : vector<128xf32> to vector<1x128xf32>
    %22 = vector.shape_cast %18 : vector<1x128xf32> to vector<1x128xf32>
    %23 = vector.broadcast %22 : vector<1x128xf32> to vector<8x128xf32>
    %c0_22 = arith.constant 0 : index
    %c0_23 = arith.constant 0 : index
    %24 = vector.load %arg10[%c0_22, %c0_23] : memref<8x128xf32, #tpu.memory_space<vmem>>, vector<8x128xf32>
    tpu.vector_store %arg10[%c0_22, %c0_23], %23 {strides = array<i32>} : memref<8x128xf32, #tpu.memory_space<vmem>>, vector<8x128xf32>,
    %25 = vector.shape_cast %21 : vector<1x128xf32> to vector<1x128xf32>
    %26 = vector.broadcast %25 : vector<1x128xf32> to vector<8x128xf32>
    %c0_24 = arith.constant 0 : index
    %c0_25 = arith.constant 0 : index
    %27 = vector.load %arg11[%c0_24, %c0_25] : memref<8x128xf32, #tpu.memory_space<vmem>>, vector<8x128xf32>
    tpu.vector_store %arg11[%c0_24, %c0_25], %26 {strides = array<i32>} : memref<8x128xf32, #tpu.memory_space<vmem>>, vector<8x128xf32>,
    return
  }
  func.func @transform_0(%arg0: i32) -> (i32, i32) {
    %c0_i32 = arith.constant 0 : i32
    %c0_i32_0 = arith.constant 0 : i32
    return %arg0, %c0_i32 : i32, i32
  }
  func.func @transform_1(%arg0: i32) -> (i32, i32) {
    %c0_i32 = arith.constant 0 : i32
    %c0_i32_0 = arith.constant 0 : i32
    return %arg0, %c0_i32 : i32, i32
  }
  func.func @transform_2(%arg0: i32) -> (i32, i32) {
    %c0_i32 = arith.constant 0 : i32
    %c0_i32_0 = arith.constant 0 : i32
    return %arg0, %c0_i32 : i32, i32
  }
  func.func @transform_3(%arg0: i32) -> (i32, i32) {
    %c0_i32 = arith.constant 0 : i32
    %c0_i32_0 = arith.constant 0 : i32
    return %arg0, %c0_i32 : i32, i32
  }
  func.func @transform_4(%arg0: i32) -> (i32, i32) {
    %c0_i32 = arith.constant 0 : i32
    %c0_i32_0 = arith.constant 0 : i32
    %c0_i32_1 = arith.constant 0 : i32
    return %c0_i32, %c0_i32_0 : i32, i32
  }
  func.func @transform_5(%arg0: i32) -> (i32, i32) {
    %c0_i32 = arith.constant 0 : i32
    %c0_i32_0 = arith.constant 0 : i32
    %c0_i32_1 = arith.constant 0 : i32
    return %c0_i32, %c0_i32_0 : i32, i32
  }
  func.func @transform_6(%arg0: i32) -> (i32, i32) {
    %c0_i32 = arith.constant 0 : i32
    %c0_i32_0 = arith.constant 0 : i32
    %c0_i32_1 = arith.constant 0 : i32
    return %c0_i32, %c0_i32_0 : i32, i32
  }
  func.func @transform_7(%arg0: i32) -> (i32, i32) {
    %c0_i32 = arith.constant 0 : i32
    %c0_i32_0 = arith.constant 0 : i32
    %c0_i32_1 = arith.constant 0 : i32
    return %c0_i32, %c0_i32_0 : i32, i32
  }
  func.func @transform_8(%arg0: i32) -> (i32, i32) {
    %c0_i32 = arith.constant 0 : i32
    %c0_i32_0 = arith.constant 0 : i32
    return %arg0, %c0_i32 : i32, i32
  }
  func.func @transform_9(%arg0: i32) -> (i32, i32) {
    %c0_i32 = arith.constant 0 : i32
    %c0_i32_0 = arith.constant 0 : i32
    return %arg0, %c0_i32 : i32, i32
  }
  func.func @transform_10(%arg0: i32) -> (i32, i32) {
    %c0_i32 = arith.constant 0 : i32
    %c0_i32_0 = arith.constant 0 : i32
    return %arg0, %c0_i32 : i32, i32
  }
}

module attributes {stable_mosaic.version = 11 : i64} {
  func.func @_gemm_kernel(%arg0: i32, %arg1: memref<8x128xbf16, #tpu.memory_space<vmem>>, %arg2: memref<8x128xbf16, #tpu.memory_space<vmem>>, %arg3: memref<8x128xbf16, #tpu.memory_space<vmem>>, %arg4: memref<8x128xbf16, #tpu.memory_space<vmem>>, %arg5: memref<128x128xbf16, #tpu.memory_space<vmem>>, %arg6: memref<128x128xbf16, #tpu.memory_space<vmem>>, %arg7: memref<128x128xbf16, #tpu.memory_space<vmem>>, %arg8: memref<128x128xbf16, #tpu.memory_space<vmem>>, %arg9: memref<8x128xbf16, #tpu.memory_space<vmem>>, %arg10: memref<8x128xf32, #tpu.memory_space<vmem>>, %arg11: memref<8x128xf32, #tpu.memory_space<vmem>>) attributes {dimension_semantics = [#tpu.dimension_semantics<parallel>], iteration_bounds = array<i64: 1>, scalar_prefetch = 0 : i64, scratch_operands = 0 : i64, tpu.core_type = #tpu.core_type<tc>, window_params = [{transform_indices = @transform_0, window_bounds = array<i64: 8, 128>}, {transform_indices = @transform_1, window_bounds = array<i64: 8, 128>}, {transform_indices = @transform_2, window_bounds = array<i64: 8, 128>}, {transform_indices = @transform_3, window_bounds = array<i64: 8, 128>}, {pipeline_mode = #tpu.pipeline_mode<synchronous>, transform_indices = @transform_4, window_bounds = array<i64: 128, 128>}, {pipeline_mode = #tpu.pipeline_mode<synchronous>, transform_indices = @transform_5, window_bounds = array<i64: 128, 128>}, {pipeline_mode = #tpu.pipeline_mode<synchronous>, transform_indices = @transform_6, window_bounds = array<i64: 128, 128>}, {pipeline_mode = #tpu.pipeline_mode<synchronous>, transform_indices = @transform_7, window_bounds = array<i64: 128, 128>}, {transform_indices = @transform_8, window_bounds = array<i64: 8, 128>}, {transform_indices = @transform_9, window_bounds = array<i64: 8, 128>}, {transform_indices = @transform_10, window_bounds = array<i64: 8, 128>}]} {
    %c0 = arith.constant 0 : index
    %c0_0 = arith.constant 0 : index
    %0 = vector.load %arg1[%c0, %c0_0] : memref<8x128xbf16, #tpu.memory_space<vmem>>, vector<8x128xbf16>
    %c0_1 = arith.constant 0 : index
    %c0_2 = arith.constant 0 : index
    %1 = vector.load %arg5[%c0_1, %c0_2] : memref<128x128xbf16, #tpu.memory_space<vmem>>, vector<128x128xbf16>
    %cst = arith.constant dense<0.000000e+00> : vector<8x128xf32>
    %2 = tpu.matmul %0, %1, %cst {dimension_numbers = #tpu.dot_dimension_numbers<[1], [0], [0], [1], [0, 0, 1, 1], [], []>} : vector<8x128xbf16>, vector<128x128xbf16>, vector<8x128xf32> -> vector<8x128xf32>
    %c0_3 = arith.constant 0 : index
    %c0_4 = arith.constant 0 : index
    %3 = vector.load %arg2[%c0_3, %c0_4] : memref<8x128xbf16, #tpu.memory_space<vmem>>, vector<8x128xbf16>
    %c0_5 = arith.constant 0 : index
    %c0_6 = arith.constant 0 : index
    %4 = vector.load %arg6[%c0_5, %c0_6] : memref<128x128xbf16, #tpu.memory_space<vmem>>, vector<128x128xbf16>
    %cst_7 = arith.constant dense<0.000000e+00> : vector<8x128xf32>
    %5 = tpu.matmul %3, %4, %cst_7 {dimension_numbers = #tpu.dot_dimension_numbers<[1], [0], [0], [1], [0, 0, 1, 1], [], []>} : vector<8x128xbf16>, vector<128x128xbf16>, vector<8x128xf32> -> vector<8x128xf32>
    %6 = arith.addf %2, %5 : vector<8x128xf32>
    %c0_8 = arith.constant 0 : index
    %c0_9 = arith.constant 0 : index
    %7 = vector.load %arg3[%c0_8, %c0_9] : memref<8x128xbf16, #tpu.memory_space<vmem>>, vector<8x128xbf16>
    %c0_10 = arith.constant 0 : index
    %c0_11 = arith.constant 0 : index
    %8 = vector.load %arg7[%c0_10, %c0_11] : memref<128x128xbf16, #tpu.memory_space<vmem>>, vector<128x128xbf16>
    %cst_12 = arith.constant dense<0.000000e+00> : vector<8x128xf32>
    %9 = tpu.matmul %7, %8, %cst_12 {dimension_numbers = #tpu.dot_dimension_numbers<[1], [0], [0], [1], [0, 0, 1, 1], [], []>} : vector<8x128xbf16>, vector<128x128xbf16>, vector<8x128xf32> -> vector<8x128xf32>
    %10 = arith.addf %6, %9 : vector<8x128xf32>
    %c0_13 = arith.constant 0 : index
    %c0_14 = arith.constant 0 : index
    %11 = vector.load %arg4[%c0_13, %c0_14] : memref<8x128xbf16, #tpu.memory_space<vmem>>, vector<8x128xbf16>
    %c0_15 = arith.constant 0 : index
    %c0_16 = arith.constant 0 : index
    %12 = vector.load %arg8[%c0_15, %c0_16] : memref<128x128xbf16, #tpu.memory_space<vmem>>, vector<128x128xbf16>
    %cst_17 = arith.constant dense<0.000000e+00> : vector<8x128xf32>
    %13 = tpu.matmul %11, %12, %cst_17 {dimension_numbers = #tpu.dot_dimension_numbers<[1], [0], [0], [1], [0, 0, 1, 1], [], []>} : vector<8x128xbf16>, vector<128x128xbf16>, vector<8x128xf32> -> vector<8x128xf32>
    %14 = arith.addf %10, %13 : vector<8x128xf32>
    %15 = arith.truncf %14 : vector<8x128xf32> to vector<8x128xbf16>
    %c0_18 = arith.constant 0 : index
    %c0_19 = arith.constant 0 : index
    %16 = vector.load %arg9[%c0_18, %c0_19] : memref<8x128xbf16, #tpu.memory_space<vmem>>, vector<8x128xbf16>
    tpu.vector_store %arg9[%c0_18, %c0_19], %15 {strides = array<i32>} : memref<8x128xbf16, #tpu.memory_space<vmem>>, vector<8x128xbf16>,
    %cst_20 = arith.constant dense<0.000000e+00> : vector<128xf32>
    %17 = vector.multi_reduction <add>, %14, %cst_20 [0] : vector<8x128xf32> to vector<128xf32>
    %18 = vector.shape_cast %17 : vector<128xf32> to vector<1x128xf32>
    %19 = arith.mulf %14, %14 : vector<8x128xf32>
    %cst_21 = arith.constant dense<0.000000e+00> : vector<128xf32>
    %20 = vector.multi_reduction <add>, %19, %cst_21 [0] : vector<8x128xf32> to vector<128xf32>
    %21 = vector.shape_cast %20 : vector<128xf32> to vector<1x128xf32>
    %22 = vector.shape_cast %18 : vector<1x128xf32> to vector<1x128xf32>
    %23 = vector.broadcast %22 : vector<1x128xf32> to vector<8x128xf32>
    %c0_22 = arith.constant 0 : index
    %c0_23 = arith.constant 0 : index
    %24 = vector.load %arg10[%c0_22, %c0_23] : memref<8x128xf32, #tpu.memory_space<vmem>>, vector<8x128xf32>
    tpu.vector_store %arg10[%c0_22, %c0_23], %23 {strides = array<i32>} : memref<8x128xf32, #tpu.memory_space<vmem>>, vector<8x128xf32>,
    %25 = vector.shape_cast %21 : vector<1x128xf32> to vector<1x128xf32>
    %26 = vector.broadcast %25 : vector<1x128xf32> to vector<8x128xf32>
    %c0_24 = arith.constant 0 : index
    %c0_25 = arith.constant 0 : index
    %27 = vector.load %arg11[%c0_24, %c0_25] : memref<8x128xf32, #tpu.memory_space<vmem>>, vector<8x128xf32>
    tpu.vector_store %arg11[%c0_24, %c0_25], %26 {strides = array<i32>} : memref<8x128xf32, #tpu.memory_space<vmem>>, vector<8x128xf32>,
    return
  }
  func.func @transform_0(%arg0: i32) -> (i32, i32) {
    %c0_i32 = arith.constant 0 : i32
    %c0_i32_0 = arith.constant 0 : i32
    return %arg0, %c0_i32 : i32, i32
  }
  func.func @transform_1(%arg0: i32) -> (i32, i32) {
    %c0_i32 = arith.constant 0 : i32
    %c0_i32_0 = arith.constant 0 : i32
    return %arg0, %c0_i32 : i32, i32
  }
  func.func @transform_2(%arg0: i32) -> (i32, i32) {
    %c0_i32 = arith.constant 0 : i32
    %c0_i32_0 = arith.constant 0 : i32
    return %arg0, %c0_i32 : i32, i32
  }
  func.func @transform_3(%arg0: i32) -> (i32, i32) {
    %c0_i32 = arith.constant 0 : i32
    %c0_i32_0 = arith.constant 0 : i32
    return %arg0, %c0_i32 : i32, i32
  }
  func.func @transform_4(%arg0: i32) -> (i32, i32) {
    %c0_i32 = arith.constant 0 : i32
    %c0_i32_0 = arith.constant 0 : i32
    %c0_i32_1 = arith.constant 0 : i32
    return %c0_i32, %c0_i32_0 : i32, i32
  }
  func.func @transform_5(%arg0: i32) -> (i32, i32) {
    %c0_i32 = arith.constant 0 : i32
    %c0_i32_0 = arith.constant 0 : i32
    %c0_i32_1 = arith.constant 0 : i32
    return %c0_i32, %c0_i32_0 : i32, i32
  }
  func.func @transform_6(%arg0: i32) -> (i32, i32) {
    %c0_i32 = arith.constant 0 : i32
    %c0_i32_0 = arith.constant 0 : i32
    %c0_i32_1 = arith.constant 0 : i32
    return %c0_i32, %c0_i32_0 : i32, i32
  }
  func.func @transform_7(%arg0: i32) -> (i32, i32) {
    %c0_i32 = arith.constant 0 : i32
    %c0_i32_0 = arith.constant 0 : i32
    %c0_i32_1 = arith.constant 0 : i32
    return %c0_i32, %c0_i32_0 : i32, i32
  }
  func.func @transform_8(%arg0: i32) -> (i32, i32) {
    %c0_i32 = arith.constant 0 : i32
    %c0_i32_0 = arith.constant 0 : i32
    return %arg0, %c0_i32 : i32, i32
  }
  func.func @transform_9(%arg0: i32) -> (i32, i32) {
    %c0_i32 = arith.constant 0 : i32
    %c0_i32_0 = arith.constant 0 : i32
    return %arg0, %c0_i32 : i32, i32
  }
  func.func @transform_10(%arg0: i32) -> (i32, i32) {
    %c0_i32 = arith.constant 0 : i32
    %c0_i32_0 = arith.constant 0 : i32
    return %arg0, %c0_i32 : i32, i32
  }
}

module attributes {stable_mosaic.version = 11 : i64} {
  func.func @_gemm_kernel(%arg0: i32, %arg1: memref<8x128xbf16, #tpu.memory_space<vmem>>, %arg2: memref<8x128xbf16, #tpu.memory_space<vmem>>, %arg3: memref<128x128xbf16, #tpu.memory_space<vmem>>, %arg4: memref<128x128xbf16, #tpu.memory_space<vmem>>, %arg5: memref<8x128xbf16, #tpu.memory_space<vmem>>, %arg6: memref<8x128xf32, #tpu.memory_space<vmem>>, %arg7: memref<8x128xf32, #tpu.memory_space<vmem>>) attributes {dimension_semantics = [#tpu.dimension_semantics<parallel>], iteration_bounds = array<i64: 1>, scalar_prefetch = 0 : i64, scratch_operands = 0 : i64, tpu.core_type = #tpu.core_type<tc>, window_params = [{transform_indices = @transform_0, window_bounds = array<i64: 8, 128>}, {transform_indices = @transform_1, window_bounds = array<i64: 8, 128>}, {pipeline_mode = #tpu.pipeline_mode<synchronous>, transform_indices = @transform_2, window_bounds = array<i64: 128, 128>}, {pipeline_mode = #tpu.pipeline_mode<synchronous>, transform_indices = @transform_3, window_bounds = array<i64: 128, 128>}, {transform_indices = @transform_4, window_bounds = array<i64: 8, 128>}, {transform_indices = @transform_5, window_bounds = array<i64: 8, 128>}, {transform_indices = @transform_6, window_bounds = array<i64: 8, 128>}]} {
    %c0 = arith.constant 0 : index
    %c0_0 = arith.constant 0 : index
    %0 = vector.load %arg1[%c0, %c0_0] : memref<8x128xbf16, #tpu.memory_space<vmem>>, vector<8x128xbf16>
    %c0_1 = arith.constant 0 : index
    %c0_2 = arith.constant 0 : index
    %1 = vector.load %arg3[%c0_1, %c0_2] : memref<128x128xbf16, #tpu.memory_space<vmem>>, vector<128x128xbf16>
    %cst = arith.constant dense<0.000000e+00> : vector<8x128xf32>
    %2 = tpu.matmul %0, %1, %cst {dimension_numbers = #tpu.dot_dimension_numbers<[1], [0], [0], [1], [0, 0, 1, 1], [], []>} : vector<8x128xbf16>, vector<128x128xbf16>, vector<8x128xf32> -> vector<8x128xf32>
    %c0_3 = arith.constant 0 : index
    %c0_4 = arith.constant 0 : index
    %3 = vector.load %arg2[%c0_3, %c0_4] : memref<8x128xbf16, #tpu.memory_space<vmem>>, vector<8x128xbf16>
    %c0_5 = arith.constant 0 : index
    %c0_6 = arith.constant 0 : index
    %4 = vector.load %arg4[%c0_5, %c0_6] : memref<128x128xbf16, #tpu.memory_space<vmem>>, vector<128x128xbf16>
    %cst_7 = arith.constant dense<0.000000e+00> : vector<8x128xf32>
    %5 = tpu.matmul %3, %4, %cst_7 {dimension_numbers = #tpu.dot_dimension_numbers<[1], [0], [0], [1], [0, 0, 1, 1], [], []>} : vector<8x128xbf16>, vector<128x128xbf16>, vector<8x128xf32> -> vector<8x128xf32>
    %6 = arith.addf %2, %5 : vector<8x128xf32>
    %7 = arith.truncf %6 : vector<8x128xf32> to vector<8x128xbf16>
    %c0_8 = arith.constant 0 : index
    %c0_9 = arith.constant 0 : index
    %8 = vector.load %arg5[%c0_8, %c0_9] : memref<8x128xbf16, #tpu.memory_space<vmem>>, vector<8x128xbf16>
    tpu.vector_store %arg5[%c0_8, %c0_9], %7 {strides = array<i32>} : memref<8x128xbf16, #tpu.memory_space<vmem>>, vector<8x128xbf16>,
    %cst_10 = arith.constant dense<0.000000e+00> : vector<128xf32>
    %9 = vector.multi_reduction <add>, %6, %cst_10 [0] : vector<8x128xf32> to vector<128xf32>
    %10 = vector.shape_cast %9 : vector<128xf32> to vector<1x128xf32>
    %11 = arith.mulf %6, %6 : vector<8x128xf32>
    %cst_11 = arith.constant dense<0.000000e+00> : vector<128xf32>
    %12 = vector.multi_reduction <add>, %11, %cst_11 [0] : vector<8x128xf32> to vector<128xf32>
    %13 = vector.shape_cast %12 : vector<128xf32> to vector<1x128xf32>
    %14 = vector.shape_cast %10 : vector<1x128xf32> to vector<1x128xf32>
    %15 = vector.broadcast %14 : vector<1x128xf32> to vector<8x128xf32>
    %c0_12 = arith.constant 0 : index
    %c0_13 = arith.constant 0 : index
    %16 = vector.load %arg6[%c0_12, %c0_13] : memref<8x128xf32, #tpu.memory_space<vmem>>, vector<8x128xf32>
    tpu.vector_store %arg6[%c0_12, %c0_13], %15 {strides = array<i32>} : memref<8x128xf32, #tpu.memory_space<vmem>>, vector<8x128xf32>,
    %17 = vector.shape_cast %13 : vector<1x128xf32> to vector<1x128xf32>
    %18 = vector.broadcast %17 : vector<1x128xf32> to vector<8x128xf32>
    %c0_14 = arith.constant 0 : index
    %c0_15 = arith.constant 0 : index
    %19 = vector.load %arg7[%c0_14, %c0_15] : memref<8x128xf32, #tpu.memory_space<vmem>>, vector<8x128xf32>
    tpu.vector_store %arg7[%c0_14, %c0_15], %18 {strides = array<i32>} : memref<8x128xf32, #tpu.memory_space<vmem>>, vector<8x128xf32>,
    return
  }
  func.func @transform_0(%arg0: i32) -> (i32, i32) {
    %c0_i32 = arith.constant 0 : i32
    %c0_i32_0 = arith.constant 0 : i32
    return %arg0, %c0_i32 : i32, i32
  }
  func.func @transform_1(%arg0: i32) -> (i32, i32) {
    %c0_i32 = arith.constant 0 : i32
    %c0_i32_0 = arith.constant 0 : i32
    return %arg0, %c0_i32 : i32, i32
  }
  func.func @transform_2(%arg0: i32) -> (i32, i32) {
    %c0_i32 = arith.constant 0 : i32
    %c0_i32_0 = arith.constant 0 : i32
    %c0_i32_1 = arith.constant 0 : i32
    return %c0_i32, %c0_i32_0 : i32, i32
  }
  func.func @transform_3(%arg0: i32) -> (i32, i32) {
    %c0_i32 = arith.constant 0 : i32
    %c0_i32_0 = arith.constant 0 : i32
    %c0_i32_1 = arith.constant 0 : i32
    return %c0_i32, %c0_i32_0 : i32, i32
  }
  func.func @transform_4(%arg0: i32) -> (i32, i32) {
    %c0_i32 = arith.constant 0 : i32
    %c0_i32_0 = arith.constant 0 : i32
    return %arg0, %c0_i32 : i32, i32
  }
  func.func @transform_5(%arg0: i32) -> (i32, i32) {
    %c0_i32 = arith.constant 0 : i32
    %c0_i32_0 = arith.constant 0 : i32
    return %arg0, %c0_i32 : i32, i32
  }
  func.func @transform_6(%arg0: i32) -> (i32, i32) {
    %c0_i32 = arith.constant 0 : i32
    %c0_i32_0 = arith.constant 0 : i32
    return %arg0, %c0_i32 : i32, i32
  }
}

module attributes {stable_mosaic.version = 11 : i64} {
  func.func @_gemm_kernel(%arg0: i32, %arg1: memref<32x128xbf16, #tpu.memory_space<vmem>>, %arg2: memref<32x128xbf16, #tpu.memory_space<vmem>>, %arg3: memref<128x128xbf16, #tpu.memory_space<vmem>>, %arg4: memref<128x128xbf16, #tpu.memory_space<vmem>>, %arg5: memref<32x128xbf16, #tpu.memory_space<vmem>>, %arg6: memref<8x128xf32, #tpu.memory_space<vmem>>, %arg7: memref<8x128xf32, #tpu.memory_space<vmem>>) attributes {dimension_semantics = [#tpu.dimension_semantics<parallel>], iteration_bounds = array<i64: 1>, scalar_prefetch = 0 : i64, scratch_operands = 0 : i64, tpu.core_type = #tpu.core_type<tc>, window_params = [{transform_indices = @transform_0, window_bounds = array<i64: 32, 128>}, {transform_indices = @transform_1, window_bounds = array<i64: 32, 128>}, {pipeline_mode = #tpu.pipeline_mode<synchronous>, transform_indices = @transform_2, window_bounds = array<i64: 128, 128>}, {pipeline_mode = #tpu.pipeline_mode<synchronous>, transform_indices = @transform_3, window_bounds = array<i64: 128, 128>}, {transform_indices = @transform_4, window_bounds = array<i64: 32, 128>}, {transform_indices = @transform_5, window_bounds = array<i64: 8, 128>}, {transform_indices = @transform_6, window_bounds = array<i64: 8, 128>}]} {
    %c0 = arith.constant 0 : index
    %c0_0 = arith.constant 0 : index
    %0 = vector.load %arg1[%c0, %c0_0] : memref<32x128xbf16, #tpu.memory_space<vmem>>, vector<32x128xbf16>
    %c0_1 = arith.constant 0 : index
    %c0_2 = arith.constant 0 : index
    %1 = vector.load %arg3[%c0_1, %c0_2] : memref<128x128xbf16, #tpu.memory_space<vmem>>, vector<128x128xbf16>
    %cst = arith.constant dense<0.000000e+00> : vector<32x128xf32>
    %2 = tpu.matmul %0, %1, %cst {dimension_numbers = #tpu.dot_dimension_numbers<[1], [0], [0], [1], [0, 0, 1, 1], [], []>} : vector<32x128xbf16>, vector<128x128xbf16>, vector<32x128xf32> -> vector<32x128xf32>
    %c0_3 = arith.constant 0 : index
    %c0_4 = arith.constant 0 : index
    %3 = vector.load %arg2[%c0_3, %c0_4] : memref<32x128xbf16, #tpu.memory_space<vmem>>, vector<32x128xbf16>
    %c0_5 = arith.constant 0 : index
    %c0_6 = arith.constant 0 : index
    %4 = vector.load %arg4[%c0_5, %c0_6] : memref<128x128xbf16, #tpu.memory_space<vmem>>, vector<128x128xbf16>
    %cst_7 = arith.constant dense<0.000000e+00> : vector<32x128xf32>
    %5 = tpu.matmul %3, %4, %cst_7 {dimension_numbers = #tpu.dot_dimension_numbers<[1], [0], [0], [1], [0, 0, 1, 1], [], []>} : vector<32x128xbf16>, vector<128x128xbf16>, vector<32x128xf32> -> vector<32x128xf32>
    %6 = arith.addf %2, %5 : vector<32x128xf32>
    %7 = arith.truncf %6 : vector<32x128xf32> to vector<32x128xbf16>
    %c0_8 = arith.constant 0 : index
    %c0_9 = arith.constant 0 : index
    %8 = vector.load %arg5[%c0_8, %c0_9] : memref<32x128xbf16, #tpu.memory_space<vmem>>, vector<32x128xbf16>
    tpu.vector_store %arg5[%c0_8, %c0_9], %7 {strides = array<i32>} : memref<32x128xbf16, #tpu.memory_space<vmem>>, vector<32x128xbf16>,
    %cst_10 = arith.constant dense<0.000000e+00> : vector<128xf32>
    %9 = vector.multi_reduction <add>, %6, %cst_10 [0] : vector<32x128xf32> to vector<128xf32>
    %10 = vector.shape_cast %9 : vector<128xf32> to vector<1x128xf32>
    %11 = arith.mulf %6, %6 : vector<32x128xf32>
    %cst_11 = arith.constant dense<0.000000e+00> : vector<128xf32>
    %12 = vector.multi_reduction <add>, %11, %cst_11 [0] : vector<32x128xf32> to vector<128xf32>
    %13 = vector.shape_cast %12 : vector<128xf32> to vector<1x128xf32>
    %14 = vector.shape_cast %10 : vector<1x128xf32> to vector<1x128xf32>
    %15 = vector.broadcast %14 : vector<1x128xf32> to vector<8x128xf32>
    %c0_12 = arith.constant 0 : index
    %c0_13 = arith.constant 0 : index
    %16 = vector.load %arg6[%c0_12, %c0_13] : memref<8x128xf32, #tpu.memory_space<vmem>>, vector<8x128xf32>
    tpu.vector_store %arg6[%c0_12, %c0_13], %15 {strides = array<i32>} : memref<8x128xf32, #tpu.memory_space<vmem>>, vector<8x128xf32>,
    %17 = vector.shape_cast %13 : vector<1x128xf32> to vector<1x128xf32>
    %18 = vector.broadcast %17 : vector<1x128xf32> to vector<8x128xf32>
    %c0_14 = arith.constant 0 : index
    %c0_15 = arith.constant 0 : index
    %19 = vector.load %arg7[%c0_14, %c0_15] : memref<8x128xf32, #tpu.memory_space<vmem>>, vector<8x128xf32>
    tpu.vector_store %arg7[%c0_14, %c0_15], %18 {strides = array<i32>} : memref<8x128xf32, #tpu.memory_space<vmem>>, vector<8x128xf32>,
    return
  }
  func.func @transform_0(%arg0: i32) -> (i32, i32) {
    %c0_i32 = arith.constant 0 : i32
    %c0_i32_0 = arith.constant 0 : i32
    return %arg0, %c0_i32 : i32, i32
  }
  func.func @transform_1(%arg0: i32) -> (i32, i32) {
    %c0_i32 = arith.constant 0 : i32
    %c0_i32_0 = arith.constant 0 : i32
    return %arg0, %c0_i32 : i32, i32
  }
  func.func @transform_2(%arg0: i32) -> (i32, i32) {
    %c0_i32 = arith.constant 0 : i32
    %c0_i32_0 = arith.constant 0 : i32
    %c0_i32_1 = arith.constant 0 : i32
    return %c0_i32, %c0_i32_0 : i32, i32
  }
  func.func @transform_3(%arg0: i32) -> (i32, i32) {
    %c0_i32 = arith.constant 0 : i32
    %c0_i32_0 = arith.constant 0 : i32
    %c0_i32_1 = arith.constant 0 : i32
    return %c0_i32, %c0_i32_0 : i32, i32
  }
  func.func @transform_4(%arg0: i32) -> (i32, i32) {
    %c0_i32 = arith.constant 0 : i32
    %c0_i32_0 = arith.constant 0 : i32
    return %arg0, %c0_i32 : i32, i32
  }
  func.func @transform_5(%arg0: i32) -> (i32, i32) {
    %c0_i32 = arith.constant 0 : i32
    %c0_i32_0 = arith.constant 0 : i32
    return %arg0, %c0_i32 : i32, i32
  }
  func.func @transform_6(%arg0: i32) -> (i32, i32) {
    %c0_i32 = arith.constant 0 : i32
    %c0_i32_0 = arith.constant 0 : i32
    return %arg0, %c0_i32 : i32, i32
  }
}

module attributes {stable_mosaic.version = 11 : i64} {
  func.func @_gemm_kernel(%arg0: i32, %arg1: memref<32x128xbf16, #tpu.memory_space<vmem>>, %arg2: memref<32x128xbf16, #tpu.memory_space<vmem>>, %arg3: memref<32x128xbf16, #tpu.memory_space<vmem>>, %arg4: memref<32x128xbf16, #tpu.memory_space<vmem>>, %arg5: memref<128x128xbf16, #tpu.memory_space<vmem>>, %arg6: memref<128x128xbf16, #tpu.memory_space<vmem>>, %arg7: memref<128x128xbf16, #tpu.memory_space<vmem>>, %arg8: memref<128x128xbf16, #tpu.memory_space<vmem>>, %arg9: memref<32x128xbf16, #tpu.memory_space<vmem>>, %arg10: memref<8x128xf32, #tpu.memory_space<vmem>>, %arg11: memref<8x128xf32, #tpu.memory_space<vmem>>) attributes {dimension_semantics = [#tpu.dimension_semantics<parallel>], iteration_bounds = array<i64: 1>, scalar_prefetch = 0 : i64, scratch_operands = 0 : i64, tpu.core_type = #tpu.core_type<tc>, window_params = [{transform_indices = @transform_0, window_bounds = array<i64: 32, 128>}, {transform_indices = @transform_1, window_bounds = array<i64: 32, 128>}, {transform_indices = @transform_2, window_bounds = array<i64: 32, 128>}, {transform_indices = @transform_3, window_bounds = array<i64: 32, 128>}, {pipeline_mode = #tpu.pipeline_mode<synchronous>, transform_indices = @transform_4, window_bounds = array<i64: 128, 128>}, {pipeline_mode = #tpu.pipeline_mode<synchronous>, transform_indices = @transform_5, window_bounds = array<i64: 128, 128>}, {pipeline_mode = #tpu.pipeline_mode<synchronous>, transform_indices = @transform_6, window_bounds = array<i64: 128, 128>}, {pipeline_mode = #tpu.pipeline_mode<synchronous>, transform_indices = @transform_7, window_bounds = array<i64: 128, 128>}, {transform_indices = @transform_8, window_bounds = array<i64: 32, 128>}, {transform_indices = @transform_9, window_bounds = array<i64: 8, 128>}, {transform_indices = @transform_10, window_bounds = array<i64: 8, 128>}]} {
    %c0 = arith.constant 0 : index
    %c0_0 = arith.constant 0 : index
    %0 = vector.load %arg1[%c0, %c0_0] : memref<32x128xbf16, #tpu.memory_space<vmem>>, vector<32x128xbf16>
    %c0_1 = arith.constant 0 : index
    %c0_2 = arith.constant 0 : index
    %1 = vector.load %arg5[%c0_1, %c0_2] : memref<128x128xbf16, #tpu.memory_space<vmem>>, vector<128x128xbf16>
    %cst = arith.constant dense<0.000000e+00> : vector<32x128xf32>
    %2 = tpu.matmul %0, %1, %cst {dimension_numbers = #tpu.dot_dimension_numbers<[1], [0], [0], [1], [0, 0, 1, 1], [], []>} : vector<32x128xbf16>, vector<128x128xbf16>, vector<32x128xf32> -> vector<32x128xf32>
    %c0_3 = arith.constant 0 : index
    %c0_4 = arith.constant 0 : index
    %3 = vector.load %arg2[%c0_3, %c0_4] : memref<32x128xbf16, #tpu.memory_space<vmem>>, vector<32x128xbf16>
    %c0_5 = arith.constant 0 : index
    %c0_6 = arith.constant 0 : index
    %4 = vector.load %arg6[%c0_5, %c0_6] : memref<128x128xbf16, #tpu.memory_space<vmem>>, vector<128x128xbf16>
    %cst_7 = arith.constant dense<0.000000e+00> : vector<32x128xf32>
    %5 = tpu.matmul %3, %4, %cst_7 {dimension_numbers = #tpu.dot_dimension_numbers<[1], [0], [0], [1], [0, 0, 1, 1], [], []>} : vector<32x128xbf16>, vector<128x128xbf16>, vector<32x128xf32> -> vector<32x128xf32>
    %6 = arith.addf %2, %5 : vector<32x128xf32>
    %c0_8 = arith.constant 0 : index
    %c0_9 = arith.constant 0 : index
    %7 = vector.load %arg3[%c0_8, %c0_9] : memref<32x128xbf16, #tpu.memory_space<vmem>>, vector<32x128xbf16>
    %c0_10 = arith.constant 0 : index
    %c0_11 = arith.constant 0 : index
    %8 = vector.load %arg7[%c0_10, %c0_11] : memref<128x128xbf16, #tpu.memory_space<vmem>>, vector<128x128xbf16>
    %cst_12 = arith.constant dense<0.000000e+00> : vector<32x128xf32>
    %9 = tpu.matmul %7, %8, %cst_12 {dimension_numbers = #tpu.dot_dimension_numbers<[1], [0], [0], [1], [0, 0, 1, 1], [], []>} : vector<32x128xbf16>, vector<128x128xbf16>, vector<32x128xf32> -> vector<32x128xf32>
    %10 = arith.addf %6, %9 : vector<32x128xf32>
    %c0_13 = arith.constant 0 : index
    %c0_14 = arith.constant 0 : index
    %11 = vector.load %arg4[%c0_13, %c0_14] : memref<32x128xbf16, #tpu.memory_space<vmem>>, vector<32x128xbf16>
    %c0_15 = arith.constant 0 : index
    %c0_16 = arith.constant 0 : index
    %12 = vector.load %arg8[%c0_15, %c0_16] : memref<128x128xbf16, #tpu.memory_space<vmem>>, vector<128x128xbf16>
    %cst_17 = arith.constant dense<0.000000e+00> : vector<32x128xf32>
    %13 = tpu.matmul %11, %12, %cst_17 {dimension_numbers = #tpu.dot_dimension_numbers<[1], [0], [0], [1], [0, 0, 1, 1], [], []>} : vector<32x128xbf16>, vector<128x128xbf16>, vector<32x128xf32> -> vector<32x128xf32>
    %14 = arith.addf %10, %13 : vector<32x128xf32>
    %15 = arith.truncf %14 : vector<32x128xf32> to vector<32x128xbf16>
    %c0_18 = arith.constant 0 : index
    %c0_19 = arith.constant 0 : index
    %16 = vector.load %arg9[%c0_18, %c0_19] : memref<32x128xbf16, #tpu.memory_space<vmem>>, vector<32x128xbf16>
    tpu.vector_store %arg9[%c0_18, %c0_19], %15 {strides = array<i32>} : memref<32x128xbf16, #tpu.memory_space<vmem>>, vector<32x128xbf16>,
    %cst_20 = arith.constant dense<0.000000e+00> : vector<128xf32>
    %17 = vector.multi_reduction <add>, %14, %cst_20 [0] : vector<32x128xf32> to vector<128xf32>
    %18 = vector.shape_cast %17 : vector<128xf32> to vector<1x128xf32>
    %19 = arith.mulf %14, %14 : vector<32x128xf32>
    %cst_21 = arith.constant dense<0.000000e+00> : vector<128xf32>
    %20 = vector.multi_reduction <add>, %19, %cst_21 [0] : vector<32x128xf32> to vector<128xf32>
    %21 = vector.shape_cast %20 : vector<128xf32> to vector<1x128xf32>
    %22 = vector.shape_cast %18 : vector<1x128xf32> to vector<1x128xf32>
    %23 = vector.broadcast %22 : vector<1x128xf32> to vector<8x128xf32>
    %c0_22 = arith.constant 0 : index
    %c0_23 = arith.constant 0 : index
    %24 = vector.load %arg10[%c0_22, %c0_23] : memref<8x128xf32, #tpu.memory_space<vmem>>, vector<8x128xf32>
    tpu.vector_store %arg10[%c0_22, %c0_23], %23 {strides = array<i32>} : memref<8x128xf32, #tpu.memory_space<vmem>>, vector<8x128xf32>,
    %25 = vector.shape_cast %21 : vector<1x128xf32> to vector<1x128xf32>
    %26 = vector.broadcast %25 : vector<1x128xf32> to vector<8x128xf32>
    %c0_24 = arith.constant 0 : index
    %c0_25 = arith.constant 0 : index
    %27 = vector.load %arg11[%c0_24, %c0_25] : memref<8x128xf32, #tpu.memory_space<vmem>>, vector<8x128xf32>
    tpu.vector_store %arg11[%c0_24, %c0_25], %26 {strides = array<i32>} : memref<8x128xf32, #tpu.memory_space<vmem>>, vector<8x128xf32>,
    return
  }
  func.func @transform_0(%arg0: i32) -> (i32, i32) {
    %c0_i32 = arith.constant 0 : i32
    %c0_i32_0 = arith.constant 0 : i32
    return %arg0, %c0_i32 : i32, i32
  }
  func.func @transform_1(%arg0: i32) -> (i32, i32) {
    %c0_i32 = arith.constant 0 : i32
    %c0_i32_0 = arith.constant 0 : i32
    return %arg0, %c0_i32 : i32, i32
  }
  func.func @transform_2(%arg0: i32) -> (i32, i32) {
    %c0_i32 = arith.constant 0 : i32
    %c0_i32_0 = arith.constant 0 : i32
    return %arg0, %c0_i32 : i32, i32
  }
  func.func @transform_3(%arg0: i32) -> (i32, i32) {
    %c0_i32 = arith.constant 0 : i32
    %c0_i32_0 = arith.constant 0 : i32
    return %arg0, %c0_i32 : i32, i32
  }
  func.func @transform_4(%arg0: i32) -> (i32, i32) {
    %c0_i32 = arith.constant 0 : i32
    %c0_i32_0 = arith.constant 0 : i32
    %c0_i32_1 = arith.constant 0 : i32
    return %c0_i32, %c0_i32_0 : i32, i32
  }
  func.func @transform_5(%arg0: i32) -> (i32, i32) {
    %c0_i32 = arith.constant 0 : i32
    %c0_i32_0 = arith.constant 0 : i32
    %c0_i32_1 = arith.constant 0 : i32
    return %c0_i32, %c0_i32_0 : i32, i32
  }
  func.func @transform_6(%arg0: i32) -> (i32, i32) {
    %c0_i32 = arith.constant 0 : i32
    %c0_i32_0 = arith.constant 0 : i32
    %c0_i32_1 = arith.constant 0 : i32
    return %c0_i32, %c0_i32_0 : i32, i32
  }
  func.func @transform_7(%arg0: i32) -> (i32, i32) {
    %c0_i32 = arith.constant 0 : i32
    %c0_i32_0 = arith.constant 0 : i32
    %c0_i32_1 = arith.constant 0 : i32
    return %c0_i32, %c0_i32_0 : i32, i32
  }
  func.func @transform_8(%arg0: i32) -> (i32, i32) {
    %c0_i32 = arith.constant 0 : i32
    %c0_i32_0 = arith.constant 0 : i32
    return %arg0, %c0_i32 : i32, i32
  }
  func.func @transform_9(%arg0: i32) -> (i32, i32) {
    %c0_i32 = arith.constant 0 : i32
    %c0_i32_0 = arith.constant 0 : i32
    return %arg0, %c0_i32 : i32, i32
  }
  func.func @transform_10(%arg0: i32) -> (i32, i32) {
    %c0_i32 = arith.constant 0 : i32
    %c0_i32_0 = arith.constant 0 : i32
    return %arg0, %c0_i32 : i32, i32
  }
}

module attributes {stable_mosaic.version = 11 : i64} {
  func.func @_gemm_kernel(%arg0: i32, %arg1: memref<128x128xbf16, #tpu.memory_space<vmem>>, %arg2: memref<128x128xbf16, #tpu.memory_space<vmem>>, %arg3: memref<1x128xf32, #tpu.memory_space<vmem>>, %arg4: memref<1x128xf32, #tpu.memory_space<vmem>>, %arg5: memref<1x128xf32, #tpu.memory_space<vmem>>, %arg6: memref<128x128xf32, #tpu.memory_space<vmem>>) attributes {dimension_semantics = [#tpu.dimension_semantics<parallel>], iteration_bounds = array<i64: 1>, scalar_prefetch = 0 : i64, scratch_operands = 0 : i64, tpu.core_type = #tpu.core_type<tc>, window_params = [{transform_indices = @transform_0, window_bounds = array<i64: 128, 128>}, {pipeline_mode = #tpu.pipeline_mode<synchronous>, transform_indices = @transform_1, window_bounds = array<i64: 128, 128>}, {pipeline_mode = #tpu.pipeline_mode<synchronous>, transform_indices = @transform_2, window_bounds = array<i64: 1, 128>}, {pipeline_mode = #tpu.pipeline_mode<synchronous>, transform_indices = @transform_3, window_bounds = array<i64: 1, 128>}, {pipeline_mode = #tpu.pipeline_mode<synchronous>, transform_indices = @transform_4, window_bounds = array<i64: 1, 128>}, {transform_indices = @transform_5, window_bounds = array<i64: 128, 128>}]} {
    %c0 = arith.constant 0 : index
    %c0_0 = arith.constant 0 : index
    %0 = vector.load %arg1[%c0, %c0_0] : memref<128x128xbf16, #tpu.memory_space<vmem>>, vector<128x128xbf16>
    %1 = arith.extf %0 : vector<128x128xbf16> to vector<128x128xf32>
    %c0_1 = arith.constant 0 : index
    %c0_2 = arith.constant 0 : index
    %2 = vector.load %arg3[%c0_1, %c0_2] : memref<1x128xf32, #tpu.memory_space<vmem>>, vector<1x128xf32>
    %3 = vector.broadcast %2 : vector<1x128xf32> to vector<128x128xf32>
    %4 = arith.mulf %1, %3 : vector<128x128xf32>
    %c0_3 = arith.constant 0 : index
    %c0_4 = arith.constant 0 : index
    %5 = vector.load %arg4[%c0_3, %c0_4] : memref<1x128xf32, #tpu.memory_space<vmem>>, vector<1x128xf32>
    %6 = vector.broadcast %5 : vector<1x128xf32> to vector<128x128xf32>
    %7 = arith.addf %4, %6 : vector<128x128xf32>
    %cst = arith.constant 0.000000e+00 : f32
    %8 = vector.broadcast %cst : f32 to vector<128x128xf32>
    %9 = arith.maximumf %7, %8 : vector<128x128xf32>
    %10 = arith.truncf %9 : vector<128x128xf32> to vector<128x128xbf16>
    %c0_5 = arith.constant 0 : index
    %c0_6 = arith.constant 0 : index
    %11 = vector.load %arg2[%c0_5, %c0_6] : memref<128x128xbf16, #tpu.memory_space<vmem>>, vector<128x128xbf16>
    %cst_7 = arith.constant dense<0.000000e+00> : vector<128x128xf32>
    %12 = tpu.matmul %10, %11, %cst_7 {dimension_numbers = #tpu.dot_dimension_numbers<[1], [0], [0], [1], [0, 0, 1, 1], [], []>} : vector<128x128xbf16>, vector<128x128xbf16>, vector<128x128xf32> -> vector<128x128xf32>
    %c0_8 = arith.constant 0 : index
    %c0_9 = arith.constant 0 : index
    %13 = vector.load %arg5[%c0_8, %c0_9] : memref<1x128xf32, #tpu.memory_space<vmem>>, vector<1x128xf32>
    %14 = vector.broadcast %13 : vector<1x128xf32> to vector<128x128xf32>
    %15 = arith.addf %12, %14 : vector<128x128xf32>
    %c0_10 = arith.constant 0 : index
    %c0_11 = arith.constant 0 : index
    %16 = vector.load %arg6[%c0_10, %c0_11] : memref<128x128xf32, #tpu.memory_space<vmem>>, vector<128x128xf32>
    tpu.vector_store %arg6[%c0_10, %c0_11], %15 {strides = array<i32>} : memref<128x128xf32, #tpu.memory_space<vmem>>, vector<128x128xf32>,
    return
  }
  func.func @transform_0(%arg0: i32) -> (i32, i32) {
    %c0_i32 = arith.constant 0 : i32
    %c0_i32_0 = arith.constant 0 : i32
    return %arg0, %c0_i32 : i32, i32
  }
  func.func @transform_1(%arg0: i32) -> (i32, i32) {
    %c0_i32 = arith.constant 0 : i32
    %c0_i32_0 = arith.constant 0 : i32
    %c0_i32_1 = arith.constant 0 : i32
    return %c0_i32, %c0_i32_0 : i32, i32
  }
  func.func @transform_2(%arg0: i32) -> (i32, i32) {
    %c0_i32 = arith.constant 0 : i32
    %c0_i32_0 = arith.constant 0 : i32
    %c0_i32_1 = arith.constant 0 : i32
    return %c0_i32, %c0_i32_0 : i32, i32
  }
  func.func @transform_3(%arg0: i32) -> (i32, i32) {
    %c0_i32 = arith.constant 0 : i32
    %c0_i32_0 = arith.constant 0 : i32
    %c0_i32_1 = arith.constant 0 : i32
    return %c0_i32, %c0_i32_0 : i32, i32
  }
  func.func @transform_4(%arg0: i32) -> (i32, i32) {
    %c0_i32 = arith.constant 0 : i32
    %c0_i32_0 = arith.constant 0 : i32
    %c0_i32_1 = arith.constant 0 : i32
    return %c0_i32, %c0_i32_0 : i32, i32
  }
  func.func @transform_5(%arg0: i32) -> (i32, i32) {
    %c0_i32 = arith.constant 0 : i32
    %c0_i32_0 = arith.constant 0 : i32
    return %arg0, %c0_i32 : i32, i32
  }
}

</mosaic_0001>

<llo_original>
// kernel: pose_resnet_forward.101
$region0: #{pose_resnet_forward.101}
  #allocation0 [shape = 'u32[]', space=smem, size = 0x4, offset = 0x4, fixed_abs, tag = 'smem constant byte address 0x4 - core index']
  #allocation1 [shape = 'u32[144,128]{1,0:T(1,128)}', space=vmem, size = 0x12000, scoped, tag = 'internal scratch']
  %s0 = inlined_call_operand.vmem [shape: bf16[128,36], index: 0, kind: input, shape index: {}]
  %s1 = inlined_call_operand.vmem [shape: bf16[36,128], index: 1, kind: input, shape index: {}]
  %s2 = inlined_call_operand.vmem [shape: f32[1,128], index: 2, kind: input, shape index: {}]
  %s3 = inlined_call_operand.vmem [shape: bf16[128,128], index: 3, kind: output, shape index: {}]
  %s4 = sld [smem:[#allocation0]]
  $region22: #{pose_resnet_forward.101} parent=0
    _
  %s6 = ssub.s32 1, %s4
  %s7 = scalar_select 0, %s6, %s4
  // Predicated region
  $region2: #{pose_resnet_forward.101} parent=0 // pred_check
    _
  $region3: #{pose_resnet_forward.101} parent=0 // pred_check_branch
    %9 = sbr.rel (0) target = $region5
  $region4: #{pose_resnet_forward.101} parent=0 // pred_region
    _
  $region5: #{pose_resnet_forward.101} parent=0 // pred_fallthru
    _
  // Predicated region
  $region6: #{pose_resnet_forward.101} parent=0 // pred_check
    _
  $region7: #{pose_resnet_forward.101} parent=0 // pred_check_branch
    %11 = sbr.rel (0) target = $region9
  $region8: #{pose_resnet_forward.101} parent=0 // pred_region
    _
  $region9: #{pose_resnet_forward.101} parent=0 // pred_fallthru
    _
  // Predicated region
  $region10: #{pose_resnet_forward.101} parent=0 // pred_check
    _
  $region11: #{pose_resnet_forward.101} parent=0 // pred_check_branch
    %13 = sbr.rel (0) target = $region13
  $region12: #{pose_resnet_forward.101} parent=0 // pred_region
    _
  $region13: #{pose_resnet_forward.101} parent=0 // pred_fallthru
    _
  %v15 = vld [vmem:[%s0] sm:$0xf]
  %v16 = vld [vmem:[%s0 + $0x4] sm:$0xf]
  %v17 = vld [vmem:[%s0 + $0x8] sm:$0xf]
  %v18 = vld [vmem:[%s0 + $0xc] sm:$0xf]
  %v19 = vld [vmem:[%s0 + $0x10] sm:$0xf]
  %v20 = vld [vmem:[%s0 + $0x14] sm:$0xf]
  %v21 = vld [vmem:[%s0 + $0x18] sm:$0xf]
  %v22 = vld [vmem:[%s0 + $0x1c] sm:$0xf]
  %v23 = vld [vmem:[%s0 + $0x20] sm:$0xf]
  %v24 = vld [vmem:[%s0 + $0x24] sm:$0xf]
  %v25 = vld [vmem:[%s0 + $0x28] sm:$0xf]
  %v26 = vld [vmem:[%s0 + $0x2c] sm:$0xf]
  %v27 = vld [vmem:[%s0 + $0x30] sm:$0xf]
  %v28 = vld [vmem:[%s0 + $0x34] sm:$0xf]
  %v29 = vld [vmem:[%s0 + $0x38] sm:$0xf]
  %v30 = vld [vmem:[%s0 + $0x3c] sm:$0xf]
  %v31 = vld [vmem:[%s1] sm:$0xf]
  %v32 = vld [vmem:[%s1 + $0x4] sm:$0xf]
  %v33 = vld [vmem:[%s1 + $0x8] sm:$0xf]
  %v34 = vld [vmem:[%s1 + $0xc] sm:$0xf]
  %v35 = vld [vmem:[%s1 + $0x10] sm:$0x3]
  %v36 = vld [vmem:[%s2] sm:$0x1]
  %v38 = vlaneseq
  %v39 = vshrl.u32 %v38, 7
  %v40 = vsub.s32 0, %v39
  %v41 = vrot.slane %v36, %v40
  %v59 = vunpack.c.l.b16 %v15
  %v60 = vunpack.c.l.b16 %v16
  %v61 = vunpack.c.l.b16 %v17
  %v62 = vunpack.c.l.b16 %v18
  %v63 = vunpack.c.l.b16 %v19
  %v64 = vunpack.c.l.b16 %v20
  %v65 = vunpack.c.l.b16 %v21
  %v66 = vunpack.c.l.b16 %v22
  %v67 = vunpack.c.l.b16 %v23
  %v68 = vunpack.c.l.b16 %v24
  %v69 = vunpack.c.l.b16 %v25
  %v70 = vunpack.c.l.b16 %v26
  %v71 = vunpack.c.l.b16 %v27
  %v72 = vunpack.c.l.b16 %v28
  %v73 = vunpack.c.l.b16 %v29
  %v74 = vunpack.c.l.b16 %v30
  %v75 = vpack.c.b16 %v60, %v59
  %v76 = vpack.c.b16 %v62, %v61
  %v77 = vpack.c.b16 %v64, %v63
  %v78 = vpack.c.b16 %v66, %v65
  %v79 = vpack.c.b16 %v68, %v67
  %v80 = vpack.c.b16 %v70, %v69
  %v81 = vpack.c.b16 %v72, %v71
  %v82 = vpack.c.b16 %v74, %v73
  %v88 = vunpack.c.l.b16 %v31
  %v89 = vunpack.c.l.b16 %v32
  %v90 = vunpack.c.l.b16 %v33
  %v91 = vunpack.c.l.b16 %v34
  %v92 = vunpack.c.l.b16 %v35
  %v93 = vpack.c.b16 %v89, %v88
  %v94 = vpack.c.b16 %v91, %v90
  %v95 = vpack.c.b16 %v92, %v92
  %vm98 = vcmask 293888
  %v100 = vsel %vm98, %v75, 0
  %v103 = vsel %vm98, %v76, 0
  %v106 = vsel %vm98, %v77, 0
  %v109 = vsel %vm98, %v78, 0
  %v112 = vsel %vm98, %v79, 0
  %v115 = vsel %vm98, %v80, 0
  %v118 = vsel %vm98, %v81, 0
  %v121 = vsel %vm98, %v82, 0
  %vm123 = vcmask 1041408
  %v125 = vsel %vm123, %v95, 0
  %127 = vmatprep.subr.bf16.mxu0 0
  %128 = vmatpush1.bf16.msra.mxu0 %v93
  %129 = vmatprep.subr.bf16.mxu0 0
  %130 = vmatpush1.bf16.msra.mxu0 %v94
  %131 = vmatprep.subr.bf16.mxu0 0
  %132 = vmatpush1.bf16.msra.mxu0 %v125
  %133 = vmatprep.subr.bf16.mxu0 0
  %134 = vmatpush1.bf16.msra.mxu0 0
  %135 = vmatprep.subr.bf16.mxu0 0
  %136 = vmatpush1.bf16.msra.mxu0 0
  %137 = vmatprep.subr.bf16.mxu0 0
  %138 = vmatpush1.bf16.msra.mxu0 0
  %139 = vmatprep.subr.bf16.mxu0 0
  %140 = vmatpush1.bf16.msra.mxu0 0
  %141 = vmatprep.subr.bf16.mxu0 0
  %142 = vmatpush1.bf16.msra.mxu0 0
  %143 = vmatprep.subr.bf16.mxu0 0
  %144 = vmatpush1.bf16.msra.mxu0 0
  %145 = vmatprep.subr.bf16.mxu0 0
  %146 = vmatpush1.bf16.msra.mxu0 0
  %147 = vmatprep.subr.bf16.mxu0 0
  %148 = vmatpush1.bf16.msra.mxu0 0
  %149 = vmatprep.subr.bf16.mxu0 0
  %150 = vmatpush1.bf16.msra.mxu0 0
  %151 = vmatprep.subr.bf16.mxu0 0
  %152 = vmatpush1.bf16.msra.mxu0 0
  %153 = vmatprep.subr.bf16.mxu0 0
  %154 = vmatpush1.bf16.msra.mxu0 0
  %155 = vmatprep.subr.bf16.mxu0 0
  %156 = vmatpush1.bf16.msra.mxu0 0
  %157 = vmatprep.subr.bf16.mxu0 0
  %158 = vmatpush1.bf16.msra.mxu0 0
  %159 = vmatprep.mubr.bf16.mxu0 0
  %160 = vmatmul.mubr.bf16.gmra.mrb[0].mxu0 %v100
  %v161 = vpop.f32.mrb[0].mxu0
  %v162 = vadd.f32 %v41, %v161
  %v163 = vpop.f32.mrb[0].mxu0
  %v164 = vpop.f32.mrb[0].mxu0
  %v165 = vadd.f32 %v41, %v164
  %v166 = vpop.f32.mrb[0].mxu0
  %167 = vmatprep.mubr.bf16.mxu0 0
  %168 = vmatmul.mubr.bf16.gmra.mrb[0].mxu0 %v103
  %v169 = vpop.f32.mrb[0].mxu0
  %v170 = vadd.f32 %v41, %v169
  %v171 = vpop.f32.mrb[0].mxu0
  %v172 = vpop.f32.mrb[0].mxu0
  %v173 = vadd.f32 %v41, %v172
  %v174 = vpop.f32.mrb[0].mxu0
  %175 = vmatprep.mubr.bf16.mxu0 0
  %176 = vmatmul.mubr.bf16.gmra.mrb[0].mxu0 %v106
  %v177 = vpop.f32.mrb[0].mxu0
  %v178 = vadd.f32 %v41, %v177
  %v179 = vpop.f32.mrb[0].mxu0
  %v180 = vpop.f32.mrb[0].mxu0
  %v181 = vadd.f32 %v41, %v180
  %v182 = vpop.f32.mrb[0].mxu0
  %183 = vmatprep.mubr.bf16.mxu0 0
  %184 = vmatmul.mubr.bf16.gmra.mrb[0].mxu0 %v109
  %v185 = vpop.f32.mrb[0].mxu0
  %v186 = vadd.f32 %v41, %v185
  %v187 = vpop.f32.mrb[0].mxu0
  %v188 = vpop.f32.mrb[0].mxu0
  %v189 = vadd.f32 %v41, %v188
  %v190 = vpop.f32.mrb[0].mxu0
  %191 = vmatprep.mubr.bf16.mxu0 0
  %192 = vmatmul.mubr.bf16.gmra.mrb[0].mxu0 %v112
  %v193 = vpop.f32.mrb[0].mxu0
  %v194 = vadd.f32 %v41, %v193
  %v195 = vpop.f32.mrb[0].mxu0
  %v196 = vpop.f32.mrb[0].mxu0
  %v197 = vadd.f32 %v41, %v196
  %v198 = vpop.f32.mrb[0].mxu0
  %199 = vmatprep.mubr.bf16.mxu0 0
  %200 = vmatmul.mubr.bf16.gmra.mrb[0].mxu0 %v115
  %v201 = vpop.f32.mrb[0].mxu0
  %v202 = vadd.f32 %v41, %v201
  %v203 = vpop.f32.mrb[0].mxu0
  %v204 = vpop.f32.mrb[0].mxu0
  %v205 = vadd.f32 %v41, %v204
  %v206 = vpop.f32.mrb[0].mxu0
  %207 = vmatprep.mubr.bf16.mxu0 0
  %208 = vmatmul.mubr.bf16.gmra.mrb[0].mxu0 %v118
  %v209 = vpop.f32.mrb[0].mxu0
  %v210 = vadd.f32 %v41, %v209
  %v211 = vpop.f32.mrb[0].mxu0
  %v212 = vpop.f32.mrb[0].mxu0
  %v213 = vadd.f32 %v41, %v212
  %v214 = vpop.f32.mrb[0].mxu0
  %215 = vmatprep.mubr.bf16.mxu0 0
  %216 = vmatmul.mubr.bf16.gmra.mrb[0].mxu0 %v121
  %v217 = vpop.f32.mrb[0].mxu0
  %v218 = vadd.f32 %v41, %v217
  %v219 = vpop.f32.mrb[0].mxu0
  %v220 = vpop.f32.mrb[0].mxu0
  %v221 = vadd.f32 %v41, %v220
  %v222 = vpop.f32.mrb[0].mxu0
  %223 = vdwg.mxu0
  %v224 = vmax.f32 %v162, 0.0
  %v225 = vmax.f32 %v165, 0.0
  %v226 = vmax.f32 %v170, 0.0
  %v227 = vmax.f32 %v173, 0.0
  %v228 = vmax.f32 %v178, 0.0
  %v229 = vmax.f32 %v181, 0.0
  %v230 = vmax.f32 %v186, 0.0
  %v231 = vmax.f32 %v189, 0.0
  %v232 = vmax.f32 %v194, 0.0
  %v233 = vmax.f32 %v197, 0.0
  %v234 = vmax.f32 %v202, 0.0
  %v235 = vmax.f32 %v205, 0.0
  %v236 = vmax.f32 %v210, 0.0
  %v237 = vmax.f32 %v213, 0.0
  %v238 = vmax.f32 %v218, 0.0
  %v239 = vmax.f32 %v221, 0.0
  %v240 = vpack.c.bf16 %v225, %v224
  %v241 = vpack.c.bf16 %v227, %v226
  %v242 = vpack.c.bf16 %v229, %v228
  %v243 = vpack.c.bf16 %v231, %v230
  %v244 = vpack.c.bf16 %v233, %v232
  %v245 = vpack.c.bf16 %v235, %v234
  %v246 = vpack.c.bf16 %v237, %v236
  %v247 = vpack.c.bf16 %v239, %v238
  %v256 = vunpack.c.l.b16 %v240
  %v257 = vunpack.c.h.b16 %v240
  %v258 = vunpack.c.l.b16 %v241
  %v259 = vunpack.c.h.b16 %v241
  %v260 = vunpack.c.l.b16 %v242
  %v261 = vunpack.c.h.b16 %v242
  %v262 = vunpack.c.l.b16 %v243
  %v263 = vunpack.c.h.b16 %v243
  %v264 = vunpack.c.l.b16 %v244
  %v265 = vunpack.c.h.b16 %v244
  %v266 = vunpack.c.l.b16 %v245
  %v267 = vunpack.c.h.b16 %v245
  %v268 = vunpack.c.l.b16 %v246
  %v269 = vunpack.c.h.b16 %v246
  %v270 = vunpack.c.l.b16 %v247
  %v271 = vunpack.c.h.b16 %v247
  %v272 = vpack.c.b16 %v256, %v256
  %v273 = vpack.c.b16 %v257, %v257
  %v274 = vpack.c.b16 %v258, %v258
  %v275 = vpack.c.b16 %v259, %v259
  %v276 = vpack.c.b16 %v260, %v260
  %v277 = vpack.c.b16 %v261, %v261
  %v278 = vpack.c.b16 %v262, %v262
  %v279 = vpack.c.b16 %v263, %v263
  %v280 = vpack.c.b16 %v264, %v264
  %v281 = vpack.c.b16 %v265, %v265
  %v282 = vpack.c.b16 %v266, %v266
  %v283 = vpack.c.b16 %v267, %v267
  %v284 = vpack.c.b16 %v268, %v268
  %v285 = vpack.c.b16 %v269, %v269
  %v286 = vpack.c.b16 %v270, %v270
  %v287 = vpack.c.b16 %v271, %v271
  %304 = vst [vmem:[%s3] sm:$0xf] %v272
  %305 = vst [vmem:[%s3 + $0x4] sm:$0xf] %v273
  %306 = vst [vmem:[%s3 + $0x8] sm:$0xf] %v274
  %307 = vst [vmem:[%s3 + $0xc] sm:$0xf] %v275
  %308 = vst [vmem:[%s3 + $0x10] sm:$0xf] %v276
  %309 = vst [vmem:[%s3 + $0x14] sm:$0xf] %v277
  %310 = vst [vmem:[%s3 + $0x18] sm:$0xf] %v278
  %311 = vst [vmem:[%s3 + $0x1c] sm:$0xf] %v279
  %312 = vst [vmem:[%s3 + $0x20] sm:$0xf] %v280
  %313 = vst [vmem:[%s3 + $0x24] sm:$0xf] %v281
  %314 = vst [vmem:[%s3 + $0x28] sm:$0xf] %v282
  %315 = vst [vmem:[%s3 + $0x2c] sm:$0xf] %v283
  %316 = vst [vmem:[%s3 + $0x30] sm:$0xf] %v284
  %317 = vst [vmem:[%s3 + $0x34] sm:$0xf] %v285
  %318 = vst [vmem:[%s3 + $0x38] sm:$0xf] %v286
  %319 = vst [vmem:[%s3 + $0x3c] sm:$0xf] %v287
  // Predicated region
  $region14: #{pose_resnet_forward.101} parent=0 // pred_check
    _
  $region15: #{pose_resnet_forward.101} parent=0 // pred_check_branch
    %321 = sbr.rel (0) target = $region17
  $region16: #{pose_resnet_forward.101} parent=0 // pred_region
    _
  $region17: #{pose_resnet_forward.101} parent=0 // pred_fallthru
    _
  // Predicated region
  $region18: #{pose_resnet_forward.101} parent=0 // pred_check
    _
  $region19: #{pose_resnet_forward.101} parent=0 // pred_check_branch
    %323 = sbr.rel (0) target = $region21
  $region20: #{pose_resnet_forward.101} parent=0 // pred_region
    _
  $region21: #{pose_resnet_forward.101} parent=0 // pred_fallthru
    _

// kernel: pose_resnet_forward.102
$region0: #{pose_resnet_forward.102}
  #allocation0 [shape = 'u32[]', space=smem, size = 0x4, offset = 0x4, fixed_abs, tag = 'smem constant byte address 0x4 - core index']
  #allocation1 [shape = 'u32[144,128]{1,0:T(1,128)}', space=vmem, size = 0x12000, scoped, tag = 'internal scratch']
  %s0 = inlined_call_operand.vmem [shape: bf16[9,32,128], index: 0, kind: input, shape index: {}]
  %s1 = inlined_call_operand.vmem [shape: bf16[32,128], index: 1, kind: output, shape index: {}]
  %s2 = sld [smem:[#allocation0]]
  $region14: #{pose_resnet_forward.102} parent=0
    _
  %s4 = ssub.s32 1, %s2
  %s5 = scalar_select 0, %s4, %s2
  // Predicated region
  $region2: #{pose_resnet_forward.102} parent=0 // pred_check
    _
  $region3: #{pose_resnet_forward.102} parent=0 // pred_check_branch
    %7 = sbr.rel (0) target = $region5
  $region4: #{pose_resnet_forward.102} parent=0 // pred_region
    _
  $region5: #{pose_resnet_forward.102} parent=0 // pred_fallthru
    _
  %v8 = vld [vmem:[%s0] sm:$0xf]
  %v9 = vld [vmem:[%s0 + $0x4] sm:$0xf]
  %v10 = vld [vmem:[%s0 + $0x8] sm:$0xf]
  %v11 = vld [vmem:[%s0 + $0xc] sm:$0xf]
  %s12 = scalar_lea.vmem %s0, 16
  %v13 = vld [vmem:[%s12] sm:$0xf]
  %v14 = vld [vmem:[%s12 + $0x4] sm:$0xf]
  %v15 = vld [vmem:[%s12 + $0x8] sm:$0xf]
  %v16 = vld [vmem:[%s12 + $0xc] sm:$0xf]
  %v17 = vmax.bf16 %v8, %v13
  %v18 = vmax.bf16 %v9, %v14
  %v19 = vmax.bf16 %v10, %v15
  %v20 = vmax.bf16 %v11, %v16
  %s21 = scalar_lea.vmem %s0, 32
  %v22 = vld [vmem:[%s21] sm:$0xf]
  %v23 = vld [vmem:[%s21 + $0x4] sm:$0xf]
  %v24 = vld [vmem:[%s21 + $0x8] sm:$0xf]
  %v25 = vld [vmem:[%s21 + $0xc] sm:$0xf]
  %v26 = vmax.bf16 %v17, %v22
  %v27 = vmax.bf16 %v18, %v23
  %v28 = vmax.bf16 %v19, %v24
  %v29 = vmax.bf16 %v20, %v25
  %s30 = scalar_lea.vmem %s0, 48
  %v31 = vld [vmem:[%s30] sm:$0xf]
  %v32 = vld [vmem:[%s30 + $0x4] sm:$0xf]
  %v33 = vld [vmem:[%s30 + $0x8] sm:$0xf]
  %v34 = vld [vmem:[%s30 + $0xc] sm:$0xf]
  %v35 = vmax.bf16 %v26, %v31
  %v36 = vmax.bf16 %v27, %v32
  %v37 = vmax.bf16 %v28, %v33
  %v38 = vmax.bf16 %v29, %v34
  %s39 = scalar_lea.vmem %s0, 64
  %v40 = vld [vmem:[%s39] sm:$0xf]
  %v41 = vld [vmem:[%s39 + $0x4] sm:$0xf]
  %v42 = vld [vmem:[%s39 + $0x8] sm:$0xf]
  %v43 = vld [vmem:[%s39 + $0xc] sm:$0xf]
  %v44 = vmax.bf16 %v35, %v40
  %v45 = vmax.bf16 %v36, %v41
  %v46 = vmax.bf16 %v37, %v42
  %v47 = vmax.bf16 %v38, %v43
  %s48 = scalar_lea.vmem %s0, 80
  %v49 = vld [vmem:[%s48] sm:$0xf]
  %v50 = vld [vmem:[%s48 + $0x4] sm:$0xf]
  %v51 = vld [vmem:[%s48 + $0x8] sm:$0xf]
  %v52 = vld [vmem:[%s48 + $0xc] sm:$0xf]
  %v53 = vmax.bf16 %v44, %v49
  %v54 = vmax.bf16 %v45, %v50
  %v55 = vmax.bf16 %v46, %v51
  %v56 = vmax.bf16 %v47, %v52
  %s57 = scalar_lea.vmem %s0, 96
  %v58 = vld [vmem:[%s57] sm:$0xf]
  %v59 = vld [vmem:[%s57 + $0x4] sm:$0xf]
  %v60 = vld [vmem:[%s57 + $0x8] sm:$0xf]
  %v61 = vld [vmem:[%s57 + $0xc] sm:$0xf]
  %v62 = vmax.bf16 %v53, %v58
  %v63 = vmax.bf16 %v54, %v59
  %v64 = vmax.bf16 %v55, %v60
  %v65 = vmax.bf16 %v56, %v61
  %s66 = scalar_lea.vmem %s0, 112
  %v67 = vld [vmem:[%s66] sm:$0xf]
  %v68 = vld [vmem:[%s66 + $0x4] sm:$0xf]
  %v69 = vld [vmem:[%s66 + $0x8] sm:$0xf]
  %v70 = vld [vmem:[%s66 + $0xc] sm:$0xf]
  %v71 = vmax.bf16 %v62, %v67
  %v72 = vmax.bf16 %v63, %v68
  %v73 = vmax.bf16 %v64, %v69
  %v74 = vmax.bf16 %v65, %v70
  %s75 = scalar_lea.vmem %s0, 128
  %v76 = vld [vmem:[%s75] sm:$0xf]
  %v77 = vld [vmem:[%s75 + $0x4] sm:$0xf]
  %v78 = vld [vmem:[%s75 + $0x8] sm:$0xf]
  %v79 = vld [vmem:[%s75 + $0xc] sm:$0xf]
  %v80 = vmax.bf16 %v71, %v76
  %v81 = vmax.bf16 %v72, %v77
  %v82 = vmax.bf16 %v73, %v78
  %v83 = vmax.bf16 %v74, %v79
  %84 = vst [vmem:[%s1] sm:$0xf] %v80
  %85 = vst [vmem:[%s1 + $0x4] sm:$0xf] %v81
  %86 = vst [vmem:[%s1 + $0x8] sm:$0xf] %v82
  %87 = vst [vmem:[%s1 + $0xc] sm:$0xf] %v83
  // Predicated region
  $region6: #{pose_resnet_forward.102} parent=0 // pred_check
    _
  $region7: #{pose_resnet_forward.102} parent=0 // pred_check_branch
    %89 = sbr.rel (0) target = $region9
  $region8: #{pose_resnet_forward.102} parent=0 // pred_region
    _
  $region9: #{pose_resnet_forward.102} parent=0 // pred_fallthru
    _
  // Predicated region
  $region10: #{pose_resnet_forward.102} parent=0 // pred_check
    _
  $region11: #{pose_resnet_forward.102} parent=0 // pred_check_branch
    %91 = sbr.rel (0) target = $region13
  $region12: #{pose_resnet_forward.102} parent=0 // pred_region
    _
  $region13: #{pose_resnet_forward.102} parent=0 // pred_fallthru
    _

// kernel: pose_resnet_forward.103
$region0: #{pose_resnet_forward.103}
  #allocation0 [shape = 'u32[]', space=smem, size = 0x4, offset = 0x4, fixed_abs, tag = 'smem constant byte address 0x4 - core index']
  #allocation1 [shape = 'u32[144,128]{1,0:T(1,128)}', space=vmem, size = 0x12000, scoped, tag = 'internal scratch']
  %s0 = inlined_call_operand.vmem [shape: bf16[32,128], index: 0, kind: input, shape index: {}]
  %s1 = inlined_call_operand.vmem [shape: bf16[128,128], index: 1, kind: input, shape index: {}]
  %s2 = inlined_call_operand.vmem [shape: bf16[32,128], index: 2, kind: output, shape index: {0}]
  %s3 = inlined_call_operand.vmem [shape: f32[8,128], index: 3, kind: output, shape index: {1}]
  %s4 = inlined_call_operand.vmem [shape: f32[8,128], index: 4, kind: output, shape index: {2}]
  %5 = xla_tuple %s2, %s3, %s4
  %s6 = sld [smem:[#allocation0]]
  $region34: #{pose_resnet_forward.103} parent=0
    _
  %s8 = ssub.s32 1, %s6
  %s9 = scalar_select 0, %s8, %s6
  // Predicated region
  $region2: #{pose_resnet_forward.103} parent=0 // pred_check
    _
  $region3: #{pose_resnet_forward.103} parent=0 // pred_check_branch
    %11 = sbr.rel (0) target = $region5
  $region4: #{pose_resnet_forward.103} parent=0 // pred_region
    _
  $region5: #{pose_resnet_forward.103} parent=0 // pred_fallthru
    _
  // Predicated region
  $region6: #{pose_resnet_forward.103} parent=0 // pred_check
    _
  $region7: #{pose_resnet_forward.103} parent=0 // pred_check_branch
    %13 = sbr.rel (0) target = $region9
  $region8: #{pose_resnet_forward.103} parent=0 // pred_region
    _
  $region9: #{pose_resnet_forward.103} parent=0 // pred_fallthru
    _
  %v15 = vld [vmem:[%s0] sm:$0xf]
  %v16 = vld [vmem:[%s0 + $0x4] sm:$0xf]
  %v17 = vld [vmem:[%s0 + $0x8] sm:$0xf]
  %v18 = vld [vmem:[%s0 + $0xc] sm:$0xf]
  %v19 = vld [vmem:[%s1] sm:$0xf]
  %v20 = vld [vmem:[%s1 + $0x4] sm:$0xf]
  %v21 = vld [vmem:[%s1 + $0x8] sm:$0xf]
  %v22 = vld [vmem:[%s1 + $0xc] sm:$0xf]
  %v23 = vld [vmem:[%s1 + $0x10] sm:$0xf]
  %v24 = vld [vmem:[%s1 + $0x14] sm:$0xf]
  %v25 = vld [vmem:[%s1 + $0x18] sm:$0xf]
  %v26 = vld [vmem:[%s1 + $0x1c] sm:$0xf]
  %v27 = vld [vmem:[%s1 + $0x20] sm:$0xf]
  %v28 = vld [vmem:[%s1 + $0x24] sm:$0xf]
  %v29 = vld [vmem:[%s1 + $0x28] sm:$0xf]
  %v30 = vld [vmem:[%s1 + $0x2c] sm:$0xf]
  %v31 = vld [vmem:[%s1 + $0x30] sm:$0xf]
  %v32 = vld [vmem:[%s1 + $0x34] sm:$0xf]
  %v33 = vld [vmem:[%s1 + $0x38] sm:$0xf]
  %v34 = vld [vmem:[%s1 + $0x3c] sm:$0xf]
  %v39 = vunpack.c.l.b16 %v15
  %v40 = vunpack.c.l.b16 %v16
  %v41 = vunpack.c.l.b16 %v17
  %v42 = vunpack.c.l.b16 %v18
  %v43 = vpack.c.b16 %v40, %v39
  %v44 = vpack.c.b16 %v42, %v41
  %v63 = vunpack.c.l.b16 %v19
  %v64 = vunpack.c.l.b16 %v20
  %v65 = vunpack.c.l.b16 %v21
  %v66 = vunpack.c.l.b16 %v22
  %v67 = vunpack.c.l.b16 %v23
  %v68 = vunpack.c.l.b16 %v24
  %v69 = vunpack.c.l.b16 %v25
  %v70 = vunpack.c.l.b16 %v26
  %v71 = vunpack.c.l.b16 %v27
  %v72 = vunpack.c.l.b16 %v28
  %v73 = vunpack.c.l.b16 %v29
  %v74 = vunpack.c.l.b16 %v30
  %v75 = vunpack.c.l.b16 %v31
  %v76 = vunpack.c.l.b16 %v32
  %v77 = vunpack.c.l.b16 %v33
  %v78 = vunpack.c.l.b16 %v34
  %v79 = vpack.c.b16 %v64, %v63
  %v80 = vpack.c.b16 %v66, %v65
  %v81 = vpack.c.b16 %v68, %v67
  %v82 = vpack.c.b16 %v70, %v69
  %v83 = vpack.c.b16 %v72, %v71
  %v84 = vpack.c.b16 %v74, %v73
  %v85 = vpack.c.b16 %v76, %v75
  %v86 = vpack.c.b16 %v78, %v77
  %95 = vmatprep.subr.bf16.mxu0 0
  %96 = vmatpush1.bf16.msra.mxu0 %v79
  %97 = vmatprep.subr.bf16.mxu0 0
  %98 = vmatpush1.bf16.msra.mxu0 %v80
  %99 = vmatprep.subr.bf16.mxu0 0
  %100 = vmatpush1.bf16.msra.mxu0 %v81
  %101 = vmatprep.subr.bf16.mxu0 0
  %102 = vmatpush1.bf16.msra.mxu0 %v82
  %103 = vmatprep.subr.bf16.mxu0 0
  %104 = vmatpush1.bf16.msra.mxu0 %v83
  %105 = vmatprep.subr.bf16.mxu0 0
  %106 = vmatpush1.bf16.msra.mxu0 %v84
  %107 = vmatprep.subr.bf16.mxu0 0
  %108 = vmatpush1.bf16.msra.mxu0 %v85
  %109 = vmatprep.subr.bf16.mxu0 0
  %110 = vmatpush1.bf16.msra.mxu0 %v86
  %111 = vmatprep.subr.bf16.mxu0 0
  %112 = vmatpush1.bf16.msra.mxu0 0
  %113 = vmatprep.subr.bf16.mxu0 0
  %114 = vmatpush1.bf16.msra.mxu0 0
  %115 = vmatprep.subr.bf16.mxu0 0
  %116 = vmatpush1.bf16.msra.mxu0 0
  %117 = vmatprep.subr.bf16.mxu0 0
  %118 = vmatpush1.bf16.msra.mxu0 0
  %119 = vmatprep.subr.bf16.mxu0 0
  %120 = vmatpush1.bf16.msra.mxu0 0
  %121 = vmatprep.subr.bf16.mxu0 0
  %122 = vmatpush1.bf16.msra.mxu0 0
  %123 = vmatprep.subr.bf16.mxu0 0
  %124 = vmatpush1.bf16.msra.mxu0 0
  %125 = vmatprep.subr.bf16.mxu0 0
  %126 = vmatpush1.bf16.msra.mxu0 0
  %127 = vmatprep.mubr.bf16.mxu0 0
  %128 = vmatmul.mubr.bf16.gmra.mrb[0].mxu0 %v43
  %v129 = vpop.f32.mrb[0].mxu0
  %v130 = vadd.f32 0.0, %v129
  %v131 = vpop.f32.mrb[0].mxu0
  %v132 = vpop.f32.mrb[0].mxu0
  %v133 = vadd.f32 0.0, %v132
  %v134 = vpop.f32.mrb[0].mxu0
  %135 = vmatprep.mubr.bf16.mxu0 0
  %136 = vmatmul.mubr.bf16.gmra.mrb[0].mxu0 %v44
  %v137 = vpop.f32.mrb[0].mxu0
  %v138 = vadd.f32 0.0, %v137
  %v139 = vpop.f32.mrb[0].mxu0
  %v140 = vpop.f32.mrb[0].mxu0
  %v141 = vadd.f32 0.0, %v140
  %v142 = vpop.f32.mrb[0].mxu0
  %143 = vdwg.mxu0
  %v144 = vpack.c.bf16 %v133, %v130
  %v145 = vpack.c.bf16 %v141, %v138
  %v148 = vunpack.c.l.b16 %v144
  %v149 = vunpack.c.h.b16 %v144
  %v150 = vunpack.c.l.b16 %v145
  %v151 = vunpack.c.h.b16 %v145
  %v152 = vpack.c.b16 %v148, %v148
  %v153 = vpack.c.b16 %v149, %v149
  %v154 = vpack.c.b16 %v150, %v150
  %v155 = vpack.c.b16 %v151, %v151
  %160 = vst [vmem:[%s2] sm:$0xf] %v152
  %161 = vst [vmem:[%s2 + $0x4] sm:$0xf] %v153
  %162 = vst [vmem:[%s2 + $0x8] sm:$0xf] %v154
  %163 = vst [vmem:[%s2 + $0xc] sm:$0xf] %v155
  %v164 = vadd.f32 %v130, %v133
  %v165 = vadd.f32 %v164, %v138
  %v166 = vadd.f32 %v165, %v141
  %v167 = vrot.slane %v166, 4
  %v168 = vadd.f32 %v166, %v167
  %v169 = vrot.slane %v168, 2
  %v170 = vadd.f32 %v168, %v169
  %v171 = vrot.slane %v170, 1
  %v172 = vadd.f32 %v170, %v171
  %v173 = vmul.f32 %v130, %v130
  %v174 = vmul.f32 %v133, %v133
  %v175 = vmul.f32 %v138, %v138
  %v176 = vmul.f32 %v141, %v141
  %v177 = vadd.f32 %v173, %v174
  %v178 = vadd.f32 %v177, %v175
  %v179 = vadd.f32 %v178, %v176
  %v180 = vrot.slane %v179, 4
  %v181 = vadd.f32 %v179, %v180
  %v182 = vrot.slane %v181, 2
  %v183 = vadd.f32 %v181, %v182
  %v184 = vrot.slane %v183, 1
  %v185 = vadd.f32 %v183, %v184
  %186 = vst [vmem:[%s3] sm:$0xff] %v172
  %187 = vst [vmem:[%s4] sm:$0xff] %v185
  // Predicated region
  $region10: #{pose_resnet_forward.103} parent=0 // pred_check
    _
  $region11: #{pose_resnet_forward.103} parent=0 // pred_check_branch
    %189 = sbr.rel (0) target = $region13
  $region12: #{pose_resnet_forward.103} parent=0 // pred_region
    _
  $region13: #{pose_resnet_forward.103} parent=0 // pred_fallthru
    _
  // Predicated region
  $region14: #{pose_resnet_forward.103} parent=0 // pred_check
    _
  $region15: #{pose_resnet_forward.103} parent=0 // pred_check_branch
    %191 = sbr.rel (0) target = $region17
  $region16: #{pose_resnet_forward.103} parent=0 // pred_region
    _
  $region17: #{pose_resnet_forward.103} parent=0 // pred_fallthru
    _
  // Predicated region
  $region18: #{pose_resnet_forward.103} parent=0 // pred_check
    _
  $region19: #{pose_resnet_forward.103} parent=0 // pred_check_branch
    %193 = sbr.rel (0) target = $region21
  $region20: #{pose_resnet_forward.103} parent=0 // pred_region
    _
  $region21: #{pose_resnet_forward.103} parent=0 // pred_fallthru
    _
  // Predicated region
  $region22: #{pose_resnet_forward.103} parent=0 // pred_check
    _
  $region23: #{pose_resnet_forward.103} parent=0 // pred_check_branch
    %195 = sbr.rel (0) target = $region25
  $region24: #{pose_resnet_forward.103} parent=0 // pred_region
    _
  $region25: #{pose_resnet_forward.103} parent=0 // pred_fallthru
    _
  // Predicated region
  $region26: #{pose_resnet_forward.103} parent=0 // pred_check
    _
  $region27: #{pose_resnet_forward.103} parent=0 // pred_check_branch
    %197 = sbr.rel (0) target = $region29
  $region28: #{pose_resnet_forward.103} parent=0 // pred_region
    _
  $region29: #{pose_resnet_forward.103} parent=0 // pred_fallthru
    _
  // Predicated region
  $region30: #{pose_resnet_forward.103} parent=0 // pred_check
    _
  $region31: #{pose_resnet_forward.103} parent=0 // pred_check_branch
    %199 = sbr.rel (0) target = $region33
  $region32: #{pose_resnet_forward.103} parent=0 // pred_region
    _
  $region33: #{pose_resnet_forward.103} parent=0 // pred_fallthru
    _

// kernel: pose_resnet_forward.104
$region0: #{pose_resnet_forward.104}
  #allocation0 [shape = 'u32[]', space=smem, size = 0x4, offset = 0x4, fixed_abs, tag = 'smem constant byte address 0x4 - core index']
  #allocation1 [shape = 'u32[144,128]{1,0:T(1,128)}', space=vmem, size = 0x12000, scoped, tag = 'internal scratch']
  %s0 = inlined_call_operand.vmem [shape: bf16[32,128], index: 0, kind: input, shape index: {}]
  %s1 = inlined_call_operand.vmem [shape: f32[1,128], index: 1, kind: input, shape index: {}]
  %s2 = inlined_call_operand.vmem [shape: f32[1,128], index: 2, kind: input, shape index: {}]
  %s3 = inlined_call_operand.vmem [shape: bf16[32,128], index: 3, kind: output, shape index: {}]
  %s4 = sld [smem:[#allocation0]]
  $region22: #{pose_resnet_forward.104} parent=0
    _
  %s6 = ssub.s32 1, %s4
  %s7 = scalar_select 0, %s6, %s4
  // Predicated region
  $region2: #{pose_resnet_forward.104} parent=0 // pred_check
    _
  $region3: #{pose_resnet_forward.104} parent=0 // pred_check_branch
    %9 = sbr.rel (0) target = $region5
  $region4: #{pose_resnet_forward.104} parent=0 // pred_region
    _
  $region5: #{pose_resnet_forward.104} parent=0 // pred_fallthru
    _
  // Predicated region
  $region6: #{pose_resnet_forward.104} parent=0 // pred_check
    _
  $region7: #{pose_resnet_forward.104} parent=0 // pred_check_branch
    %11 = sbr.rel (0) target = $region9
  $region8: #{pose_resnet_forward.104} parent=0 // pred_region
    _
  $region9: #{pose_resnet_forward.104} parent=0 // pred_fallthru
    _
  // Predicated region
  $region10: #{pose_resnet_forward.104} parent=0 // pred_check
    _
  $region11: #{pose_resnet_forward.104} parent=0 // pred_check_branch
    %13 = sbr.rel (0) target = $region13
  $region12: #{pose_resnet_forward.104} parent=0 // pred_region
    _
  $region13: #{pose_resnet_forward.104} parent=0 // pred_fallthru
    _
  %v14 = vld [vmem:[%s0] sm:$0xf]
  %v15 = vld [vmem:[%s0 + $0x4] sm:$0xf]
  %v16 = vld [vmem:[%s0 + $0x8] sm:$0xf]
  %v17 = vld [vmem:[%s0 + $0xc] sm:$0xf]
  %v18 = vunpack.c.l.bf16 %v14
  %v19 = vunpack.c.l.bf16 %v15
  %v20 = vunpack.c.l.bf16 %v16
  %v21 = vunpack.c.l.bf16 %v17
  %v22 = vld [vmem:[%s1] sm:$0x1]
  %v24 = vlaneseq
  %v25 = vshrl.u32 %v24, 7
  %v26 = vsub.s32 0, %v25
  %v27 = vrot.slane %v22, %v26
  %v29 = vmul.f32 %v18, %v27
  %v30 = vmul.f32 %v19, %v27
  %v31 = vmul.f32 %v20, %v27
  %v32 = vmul.f32 %v21, %v27
  %v33 = vld [vmem:[%s2] sm:$0x1]
  %v35 = vlaneseq
  %v36 = vshrl.u32 %v35, 7
  %v37 = vsub.s32 0, %v36
  %v38 = vrot.slane %v33, %v37
  %v40 = vadd.f32 %v29, %v38
  %v41 = vadd.f32 %v30, %v38
  %v42 = vadd.f32 %v31, %v38
  %v43 = vadd.f32 %v32, %v38
  %v44 = vmax.f32 %v40, 0.0
  %v45 = vmax.f32 %v41, 0.0
  %v46 = vmax.f32 %v42, 0.0
  %v47 = vmax.f32 %v43, 0.0
  %v48 = vpack.c.bf16 %v45, %v44
  %v49 = vpack.c.bf16 %v47, %v46
  %v52 = vunpack.c.l.b16 %v48
  %v53 = vunpack.c.h.b16 %v48
  %v54 = vunpack.c.l.b16 %v49
  %v55 = vunpack.c.h.b16 %v49
  %v56 = vpack.c.b16 %v52, %v52
  %v57 = vpack.c.b16 %v53, %v53
  %v58 = vpack.c.b16 %v54, %v54
  %v59 = vpack.c.b16 %v55, %v55
  %64 = vst [vmem:[%s3] sm:$0xf] %v56
  %65 = vst [vmem:[%s3 + $0x4] sm:$0xf] %v57
  %66 = vst [vmem:[%s3 + $0x8] sm:$0xf] %v58
  %67 = vst [vmem:[%s3 + $0xc] sm:$0xf] %v59
  // Predicated region
  $region14: #{pose_resnet_forward.104} parent=0 // pred_check
    _
  $region15: #{pose_resnet_forward.104} parent=0 // pred_check_branch
    %69 = sbr.rel (0) target = $region17
  $region16: #{pose_resnet_forward.104} parent=0 // pred_region
    _
  $region17: #{pose_resnet_forward.104} parent=0 // pred_fallthru
    _
  // Predicated region
  $region18: #{pose_resnet_forward.104} parent=0 // pred_check
    _
  $region19: #{pose_resnet_forward.104} parent=0 // pred_check_branch
    %71 = sbr.rel (0) target = $region21
  $region20: #{pose_resnet_forward.104} parent=0 // pred_region
    _
  $region21: #{pose_resnet_forward.104} parent=0 // pred_fallthru
    _

// kernel: pose_resnet_forward.108
$region0: #{pose_resnet_forward.108}
  #allocation0 [shape = 'u32[]', space=smem, size = 0x4, offset = 0x4, fixed_abs, tag = 'smem constant byte address 0x4 - core index']
  #allocation1 [shape = 'u32[144,128]{1,0:T(1,128)}', space=vmem, size = 0x12000, scoped, tag = 'internal scratch']
  %s0 = inlined_call_operand.vmem [shape: bf16[32,128], index: 0, kind: input, shape index: {}]
  %s1 = inlined_call_operand.vmem [shape: bf16[32,128], index: 1, kind: input, shape index: {}]
  %s2 = inlined_call_operand.vmem [shape: f32[1,128], index: 2, kind: input, shape index: {}]
  %s3 = inlined_call_operand.vmem [shape: f32[1,128], index: 3, kind: input, shape index: {}]
  %s4 = inlined_call_operand.vmem [shape: f32[1,128], index: 4, kind: input, shape index: {}]
  %s5 = inlined_call_operand.vmem [shape: f32[1,128], index: 5, kind: input, shape index: {}]
  %s6 = inlined_call_operand.vmem [shape: bf16[32,128], index: 6, kind: output, shape index: {}]
  %s7 = sld [smem:[#allocation0]]
  $region34: #{pose_resnet_forward.108} parent=0
    _
  %s9 = ssub.s32 1, %s7
  %s10 = scalar_select 0, %s9, %s7
  // Predicated region
  $region2: #{pose_resnet_forward.108} parent=0 // pred_check
    _
  $region3: #{pose_resnet_forward.108} parent=0 // pred_check_branch
    %12 = sbr.rel (0) target = $region5
  $region4: #{pose_resnet_forward.108} parent=0 // pred_region
    _
  $region5: #{pose_resnet_forward.108} parent=0 // pred_fallthru
    _
  // Predicated region
  $region6: #{pose_resnet_forward.108} parent=0 // pred_check
    _
  $region7: #{pose_resnet_forward.108} parent=0 // pred_check_branch
    %14 = sbr.rel (0) target = $region9
  $region8: #{pose_resnet_forward.108} parent=0 // pred_region
    _
  $region9: #{pose_resnet_forward.108} parent=0 // pred_fallthru
    _
  // Predicated region
  $region10: #{pose_resnet_forward.108} parent=0 // pred_check
    _
  $region11: #{pose_resnet_forward.108} parent=0 // pred_check_branch
    %16 = sbr.rel (0) target = $region13
  $region12: #{pose_resnet_forward.108} parent=0 // pred_region
    _
  $region13: #{pose_resnet_forward.108} parent=0 // pred_fallthru
    _
  // Predicated region
  $region14: #{pose_resnet_forward.108} parent=0 // pred_check
    _
  $region15: #{pose_resnet_forward.108} parent=0 // pred_check_branch
    %18 = sbr.rel (0) target = $region17
  $region16: #{pose_resnet_forward.108} parent=0 // pred_region
    _
  $region17: #{pose_resnet_forward.108} parent=0 // pred_fallthru
    _
  // Predicated region
  $region18: #{pose_resnet_forward.108} parent=0 // pred_check
    _
  $region19: #{pose_resnet_forward.108} parent=0 // pred_check_branch
    %20 = sbr.rel (0) target = $region21
  $region20: #{pose_resnet_forward.108} parent=0 // pred_region
    _
  $region21: #{pose_resnet_forward.108} parent=0 // pred_fallthru
    _
  // Predicated region
  $region22: #{pose_resnet_forward.108} parent=0 // pred_check
    _
  $region23: #{pose_resnet_forward.108} parent=0 // pred_check_branch
    %22 = sbr.rel (0) target = $region25
  $region24: #{pose_resnet_forward.108} parent=0 // pred_region
    _
  $region25: #{pose_resnet_forward.108} parent=0 // pred_fallthru
    _
  %v23 = vld [vmem:[%s0] sm:$0xf]
  %v24 = vld [vmem:[%s0 + $0x4] sm:$0xf]
  %v25 = vld [vmem:[%s0 + $0x8] sm:$0xf]
  %v26 = vld [vmem:[%s0 + $0xc] sm:$0xf]
  %v27 = vunpack.c.l.bf16 %v23
  %v28 = vunpack.c.l.bf16 %v24
  %v29 = vunpack.c.l.bf16 %v25
  %v30 = vunpack.c.l.bf16 %v26
  %v31 = vld [vmem:[%s2] sm:$0x1]
  %v33 = vlaneseq
  %v34 = vshrl.u32 %v33, 7
  %v35 = vsub.s32 0, %v34
  %v36 = vrot.slane %v31, %v35
  %v38 = vmul.f32 %v27, %v36
  %v39 = vmul.f32 %v28, %v36
  %v40 = vmul.f32 %v29, %v36
  %v41 = vmul.f32 %v30, %v36
  %v42 = vld [vmem:[%s3] sm:$0x1]
  %v44 = vlaneseq
  %v45 = vshrl.u32 %v44, 7
  %v46 = vsub.s32 0, %v45
  %v47 = vrot.slane %v42, %v46
  %v49 = vadd.f32 %v38, %v47
  %v50 = vadd.f32 %v39, %v47
  %v51 = vadd.f32 %v40, %v47
  %v52 = vadd.f32 %v41, %v47
  %v53 = vld [vmem:[%s1] sm:$0xf]
  %v54 = vld [vmem:[%s1 + $0x4] sm:$0xf]
  %v55 = vld [vmem:[%s1 + $0x8] sm:$0xf]
  %v56 = vld [vmem:[%s1 + $0xc] sm:$0xf]
  %v57 = vunpack.c.l.bf16 %v53
  %v58 = vunpack.c.l.bf16 %v54
  %v59 = vunpack.c.l.bf16 %v55
  %v60 = vunpack.c.l.bf16 %v56
  %v61 = vld [vmem:[%s4] sm:$0x1]
  %v63 = vlaneseq
  %v64 = vshrl.u32 %v63, 7
  %v65 = vsub.s32 0, %v64
  %v66 = vrot.slane %v61, %v65
  %v68 = vmul.f32 %v57, %v66
  %v69 = vmul.f32 %v58, %v66
  %v70 = vmul.f32 %v59, %v66
  %v71 = vmul.f32 %v60, %v66
  %v72 = vadd.f32 %v49, %v68
  %v73 = vadd.f32 %v50, %v69
  %v74 = vadd.f32 %v51, %v70
  %v75 = vadd.f32 %v52, %v71
  %v76 = vld [vmem:[%s5] sm:$0x1]
  %v78 = vlaneseq
  %v79 = vshrl.u32 %v78, 7
  %v80 = vsub.s32 0, %v79
  %v81 = vrot.slane %v76, %v80
  %v83 = vadd.f32 %v72, %v81
  %v84 = vadd.f32 %v73, %v81
  %v85 = vadd.f32 %v74, %v81
  %v86 = vadd.f32 %v75, %v81
  %v87 = vmax.f32 %v83, 0.0
  %v88 = vmax.f32 %v84, 0.0
  %v89 = vmax.f32 %v85, 0.0
  %v90 = vmax.f32 %v86, 0.0
  %v91 = vpack.c.bf16 %v88, %v87
  %v92 = vpack.c.bf16 %v90, %v89
  %v95 = vunpack.c.l.b16 %v91
  %v96 = vunpack.c.h.b16 %v91
  %v97 = vunpack.c.l.b16 %v92
  %v98 = vunpack.c.h.b16 %v92
  %v99 = vpack.c.b16 %v95, %v95
  %v100 = vpack.c.b16 %v96, %v96
  %v101 = vpack.c.b16 %v97, %v97
  %v102 = vpack.c.b16 %v98, %v98
  %107 = vst [vmem:[%s6] sm:$0xf] %v99
  %108 = vst [vmem:[%s6 + $0x4] sm:$0xf] %v100
  %109 = vst [vmem:[%s6 + $0x8] sm:$0xf] %v101
  %110 = vst [vmem:[%s6 + $0xc] sm:$0xf] %v102
  // Predicated region
  $region26: #{pose_resnet_forward.108} parent=0 // pred_check
    _
  $region27: #{pose_resnet_forward.108} parent=0 // pred_check_branch
    %112 = sbr.rel (0) target = $region29
  $region28: #{pose_resnet_forward.108} parent=0 // pred_region
    _
  $region29: #{pose_resnet_forward.108} parent=0 // pred_fallthru
    _
  // Predicated region
  $region30: #{pose_resnet_forward.108} parent=0 // pred_check
    _
  $region31: #{pose_resnet_forward.108} parent=0 // pred_check_branch
    %114 = sbr.rel (0) target = $region33
  $region32: #{pose_resnet_forward.108} parent=0 // pred_region
    _
  $region33: #{pose_resnet_forward.108} parent=0 // pred_fallthru
    _

// kernel: pose_resnet_forward.106
$region0: #{pose_resnet_forward.106}
  #allocation0 [shape = 'u32[]', space=smem, size = 0x4, offset = 0x4, fixed_abs, tag = 'smem constant byte address 0x4 - core index']
  #allocation1 [shape = 'u32[144,128]{1,0:T(1,128)}', space=vmem, size = 0x12000, scoped, tag = 'internal scratch']
  %s0 = inlined_call_operand.vmem [shape: bf16[32,128], index: 0, kind: input, shape index: {}]
  %s1 = inlined_call_operand.vmem [shape: bf16[128,128], index: 1, kind: input, shape index: {}]
  %s2 = inlined_call_operand.vmem [shape: f32[1,128], index: 2, kind: input, shape index: {}]
  %s3 = inlined_call_operand.vmem [shape: f32[1,128], index: 3, kind: input, shape index: {}]
  %s4 = inlined_call_operand.vmem [shape: bf16[32,128], index: 4, kind: output, shape index: {0}]
  %s5 = inlined_call_operand.vmem [shape: f32[8,128], index: 5, kind: output, shape index: {1}]
  %s6 = inlined_call_operand.vmem [shape: f32[8,128], index: 6, kind: output, shape index: {2}]
  %7 = xla_tuple %s4, %s5, %s6
  %s8 = sld [smem:[#allocation0]]
  $region42: #{pose_resnet_forward.106} parent=0
    _
  %s10 = ssub.s32 1, %s8
  %s11 = scalar_select 0, %s10, %s8
  // Predicated region
  $region2: #{pose_resnet_forward.106} parent=0 // pred_check
    _
  $region3: #{pose_resnet_forward.106} parent=0 // pred_check_branch
    %13 = sbr.rel (0) target = $region5
  $region4: #{pose_resnet_forward.106} parent=0 // pred_region
    _
  $region5: #{pose_resnet_forward.106} parent=0 // pred_fallthru
    _
  // Predicated region
  $region6: #{pose_resnet_forward.106} parent=0 // pred_check
    _
  $region7: #{pose_resnet_forward.106} parent=0 // pred_check_branch
    %15 = sbr.rel (0) target = $region9
  $region8: #{pose_resnet_forward.106} parent=0 // pred_region
    _
  $region9: #{pose_resnet_forward.106} parent=0 // pred_fallthru
    _
  // Predicated region
  $region10: #{pose_resnet_forward.106} parent=0 // pred_check
    _
  $region11: #{pose_resnet_forward.106} parent=0 // pred_check_branch
    %17 = sbr.rel (0) target = $region13
  $region12: #{pose_resnet_forward.106} parent=0 // pred_region
    _
  $region13: #{pose_resnet_forward.106} parent=0 // pred_fallthru
    _
  // Predicated region
  $region14: #{pose_resnet_forward.106} parent=0 // pred_check
    _
  $region15: #{pose_resnet_forward.106} parent=0 // pred_check_branch
    %19 = sbr.rel (0) target = $region17
  $region16: #{pose_resnet_forward.106} parent=0 // pred_region
    _
  $region17: #{pose_resnet_forward.106} parent=0 // pred_fallthru
    _
  %v21 = vld [vmem:[%s0] sm:$0xf]
  %v22 = vld [vmem:[%s0 + $0x4] sm:$0xf]
  %v23 = vld [vmem:[%s0 + $0x8] sm:$0xf]
  %v24 = vld [vmem:[%s0 + $0xc] sm:$0xf]
  %v25 = vunpack.c.l.bf16 %v21
  %v26 = vunpack.c.l.bf16 %v22
  %v27 = vunpack.c.l.bf16 %v23
  %v28 = vunpack.c.l.bf16 %v24
  %v29 = vld [vmem:[%s2] sm:$0x1]
  %v31 = vlaneseq
  %v32 = vshrl.u32 %v31, 7
  %v33 = vsub.s32 0, %v32
  %v34 = vrot.slane %v29, %v33
  %v36 = vmul.f32 %v25, %v34
  %v37 = vmul.f32 %v26, %v34
  %v38 = vmul.f32 %v27, %v34
  %v39 = vmul.f32 %v28, %v34
  %v40 = vld [vmem:[%s3] sm:$0x1]
  %v42 = vlaneseq
  %v43 = vshrl.u32 %v42, 7
  %v44 = vsub.s32 0, %v43
  %v45 = vrot.slane %v40, %v44
  %v47 = vadd.f32 %v36, %v45
  %v48 = vadd.f32 %v37, %v45
  %v49 = vadd.f32 %v38, %v45
  %v50 = vadd.f32 %v39, %v45
  %v51 = vmax.f32 %v47, 0.0
  %v52 = vmax.f32 %v48, 0.0
  %v53 = vmax.f32 %v49, 0.0
  %v54 = vmax.f32 %v50, 0.0
  %v55 = vpack.c.bf16 %v52, %v51
  %v56 = vpack.c.bf16 %v54, %v53
  %v57 = vld [vmem:[%s1] sm:$0xf]
  %v58 = vld [vmem:[%s1 + $0x4] sm:$0xf]
  %v59 = vld [vmem:[%s1 + $0x8] sm:$0xf]
  %v60 = vld [vmem:[%s1 + $0xc] sm:$0xf]
  %v61 = vld [vmem:[%s1 + $0x10] sm:$0xf]
  %v62 = vld [vmem:[%s1 + $0x14] sm:$0xf]
  %v63 = vld [vmem:[%s1 + $0x18] sm:$0xf]
  %v64 = vld [vmem:[%s1 + $0x1c] sm:$0xf]
  %v65 = vld [vmem:[%s1 + $0x20] sm:$0xf]
  %v66 = vld [vmem:[%s1 + $0x24] sm:$0xf]
  %v67 = vld [vmem:[%s1 + $0x28] sm:$0xf]
  %v68 = vld [vmem:[%s1 + $0x2c] sm:$0xf]
  %v69 = vld [vmem:[%s1 + $0x30] sm:$0xf]
  %v70 = vld [vmem:[%s1 + $0x34] sm:$0xf]
  %v71 = vld [vmem:[%s1 + $0x38] sm:$0xf]
  %v72 = vld [vmem:[%s1 + $0x3c] sm:$0xf]
  %v89 = vunpack.c.l.b16 %v57
  %v90 = vunpack.c.l.b16 %v58
  %v91 = vunpack.c.l.b16 %v59
  %v92 = vunpack.c.l.b16 %v60
  %v93 = vunpack.c.l.b16 %v61
  %v94 = vunpack.c.l.b16 %v62
  %v95 = vunpack.c.l.b16 %v63
  %v96 = vunpack.c.l.b16 %v64
  %v97 = vunpack.c.l.b16 %v65
  %v98 = vunpack.c.l.b16 %v66
  %v99 = vunpack.c.l.b16 %v67
  %v100 = vunpack.c.l.b16 %v68
  %v101 = vunpack.c.l.b16 %v69
  %v102 = vunpack.c.l.b16 %v70
  %v103 = vunpack.c.l.b16 %v71
  %v104 = vunpack.c.l.b16 %v72
  %v105 = vpack.c.b16 %v90, %v89
  %v106 = vpack.c.b16 %v92, %v91
  %v107 = vpack.c.b16 %v94, %v93
  %v108 = vpack.c.b16 %v96, %v95
  %v109 = vpack.c.b16 %v98, %v97
  %v110 = vpack.c.b16 %v100, %v99
  %v111 = vpack.c.b16 %v102, %v101
  %v112 = vpack.c.b16 %v104, %v103
  %121 = vmatprep.subr.bf16.mxu0 0
  %122 = vmatpush1.bf16.msra.mxu0 %v105
  %123 = vmatprep.subr.bf16.mxu0 0
  %124 = vmatpush1.bf16.msra.mxu0 %v106
  %125 = vmatprep.subr.bf16.mxu0 0
  %126 = vmatpush1.bf16.msra.mxu0 %v107
  %127 = vmatprep.subr.bf16.mxu0 0
  %128 = vmatpush1.bf16.msra.mxu0 %v108
  %129 = vmatprep.subr.bf16.mxu0 0
  %130 = vmatpush1.bf16.msra.mxu0 %v109
  %131 = vmatprep.subr.bf16.mxu0 0
  %132 = vmatpush1.bf16.msra.mxu0 %v110
  %133 = vmatprep.subr.bf16.mxu0 0
  %134 = vmatpush1.bf16.msra.mxu0 %v111
  %135 = vmatprep.subr.bf16.mxu0 0
  %136 = vmatpush1.bf16.msra.mxu0 %v112
  %137 = vmatprep.subr.bf16.mxu0 0
  %138 = vmatpush1.bf16.msra.mxu0 0
  %139 = vmatprep.subr.bf16.mxu0 0
  %140 = vmatpush1.bf16.msra.mxu0 0
  %141 = vmatprep.subr.bf16.mxu0 0
  %142 = vmatpush1.bf16.msra.mxu0 0
  %143 = vmatprep.subr.bf16.mxu0 0
  %144 = vmatpush1.bf16.msra.mxu0 0
  %145 = vmatprep.subr.bf16.mxu0 0
  %146 = vmatpush1.bf16.msra.mxu0 0
  %147 = vmatprep.subr.bf16.mxu0 0
  %148 = vmatpush1.bf16.msra.mxu0 0
  %149 = vmatprep.subr.bf16.mxu0 0
  %150 = vmatpush1.bf16.msra.mxu0 0
  %151 = vmatprep.subr.bf16.mxu0 0
  %152 = vmatpush1.bf16.msra.mxu0 0
  %153 = vmatprep.mubr.bf16.mxu0 0
  %154 = vmatmul.mubr.bf16.gmra.mrb[0].mxu0 %v55
  %v155 = vpop.f32.mrb[0].mxu0
  %v156 = vadd.f32 0.0, %v155
  %v157 = vpop.f32.mrb[0].mxu0
  %v158 = vpop.f32.mrb[0].mxu0
  %v159 = vadd.f32 0.0, %v158
  %v160 = vpop.f32.mrb[0].mxu0
  %161 = vmatprep.mubr.bf16.mxu0 0
  %162 = vmatmul.mubr.bf16.gmra.mrb[0].mxu0 %v56
  %v163 = vpop.f32.mrb[0].mxu0
  %v164 = vadd.f32 0.0, %v163
  %v165 = vpop.f32.mrb[0].mxu0
  %v166 = vpop.f32.mrb[0].mxu0
  %v167 = vadd.f32 0.0, %v166
  %v168 = vpop.f32.mrb[0].mxu0
  %169 = vdwg.mxu0
  %v170 = vpack.c.bf16 %v159, %v156
  %v171 = vpack.c.bf16 %v167, %v164
  %v174 = vunpack.c.l.b16 %v170
  %v175 = vunpack.c.h.b16 %v170
  %v176 = vunpack.c.l.b16 %v171
  %v177 = vunpack.c.h.b16 %v171
  %v178 = vpack.c.b16 %v174, %v174
  %v179 = vpack.c.b16 %v175, %v175
  %v180 = vpack.c.b16 %v176, %v176
  %v181 = vpack.c.b16 %v177, %v177
  %186 = vst [vmem:[%s4] sm:$0xf] %v178
  %187 = vst [vmem:[%s4 + $0x4] sm:$0xf] %v179
  %188 = vst [vmem:[%s4 + $0x8] sm:$0xf] %v180
  %189 = vst [vmem:[%s4 + $0xc] sm:$0xf] %v181
  %v190 = vadd.f32 %v156, %v159
  %v191 = vadd.f32 %v190, %v164
  %v192 = vadd.f32 %v191, %v167
  %v193 = vrot.slane %v192, 4
  %v194 = vadd.f32 %v192, %v193
  %v195 = vrot.slane %v194, 2
  %v196 = vadd.f32 %v194, %v195
  %v197 = vrot.slane %v196, 1
  %v198 = vadd.f32 %v196, %v197
  %v199 = vmul.f32 %v156, %v156
  %v200 = vmul.f32 %v159, %v159
  %v201 = vmul.f32 %v164, %v164
  %v202 = vmul.f32 %v167, %v167
  %v203 = vadd.f32 %v199, %v200
  %v204 = vadd.f32 %v203, %v201
  %v205 = vadd.f32 %v204, %v202
  %v206 = vrot.slane %v205, 4
  %v207 = vadd.f32 %v205, %v206
  %v208 = vrot.slane %v207, 2
  %v209 = vadd.f32 %v207, %v208
  %v210 = vrot.slane %v209, 1
  %v211 = vadd.f32 %v209, %v210
  %212 = vst [vmem:[%s5] sm:$0xff] %v198
  %213 = vst [vmem:[%s6] sm:$0xff] %v211
  // Predicated region
  $region18: #{pose_resnet_forward.106} parent=0 // pred_check
    _
  $region19: #{pose_resnet_forward.106} parent=0 // pred_check_branch
    %215 = sbr.rel (0) target = $region21
  $region20: #{pose_resnet_forward.106} parent=0 // pred_region
    _
  $region21: #{pose_resnet_forward.106} parent=0 // pred_fallthru
    _
  // Predicated region
  $region22: #{pose_resnet_forward.106} parent=0 // pred_check
    _
  $region23: #{pose_resnet_forward.106} parent=0 // pred_check_branch
    %217 = sbr.rel (0) target = $region25
  $region24: #{pose_resnet_forward.106} parent=0 // pred_region
    _
  $region25: #{pose_resnet_forward.106} parent=0 // pred_fallthru
    _
  // Predicated region
  $region26: #{pose_resnet_forward.106} parent=0 // pred_check
    _
  $region27: #{pose_resnet_forward.106} parent=0 // pred_check_branch
    %219 = sbr.rel (0) target = $region29
  $region28: #{pose_resnet_forward.106} parent=0 // pred_region
    _
  $region29: #{pose_resnet_forward.106} parent=0 // pred_fallthru
    _
  // Predicated region
  $region30: #{pose_resnet_forward.106} parent=0 // pred_check
    _
  $region31: #{pose_resnet_forward.106} parent=0 // pred_check_branch
    %221 = sbr.rel (0) target = $region33
  $region32: #{pose_resnet_forward.106} parent=0 // pred_region
    _
  $region33: #{pose_resnet_forward.106} parent=0 // pred_fallthru
    _
  // Predicated region
  $region34: #{pose_resnet_forward.106} parent=0 // pred_check
    _
  $region35: #{pose_resnet_forward.106} parent=0 // pred_check_branch
    %223 = sbr.rel (0) target = $region37
  $region36: #{pose_resnet_forward.106} parent=0 // pred_region
    _
  $region37: #{pose_resnet_forward.106} parent=0 // pred_fallthru
    _
  // Predicated region
  $region38: #{pose_resnet_forward.106} parent=0 // pred_check
    _
  $region39: #{pose_resnet_forward.106} parent=0 // pred_check_branch
    %225 = sbr.rel (0) target = $region41
  $region40: #{pose_resnet_forward.106} parent=0 // pred_region
    _
  $region41: #{pose_resnet_forward.106} parent=0 // pred_fallthru
    _

// kernel: pose_resnet_forward.105
$region0: #{pose_resnet_forward.105}
  #allocation0 [shape = 'u32[]', space=smem, size = 0x4, offset = 0x4, fixed_abs, tag = 'smem constant byte address 0x4 - core index']
  #allocation1 [shape = 'u32[144,128]{1,0:T(1,128)}', space=vmem, size = 0x12000, scoped, tag = 'internal scratch']
  %s0 = inlined_call_operand.vmem [shape: bf16[32,1152], index: 0, kind: input, shape index: {}]
  %s1 = inlined_call_operand.vmem [shape: bf16[1152,128], index: 1, kind: input, shape index: {}]
  %s2 = inlined_call_operand.vmem [shape: bf16[32,128], index: 2, kind: output, shape index: {0}]
  %s3 = inlined_call_operand.vmem [shape: f32[8,128], index: 3, kind: output, shape index: {1}]
  %s4 = inlined_call_operand.vmem [shape: f32[8,128], index: 4, kind: output, shape index: {2}]
  %5 = xla_tuple %s2, %s3, %s4
  %s6 = sld [smem:[#allocation0]]
  $region34: #{pose_resnet_forward.105} parent=0
    _
  %s8 = ssub.s32 1, %s6
  %s9 = scalar_select 0, %s8, %s6
  // Predicated region
  $region2: #{pose_resnet_forward.105} parent=0 // pred_check
    _
  $region3: #{pose_resnet_forward.105} parent=0 // pred_check_branch
    %11 = sbr.rel (0) target = $region5
  $region4: #{pose_resnet_forward.105} parent=0 // pred_region
    _
  $region5: #{pose_resnet_forward.105} parent=0 // pred_fallthru
    _
  // Predicated region
  $region6: #{pose_resnet_forward.105} parent=0 // pred_check
    _
  $region7: #{pose_resnet_forward.105} parent=0 // pred_check_branch
    %13 = sbr.rel (0) target = $region9
  $region8: #{pose_resnet_forward.105} parent=0 // pred_region
    _
  $region9: #{pose_resnet_forward.105} parent=0 // pred_fallthru
    _
  %v15 = vld [vmem:[%s0] sm:$0xff]
  %v16 = vld [vmem:[%s0 + $0x8] sm:$0xff]
  %v17 = vld [vmem:[%s0 + $0x10] sm:$0xff]
  %v18 = vld [vmem:[%s0 + $0x18] sm:$0xff]
  %v19 = vld [vmem:[%s0 + $0x20] sm:$0xf]
  %v20 = vld [vmem:[%s0 + $0x24] sm:$0xff]
  %v21 = vld [vmem:[%s0 + $0x2c] sm:$0xff]
  %v22 = vld [vmem:[%s0 + $0x34] sm:$0xff]
  %v23 = vld [vmem:[%s0 + $0x3c] sm:$0xff]
  %v24 = vld [vmem:[%s0 + $0x44] sm:$0xf]
  %v25 = vld [vmem:[%s0 + $0x48] sm:$0xff]
  %v26 = vld [vmem:[%s0 + $0x50] sm:$0xff]
  %v27 = vld [vmem:[%s0 + $0x58] sm:$0xff]
  %v28 = vld [vmem:[%s0 + $0x60] sm:$0xff]
  %v29 = vld [vmem:[%s0 + $0x68] sm:$0xf]
  %v30 = vld [vmem:[%s0 + $0x6c] sm:$0xff]
  %v31 = vld [vmem:[%s0 + $0x74] sm:$0xff]
  %v32 = vld [vmem:[%s0 + $0x7c] sm:$0xff]
  %v33 = vld [vmem:[%s0 + $0x84] sm:$0xff]
  %v34 = vld [vmem:[%s0 + $0x8c] sm:$0xf]
  %v35 = vld [vmem:[%s1] sm:$0xf]
  %v36 = vld [vmem:[%s1 + $0x4] sm:$0xf]
  %v37 = vld [vmem:[%s1 + $0x8] sm:$0xf]
  %v38 = vld [vmem:[%s1 + $0xc] sm:$0xf]
  %v39 = vld [vmem:[%s1 + $0x10] sm:$0xf]
  %v40 = vld [vmem:[%s1 + $0x14] sm:$0xf]
  %v41 = vld [vmem:[%s1 + $0x18] sm:$0xf]
  %v42 = vld [vmem:[%s1 + $0x1c] sm:$0xf]
  %v43 = vld [vmem:[%s1 + $0x20] sm:$0xf]
  %v44 = vld [vmem:[%s1 + $0x24] sm:$0xf]
  %v45 = vld [vmem:[%s1 + $0x28] sm:$0xf]
  %v46 = vld [vmem:[%s1 + $0x2c] sm:$0xf]
  %v47 = vld [vmem:[%s1 + $0x30] sm:$0xf]
  %v48 = vld [vmem:[%s1 + $0x34] sm:$0xf]
  %v49 = vld [vmem:[%s1 + $0x38] sm:$0xf]
  %v50 = vld [vmem:[%s1 + $0x3c] sm:$0xf]
  %v51 = vld [vmem:[%s1 + $0x40] sm:$0xf]
  %v52 = vld [vmem:[%s1 + $0x44] sm:$0xf]
  %v53 = vld [vmem:[%s1 + $0x48] sm:$0xf]
  %v54 = vld [vmem:[%s1 + $0x4c] sm:$0xf]
  %v55 = vld [vmem:[%s1 + $0x50] sm:$0xf]
  %v56 = vld [vmem:[%s1 + $0x54] sm:$0xf]
  %v57 = vld [vmem:[%s1 + $0x58] sm:$0xf]
  %v58 = vld [vmem:[%s1 + $0x5c] sm:$0xf]
  %v59 = vld [vmem:[%s1 + $0x60] sm:$0xf]
  %v60 = vld [vmem:[%s1 + $0x64] sm:$0xf]
  %v61 = vld [vmem:[%s1 + $0x68] sm:$0xf]
  %v62 = vld [vmem:[%s1 + $0x6c] sm:$0xf]
  %v63 = vld [vmem:[%s1 + $0x70] sm:$0xf]
  %v64 = vld [vmem:[%s1 + $0x74] sm:$0xf]
  %v65 = vld [vmem:[%s1 + $0x78] sm:$0xf]
  %v66 = vld [vmem:[%s1 + $0x7c] sm:$0xf]
  %v67 = vld [vmem:[%s1 + $0x80] sm:$0xf]
  %v68 = vld [vmem:[%s1 + $0x84] sm:$0xf]
  %v69 = vld [vmem:[%s1 + $0x88] sm:$0xf]
  %v70 = vld [vmem:[%s1 + $0x8c] sm:$0xf]
  %v71 = vld [vmem:[%s1 + $0x90] sm:$0xf]
  %v72 = vld [vmem:[%s1 + $0x94] sm:$0xf]
  %v73 = vld [vmem:[%s1 + $0x98] sm:$0xf]
  %v74 = vld [vmem:[%s1 + $0x9c] sm:$0xf]
  %v75 = vld [vmem:[%s1 + $0xa0] sm:$0xf]
  %v76 = vld [vmem:[%s1 + $0xa4] sm:$0xf]
  %v77 = vld [vmem:[%s1 + $0xa8] sm:$0xf]
  %v78 = vld [vmem:[%s1 + $0xac] sm:$0xf]
  %v79 = vld [vmem:[%s1 + $0xb0] sm:$0xf]
  %v80 = vld [vmem:[%s1 + $0xb4] sm:$0xf]
  %v81 = vld [vmem:[%s1 + $0xb8] sm:$0xf]
  %v82 = vld [vmem:[%s1 + $0xbc] sm:$0xf]
  %v83 = vld [vmem:[%s1 + $0xc0] sm:$0xf]
  %v84 = vld [vmem:[%s1 + $0xc4] sm:$0xf]
  %v85 = vld [vmem:[%s1 + $0xc8] sm:$0xf]
  %v86 = vld [vmem:[%s1 + $0xcc] sm:$0xf]
  %v87 = vld [vmem:[%s1 + $0xd0] sm:$0xf]
  %v88 = vld [vmem:[%s1 + $0xd4] sm:$0xf]
  %v89 = vld [vmem:[%s1 + $0xd8] sm:$0xf]
  %v90 = vld [vmem:[%s1 + $0xdc] sm:$0xf]
  %v91 = vld [vmem:[%s1 + $0xe0] sm:$0xf]
  %v92 = vld [vmem:[%s1 + $0xe4] sm:$0xf]
  %v93 = vld [vmem:[%s1 + $0xe8] sm:$0xf]
  %v94 = vld [vmem:[%s1 + $0xec] sm:$0xf]
  %v95 = vld [vmem:[%s1 + $0xf0] sm:$0xf]
  %v96 = vld [vmem:[%s1 + $0xf4] sm:$0xf]
  %v97 = vld [vmem:[%s1 + $0xf8] sm:$0xf]
  %v98 = vld [vmem:[%s1 + $0xfc] sm:$0xf]
  %v99 = vld [vmem:[%s1 + $0x100] sm:$0xf]
  %v100 = vld [vmem:[%s1 + $0x104] sm:$0xf]
  %v101 = vld [vmem:[%s1 + $0x108] sm:$0xf]
  %v102 = vld [vmem:[%s1 + $0x10c] sm:$0xf]
  %v103 = vld [vmem:[%s1 + $0x110] sm:$0xf]
  %v104 = vld [vmem:[%s1 + $0x114] sm:$0xf]
  %v105 = vld [vmem:[%s1 + $0x118] sm:$0xf]
  %v106 = vld [vmem:[%s1 + $0x11c] sm:$0xf]
  %v107 = vld [vmem:[%s1 + $0x120] sm:$0xf]
  %v108 = vld [vmem:[%s1 + $0x124] sm:$0xf]
  %v109 = vld [vmem:[%s1 + $0x128] sm:$0xf]
  %v110 = vld [vmem:[%s1 + $0x12c] sm:$0xf]
  %v111 = vld [vmem:[%s1 + $0x130] sm:$0xf]
  %v112 = vld [vmem:[%s1 + $0x134] sm:$0xf]
  %v113 = vld [vmem:[%s1 + $0x138] sm:$0xf]
  %v114 = vld [vmem:[%s1 + $0x13c] sm:$0xf]
  %v115 = vld [vmem:[%s1 + $0x140] sm:$0xf]
  %v116 = vld [vmem:[%s1 + $0x144] sm:$0xf]
  %v117 = vld [vmem:[%s1 + $0x148] sm:$0xf]
  %v118 = vld [vmem:[%s1 + $0x14c] sm:$0xf]
  %v119 = vld [vmem:[%s1 + $0x150] sm:$0xf]
  %v120 = vld [vmem:[%s1 + $0x154] sm:$0xf]
  %v121 = vld [vmem:[%s1 + $0x158] sm:$0xf]
  %v122 = vld [vmem:[%s1 + $0x15c] sm:$0xf]
  %v123 = vld [vmem:[%s1 + $0x160] sm:$0xf]
  %v124 = vld [vmem:[%s1 + $0x164] sm:$0xf]
  %v125 = vld [vmem:[%s1 + $0x168] sm:$0xf]
  %v126 = vld [vmem:[%s1 + $0x16c] sm:$0xf]
  %v127 = vld [vmem:[%s1 + $0x170] sm:$0xf]
  %v128 = vld [vmem:[%s1 + $0x174] sm:$0xf]
  %v129 = vld [vmem:[%s1 + $0x178] sm:$0xf]
  %v130 = vld [vmem:[%s1 + $0x17c] sm:$0xf]
  %v131 = vld [vmem:[%s1 + $0x180] sm:$0xf]
  %v132 = vld [vmem:[%s1 + $0x184] sm:$0xf]
  %v133 = vld [vmem:[%s1 + $0x188] sm:$0xf]
  %v134 = vld [vmem:[%s1 + $0x18c] sm:$0xf]
  %v135 = vld [vmem:[%s1 + $0x190] sm:$0xf]
  %v136 = vld [vmem:[%s1 + $0x194] sm:$0xf]
  %v137 = vld [vmem:[%s1 + $0x198] sm:$0xf]
  %v138 = vld [vmem:[%s1 + $0x19c] sm:$0xf]
  %v139 = vld [vmem:[%s1 + $0x1a0] sm:$0xf]
  %v140 = vld [vmem:[%s1 + $0x1a4] sm:$0xf]
  %v141 = vld [vmem:[%s1 + $0x1a8] sm:$0xf]
  %v142 = vld [vmem:[%s1 + $0x1ac] sm:$0xf]
  %v143 = vld [vmem:[%s1 + $0x1b0] sm:$0xf]
  %v144 = vld [vmem:[%s1 + $0x1b4] sm:$0xf]
  %v145 = vld [vmem:[%s1 + $0x1b8] sm:$0xf]
  %v146 = vld [vmem:[%s1 + $0x1bc] sm:$0xf]
  %v147 = vld [vmem:[%s1 + $0x1c0] sm:$0xf]
  %v148 = vld [vmem:[%s1 + $0x1c4] sm:$0xf]
  %v149 = vld [vmem:[%s1 + $0x1c8] sm:$0xf]
  %v150 = vld [vmem:[%s1 + $0x1cc] sm:$0xf]
  %v151 = vld [vmem:[%s1 + $0x1d0] sm:$0xf]
  %v152 = vld [vmem:[%s1 + $0x1d4] sm:$0xf]
  %v153 = vld [vmem:[%s1 + $0x1d8] sm:$0xf]
  %v154 = vld [vmem:[%s1 + $0x1dc] sm:$0xf]
  %v155 = vld [vmem:[%s1 + $0x1e0] sm:$0xf]
  %v156 = vld [vmem:[%s1 + $0x1e4] sm:$0xf]
  %v157 = vld [vmem:[%s1 + $0x1e8] sm:$0xf]
  %v158 = vld [vmem:[%s1 + $0x1ec] sm:$0xf]
  %v159 = vld [vmem:[%s1 + $0x1f0] sm:$0xf]
  %v160 = vld [vmem:[%s1 + $0x1f4] sm:$0xf]
  %v161 = vld [vmem:[%s1 + $0x1f8] sm:$0xf]
  %v162 = vld [vmem:[%s1 + $0x1fc] sm:$0xf]
  %v163 = vld [vmem:[%s1 + $0x200] sm:$0xf]
  %v164 = vld [vmem:[%s1 + $0x204] sm:$0xf]
  %v165 = vld [vmem:[%s1 + $0x208] sm:$0xf]
  %v166 = vld [vmem:[%s1 + $0x20c] sm:$0xf]
  %v167 = vld [vmem:[%s1 + $0x210] sm:$0xf]
  %v168 = vld [vmem:[%s1 + $0x214] sm:$0xf]
  %v169 = vld [vmem:[%s1 + $0x218] sm:$0xf]
  %v170 = vld [vmem:[%s1 + $0x21c] sm:$0xf]
  %v171 = vld [vmem:[%s1 + $0x220] sm:$0xf]
  %v172 = vld [vmem:[%s1 + $0x224] sm:$0xf]
  %v173 = vld [vmem:[%s1 + $0x228] sm:$0xf]
  %v174 = vld [vmem:[%s1 + $0x22c] sm:$0xf]
  %v175 = vld [vmem:[%s1 + $0x230] sm:$0xf]
  %v176 = vld [vmem:[%s1 + $0x234] sm:$0xf]
  %v177 = vld [vmem:[%s1 + $0x238] sm:$0xf]
  %v178 = vld [vmem:[%s1 + $0x23c] sm:$0xf]
  %v199 = vunpack.c.l.b16 %v15
  %v200 = vunpack.c.h.b16 %v15
  %v201 = vunpack.c.l.b16 %v16
  %v202 = vunpack.c.h.b16 %v16
  %v203 = vunpack.c.l.b16 %v17
  %v204 = vunpack.c.h.b16 %v17
  %v205 = vunpack.c.l.b16 %v18
  %v206 = vunpack.c.h.b16 %v18
  %v207 = vunpack.c.l.b16 %v19
  %v208 = vunpack.c.l.b16 %v20
  %v209 = vunpack.c.h.b16 %v20
  %v210 = vunpack.c.l.b16 %v21
  %v211 = vunpack.c.h.b16 %v21
  %v212 = vunpack.c.l.b16 %v22
  %v213 = vunpack.c.h.b16 %v22
  %v214 = vunpack.c.l.b16 %v23
  %v215 = vunpack.c.h.b16 %v23
  %v216 = vunpack.c.l.b16 %v24
  %v217 = vunpack.c.l.b16 %v25
  %v218 = vunpack.c.h.b16 %v25
  %v219 = vunpack.c.l.b16 %v26
  %v220 = vunpack.c.h.b16 %v26
  %v221 = vunpack.c.l.b16 %v27
  %v222 = vunpack.c.h.b16 %v27
  %v223 = vunpack.c.l.b16 %v28
  %v224 = vunpack.c.h.b16 %v28
  %v225 = vunpack.c.l.b16 %v29
  %v226 = vunpack.c.l.b16 %v30
  %v227 = vunpack.c.h.b16 %v30
  %v228 = vunpack.c.l.b16 %v31
  %v229 = vunpack.c.h.b16 %v31
  %v230 = vunpack.c.l.b16 %v32
  %v231 = vunpack.c.h.b16 %v32
  %v232 = vunpack.c.l.b16 %v33
  %v233 = vunpack.c.h.b16 %v33
  %v234 = vunpack.c.l.b16 %v34
  %v235 = vpack.c.b16 %v208, %v199
  %v236 = vpack.c.b16 %v209, %v200
  %v237 = vpack.c.b16 %v210, %v201
  %v238 = vpack.c.b16 %v211, %v202
  %v239 = vpack.c.b16 %v212, %v203
  %v240 = vpack.c.b16 %v213, %v204
  %v241 = vpack.c.b16 %v214, %v205
  %v242 = vpack.c.b16 %v215, %v206
  %v243 = vpack.c.b16 %v216, %v207
  %v244 = vpack.c.b16 %v226, %v217
  %v245 = vpack.c.b16 %v227, %v218
  %v246 = vpack.c.b16 %v228, %v219
  %v247 = vpack.c.b16 %v229, %v220
  %v248 = vpack.c.b16 %v230, %v221
  %v249 = vpack.c.b16 %v231, %v222
  %v250 = vpack.c.b16 %v232, %v223
  %v251 = vpack.c.b16 %v233, %v224
  %v252 = vpack.c.b16 %v234, %v225
  %v415 = vunpack.c.l.b16 %v35
  %v416 = vunpack.c.l.b16 %v36
  %v417 = vunpack.c.l.b16 %v37
  %v418 = vunpack.c.l.b16 %v38
  %v419 = vunpack.c.l.b16 %v39
  %v420 = vunpack.c.l.b16 %v40
  %v421 = vunpack.c.l.b16 %v41
  %v422 = vunpack.c.l.b16 %v42
  %v423 = vunpack.c.l.b16 %v43
  %v424 = vunpack.c.l.b16 %v44
  %v425 = vunpack.c.l.b16 %v45
  %v426 = vunpack.c.l.b16 %v46
  %v427 = vunpack.c.l.b16 %v47
  %v428 = vunpack.c.l.b16 %v48
  %v429 = vunpack.c.l.b16 %v49
  %v430 = vunpack.c.l.b16 %v50
  %v431 = vunpack.c.l.b16 %v51
  %v432 = vunpack.c.l.b16 %v52
  %v433 = vunpack.c.l.b16 %v53
  %v434 = vunpack.c.l.b16 %v54
  %v435 = vunpack.c.l.b16 %v55
  %v436 = vunpack.c.l.b16 %v56
  %v437 = vunpack.c.l.b16 %v57
  %v438 = vunpack.c.l.b16 %v58
  %v439 = vunpack.c.l.b16 %v59
  %v440 = vunpack.c.l.b16 %v60
  %v441 = vunpack.c.l.b16 %v61
  %v442 = vunpack.c.l.b16 %v62
  %v443 = vunpack.c.l.b16 %v63
  %v444 = vunpack.c.l.b16 %v64
  %v445 = vunpack.c.l.b16 %v65
  %v446 = vunpack.c.l.b16 %v66
  %v447 = vunpack.c.l.b16 %v67
  %v448 = vunpack.c.l.b16 %v68
  %v449 = vunpack.c.l.b16 %v69
  %v450 = vunpack.c.l.b16 %v70
  %v451 = vunpack.c.l.b16 %v71
  %v452 = vunpack.c.l.b16 %v72
  %v453 = vunpack.c.l.b16 %v73
  %v454 = vunpack.c.l.b16 %v74
  %v455 = vunpack.c.l.b16 %v75
  %v456 = vunpack.c.l.b16 %v76
  %v457 = vunpack.c.l.b16 %v77
  %v458 = vunpack.c.l.b16 %v78
  %v459 = vunpack.c.l.b16 %v79
  %v460 = vunpack.c.l.b16 %v80
  %v461 = vunpack.c.l.b16 %v81
  %v462 = vunpack.c.l.b16 %v82
  %v463 = vunpack.c.l.b16 %v83
  %v464 = vunpack.c.l.b16 %v84
  %v465 = vunpack.c.l.b16 %v85
  %v466 = vunpack.c.l.b16 %v86
  %v467 = vunpack.c.l.b16 %v87
  %v468 = vunpack.c.l.b16 %v88
  %v469 = vunpack.c.l.b16 %v89
  %v470 = vunpack.c.l.b16 %v90
  %v471 = vunpack.c.l.b16 %v91
  %v472 = vunpack.c.l.b16 %v92
  %v473 = vunpack.c.l.b16 %v93
  %v474 = vunpack.c.l.b16 %v94
  %v475 = vunpack.c.l.b16 %v95
  %v476 = vunpack.c.l.b16 %v96
  %v477 = vunpack.c.l.b16 %v97
  %v478 = vunpack.c.l.b16 %v98
  %v479 = vunpack.c.l.b16 %v99
  %v480 = vunpack.c.l.b16 %v100
  %v481 = vunpack.c.l.b16 %v101
  %v482 = vunpack.c.l.b16 %v102
  %v483 = vunpack.c.l.b16 %v103
  %v484 = vunpack.c.l.b16 %v104
  %v485 = vunpack.c.l.b16 %v105
  %v486 = vunpack.c.l.b16 %v106
  %v487 = vunpack.c.l.b16 %v107
  %v488 = vunpack.c.l.b16 %v108
  %v489 = vunpack.c.l.b16 %v109
  %v490 = vunpack.c.l.b16 %v110
  %v491 = vunpack.c.l.b16 %v111
  %v492 = vunpack.c.l.b16 %v112
  %v493 = vunpack.c.l.b16 %v113
  %v494 = vunpack.c.l.b16 %v114
  %v495 = vunpack.c.l.b16 %v115
  %v496 = vunpack.c.l.b16 %v116
  %v497 = vunpack.c.l.b16 %v117
  %v498 = vunpack.c.l.b16 %v118
  %v499 = vunpack.c.l.b16 %v119
  %v500 = vunpack.c.l.b16 %v120
  %v501 = vunpack.c.l.b16 %v121
  %v502 = vunpack.c.l.b16 %v122
  %v503 = vunpack.c.l.b16 %v123
  %v504 = vunpack.c.l.b16 %v124
  %v505 = vunpack.c.l.b16 %v125
  %v506 = vunpack.c.l.b16 %v126
  %v507 = vunpack.c.l.b16 %v127
  %v508 = vunpack.c.l.b16 %v128
  %v509 = vunpack.c.l.b16 %v129
  %v510 = vunpack.c.l.b16 %v130
  %v511 = vunpack.c.l.b16 %v131
  %v512 = vunpack.c.l.b16 %v132
  %v513 = vunpack.c.l.b16 %v133
  %v514 = vunpack.c.l.b16 %v134
  %v515 = vunpack.c.l.b16 %v135
  %v516 = vunpack.c.l.b16 %v136
  %v517 = vunpack.c.l.b16 %v137
  %v518 = vunpack.c.l.b16 %v138
  %v519 = vunpack.c.l.b16 %v139
  %v520 = vunpack.c.l.b16 %v140
  %v521 = vunpack.c.l.b16 %v141
  %v522 = vunpack.c.l.b16 %v142
  %v523 = vunpack.c.l.b16 %v143
  %v524 = vunpack.c.l.b16 %v144
  %v525 = vunpack.c.l.b16 %v145
  %v526 = vunpack.c.l.b16 %v146
  %v527 = vunpack.c.l.b16 %v147
  %v528 = vunpack.c.l.b16 %v148
  %v529 = vunpack.c.l.b16 %v149
  %v530 = vunpack.c.l.b16 %v150
  %v531 = vunpack.c.l.b16 %v151
  %v532 = vunpack.c.l.b16 %v152
  %v533 = vunpack.c.l.b16 %v153
  %v534 = vunpack.c.l.b16 %v154
  %v535 = vunpack.c.l.b16 %v155
  %v536 = vunpack.c.l.b16 %v156
  %v537 = vunpack.c.l.b16 %v157
  %v538 = vunpack.c.l.b16 %v158
  %v539 = vunpack.c.l.b16 %v159
  %v540 = vunpack.c.l.b16 %v160
  %v541 = vunpack.c.l.b16 %v161
  %v542 = vunpack.c.l.b16 %v162
  %v543 = vunpack.c.l.b16 %v163
  %v544 = vunpack.c.l.b16 %v164
  %v545 = vunpack.c.l.b16 %v165
  %v546 = vunpack.c.l.b16 %v166
  %v547 = vunpack.c.l.b16 %v167
  %v548 = vunpack.c.l.b16 %v168
  %v549 = vunpack.c.l.b16 %v169
  %v550 = vunpack.c.l.b16 %v170
  %v551 = vunpack.c.l.b16 %v171
  %v552 = vunpack.c.l.b16 %v172
  %v553 = vunpack.c.l.b16 %v173
  %v554 = vunpack.c.l.b16 %v174
  %v555 = vunpack.c.l.b16 %v175
  %v556 = vunpack.c.l.b16 %v176
  %v557 = vunpack.c.l.b16 %v177
  %v558 = vunpack.c.l.b16 %v178
  %v559 = vpack.c.b16 %v416, %v415
  %v560 = vpack.c.b16 %v418, %v417
  %v561 = vpack.c.b16 %v420, %v419
  %v562 = vpack.c.b16 %v422, %v421
  %v563 = vpack.c.b16 %v424, %v423
  %v564 = vpack.c.b16 %v426, %v425
  %v565 = vpack.c.b16 %v428, %v427
  %v566 = vpack.c.b16 %v430, %v429
  %v567 = vpack.c.b16 %v432, %v431
  %v568 = vpack.c.b16 %v434, %v433
  %v569 = vpack.c.b16 %v436, %v435
  %v570 = vpack.c.b16 %v438, %v437
  %v571 = vpack.c.b16 %v440, %v439
  %v572 = vpack.c.b16 %v442, %v441
  %v573 = vpack.c.b16 %v444, %v443
  %v574 = vpack.c.b16 %v446, %v445
  %v575 = vpack.c.b16 %v448, %v447
  %v576 = vpack.c.b16 %v450, %v449
  %v577 = vpack.c.b16 %v452, %v451
  %v578 = vpack.c.b16 %v454, %v453
  %v579 = vpack.c.b16 %v456, %v455
  %v580 = vpack.c.b16 %v458, %v457
  %v581 = vpack.c.b16 %v460, %v459
  %v582 = vpack.c.b16 %v462, %v461
  %v583 = vpack.c.b16 %v464, %v463
  %v584 = vpack.c.b16 %v466, %v465
  %v585 = vpack.c.b16 %v468, %v467
  %v586 = vpack.c.b16 %v470, %v469
  %v587 = vpack.c.b16 %v472, %v471
  %v588 = vpack.c.b16 %v474, %v473
  %v589 = vpack.c.b16 %v476, %v475
  %v590 = vpack.c.b16 %v478, %v477
  %v591 = vpack.c.b16 %v480, %v479
  %v592 = vpack.c.b16 %v482, %v481
  %v593 = vpack.c.b16 %v484, %v483
  %v594 = vpack.c.b16 %v486, %v485
  %v595 = vpack.c.b16 %v488, %v487
  %v596 = vpack.c.b16 %v490, %v489
  %v597 = vpack.c.b16 %v492, %v491
  %v598 = vpack.c.b16 %v494, %v493
  %v599 = vpack.c.b16 %v496, %v495
  %v600 = vpack.c.b16 %v498, %v497
  %v601 = vpack.c.b16 %v500, %v499
  %v602 = vpack.c.b16 %v502, %v501
  %v603 = vpack.c.b16 %v504, %v503
  %v604 = vpack.c.b16 %v506, %v505
  %v605 = vpack.c.b16 %v508, %v507
  %v606 = vpack.c.b16 %v510, %v509
  %v607 = vpack.c.b16 %v512, %v511
  %v608 = vpack.c.b16 %v514, %v513
  %v609 = vpack.c.b16 %v516, %v515
  %v610 = vpack.c.b16 %v518, %v517
  %v611 = vpack.c.b16 %v520, %v519
  %v612 = vpack.c.b16 %v522, %v521
  %v613 = vpack.c.b16 %v524, %v523
  %v614 = vpack.c.b16 %v526, %v525
  %v615 = vpack.c.b16 %v528, %v527
  %v616 = vpack.c.b16 %v530, %v529
  %v617 = vpack.c.b16 %v532, %v531
  %v618 = vpack.c.b16 %v534, %v533
  %v619 = vpack.c.b16 %v536, %v535
  %v620 = vpack.c.b16 %v538, %v537
  %v621 = vpack.c.b16 %v540, %v539
  %v622 = vpack.c.b16 %v542, %v541
  %v623 = vpack.c.b16 %v544, %v543
  %v624 = vpack.c.b16 %v546, %v545
  %v625 = vpack.c.b16 %v548, %v547
  %v626 = vpack.c.b16 %v550, %v549
  %v627 = vpack.c.b16 %v552, %v551
  %v628 = vpack.c.b16 %v554, %v553
  %v629 = vpack.c.b16 %v556, %v555
  %v630 = vpack.c.b16 %v558, %v557
  %703 = vmatprep.subr.bf16.mxu0 0
  %704 = vmatpush1.bf16.msra.mxu0 %v559
  %705 = vmatprep.subr.bf16.mxu0 0
  %706 = vmatpush1.bf16.msra.mxu0 %v560
  %707 = vmatprep.subr.bf16.mxu0 0
  %708 = vmatpush1.bf16.msra.mxu0 %v561
  %709 = vmatprep.subr.bf16.mxu0 0
  %710 = vmatpush1.bf16.msra.mxu0 %v562
  %711 = vmatprep.subr.bf16.mxu0 0
  %712 = vmatpush1.bf16.msra.mxu0 %v563
  %713 = vmatprep.subr.bf16.mxu0 0
  %714 = vmatpush1.bf16.msra.mxu0 %v564
  %715 = vmatprep.subr.bf16.mxu0 0
  %716 = vmatpush1.bf16.msra.mxu0 %v565
  %717 = vmatprep.subr.bf16.mxu0 0
  %718 = vmatpush1.bf16.msra.mxu0 %v566
  %719 = vmatprep.subr.bf16.mxu0 0
  %720 = vmatpush1.bf16.msra.mxu0 %v567
  %721 = vmatprep.subr.bf16.mxu0 0
  %722 = vmatpush1.bf16.msra.mxu0 %v568
  %723 = vmatprep.subr.bf16.mxu0 0
  %724 = vmatpush1.bf16.msra.mxu0 %v569
  %725 = vmatprep.subr.bf16.mxu0 0
  %726 = vmatpush1.bf16.msra.mxu0 %v570
  %727 = vmatprep.subr.bf16.mxu0 0
  %728 = vmatpush1.bf16.msra.mxu0 %v571
  %729 = vmatprep.subr.bf16.mxu0 0
  %730 = vmatpush1.bf16.msra.mxu0 %v572
  %731 = vmatprep.subr.bf16.mxu0 0
  %732 = vmatpush1.bf16.msra.mxu0 %v573
  %733 = vmatprep.subr.bf16.mxu0 0
  %734 = vmatpush1.bf16.msra.mxu0 %v574
  %735 = vmatprep.mubr.bf16.mxu0 %v236
  %736 = vmatmul.mubr.bf16.gmra.mrb[0].mxu0 %v235
  %v737 = vpop.f32.mrb[0].mxu0
  %v738 = vadd.f32 0.0, %v737
  %v739 = vpop.f32.mrb[0].mxu0
  %v740 = vpop.f32.mrb[0].mxu0
  %v741 = vadd.f32 0.0, %v740
  %v742 = vpop.f32.mrb[0].mxu0
  %743 = vmatprep.mubr.bf16.mxu0 %v245
  %744 = vmatmul.mubr.bf16.gmra.mrb[0].mxu0 %v244
  %v745 = vpop.f32.mrb[0].mxu0
  %v746 = vadd.f32 0.0, %v745
  %v747 = vpop.f32.mrb[0].mxu0
  %v748 = vpop.f32.mrb[0].mxu0
  %v749 = vadd.f32 0.0, %v748
  %v750 = vpop.f32.mrb[0].mxu0
  %751 = vdwg.mxu0
  %752 = vmatprep.subr.bf16.mxu0 0
  %753 = vmatpush1.bf16.msra.mxu0 %v575
  %754 = vmatprep.subr.bf16.mxu0 0
  %755 = vmatpush1.bf16.msra.mxu0 %v576
  %756 = vmatprep.subr.bf16.mxu0 0
  %757 = vmatpush1.bf16.msra.mxu0 %v577
  %758 = vmatprep.subr.bf16.mxu0 0
  %759 = vmatpush1.bf16.msra.mxu0 %v578
  %760 = vmatprep.subr.bf16.mxu0 0
  %761 = vmatpush1.bf16.msra.mxu0 %v579
  %762 = vmatprep.subr.bf16.mxu0 0
  %763 = vmatpush1.bf16.msra.mxu0 %v580
  %764 = vmatprep.subr.bf16.mxu0 0
  %765 = vmatpush1.bf16.msra.mxu0 %v581
  %766 = vmatprep.subr.bf16.mxu0 0
  %767 = vmatpush1.bf16.msra.mxu0 %v582
  %768 = vmatprep.subr.bf16.mxu0 0
  %769 = vmatpush1.bf16.msra.mxu0 %v583
  %770 = vmatprep.subr.bf16.mxu0 0
  %771 = vmatpush1.bf16.msra.mxu0 %v584
  %772 = vmatprep.subr.bf16.mxu0 0
  %773 = vmatpush1.bf16.msra.mxu0 %v585
  %774 = vmatprep.subr.bf16.mxu0 0
  %775 = vmatpush1.bf16.msra.mxu0 %v586
  %776 = vmatprep.subr.bf16.mxu0 0
  %777 = vmatpush1.bf16.msra.mxu0 %v587
  %778 = vmatprep.subr.bf16.mxu0 0
  %779 = vmatpush1.bf16.msra.mxu0 %v588
  %780 = vmatprep.subr.bf16.mxu0 0
  %781 = vmatpush1.bf16.msra.mxu0 %v589
  %782 = vmatprep.subr.bf16.mxu0 0
  %783 = vmatpush1.bf16.msra.mxu0 %v590
  %784 = vmatprep.mubr.bf16.mxu0 %v238
  %785 = vmatmul.mubr.bf16.gmra.mrb[0].mxu0 %v237
  %v786 = vpop.f32.mrb[0].mxu0
  %v787 = vadd.f32 %v738, %v786
  %v788 = vpop.f32.mrb[0].mxu0
  %v789 = vpop.f32.mrb[0].mxu0
  %v790 = vadd.f32 %v741, %v789
  %v791 = vpop.f32.mrb[0].mxu0
  %792 = vmatprep.mubr.bf16.mxu0 %v247
  %793 = vmatmul.mubr.bf16.gmra.mrb[0].mxu0 %v246
  %v794 = vpop.f32.mrb[0].mxu0
  %v795 = vadd.f32 %v746, %v794
  %v796 = vpop.f32.mrb[0].mxu0
  %v797 = vpop.f32.mrb[0].mxu0
  %v798 = vadd.f32 %v749, %v797
  %v799 = vpop.f32.mrb[0].mxu0
  %800 = vdwg.mxu0
  %801 = vmatprep.subr.bf16.mxu0 0
  %802 = vmatpush1.bf16.msra.mxu0 %v591
  %803 = vmatprep.subr.bf16.mxu0 0
  %804 = vmatpush1.bf16.msra.mxu0 %v592
  %805 = vmatprep.subr.bf16.mxu0 0
  %806 = vmatpush1.bf16.msra.mxu0 %v593
  %807 = vmatprep.subr.bf16.mxu0 0
  %808 = vmatpush1.bf16.msra.mxu0 %v594
  %809 = vmatprep.subr.bf16.mxu0 0
  %810 = vmatpush1.bf16.msra.mxu0 %v595
  %811 = vmatprep.subr.bf16.mxu0 0
  %812 = vmatpush1.bf16.msra.mxu0 %v596
  %813 = vmatprep.subr.bf16.mxu0 0
  %814 = vmatpush1.bf16.msra.mxu0 %v597
  %815 = vmatprep.subr.bf16.mxu0 0
  %816 = vmatpush1.bf16.msra.mxu0 %v598
  %817 = vmatprep.subr.bf16.mxu0 0
  %818 = vmatpush1.bf16.msra.mxu0 %v599
  %819 = vmatprep.subr.bf16.mxu0 0
  %820 = vmatpush1.bf16.msra.mxu0 %v600
  %821 = vmatprep.subr.bf16.mxu0 0
  %822 = vmatpush1.bf16.msra.mxu0 %v601
  %823 = vmatprep.subr.bf16.mxu0 0
  %824 = vmatpush1.bf16.msra.mxu0 %v602
  %825 = vmatprep.subr.bf16.mxu0 0
  %826 = vmatpush1.bf16.msra.mxu0 %v603
  %827 = vmatprep.subr.bf16.mxu0 0
  %828 = vmatpush1.bf16.msra.mxu0 %v604
  %829 = vmatprep.subr.bf16.mxu0 0
  %830 = vmatpush1.bf16.msra.mxu0 %v605
  %831 = vmatprep.subr.bf16.mxu0 0
  %832 = vmatpush1.bf16.msra.mxu0 %v606
  %833 = vmatprep.mubr.bf16.mxu0 %v240
  %834 = vmatmul.mubr.bf16.gmra.mrb[0].mxu0 %v239
  %v835 = vpop.f32.mrb[0].mxu0
  %v836 = vadd.f32 %v787, %v835
  %v837 = vpop.f32.mrb[0].mxu0
  %v838 = vpop.f32.mrb[0].mxu0
  %v839 = vadd.f32 %v790, %v838
  %v840 = vpop.f32.mrb[0].mxu0
  %841 = vmatprep.mubr.bf16.mxu0 %v249
  %842 = vmatmul.mubr.bf16.gmra.mrb[0].mxu0 %v248
  %v843 = vpop.f32.mrb[0].mxu0
  %v844 = vadd.f32 %v795, %v843
  %v845 = vpop.f32.mrb[0].mxu0
  %v846 = vpop.f32.mrb[0].mxu0
  %v847 = vadd.f32 %v798, %v846
  %v848 = vpop.f32.mrb[0].mxu0
  %849 = vdwg.mxu0
  %850 = vmatprep.subr.bf16.mxu0 0
  %851 = vmatpush1.bf16.msra.mxu0 %v607
  %852 = vmatprep.subr.bf16.mxu0 0
  %853 = vmatpush1.bf16.msra.mxu0 %v608
  %854 = vmatprep.subr.bf16.mxu0 0
  %855 = vmatpush1.bf16.msra.mxu0 %v609
  %856 = vmatprep.subr.bf16.mxu0 0
  %857 = vmatpush1.bf16.msra.mxu0 %v610
  %858 = vmatprep.subr.bf16.mxu0 0
  %859 = vmatpush1.bf16.msra.mxu0 %v611
  %860 = vmatprep.subr.bf16.mxu0 0
  %861 = vmatpush1.bf16.msra.mxu0 %v612
  %862 = vmatprep.subr.bf16.mxu0 0
  %863 = vmatpush1.bf16.msra.mxu0 %v613
  %864 = vmatprep.subr.bf16.mxu0 0
  %865 = vmatpush1.bf16.msra.mxu0 %v614
  %866 = vmatprep.subr.bf16.mxu0 0
  %867 = vmatpush1.bf16.msra.mxu0 %v615
  %868 = vmatprep.subr.bf16.mxu0 0
  %869 = vmatpush1.bf16.msra.mxu0 %v616
  %870 = vmatprep.subr.bf16.mxu0 0
  %871 = vmatpush1.bf16.msra.mxu0 %v617
  %872 = vmatprep.subr.bf16.mxu0 0
  %873 = vmatpush1.bf16.msra.mxu0 %v618
  %874 = vmatprep.subr.bf16.mxu0 0
  %875 = vmatpush1.bf16.msra.mxu0 %v619
  %876 = vmatprep.subr.bf16.mxu0 0
  %877 = vmatpush1.bf16.msra.mxu0 %v620
  %878 = vmatprep.subr.bf16.mxu0 0
  %879 = vmatpush1.bf16.msra.mxu0 %v621
  %880 = vmatprep.subr.bf16.mxu0 0
  %881 = vmatpush1.bf16.msra.mxu0 %v622
  %882 = vmatprep.mubr.bf16.mxu0 %v242
  %883 = vmatmul.mubr.bf16.gmra.mrb[0].mxu0 %v241
  %v884 = vpop.f32.mrb[0].mxu0
  %v885 = vadd.f32 %v836, %v884
  %v886 = vpop.f32.mrb[0].mxu0
  %v887 = vpop.f32.mrb[0].mxu0
  %v888 = vadd.f32 %v839, %v887
  %v889 = vpop.f32.mrb[0].mxu0
  %890 = vmatprep.mubr.bf16.mxu0 %v251
  %891 = vmatmul.mubr.bf16.gmra.mrb[0].mxu0 %v250
  %v892 = vpop.f32.mrb[0].mxu0
  %v893 = vadd.f32 %v844, %v892
  %v894 = vpop.f32.mrb[0].mxu0
  %v895 = vpop.f32.mrb[0].mxu0
  %v896 = vadd.f32 %v847, %v895
  %v897 = vpop.f32.mrb[0].mxu0
  %898 = vdwg.mxu0
  %899 = vmatprep.subr.bf16.mxu0 0
  %900 = vmatpush1.bf16.msra.mxu0 %v623
  %901 = vmatprep.subr.bf16.mxu0 0
  %902 = vmatpush1.bf16.msra.mxu0 %v624
  %903 = vmatprep.subr.bf16.mxu0 0
  %904 = vmatpush1.bf16.msra.mxu0 %v625
  %905 = vmatprep.subr.bf16.mxu0 0
  %906 = vmatpush1.bf16.msra.mxu0 %v626
  %907 = vmatprep.subr.bf16.mxu0 0
  %908 = vmatpush1.bf16.msra.mxu0 %v627
  %909 = vmatprep.subr.bf16.mxu0 0
  %910 = vmatpush1.bf16.msra.mxu0 %v628
  %911 = vmatprep.subr.bf16.mxu0 0
  %912 = vmatpush1.bf16.msra.mxu0 %v629
  %913 = vmatprep.subr.bf16.mxu0 0
  %914 = vmatpush1.bf16.msra.mxu0 %v630
  %915 = vmatprep.subr.bf16.mxu0 0
  %916 = vmatpush1.bf16.msra.mxu0 0
  %917 = vmatprep.subr.bf16.mxu0 0
  %918 = vmatpush1.bf16.msra.mxu0 0
  %919 = vmatprep.subr.bf16.mxu0 0
  %920 = vmatpush1.bf16.msra.mxu0 0
  %921 = vmatprep.subr.bf16.mxu0 0
  %922 = vmatpush1.bf16.msra.mxu0 0
  %923 = vmatprep.subr.bf16.mxu0 0
  %924 = vmatpush1.bf16.msra.mxu0 0
  %925 = vmatprep.subr.bf16.mxu0 0
  %926 = vmatpush1.bf16.msra.mxu0 0
  %927 = vmatprep.subr.bf16.mxu0 0
  %928 = vmatpush1.bf16.msra.mxu0 0
  %929 = vmatprep.subr.bf16.mxu0 0
  %930 = vmatpush1.bf16.msra.mxu0 0
  %931 = vmatprep.mubr.bf16.mxu0 0
  %932 = vmatmul.mubr.bf16.gmra.mrb[0].mxu0 %v243
  %v933 = vpop.f32.mrb[0].mxu0
  %v934 = vadd.f32 %v885, %v933
  %v935 = vpop.f32.mrb[0].mxu0
  %v936 = vpop.f32.mrb[0].mxu0
  %v937 = vadd.f32 %v888, %v936
  %v938 = vpop.f32.mrb[0].mxu0
  %939 = vmatprep.mubr.bf16.mxu0 0
  %940 = vmatmul.mubr.bf16.gmra.mrb[0].mxu0 %v252
  %v941 = vpop.f32.mrb[0].mxu0
  %v942 = vadd.f32 %v893, %v941
  %v943 = vpop.f32.mrb[0].mxu0
  %v944 = vpop.f32.mrb[0].mxu0
  %v945 = vadd.f32 %v896, %v944
  %v946 = vpop.f32.mrb[0].mxu0
  %947 = vdwg.mxu0
  %v948 = vpack.c.bf16 %v937, %v934
  %v949 = vpack.c.bf16 %v945, %v942
  %v952 = vunpack.c.l.b16 %v948
  %v953 = vunpack.c.h.b16 %v948
  %v954 = vunpack.c.l.b16 %v949
  %v955 = vunpack.c.h.b16 %v949
  %v956 = vpack.c.b16 %v952, %v952
  %v957 = vpack.c.b16 %v953, %v953
  %v958 = vpack.c.b16 %v954, %v954
  %v959 = vpack.c.b16 %v955, %v955
  %964 = vst [vmem:[%s2] sm:$0xf] %v956
  %965 = vst [vmem:[%s2 + $0x4] sm:$0xf] %v957
  %966 = vst [vmem:[%s2 + $0x8] sm:$0xf] %v958
  %967 = vst [vmem:[%s2 + $0xc] sm:$0xf] %v959
  %v968 = vadd.f32 %v934, %v937
  %v969 = vadd.f32 %v968, %v942
  %v970 = vadd.f32 %v969, %v945
  %v971 = vrot.slane %v970, 4
  %v972 = vadd.f32 %v970, %v971
  %v973 = vrot.slane %v972, 2
  %v974 = vadd.f32 %v972, %v973
  %v975 = vrot.slane %v974, 1
  %v976 = vadd.f32 %v974, %v975
  %v977 = vmul.f32 %v934, %v934
  %v978 = vmul.f32 %v937, %v937
  %v979 = vmul.f32 %v942, %v942
  %v980 = vmul.f32 %v945, %v945
  %v981 = vadd.f32 %v977, %v978
  %v982 = vadd.f32 %v981, %v979
  %v983 = vadd.f32 %v982, %v980
  %v984 = vrot.slane %v983, 4
  %v985 = vadd.f32 %v983, %v984
  %v986 = vrot.slane %v985, 2
  %v987 = vadd.f32 %v985, %v986
  %v988 = vrot.slane %v987, 1
  %v989 = vadd.f32 %v987, %v988
  %990 = vst [vmem:[%s3] sm:$0xff] %v976
  %991 = vst [vmem:[%s4] sm:$0xff] %v989
  // Predicated region
  $region10: #{pose_resnet_forward.105} parent=0 // pred_check
    _
  $region11: #{pose_resnet_forward.105} parent=0 // pred_check_branch
    %993 = sbr.rel (0) target = $region13
  $region12: #{pose_resnet_forward.105} parent=0 // pred_region
    _
  $region13: #{pose_resnet_forward.105} parent=0 // pred_fallthru
    _
  // Predicated region
  $region14: #{pose_resnet_forward.105} parent=0 // pred_check
    _
  $region15: #{pose_resnet_forward.105} parent=0 // pred_check_branch
    %995 = sbr.rel (0) target = $region17
  $region16: #{pose_resnet_forward.105} parent=0 // pred_region
    _
  $region17: #{pose_resnet_forward.105} parent=0 // pred_fallthru
    _
  // Predicated region
  $region18: #{pose_resnet_forward.105} parent=0 // pred_check
    _
  $region19: #{pose_resnet_forward.105} parent=0 // pred_check_branch
    %997 = sbr.rel (0) target = $region21
  $region20: #{pose_resnet_forward.105} parent=0 // pred_region
    _
  $region21: #{pose_resnet_forward.105} parent=0 // pred_fallthru
    _
  // Predicated region
  $region22: #{pose_resnet_forward.105} parent=0 // pred_check
    _
  $region23: #{pose_resnet_forward.105} parent=0 // pred_check_branch
    %999 = sbr.rel (0) target = $region25
  $region24: #{pose_resnet_forward.105} parent=0 // pred_region
    _
  $region25: #{pose_resnet_forward.105} parent=0 // pred_fallthru
    _
  // Predicated region
  $region26: #{pose_resnet_forward.105} parent=0 // pred_check
    _
  $region27: #{pose_resnet_forward.105} parent=0 // pred_check_branch
    %1001 = sbr.rel (0) target = $region29
  $region28: #{pose_resnet_forward.105} parent=0 // pred_region
    _
  $region29: #{pose_resnet_forward.105} parent=0 // pred_fallthru
    _
  // Predicated region
  $region30: #{pose_resnet_forward.105} parent=0 // pred_check
    _
  $region31: #{pose_resnet_forward.105} parent=0 // pred_check_branch
    %1003 = sbr.rel (0) target = $region33
  $region32: #{pose_resnet_forward.105} parent=0 // pred_region
    _
  $region33: #{pose_resnet_forward.105} parent=0 // pred_fallthru
    _

// kernel: pose_resnet_forward.122
$region0: #{pose_resnet_forward.122}
  #allocation0 [shape = 'u32[]', space=smem, size = 0x4, offset = 0x4, fixed_abs, tag = 'smem constant byte address 0x4 - core index']
  #allocation1 [shape = 'u32[144,128]{1,0:T(1,128)}', space=vmem, size = 0x12000, scoped, tag = 'internal scratch']
  %s0 = inlined_call_operand.vmem [shape: bf16[8,128], index: 0, kind: input, shape index: {}]
  %s1 = inlined_call_operand.vmem [shape: bf16[128,128], index: 1, kind: input, shape index: {}]
  %s2 = inlined_call_operand.vmem [shape: f32[1,128], index: 2, kind: input, shape index: {}]
  %s3 = inlined_call_operand.vmem [shape: f32[1,128], index: 3, kind: input, shape index: {}]
  %s4 = inlined_call_operand.vmem [shape: bf16[8,128], index: 4, kind: output, shape index: {0}]
  %s5 = inlined_call_operand.vmem [shape: f32[8,128], index: 5, kind: output, shape index: {1}]
  %s6 = inlined_call_operand.vmem [shape: f32[8,128], index: 6, kind: output, shape index: {2}]
  %7 = xla_tuple %s4, %s5, %s6
  %s8 = sld [smem:[#allocation0]]
  $region42: #{pose_resnet_forward.122} parent=0
    _
  %s10 = ssub.s32 1, %s8
  %s11 = scalar_select 0, %s10, %s8
  // Predicated region
  $region2: #{pose_resnet_forward.122} parent=0 // pred_check
    _
  $region3: #{pose_resnet_forward.122} parent=0 // pred_check_branch
    %13 = sbr.rel (0) target = $region5
  $region4: #{pose_resnet_forward.122} parent=0 // pred_region
    _
  $region5: #{pose_resnet_forward.122} parent=0 // pred_fallthru
    _
  // Predicated region
  $region6: #{pose_resnet_forward.122} parent=0 // pred_check
    _
  $region7: #{pose_resnet_forward.122} parent=0 // pred_check_branch
    %15 = sbr.rel (0) target = $region9
  $region8: #{pose_resnet_forward.122} parent=0 // pred_region
    _
  $region9: #{pose_resnet_forward.122} parent=0 // pred_fallthru
    _
  // Predicated region
  $region10: #{pose_resnet_forward.122} parent=0 // pred_check
    _
  $region11: #{pose_resnet_forward.122} parent=0 // pred_check_branch
    %17 = sbr.rel (0) target = $region13
  $region12: #{pose_resnet_forward.122} parent=0 // pred_region
    _
  $region13: #{pose_resnet_forward.122} parent=0 // pred_fallthru
    _
  // Predicated region
  $region14: #{pose_resnet_forward.122} parent=0 // pred_check
    _
  $region15: #{pose_resnet_forward.122} parent=0 // pred_check_branch
    %19 = sbr.rel (0) target = $region17
  $region16: #{pose_resnet_forward.122} parent=0 // pred_region
    _
  $region17: #{pose_resnet_forward.122} parent=0 // pred_fallthru
    _
  %v21 = vld [vmem:[%s0] sm:$0xf]
  %v22 = vunpack.c.l.bf16 %v21
  %v23 = vld [vmem:[%s2] sm:$0x1]
  %v25 = vlaneseq
  %v26 = vshrl.u32 %v25, 7
  %v27 = vsub.s32 0, %v26
  %v28 = vrot.slane %v23, %v27
  %v30 = vmul.f32 %v22, %v28
  %v31 = vld [vmem:[%s3] sm:$0x1]
  %v33 = vlaneseq
  %v34 = vshrl.u32 %v33, 7
  %v35 = vsub.s32 0, %v34
  %v36 = vrot.slane %v31, %v35
  %v38 = vadd.f32 %v30, %v36
  %v39 = vmax.f32 %v38, 0.0
  %v40 = vpack.c.bf16 %v39, %v39
  %v41 = vld [vmem:[%s1] sm:$0xf]
  %v42 = vld [vmem:[%s1 + $0x4] sm:$0xf]
  %v43 = vld [vmem:[%s1 + $0x8] sm:$0xf]
  %v44 = vld [vmem:[%s1 + $0xc] sm:$0xf]
  %v45 = vld [vmem:[%s1 + $0x10] sm:$0xf]
  %v46 = vld [vmem:[%s1 + $0x14] sm:$0xf]
  %v47 = vld [vmem:[%s1 + $0x18] sm:$0xf]
  %v48 = vld [vmem:[%s1 + $0x1c] sm:$0xf]
  %v49 = vld [vmem:[%s1 + $0x20] sm:$0xf]
  %v50 = vld [vmem:[%s1 + $0x24] sm:$0xf]
  %v51 = vld [vmem:[%s1 + $0x28] sm:$0xf]
  %v52 = vld [vmem:[%s1 + $0x2c] sm:$0xf]
  %v53 = vld [vmem:[%s1 + $0x30] sm:$0xf]
  %v54 = vld [vmem:[%s1 + $0x34] sm:$0xf]
  %v55 = vld [vmem:[%s1 + $0x38] sm:$0xf]
  %v56 = vld [vmem:[%s1 + $0x3c] sm:$0xf]
  %v73 = vunpack.c.l.b16 %v41
  %v74 = vunpack.c.l.b16 %v42
  %v75 = vunpack.c.l.b16 %v43
  %v76 = vunpack.c.l.b16 %v44
  %v77 = vunpack.c.l.b16 %v45
  %v78 = vunpack.c.l.b16 %v46
  %v79 = vunpack.c.l.b16 %v47
  %v80 = vunpack.c.l.b16 %v48
  %v81 = vunpack.c.l.b16 %v49
  %v82 = vunpack.c.l.b16 %v50
  %v83 = vunpack.c.l.b16 %v51
  %v84 = vunpack.c.l.b16 %v52
  %v85 = vunpack.c.l.b16 %v53
  %v86 = vunpack.c.l.b16 %v54
  %v87 = vunpack.c.l.b16 %v55
  %v88 = vunpack.c.l.b16 %v56
  %v89 = vpack.c.b16 %v74, %v73
  %v90 = vpack.c.b16 %v76, %v75
  %v91 = vpack.c.b16 %v78, %v77
  %v92 = vpack.c.b16 %v80, %v79
  %v93 = vpack.c.b16 %v82, %v81
  %v94 = vpack.c.b16 %v84, %v83
  %v95 = vpack.c.b16 %v86, %v85
  %v96 = vpack.c.b16 %v88, %v87
  %105 = vmatprep.subr.bf16.mxu0 0
  %106 = vmatpush1.bf16.msra.mxu0 %v89
  %107 = vmatprep.subr.bf16.mxu0 0
  %108 = vmatpush1.bf16.msra.mxu0 %v90
  %109 = vmatprep.subr.bf16.mxu0 0
  %110 = vmatpush1.bf16.msra.mxu0 %v91
  %111 = vmatprep.subr.bf16.mxu0 0
  %112 = vmatpush1.bf16.msra.mxu0 %v92
  %113 = vmatprep.subr.bf16.mxu0 0
  %114 = vmatpush1.bf16.msra.mxu0 %v93
  %115 = vmatprep.subr.bf16.mxu0 0
  %116 = vmatpush1.bf16.msra.mxu0 %v94
  %117 = vmatprep.subr.bf16.mxu0 0
  %118 = vmatpush1.bf16.msra.mxu0 %v95
  %119 = vmatprep.subr.bf16.mxu0 0
  %120 = vmatpush1.bf16.msra.mxu0 %v96
  %121 = vmatprep.subr.bf16.mxu0 0
  %122 = vmatpush1.bf16.msra.mxu0 0
  %123 = vmatprep.subr.bf16.mxu0 0
  %124 = vmatpush1.bf16.msra.mxu0 0
  %125 = vmatprep.subr.bf16.mxu0 0
  %126 = vmatpush1.bf16.msra.mxu0 0
  %127 = vmatprep.subr.bf16.mxu0 0
  %128 = vmatpush1.bf16.msra.mxu0 0
  %129 = vmatprep.subr.bf16.mxu0 0
  %130 = vmatpush1.bf16.msra.mxu0 0
  %131 = vmatprep.subr.bf16.mxu0 0
  %132 = vmatpush1.bf16.msra.mxu0 0
  %133 = vmatprep.subr.bf16.mxu0 0
  %134 = vmatpush1.bf16.msra.mxu0 0
  %135 = vmatprep.subr.bf16.mxu0 0
  %136 = vmatpush1.bf16.msra.mxu0 0
  %137 = vmatprep.mubr.bf16.mxu0 0
  %138 = vmatmul.mubr.bf16.gmra.mrb[0].mxu0 %v40
  %v139 = vpop.f32.mrb[0].mxu0
  %v140 = vadd.f32 0.0, %v139
  %v141 = vpop.f32.mrb[0].mxu0
  %v142 = vpop.f32.mrb[0].mxu0
  %v143 = vpop.f32.mrb[0].mxu0
  %144 = vdwg.mxu0
  %v145 = vpack.c.bf16 %v140, %v140
  %146 = vst [vmem:[%s4] sm:$0xf] %v145
  %v147 = vrot.slane %v140, 4
  %v148 = vadd.f32 %v140, %v147
  %v149 = vrot.slane %v148, 2
  %v150 = vadd.f32 %v148, %v149
  %v151 = vrot.slane %v150, 1
  %v152 = vadd.f32 %v150, %v151
  %v153 = vmul.f32 %v140, %v140
  %v154 = vrot.slane %v153, 4
  %v155 = vadd.f32 %v153, %v154
  %v156 = vrot.slane %v155, 2
  %v157 = vadd.f32 %v155, %v156
  %v158 = vrot.slane %v157, 1
  %v159 = vadd.f32 %v157, %v158
  %160 = vst [vmem:[%s5] sm:$0xff] %v152
  %161 = vst [vmem:[%s6] sm:$0xff] %v159
  // Predicated region
  $region18: #{pose_resnet_forward.122} parent=0 // pred_check
    _
  $region19: #{pose_resnet_forward.122} parent=0 // pred_check_branch
    %163 = sbr.rel (0) target = $region21
  $region20: #{pose_resnet_forward.122} parent=0 // pred_region
    _
  $region21: #{pose_resnet_forward.122} parent=0 // pred_fallthru
    _
  // Predicated region
  $region22: #{pose_resnet_forward.122} parent=0 // pred_check
    _
  $region23: #{pose_resnet_forward.122} parent=0 // pred_check_branch
    %165 = sbr.rel (0) target = $region25
  $region24: #{pose_resnet_forward.122} parent=0 // pred_region
    _
  $region25: #{pose_resnet_forward.122} parent=0 // pred_fallthru
    _
  // Predicated region
  $region26: #{pose_resnet_forward.122} parent=0 // pred_check
    _
  $region27: #{pose_resnet_forward.122} parent=0 // pred_check_branch
    %167 = sbr.rel (0) target = $region29
  $region28: #{pose_resnet_forward.122} parent=0 // pred_region
    _
  $region29: #{pose_resnet_forward.122} parent=0 // pred_fallthru
    _
  // Predicated region
  $region30: #{pose_resnet_forward.122} parent=0 // pred_check
    _
  $region31: #{pose_resnet_forward.122} parent=0 // pred_check_branch
    %169 = sbr.rel (0) target = $region33
  $region32: #{pose_resnet_forward.122} parent=0 // pred_region
    _
  $region33: #{pose_resnet_forward.122} parent=0 // pred_fallthru
    _
  // Predicated region
  $region34: #{pose_resnet_forward.122} parent=0 // pred_check
    _
  $region35: #{pose_resnet_forward.122} parent=0 // pred_check_branch
    %171 = sbr.rel (0) target = $region37
  $region36: #{pose_resnet_forward.122} parent=0 // pred_region
    _
  $region37: #{pose_resnet_forward.122} parent=0 // pred_fallthru
    _
  // Predicated region
  $region38: #{pose_resnet_forward.122} parent=0 // pred_check
    _
  $region39: #{pose_resnet_forward.122} parent=0 // pred_check_branch
    %173 = sbr.rel (0) target = $region41
  $region40: #{pose_resnet_forward.122} parent=0 // pred_region
    _
  $region41: #{pose_resnet_forward.122} parent=0 // pred_fallthru
    _

// kernel: pose_resnet_forward.124
$region0: #{pose_resnet_forward.124}
  #allocation0 [shape = 'u32[]', space=smem, size = 0x4, offset = 0x4, fixed_abs, tag = 'smem constant byte address 0x4 - core index']
  #allocation1 [shape = 'u32[144,128]{1,0:T(1,128)}', space=vmem, size = 0x12000, scoped, tag = 'internal scratch']
  %s0 = inlined_call_operand.vmem [shape: bf16[8,128], index: 0, kind: input, shape index: {}]
  %s1 = inlined_call_operand.vmem [shape: bf16[8,128], index: 1, kind: input, shape index: {}]
  %s2 = inlined_call_operand.vmem [shape: f32[1,128], index: 2, kind: input, shape index: {}]
  %s3 = inlined_call_operand.vmem [shape: f32[1,128], index: 3, kind: input, shape index: {}]
  %s4 = inlined_call_operand.vmem [shape: f32[1,128], index: 4, kind: input, shape index: {}]
  %s5 = inlined_call_operand.vmem [shape: f32[1,128], index: 5, kind: input, shape index: {}]
  %s6 = inlined_call_operand.vmem [shape: bf16[8,128], index: 6, kind: output, shape index: {}]
  %s7 = sld [smem:[#allocation0]]
  $region34: #{pose_resnet_forward.124} parent=0
    _
  %s9 = ssub.s32 1, %s7
  %s10 = scalar_select 0, %s9, %s7
  // Predicated region
  $region2: #{pose_resnet_forward.124} parent=0 // pred_check
    _
  $region3: #{pose_resnet_forward.124} parent=0 // pred_check_branch
    %12 = sbr.rel (0) target = $region5
  $region4: #{pose_resnet_forward.124} parent=0 // pred_region
    _
  $region5: #{pose_resnet_forward.124} parent=0 // pred_fallthru
    _
  // Predicated region
  $region6: #{pose_resnet_forward.124} parent=0 // pred_check
    _
  $region7: #{pose_resnet_forward.124} parent=0 // pred_check_branch
    %14 = sbr.rel (0) target = $region9
  $region8: #{pose_resnet_forward.124} parent=0 // pred_region
    _
  $region9: #{pose_resnet_forward.124} parent=0 // pred_fallthru
    _
  // Predicated region
  $region10: #{pose_resnet_forward.124} parent=0 // pred_check
    _
  $region11: #{pose_resnet_forward.124} parent=0 // pred_check_branch
    %16 = sbr.rel (0) target = $region13
  $region12: #{pose_resnet_forward.124} parent=0 // pred_region
    _
  $region13: #{pose_resnet_forward.124} parent=0 // pred_fallthru
    _
  // Predicated region
  $region14: #{pose_resnet_forward.124} parent=0 // pred_check
    _
  $region15: #{pose_resnet_forward.124} parent=0 // pred_check_branch
    %18 = sbr.rel (0) target = $region17
  $region16: #{pose_resnet_forward.124} parent=0 // pred_region
    _
  $region17: #{pose_resnet_forward.124} parent=0 // pred_fallthru
    _
  // Predicated region
  $region18: #{pose_resnet_forward.124} parent=0 // pred_check
    _
  $region19: #{pose_resnet_forward.124} parent=0 // pred_check_branch
    %20 = sbr.rel (0) target = $region21
  $region20: #{pose_resnet_forward.124} parent=0 // pred_region
    _
  $region21: #{pose_resnet_forward.124} parent=0 // pred_fallthru
    _
  // Predicated region
  $region22: #{pose_resnet_forward.124} parent=0 // pred_check
    _
  $region23: #{pose_resnet_forward.124} parent=0 // pred_check_branch
    %22 = sbr.rel (0) target = $region25
  $region24: #{pose_resnet_forward.124} parent=0 // pred_region
    _
  $region25: #{pose_resnet_forward.124} parent=0 // pred_fallthru
    _
  %v23 = vld [vmem:[%s0] sm:$0xf]
  %v24 = vunpack.c.l.bf16 %v23
  %v25 = vld [vmem:[%s2] sm:$0x1]
  %v27 = vlaneseq
  %v28 = vshrl.u32 %v27, 7
  %v29 = vsub.s32 0, %v28
  %v30 = vrot.slane %v25, %v29
  %v32 = vmul.f32 %v24, %v30
  %v33 = vld [vmem:[%s3] sm:$0x1]
  %v35 = vlaneseq
  %v36 = vshrl.u32 %v35, 7
  %v37 = vsub.s32 0, %v36
  %v38 = vrot.slane %v33, %v37
  %v40 = vadd.f32 %v32, %v38
  %v41 = vld [vmem:[%s1] sm:$0xf]
  %v42 = vunpack.c.l.bf16 %v41
  %v43 = vld [vmem:[%s4] sm:$0x1]
  %v45 = vlaneseq
  %v46 = vshrl.u32 %v45, 7
  %v47 = vsub.s32 0, %v46
  %v48 = vrot.slane %v43, %v47
  %v50 = vmul.f32 %v42, %v48
  %v51 = vadd.f32 %v40, %v50
  %v52 = vld [vmem:[%s5] sm:$0x1]
  %v54 = vlaneseq
  %v55 = vshrl.u32 %v54, 7
  %v56 = vsub.s32 0, %v55
  %v57 = vrot.slane %v52, %v56
  %v59 = vadd.f32 %v51, %v57
  %v60 = vmax.f32 %v59, 0.0
  %v61 = vpack.c.bf16 %v60, %v60
  %62 = vst [vmem:[%s6] sm:$0xf] %v61
  // Predicated region
  $region26: #{pose_resnet_forward.124} parent=0 // pred_check
    _
  $region27: #{pose_resnet_forward.124} parent=0 // pred_check_branch
    %64 = sbr.rel (0) target = $region29
  $region28: #{pose_resnet_forward.124} parent=0 // pred_region
    _
  $region29: #{pose_resnet_forward.124} parent=0 // pred_fallthru
    _
  // Predicated region
  $region30: #{pose_resnet_forward.124} parent=0 // pred_check
    _
  $region31: #{pose_resnet_forward.124} parent=0 // pred_check_branch
    %66 = sbr.rel (0) target = $region33
  $region32: #{pose_resnet_forward.124} parent=0 // pred_region
    _
  $region33: #{pose_resnet_forward.124} parent=0 // pred_fallthru
    _

// kernel: pose_resnet_forward.123
$region0: #{pose_resnet_forward.123}
  #allocation0 [shape = 'u32[]', space=smem, size = 0x4, offset = 0x4, fixed_abs, tag = 'smem constant byte address 0x4 - core index']
  #allocation1 [shape = 'u32[144,128]{1,0:T(1,128)}', space=vmem, size = 0x12000, scoped, tag = 'internal scratch']
  %s0 = inlined_call_operand.vmem [shape: bf16[8,128], index: 0, kind: input, shape index: {}]
  %s1 = inlined_call_operand.vmem [shape: bf16[128,128], index: 1, kind: input, shape index: {}]
  %s2 = inlined_call_operand.vmem [shape: bf16[8,128], index: 2, kind: output, shape index: {0}]
  %s3 = inlined_call_operand.vmem [shape: f32[8,128], index: 3, kind: output, shape index: {1}]
  %s4 = inlined_call_operand.vmem [shape: f32[8,128], index: 4, kind: output, shape index: {2}]
  %5 = xla_tuple %s2, %s3, %s4
  %s6 = sld [smem:[#allocation0]]
  $region34: #{pose_resnet_forward.123} parent=0
    _
  %s8 = ssub.s32 1, %s6
  %s9 = scalar_select 0, %s8, %s6
  // Predicated region
  $region2: #{pose_resnet_forward.123} parent=0 // pred_check
    _
  $region3: #{pose_resnet_forward.123} parent=0 // pred_check_branch
    %11 = sbr.rel (0) target = $region5
  $region4: #{pose_resnet_forward.123} parent=0 // pred_region
    _
  $region5: #{pose_resnet_forward.123} parent=0 // pred_fallthru
    _
  // Predicated region
  $region6: #{pose_resnet_forward.123} parent=0 // pred_check
    _
  $region7: #{pose_resnet_forward.123} parent=0 // pred_check_branch
    %13 = sbr.rel (0) target = $region9
  $region8: #{pose_resnet_forward.123} parent=0 // pred_region
    _
  $region9: #{pose_resnet_forward.123} parent=0 // pred_fallthru
    _
  %v15 = vld [vmem:[%s0] sm:$0xf]
  %v16 = vld [vmem:[%s1] sm:$0xf]
  %v17 = vld [vmem:[%s1 + $0x4] sm:$0xf]
  %v18 = vld [vmem:[%s1 + $0x8] sm:$0xf]
  %v19 = vld [vmem:[%s1 + $0xc] sm:$0xf]
  %v20 = vld [vmem:[%s1 + $0x10] sm:$0xf]
  %v21 = vld [vmem:[%s1 + $0x14] sm:$0xf]
  %v22 = vld [vmem:[%s1 + $0x18] sm:$0xf]
  %v23 = vld [vmem:[%s1 + $0x1c] sm:$0xf]
  %v24 = vld [vmem:[%s1 + $0x20] sm:$0xf]
  %v25 = vld [vmem:[%s1 + $0x24] sm:$0xf]
  %v26 = vld [vmem:[%s1 + $0x28] sm:$0xf]
  %v27 = vld [vmem:[%s1 + $0x2c] sm:$0xf]
  %v28 = vld [vmem:[%s1 + $0x30] sm:$0xf]
  %v29 = vld [vmem:[%s1 + $0x34] sm:$0xf]
  %v30 = vld [vmem:[%s1 + $0x38] sm:$0xf]
  %v31 = vld [vmem:[%s1 + $0x3c] sm:$0xf]
  %v48 = vunpack.c.l.b16 %v16
  %v49 = vunpack.c.l.b16 %v17
  %v50 = vunpack.c.l.b16 %v18
  %v51 = vunpack.c.l.b16 %v19
  %v52 = vunpack.c.l.b16 %v20
  %v53 = vunpack.c.l.b16 %v21
  %v54 = vunpack.c.l.b16 %v22
  %v55 = vunpack.c.l.b16 %v23
  %v56 = vunpack.c.l.b16 %v24
  %v57 = vunpack.c.l.b16 %v25
  %v58 = vunpack.c.l.b16 %v26
  %v59 = vunpack.c.l.b16 %v27
  %v60 = vunpack.c.l.b16 %v28
  %v61 = vunpack.c.l.b16 %v29
  %v62 = vunpack.c.l.b16 %v30
  %v63 = vunpack.c.l.b16 %v31
  %v64 = vpack.c.b16 %v49, %v48
  %v65 = vpack.c.b16 %v51, %v50
  %v66 = vpack.c.b16 %v53, %v52
  %v67 = vpack.c.b16 %v55, %v54
  %v68 = vpack.c.b16 %v57, %v56
  %v69 = vpack.c.b16 %v59, %v58
  %v70 = vpack.c.b16 %v61, %v60
  %v71 = vpack.c.b16 %v63, %v62
  %80 = vmatprep.subr.bf16.mxu0 0
  %81 = vmatpush1.bf16.msra.mxu0 %v64
  %82 = vmatprep.subr.bf16.mxu0 0
  %83 = vmatpush1.bf16.msra.mxu0 %v65
  %84 = vmatprep.subr.bf16.mxu0 0
  %85 = vmatpush1.bf16.msra.mxu0 %v66
  %86 = vmatprep.subr.bf16.mxu0 0
  %87 = vmatpush1.bf16.msra.mxu0 %v67
  %88 = vmatprep.subr.bf16.mxu0 0
  %89 = vmatpush1.bf16.msra.mxu0 %v68
  %90 = vmatprep.subr.bf16.mxu0 0
  %91 = vmatpush1.bf16.msra.mxu0 %v69
  %92 = vmatprep.subr.bf16.mxu0 0
  %93 = vmatpush1.bf16.msra.mxu0 %v70
  %94 = vmatprep.subr.bf16.mxu0 0
  %95 = vmatpush1.bf16.msra.mxu0 %v71
  %96 = vmatprep.subr.bf16.mxu0 0
  %97 = vmatpush1.bf16.msra.mxu0 0
  %98 = vmatprep.subr.bf16.mxu0 0
  %99 = vmatpush1.bf16.msra.mxu0 0
  %100 = vmatprep.subr.bf16.mxu0 0
  %101 = vmatpush1.bf16.msra.mxu0 0
  %102 = vmatprep.subr.bf16.mxu0 0
  %103 = vmatpush1.bf16.msra.mxu0 0
  %104 = vmatprep.subr.bf16.mxu0 0
  %105 = vmatpush1.bf16.msra.mxu0 0
  %106 = vmatprep.subr.bf16.mxu0 0
  %107 = vmatpush1.bf16.msra.mxu0 0
  %108 = vmatprep.subr.bf16.mxu0 0
  %109 = vmatpush1.bf16.msra.mxu0 0
  %110 = vmatprep.subr.bf16.mxu0 0
  %111 = vmatpush1.bf16.msra.mxu0 0
  %112 = vmatprep.mubr.bf16.mxu0 0
  %113 = vmatmul.mubr.bf16.gmra.mrb[0].mxu0 %v15
  %v114 = vpop.f32.mrb[0].mxu0
  %v115 = vadd.f32 0.0, %v114
  %v116 = vpop.f32.mrb[0].mxu0
  %v117 = vpop.f32.mrb[0].mxu0
  %v118 = vpop.f32.mrb[0].mxu0
  %119 = vdwg.mxu0
  %v120 = vpack.c.bf16 %v115, %v115
  %121 = vst [vmem:[%s2] sm:$0xf] %v120
  %v122 = vrot.slane %v115, 4
  %v123 = vadd.f32 %v115, %v122
  %v124 = vrot.slane %v123, 2
  %v125 = vadd.f32 %v123, %v124
  %v126 = vrot.slane %v125, 1
  %v127 = vadd.f32 %v125, %v126
  %v128 = vmul.f32 %v115, %v115
  %v129 = vrot.slane %v128, 4
  %v130 = vadd.f32 %v128, %v129
  %v131 = vrot.slane %v130, 2
  %v132 = vadd.f32 %v130, %v131
  %v133 = vrot.slane %v132, 1
  %v134 = vadd.f32 %v132, %v133
  %135 = vst [vmem:[%s3] sm:$0xff] %v127
  %136 = vst [vmem:[%s4] sm:$0xff] %v134
  // Predicated region
  $region10: #{pose_resnet_forward.123} parent=0 // pred_check
    _
  $region11: #{pose_resnet_forward.123} parent=0 // pred_check_branch
    %138 = sbr.rel (0) target = $region13
  $region12: #{pose_resnet_forward.123} parent=0 // pred_region
    _
  $region13: #{pose_resnet_forward.123} parent=0 // pred_fallthru
    _
  // Predicated region
  $region14: #{pose_resnet_forward.123} parent=0 // pred_check
    _
  $region15: #{pose_resnet_forward.123} parent=0 // pred_check_branch
    %140 = sbr.rel (0) target = $region17
  $region16: #{pose_resnet_forward.123} parent=0 // pred_region
    _
  $region17: #{pose_resnet_forward.123} parent=0 // pred_fallthru
    _
  // Predicated region
  $region18: #{pose_resnet_forward.123} parent=0 // pred_check
    _
  $region19: #{pose_resnet_forward.123} parent=0 // pred_check_branch
    %142 = sbr.rel (0) target = $region21
  $region20: #{pose_resnet_forward.123} parent=0 // pred_region
    _
  $region21: #{pose_resnet_forward.123} parent=0 // pred_fallthru
    _
  // Predicated region
  $region22: #{pose_resnet_forward.123} parent=0 // pred_check
    _
  $region23: #{pose_resnet_forward.123} parent=0 // pred_check_branch
    %144 = sbr.rel (0) target = $region25
  $region24: #{pose_resnet_forward.123} parent=0 // pred_region
    _
  $region25: #{pose_resnet_forward.123} parent=0 // pred_fallthru
    _
  // Predicated region
  $region26: #{pose_resnet_forward.123} parent=0 // pred_check
    _
  $region27: #{pose_resnet_forward.123} parent=0 // pred_check_branch
    %146 = sbr.rel (0) target = $region29
  $region28: #{pose_resnet_forward.123} parent=0 // pred_region
    _
  $region29: #{pose_resnet_forward.123} parent=0 // pred_fallthru
    _
  // Predicated region
  $region30: #{pose_resnet_forward.123} parent=0 // pred_check
    _
  $region31: #{pose_resnet_forward.123} parent=0 // pred_check_branch
    %148 = sbr.rel (0) target = $region33
  $region32: #{pose_resnet_forward.123} parent=0 // pred_region
    _
  $region33: #{pose_resnet_forward.123} parent=0 // pred_fallthru
    _

// kernel: pose_resnet_forward.126
$region0: #{pose_resnet_forward.126}
  #allocation0 [shape = 'u32[]', space=smem, size = 0x4, offset = 0x4, fixed_abs, tag = 'smem constant byte address 0x4 - core index']
  #allocation1 [shape = 'u32[144,128]{1,0:T(1,128)}', space=vmem, size = 0x12000, scoped, tag = 'internal scratch']
  %s0 = inlined_call_operand.vmem [shape: bf16[8,128], index: 0, kind: input, shape index: {}]
  %s1 = inlined_call_operand.vmem [shape: f32[1,128], index: 1, kind: input, shape index: {}]
  %s2 = inlined_call_operand.vmem [shape: f32[1,128], index: 2, kind: input, shape index: {}]
  %s3 = inlined_call_operand.vmem [shape: bf16[8,128], index: 3, kind: output, shape index: {}]
  %s4 = sld [smem:[#allocation0]]
  $region22: #{pose_resnet_forward.126} parent=0
    _
  %s6 = ssub.s32 1, %s4
  %s7 = scalar_select 0, %s6, %s4
  // Predicated region
  $region2: #{pose_resnet_forward.126} parent=0 // pred_check
    _
  $region3: #{pose_resnet_forward.126} parent=0 // pred_check_branch
    %9 = sbr.rel (0) target = $region5
  $region4: #{pose_resnet_forward.126} parent=0 // pred_region
    _
  $region5: #{pose_resnet_forward.126} parent=0 // pred_fallthru
    _
  // Predicated region
  $region6: #{pose_resnet_forward.126} parent=0 // pred_check
    _
  $region7: #{pose_resnet_forward.126} parent=0 // pred_check_branch
    %11 = sbr.rel (0) target = $region9
  $region8: #{pose_resnet_forward.126} parent=0 // pred_region
    _
  $region9: #{pose_resnet_forward.126} parent=0 // pred_fallthru
    _
  // Predicated region
  $region10: #{pose_resnet_forward.126} parent=0 // pred_check
    _
  $region11: #{pose_resnet_forward.126} parent=0 // pred_check_branch
    %13 = sbr.rel (0) target = $region13
  $region12: #{pose_resnet_forward.126} parent=0 // pred_region
    _
  $region13: #{pose_resnet_forward.126} parent=0 // pred_fallthru
    _
  %v14 = vld [vmem:[%s0] sm:$0xf]
  %v15 = vunpack.c.l.bf16 %v14
  %v16 = vld [vmem:[%s1] sm:$0x1]
  %v18 = vlaneseq
  %v19 = vshrl.u32 %v18, 7
  %v20 = vsub.s32 0, %v19
  %v21 = vrot.slane %v16, %v20
  %v23 = vmul.f32 %v15, %v21
  %v24 = vld [vmem:[%s2] sm:$0x1]
  %v26 = vlaneseq
  %v27 = vshrl.u32 %v26, 7
  %v28 = vsub.s32 0, %v27
  %v29 = vrot.slane %v24, %v28
  %v31 = vadd.f32 %v23, %v29
  %v32 = vmax.f32 %v31, 0.0
  %v33 = vpack.c.bf16 %v32, %v32
  %34 = vst [vmem:[%s3] sm:$0xf] %v33
  // Predicated region
  $region14: #{pose_resnet_forward.126} parent=0 // pred_check
    _
  $region15: #{pose_resnet_forward.126} parent=0 // pred_check_branch
    %36 = sbr.rel (0) target = $region17
  $region16: #{pose_resnet_forward.126} parent=0 // pred_region
    _
  $region17: #{pose_resnet_forward.126} parent=0 // pred_fallthru
    _
  // Predicated region
  $region18: #{pose_resnet_forward.126} parent=0 // pred_check
    _
  $region19: #{pose_resnet_forward.126} parent=0 // pred_check_branch
    %38 = sbr.rel (0) target = $region21
  $region20: #{pose_resnet_forward.126} parent=0 // pred_region
    _
  $region21: #{pose_resnet_forward.126} parent=0 // pred_fallthru
    _

// kernel: pose_resnet_forward.121
$region0: #{pose_resnet_forward.121}
  #allocation0 [shape = 'u32[]', space=smem, size = 0x4, offset = 0x4, fixed_abs, tag = 'smem constant byte address 0x4 - core index']
  #allocation1 [shape = 'u32[144,128]{1,0:T(1,128)}', space=vmem, size = 0x12000, scoped, tag = 'internal scratch']
  %s0 = inlined_call_operand.vmem [shape: bf16[8,1152], index: 0, kind: input, shape index: {}]
  %s1 = inlined_call_operand.vmem [shape: bf16[1152,128], index: 1, kind: input, shape index: {}]
  %s2 = inlined_call_operand.vmem [shape: bf16[8,128], index: 2, kind: output, shape index: {0}]
  %s3 = inlined_call_operand.vmem [shape: f32[8,128], index: 3, kind: output, shape index: {1}]
  %s4 = inlined_call_operand.vmem [shape: f32[8,128], index: 4, kind: output, shape index: {2}]
  %5 = xla_tuple %s2, %s3, %s4
  %s6 = sld [smem:[#allocation0]]
  $region34: #{pose_resnet_forward.121} parent=0
    _
  %s8 = ssub.s32 1, %s6
  %s9 = scalar_select 0, %s8, %s6
  // Predicated region
  $region2: #{pose_resnet_forward.121} parent=0 // pred_check
    _
  $region3: #{pose_resnet_forward.121} parent=0 // pred_check_branch
    %11 = sbr.rel (0) target = $region5
  $region4: #{pose_resnet_forward.121} parent=0 // pred_region
    _
  $region5: #{pose_resnet_forward.121} parent=0 // pred_fallthru
    _
  // Predicated region
  $region6: #{pose_resnet_forward.121} parent=0 // pred_check
    _
  $region7: #{pose_resnet_forward.121} parent=0 // pred_check_branch
    %13 = sbr.rel (0) target = $region9
  $region8: #{pose_resnet_forward.121} parent=0 // pred_region
    _
  $region9: #{pose_resnet_forward.121} parent=0 // pred_fallthru
    _
  %v15 = vld [vmem:[%s0] sm:$0xff]
  %v16 = vld [vmem:[%s0 + $0x8] sm:$0xff]
  %v17 = vld [vmem:[%s0 + $0x10] sm:$0xff]
  %v18 = vld [vmem:[%s0 + $0x18] sm:$0xff]
  %v19 = vld [vmem:[%s0 + $0x20] sm:$0xf]
  %v20 = vld [vmem:[%s1] sm:$0xf]
  %v21 = vld [vmem:[%s1 + $0x4] sm:$0xf]
  %v22 = vld [vmem:[%s1 + $0x8] sm:$0xf]
  %v23 = vld [vmem:[%s1 + $0xc] sm:$0xf]
  %v24 = vld [vmem:[%s1 + $0x10] sm:$0xf]
  %v25 = vld [vmem:[%s1 + $0x14] sm:$0xf]
  %v26 = vld [vmem:[%s1 + $0x18] sm:$0xf]
  %v27 = vld [vmem:[%s1 + $0x1c] sm:$0xf]
  %v28 = vld [vmem:[%s1 + $0x20] sm:$0xf]
  %v29 = vld [vmem:[%s1 + $0x24] sm:$0xf]
  %v30 = vld [vmem:[%s1 + $0x28] sm:$0xf]
  %v31 = vld [vmem:[%s1 + $0x2c] sm:$0xf]
  %v32 = vld [vmem:[%s1 + $0x30] sm:$0xf]
  %v33 = vld [vmem:[%s1 + $0x34] sm:$0xf]
  %v34 = vld [vmem:[%s1 + $0x38] sm:$0xf]
  %v35 = vld [vmem:[%s1 + $0x3c] sm:$0xf]
  %v36 = vld [vmem:[%s1 + $0x40] sm:$0xf]
  %v37 = vld [vmem:[%s1 + $0x44] sm:$0xf]
  %v38 = vld [vmem:[%s1 + $0x48] sm:$0xf]
  %v39 = vld [vmem:[%s1 + $0x4c] sm:$0xf]
  %v40 = vld [vmem:[%s1 + $0x50] sm:$0xf]
  %v41 = vld [vmem:[%s1 + $0x54] sm:$0xf]
  %v42 = vld [vmem:[%s1 + $0x58] sm:$0xf]
  %v43 = vld [vmem:[%s1 + $0x5c] sm:$0xf]
  %v44 = vld [vmem:[%s1 + $0x60] sm:$0xf]
  %v45 = vld [vmem:[%s1 + $0x64] sm:$0xf]
  %v46 = vld [vmem:[%s1 + $0x68] sm:$0xf]
  %v47 = vld [vmem:[%s1 + $0x6c] sm:$0xf]
  %v48 = vld [vmem:[%s1 + $0x70] sm:$0xf]
  %v49 = vld [vmem:[%s1 + $0x74] sm:$0xf]
  %v50 = vld [vmem:[%s1 + $0x78] sm:$0xf]
  %v51 = vld [vmem:[%s1 + $0x7c] sm:$0xf]
  %v52 = vld [vmem:[%s1 + $0x80] sm:$0xf]
  %v53 = vld [vmem:[%s1 + $0x84] sm:$0xf]
  %v54 = vld [vmem:[%s1 + $0x88] sm:$0xf]
  %v55 = vld [vmem:[%s1 + $0x8c] sm:$0xf]
  %v56 = vld [vmem:[%s1 + $0x90] sm:$0xf]
  %v57 = vld [vmem:[%s1 + $0x94] sm:$0xf]
  %v58 = vld [vmem:[%s1 + $0x98] sm:$0xf]
  %v59 = vld [vmem:[%s1 + $0x9c] sm:$0xf]
  %v60 = vld [vmem:[%s1 + $0xa0] sm:$0xf]
  %v61 = vld [vmem:[%s1 + $0xa4] sm:$0xf]
  %v62 = vld [vmem:[%s1 + $0xa8] sm:$0xf]
  %v63 = vld [vmem:[%s1 + $0xac] sm:$0xf]
  %v64 = vld [vmem:[%s1 + $0xb0] sm:$0xf]
  %v65 = vld [vmem:[%s1 + $0xb4] sm:$0xf]
  %v66 = vld [vmem:[%s1 + $0xb8] sm:$0xf]
  %v67 = vld [vmem:[%s1 + $0xbc] sm:$0xf]
  %v68 = vld [vmem:[%s1 + $0xc0] sm:$0xf]
  %v69 = vld [vmem:[%s1 + $0xc4] sm:$0xf]
  %v70 = vld [vmem:[%s1 + $0xc8] sm:$0xf]
  %v71 = vld [vmem:[%s1 + $0xcc] sm:$0xf]
  %v72 = vld [vmem:[%s1 + $0xd0] sm:$0xf]
  %v73 = vld [vmem:[%s1 + $0xd4] sm:$0xf]
  %v74 = vld [vmem:[%s1 + $0xd8] sm:$0xf]
  %v75 = vld [vmem:[%s1 + $0xdc] sm:$0xf]
  %v76 = vld [vmem:[%s1 + $0xe0] sm:$0xf]
  %v77 = vld [vmem:[%s1 + $0xe4] sm:$0xf]
  %v78 = vld [vmem:[%s1 + $0xe8] sm:$0xf]
  %v79 = vld [vmem:[%s1 + $0xec] sm:$0xf]
  %v80 = vld [vmem:[%s1 + $0xf0] sm:$0xf]
  %v81 = vld [vmem:[%s1 + $0xf4] sm:$0xf]
  %v82 = vld [vmem:[%s1 + $0xf8] sm:$0xf]
  %v83 = vld [vmem:[%s1 + $0xfc] sm:$0xf]
  %v84 = vld [vmem:[%s1 + $0x100] sm:$0xf]
  %v85 = vld [vmem:[%s1 + $0x104] sm:$0xf]
  %v86 = vld [vmem:[%s1 + $0x108] sm:$0xf]
  %v87 = vld [vmem:[%s1 + $0x10c] sm:$0xf]
  %v88 = vld [vmem:[%s1 + $0x110] sm:$0xf]
  %v89 = vld [vmem:[%s1 + $0x114] sm:$0xf]
  %v90 = vld [vmem:[%s1 + $0x118] sm:$0xf]
  %v91 = vld [vmem:[%s1 + $0x11c] sm:$0xf]
  %v92 = vld [vmem:[%s1 + $0x120] sm:$0xf]
  %v93 = vld [vmem:[%s1 + $0x124] sm:$0xf]
  %v94 = vld [vmem:[%s1 + $0x128] sm:$0xf]
  %v95 = vld [vmem:[%s1 + $0x12c] sm:$0xf]
  %v96 = vld [vmem:[%s1 + $0x130] sm:$0xf]
  %v97 = vld [vmem:[%s1 + $0x134] sm:$0xf]
  %v98 = vld [vmem:[%s1 + $0x138] sm:$0xf]
  %v99 = vld [vmem:[%s1 + $0x13c] sm:$0xf]
  %v100 = vld [vmem:[%s1 + $0x140] sm:$0xf]
  %v101 = vld [vmem:[%s1 + $0x144] sm:$0xf]
  %v102 = vld [vmem:[%s1 + $0x148] sm:$0xf]
  %v103 = vld [vmem:[%s1 + $0x14c] sm:$0xf]
  %v104 = vld [vmem:[%s1 + $0x150] sm:$0xf]
  %v105 = vld [vmem:[%s1 + $0x154] sm:$0xf]
  %v106 = vld [vmem:[%s1 + $0x158] sm:$0xf]
  %v107 = vld [vmem:[%s1 + $0x15c] sm:$0xf]
  %v108 = vld [vmem:[%s1 + $0x160] sm:$0xf]
  %v109 = vld [vmem:[%s1 + $0x164] sm:$0xf]
  %v110 = vld [vmem:[%s1 + $0x168] sm:$0xf]
  %v111 = vld [vmem:[%s1 + $0x16c] sm:$0xf]
  %v112 = vld [vmem:[%s1 + $0x170] sm:$0xf]
  %v113 = vld [vmem:[%s1 + $0x174] sm:$0xf]
  %v114 = vld [vmem:[%s1 + $0x178] sm:$0xf]
  %v115 = vld [vmem:[%s1 + $0x17c] sm:$0xf]
  %v116 = vld [vmem:[%s1 + $0x180] sm:$0xf]
  %v117 = vld [vmem:[%s1 + $0x184] sm:$0xf]
  %v118 = vld [vmem:[%s1 + $0x188] sm:$0xf]
  %v119 = vld [vmem:[%s1 + $0x18c] sm:$0xf]
  %v120 = vld [vmem:[%s1 + $0x190] sm:$0xf]
  %v121 = vld [vmem:[%s1 + $0x194] sm:$0xf]
  %v122 = vld [vmem:[%s1 + $0x198] sm:$0xf]
  %v123 = vld [vmem:[%s1 + $0x19c] sm:$0xf]
  %v124 = vld [vmem:[%s1 + $0x1a0] sm:$0xf]
  %v125 = vld [vmem:[%s1 + $0x1a4] sm:$0xf]
  %v126 = vld [vmem:[%s1 + $0x1a8] sm:$0xf]
  %v127 = vld [vmem:[%s1 + $0x1ac] sm:$0xf]
  %v128 = vld [vmem:[%s1 + $0x1b0] sm:$0xf]
  %v129 = vld [vmem:[%s1 + $0x1b4] sm:$0xf]
  %v130 = vld [vmem:[%s1 + $0x1b8] sm:$0xf]
  %v131 = vld [vmem:[%s1 + $0x1bc] sm:$0xf]
  %v132 = vld [vmem:[%s1 + $0x1c0] sm:$0xf]
  %v133 = vld [vmem:[%s1 + $0x1c4] sm:$0xf]
  %v134 = vld [vmem:[%s1 + $0x1c8] sm:$0xf]
  %v135 = vld [vmem:[%s1 + $0x1cc] sm:$0xf]
  %v136 = vld [vmem:[%s1 + $0x1d0] sm:$0xf]
  %v137 = vld [vmem:[%s1 + $0x1d4] sm:$0xf]
  %v138 = vld [vmem:[%s1 + $0x1d8] sm:$0xf]
  %v139 = vld [vmem:[%s1 + $0x1dc] sm:$0xf]
  %v140 = vld [vmem:[%s1 + $0x1e0] sm:$0xf]
  %v141 = vld [vmem:[%s1 + $0x1e4] sm:$0xf]
  %v142 = vld [vmem:[%s1 + $0x1e8] sm:$0xf]
  %v143 = vld [vmem:[%s1 + $0x1ec] sm:$0xf]
  %v144 = vld [vmem:[%s1 + $0x1f0] sm:$0xf]
  %v145 = vld [vmem:[%s1 + $0x1f4] sm:$0xf]
  %v146 = vld [vmem:[%s1 + $0x1f8] sm:$0xf]
  %v147 = vld [vmem:[%s1 + $0x1fc] sm:$0xf]
  %v148 = vld [vmem:[%s1 + $0x200] sm:$0xf]
  %v149 = vld [vmem:[%s1 + $0x204] sm:$0xf]
  %v150 = vld [vmem:[%s1 + $0x208] sm:$0xf]
  %v151 = vld [vmem:[%s1 + $0x20c] sm:$0xf]
  %v152 = vld [vmem:[%s1 + $0x210] sm:$0xf]
  %v153 = vld [vmem:[%s1 + $0x214] sm:$0xf]
  %v154 = vld [vmem:[%s1 + $0x218] sm:$0xf]
  %v155 = vld [vmem:[%s1 + $0x21c] sm:$0xf]
  %v156 = vld [vmem:[%s1 + $0x220] sm:$0xf]
  %v157 = vld [vmem:[%s1 + $0x224] sm:$0xf]
  %v158 = vld [vmem:[%s1 + $0x228] sm:$0xf]
  %v159 = vld [vmem:[%s1 + $0x22c] sm:$0xf]
  %v160 = vld [vmem:[%s1 + $0x230] sm:$0xf]
  %v161 = vld [vmem:[%s1 + $0x234] sm:$0xf]
  %v162 = vld [vmem:[%s1 + $0x238] sm:$0xf]
  %v163 = vld [vmem:[%s1 + $0x23c] sm:$0xf]
  %v169 = vunpack.c.l.b16 %v15
  %v170 = vunpack.c.h.b16 %v15
  %v171 = vunpack.c.l.b16 %v16
  %v172 = vunpack.c.h.b16 %v16
  %v173 = vunpack.c.l.b16 %v17
  %v174 = vunpack.c.h.b16 %v17
  %v175 = vunpack.c.l.b16 %v18
  %v176 = vunpack.c.h.b16 %v18
  %v177 = vunpack.c.l.b16 %v19
  %v178 = vpack.c.b16 %v169, %v169
  %v179 = vpack.c.b16 %v170, %v170
  %v180 = vpack.c.b16 %v171, %v171
  %v181 = vpack.c.b16 %v172, %v172
  %v182 = vpack.c.b16 %v173, %v173
  %v183 = vpack.c.b16 %v174, %v174
  %v184 = vpack.c.b16 %v175, %v175
  %v185 = vpack.c.b16 %v176, %v176
  %v186 = vpack.c.b16 %v177, %v177
  %v340 = vunpack.c.l.b16 %v20
  %v341 = vunpack.c.l.b16 %v21
  %v342 = vunpack.c.l.b16 %v22
  %v343 = vunpack.c.l.b16 %v23
  %v344 = vunpack.c.l.b16 %v24
  %v345 = vunpack.c.l.b16 %v25
  %v346 = vunpack.c.l.b16 %v26
  %v347 = vunpack.c.l.b16 %v27
  %v348 = vunpack.c.l.b16 %v28
  %v349 = vunpack.c.l.b16 %v29
  %v350 = vunpack.c.l.b16 %v30
  %v351 = vunpack.c.l.b16 %v31
  %v352 = vunpack.c.l.b16 %v32
  %v353 = vunpack.c.l.b16 %v33
  %v354 = vunpack.c.l.b16 %v34
  %v355 = vunpack.c.l.b16 %v35
  %v356 = vunpack.c.l.b16 %v36
  %v357 = vunpack.c.l.b16 %v37
  %v358 = vunpack.c.l.b16 %v38
  %v359 = vunpack.c.l.b16 %v39
  %v360 = vunpack.c.l.b16 %v40
  %v361 = vunpack.c.l.b16 %v41
  %v362 = vunpack.c.l.b16 %v42
  %v363 = vunpack.c.l.b16 %v43
  %v364 = vunpack.c.l.b16 %v44
  %v365 = vunpack.c.l.b16 %v45
  %v366 = vunpack.c.l.b16 %v46
  %v367 = vunpack.c.l.b16 %v47
  %v368 = vunpack.c.l.b16 %v48
  %v369 = vunpack.c.l.b16 %v49
  %v370 = vunpack.c.l.b16 %v50
  %v371 = vunpack.c.l.b16 %v51
  %v372 = vunpack.c.l.b16 %v52
  %v373 = vunpack.c.l.b16 %v53
  %v374 = vunpack.c.l.b16 %v54
  %v375 = vunpack.c.l.b16 %v55
  %v376 = vunpack.c.l.b16 %v56
  %v377 = vunpack.c.l.b16 %v57
  %v378 = vunpack.c.l.b16 %v58
  %v379 = vunpack.c.l.b16 %v59
  %v380 = vunpack.c.l.b16 %v60
  %v381 = vunpack.c.l.b16 %v61
  %v382 = vunpack.c.l.b16 %v62
  %v383 = vunpack.c.l.b16 %v63
  %v384 = vunpack.c.l.b16 %v64
  %v385 = vunpack.c.l.b16 %v65
  %v386 = vunpack.c.l.b16 %v66
  %v387 = vunpack.c.l.b16 %v67
  %v388 = vunpack.c.l.b16 %v68
  %v389 = vunpack.c.l.b16 %v69
  %v390 = vunpack.c.l.b16 %v70
  %v391 = vunpack.c.l.b16 %v71
  %v392 = vunpack.c.l.b16 %v72
  %v393 = vunpack.c.l.b16 %v73
  %v394 = vunpack.c.l.b16 %v74
  %v395 = vunpack.c.l.b16 %v75
  %v396 = vunpack.c.l.b16 %v76
  %v397 = vunpack.c.l.b16 %v77
  %v398 = vunpack.c.l.b16 %v78
  %v399 = vunpack.c.l.b16 %v79
  %v400 = vunpack.c.l.b16 %v80
  %v401 = vunpack.c.l.b16 %v81
  %v402 = vunpack.c.l.b16 %v82
  %v403 = vunpack.c.l.b16 %v83
  %v404 = vunpack.c.l.b16 %v84
  %v405 = vunpack.c.l.b16 %v85
  %v406 = vunpack.c.l.b16 %v86
  %v407 = vunpack.c.l.b16 %v87
  %v408 = vunpack.c.l.b16 %v88
  %v409 = vunpack.c.l.b16 %v89
  %v410 = vunpack.c.l.b16 %v90
  %v411 = vunpack.c.l.b16 %v91
  %v412 = vunpack.c.l.b16 %v92
  %v413 = vunpack.c.l.b16 %v93
  %v414 = vunpack.c.l.b16 %v94
  %v415 = vunpack.c.l.b16 %v95
  %v416 = vunpack.c.l.b16 %v96
  %v417 = vunpack.c.l.b16 %v97
  %v418 = vunpack.c.l.b16 %v98
  %v419 = vunpack.c.l.b16 %v99
  %v420 = vunpack.c.l.b16 %v100
  %v421 = vunpack.c.l.b16 %v101
  %v422 = vunpack.c.l.b16 %v102
  %v423 = vunpack.c.l.b16 %v103
  %v424 = vunpack.c.l.b16 %v104
  %v425 = vunpack.c.l.b16 %v105
  %v426 = vunpack.c.l.b16 %v106
  %v427 = vunpack.c.l.b16 %v107
  %v428 = vunpack.c.l.b16 %v108
  %v429 = vunpack.c.l.b16 %v109
  %v430 = vunpack.c.l.b16 %v110
  %v431 = vunpack.c.l.b16 %v111
  %v432 = vunpack.c.l.b16 %v112
  %v433 = vunpack.c.l.b16 %v113
  %v434 = vunpack.c.l.b16 %v114
  %v435 = vunpack.c.l.b16 %v115
  %v436 = vunpack.c.l.b16 %v116
  %v437 = vunpack.c.l.b16 %v117
  %v438 = vunpack.c.l.b16 %v118
  %v439 = vunpack.c.l.b16 %v119
  %v440 = vunpack.c.l.b16 %v120
  %v441 = vunpack.c.l.b16 %v121
  %v442 = vunpack.c.l.b16 %v122
  %v443 = vunpack.c.l.b16 %v123
  %v444 = vunpack.c.l.b16 %v124
  %v445 = vunpack.c.l.b16 %v125
  %v446 = vunpack.c.l.b16 %v126
  %v447 = vunpack.c.l.b16 %v127
  %v448 = vunpack.c.l.b16 %v128
  %v449 = vunpack.c.l.b16 %v129
  %v450 = vunpack.c.l.b16 %v130
  %v451 = vunpack.c.l.b16 %v131
  %v452 = vunpack.c.l.b16 %v132
  %v453 = vunpack.c.l.b16 %v133
  %v454 = vunpack.c.l.b16 %v134
  %v455 = vunpack.c.l.b16 %v135
  %v456 = vunpack.c.l.b16 %v136
  %v457 = vunpack.c.l.b16 %v137
  %v458 = vunpack.c.l.b16 %v138
  %v459 = vunpack.c.l.b16 %v139
  %v460 = vunpack.c.l.b16 %v140
  %v461 = vunpack.c.l.b16 %v141
  %v462 = vunpack.c.l.b16 %v142
  %v463 = vunpack.c.l.b16 %v143
  %v464 = vunpack.c.l.b16 %v144
  %v465 = vunpack.c.l.b16 %v145
  %v466 = vunpack.c.l.b16 %v146
  %v467 = vunpack.c.l.b16 %v147
  %v468 = vunpack.c.l.b16 %v148
  %v469 = vunpack.c.l.b16 %v149
  %v470 = vunpack.c.l.b16 %v150
  %v471 = vunpack.c.l.b16 %v151
  %v472 = vunpack.c.l.b16 %v152
  %v473 = vunpack.c.l.b16 %v153
  %v474 = vunpack.c.l.b16 %v154
  %v475 = vunpack.c.l.b16 %v155
  %v476 = vunpack.c.l.b16 %v156
  %v477 = vunpack.c.l.b16 %v157
  %v478 = vunpack.c.l.b16 %v158
  %v479 = vunpack.c.l.b16 %v159
  %v480 = vunpack.c.l.b16 %v160
  %v481 = vunpack.c.l.b16 %v161
  %v482 = vunpack.c.l.b16 %v162
  %v483 = vunpack.c.l.b16 %v163
  %v484 = vpack.c.b16 %v341, %v340
  %v485 = vpack.c.b16 %v343, %v342
  %v486 = vpack.c.b16 %v345, %v344
  %v487 = vpack.c.b16 %v347, %v346
  %v488 = vpack.c.b16 %v349, %v348
  %v489 = vpack.c.b16 %v351, %v350
  %v490 = vpack.c.b16 %v353, %v352
  %v491 = vpack.c.b16 %v355, %v354
  %v492 = vpack.c.b16 %v357, %v356
  %v493 = vpack.c.b16 %v359, %v358
  %v494 = vpack.c.b16 %v361, %v360
  %v495 = vpack.c.b16 %v363, %v362
  %v496 = vpack.c.b16 %v365, %v364
  %v497 = vpack.c.b16 %v367, %v366
  %v498 = vpack.c.b16 %v369, %v368
  %v499 = vpack.c.b16 %v371, %v370
  %v500 = vpack.c.b16 %v373, %v372
  %v501 = vpack.c.b16 %v375, %v374
  %v502 = vpack.c.b16 %v377, %v376
  %v503 = vpack.c.b16 %v379, %v378
  %v504 = vpack.c.b16 %v381, %v380
  %v505 = vpack.c.b16 %v383, %v382
  %v506 = vpack.c.b16 %v385, %v384
  %v507 = vpack.c.b16 %v387, %v386
  %v508 = vpack.c.b16 %v389, %v388
  %v509 = vpack.c.b16 %v391, %v390
  %v510 = vpack.c.b16 %v393, %v392
  %v511 = vpack.c.b16 %v395, %v394
  %v512 = vpack.c.b16 %v397, %v396
  %v513 = vpack.c.b16 %v399, %v398
  %v514 = vpack.c.b16 %v401, %v400
  %v515 = vpack.c.b16 %v403, %v402
  %v516 = vpack.c.b16 %v405, %v404
  %v517 = vpack.c.b16 %v407, %v406
  %v518 = vpack.c.b16 %v409, %v408
  %v519 = vpack.c.b16 %v411, %v410
  %v520 = vpack.c.b16 %v413, %v412
  %v521 = vpack.c.b16 %v415, %v414
  %v522 = vpack.c.b16 %v417, %v416
  %v523 = vpack.c.b16 %v419, %v418
  %v524 = vpack.c.b16 %v421, %v420
  %v525 = vpack.c.b16 %v423, %v422
  %v526 = vpack.c.b16 %v425, %v424
  %v527 = vpack.c.b16 %v427, %v426
  %v528 = vpack.c.b16 %v429, %v428
  %v529 = vpack.c.b16 %v431, %v430
  %v530 = vpack.c.b16 %v433, %v432
  %v531 = vpack.c.b16 %v435, %v434
  %v532 = vpack.c.b16 %v437, %v436
  %v533 = vpack.c.b16 %v439, %v438
  %v534 = vpack.c.b16 %v441, %v440
  %v535 = vpack.c.b16 %v443, %v442
  %v536 = vpack.c.b16 %v445, %v444
  %v537 = vpack.c.b16 %v447, %v446
  %v538 = vpack.c.b16 %v449, %v448
  %v539 = vpack.c.b16 %v451, %v450
  %v540 = vpack.c.b16 %v453, %v452
  %v541 = vpack.c.b16 %v455, %v454
  %v542 = vpack.c.b16 %v457, %v456
  %v543 = vpack.c.b16 %v459, %v458
  %v544 = vpack.c.b16 %v461, %v460
  %v545 = vpack.c.b16 %v463, %v462
  %v546 = vpack.c.b16 %v465, %v464
  %v547 = vpack.c.b16 %v467, %v466
  %v548 = vpack.c.b16 %v469, %v468
  %v549 = vpack.c.b16 %v471, %v470
  %v550 = vpack.c.b16 %v473, %v472
  %v551 = vpack.c.b16 %v475, %v474
  %v552 = vpack.c.b16 %v477, %v476
  %v553 = vpack.c.b16 %v479, %v478
  %v554 = vpack.c.b16 %v481, %v480
  %v555 = vpack.c.b16 %v483, %v482
  %628 = vmatprep.subr.bf16.mxu0 0
  %629 = vmatpush1.bf16.msra.mxu0 %v484
  %630 = vmatprep.subr.bf16.mxu0 0
  %631 = vmatpush1.bf16.msra.mxu0 %v485
  %632 = vmatprep.subr.bf16.mxu0 0
  %633 = vmatpush1.bf16.msra.mxu0 %v486
  %634 = vmatprep.subr.bf16.mxu0 0
  %635 = vmatpush1.bf16.msra.mxu0 %v487
  %636 = vmatprep.subr.bf16.mxu0 0
  %637 = vmatpush1.bf16.msra.mxu0 %v488
  %638 = vmatprep.subr.bf16.mxu0 0
  %639 = vmatpush1.bf16.msra.mxu0 %v489
  %640 = vmatprep.subr.bf16.mxu0 0
  %641 = vmatpush1.bf16.msra.mxu0 %v490
  %642 = vmatprep.subr.bf16.mxu0 0
  %643 = vmatpush1.bf16.msra.mxu0 %v491
  %644 = vmatprep.subr.bf16.mxu0 0
  %645 = vmatpush1.bf16.msra.mxu0 %v492
  %646 = vmatprep.subr.bf16.mxu0 0
  %647 = vmatpush1.bf16.msra.mxu0 %v493
  %648 = vmatprep.subr.bf16.mxu0 0
  %649 = vmatpush1.bf16.msra.mxu0 %v494
  %650 = vmatprep.subr.bf16.mxu0 0
  %651 = vmatpush1.bf16.msra.mxu0 %v495
  %652 = vmatprep.subr.bf16.mxu0 0
  %653 = vmatpush1.bf16.msra.mxu0 %v496
  %654 = vmatprep.subr.bf16.mxu0 0
  %655 = vmatpush1.bf16.msra.mxu0 %v497
  %656 = vmatprep.subr.bf16.mxu0 0
  %657 = vmatpush1.bf16.msra.mxu0 %v498
  %658 = vmatprep.subr.bf16.mxu0 0
  %659 = vmatpush1.bf16.msra.mxu0 %v499
  %660 = vmatprep.mubr.bf16.mxu0 %v179
  %661 = vmatmul.mubr.bf16.gmra.mrb[0].mxu0 %v178
  %v662 = vpop.f32.mrb[0].mxu0
  %v663 = vadd.f32 0.0, %v662
  %v664 = vpop.f32.mrb[0].mxu0
  %v665 = vpop.f32.mrb[0].mxu0
  %v666 = vpop.f32.mrb[0].mxu0
  %667 = vdwg.mxu0
  %668 = vmatprep.subr.bf16.mxu0 0
  %669 = vmatpush1.bf16.msra.mxu0 %v500
  %670 = vmatprep.subr.bf16.mxu0 0
  %671 = vmatpush1.bf16.msra.mxu0 %v501
  %672 = vmatprep.subr.bf16.mxu0 0
  %673 = vmatpush1.bf16.msra.mxu0 %v502
  %674 = vmatprep.subr.bf16.mxu0 0
  %675 = vmatpush1.bf16.msra.mxu0 %v503
  %676 = vmatprep.subr.bf16.mxu0 0
  %677 = vmatpush1.bf16.msra.mxu0 %v504
  %678 = vmatprep.subr.bf16.mxu0 0
  %679 = vmatpush1.bf16.msra.mxu0 %v505
  %680 = vmatprep.subr.bf16.mxu0 0
  %681 = vmatpush1.bf16.msra.mxu0 %v506
  %682 = vmatprep.subr.bf16.mxu0 0
  %683 = vmatpush1.bf16.msra.mxu0 %v507
  %684 = vmatprep.subr.bf16.mxu0 0
  %685 = vmatpush1.bf16.msra.mxu0 %v508
  %686 = vmatprep.subr.bf16.mxu0 0
  %687 = vmatpush1.bf16.msra.mxu0 %v509
  %688 = vmatprep.subr.bf16.mxu0 0
  %689 = vmatpush1.bf16.msra.mxu0 %v510
  %690 = vmatprep.subr.bf16.mxu0 0
  %691 = vmatpush1.bf16.msra.mxu0 %v511
  %692 = vmatprep.subr.bf16.mxu0 0
  %693 = vmatpush1.bf16.msra.mxu0 %v512
  %694 = vmatprep.subr.bf16.mxu0 0
  %695 = vmatpush1.bf16.msra.mxu0 %v513
  %696 = vmatprep.subr.bf16.mxu0 0
  %697 = vmatpush1.bf16.msra.mxu0 %v514
  %698 = vmatprep.subr.bf16.mxu0 0
  %699 = vmatpush1.bf16.msra.mxu0 %v515
  %700 = vmatprep.mubr.bf16.mxu0 %v181
  %701 = vmatmul.mubr.bf16.gmra.mrb[0].mxu0 %v180
  %v702 = vpop.f32.mrb[0].mxu0
  %v703 = vadd.f32 %v663, %v702
  %v704 = vpop.f32.mrb[0].mxu0
  %v705 = vpop.f32.mrb[0].mxu0
  %v706 = vpop.f32.mrb[0].mxu0
  %707 = vdwg.mxu0
  %708 = vmatprep.subr.bf16.mxu0 0
  %709 = vmatpush1.bf16.msra.mxu0 %v516
  %710 = vmatprep.subr.bf16.mxu0 0
  %711 = vmatpush1.bf16.msra.mxu0 %v517
  %712 = vmatprep.subr.bf16.mxu0 0
  %713 = vmatpush1.bf16.msra.mxu0 %v518
  %714 = vmatprep.subr.bf16.mxu0 0
  %715 = vmatpush1.bf16.msra.mxu0 %v519
  %716 = vmatprep.subr.bf16.mxu0 0
  %717 = vmatpush1.bf16.msra.mxu0 %v520
  %718 = vmatprep.subr.bf16.mxu0 0
  %719 = vmatpush1.bf16.msra.mxu0 %v521
  %720 = vmatprep.subr.bf16.mxu0 0
  %721 = vmatpush1.bf16.msra.mxu0 %v522
  %722 = vmatprep.subr.bf16.mxu0 0
  %723 = vmatpush1.bf16.msra.mxu0 %v523
  %724 = vmatprep.subr.bf16.mxu0 0
  %725 = vmatpush1.bf16.msra.mxu0 %v524
  %726 = vmatprep.subr.bf16.mxu0 0
  %727 = vmatpush1.bf16.msra.mxu0 %v525
  %728 = vmatprep.subr.bf16.mxu0 0
  %729 = vmatpush1.bf16.msra.mxu0 %v526
  %730 = vmatprep.subr.bf16.mxu0 0
  %731 = vmatpush1.bf16.msra.mxu0 %v527
  %732 = vmatprep.subr.bf16.mxu0 0
  %733 = vmatpush1.bf16.msra.mxu0 %v528
  %734 = vmatprep.subr.bf16.mxu0 0
  %735 = vmatpush1.bf16.msra.mxu0 %v529
  %736 = vmatprep.subr.bf16.mxu0 0
  %737 = vmatpush1.bf16.msra.mxu0 %v530
  %738 = vmatprep.subr.bf16.mxu0 0
  %739 = vmatpush1.bf16.msra.mxu0 %v531
  %740 = vmatprep.mubr.bf16.mxu0 %v183
  %741 = vmatmul.mubr.bf16.gmra.mrb[0].mxu0 %v182
  %v742 = vpop.f32.mrb[0].mxu0
  %v743 = vadd.f32 %v703, %v742
  %v744 = vpop.f32.mrb[0].mxu0
  %v745 = vpop.f32.mrb[0].mxu0
  %v746 = vpop.f32.mrb[0].mxu0
  %747 = vdwg.mxu0
  %748 = vmatprep.subr.bf16.mxu0 0
  %749 = vmatpush1.bf16.msra.mxu0 %v532
  %750 = vmatprep.subr.bf16.mxu0 0
  %751 = vmatpush1.bf16.msra.mxu0 %v533
  %752 = vmatprep.subr.bf16.mxu0 0
  %753 = vmatpush1.bf16.msra.mxu0 %v534
  %754 = vmatprep.subr.bf16.mxu0 0
  %755 = vmatpush1.bf16.msra.mxu0 %v535
  %756 = vmatprep.subr.bf16.mxu0 0
  %757 = vmatpush1.bf16.msra.mxu0 %v536
  %758 = vmatprep.subr.bf16.mxu0 0
  %759 = vmatpush1.bf16.msra.mxu0 %v537
  %760 = vmatprep.subr.bf16.mxu0 0
  %761 = vmatpush1.bf16.msra.mxu0 %v538
  %762 = vmatprep.subr.bf16.mxu0 0
  %763 = vmatpush1.bf16.msra.mxu0 %v539
  %764 = vmatprep.subr.bf16.mxu0 0
  %765 = vmatpush1.bf16.msra.mxu0 %v540
  %766 = vmatprep.subr.bf16.mxu0 0
  %767 = vmatpush1.bf16.msra.mxu0 %v541
  %768 = vmatprep.subr.bf16.mxu0 0
  %769 = vmatpush1.bf16.msra.mxu0 %v542
  %770 = vmatprep.subr.bf16.mxu0 0
  %771 = vmatpush1.bf16.msra.mxu0 %v543
  %772 = vmatprep.subr.bf16.mxu0 0
  %773 = vmatpush1.bf16.msra.mxu0 %v544
  %774 = vmatprep.subr.bf16.mxu0 0
  %775 = vmatpush1.bf16.msra.mxu0 %v545
  %776 = vmatprep.subr.bf16.mxu0 0
  %777 = vmatpush1.bf16.msra.mxu0 %v546
  %778 = vmatprep.subr.bf16.mxu0 0
  %779 = vmatpush1.bf16.msra.mxu0 %v547
  %780 = vmatprep.mubr.bf16.mxu0 %v185
  %781 = vmatmul.mubr.bf16.gmra.mrb[0].mxu0 %v184
  %v782 = vpop.f32.mrb[0].mxu0
  %v783 = vadd.f32 %v743, %v782
  %v784 = vpop.f32.mrb[0].mxu0
  %v785 = vpop.f32.mrb[0].mxu0
  %v786 = vpop.f32.mrb[0].mxu0
  %787 = vdwg.mxu0
  %788 = vmatprep.subr.bf16.mxu0 0
  %789 = vmatpush1.bf16.msra.mxu0 %v548
  %790 = vmatprep.subr.bf16.mxu0 0
  %791 = vmatpush1.bf16.msra.mxu0 %v549
  %792 = vmatprep.subr.bf16.mxu0 0
  %793 = vmatpush1.bf16.msra.mxu0 %v550
  %794 = vmatprep.subr.bf16.mxu0 0
  %795 = vmatpush1.bf16.msra.mxu0 %v551
  %796 = vmatprep.subr.bf16.mxu0 0
  %797 = vmatpush1.bf16.msra.mxu0 %v552
  %798 = vmatprep.subr.bf16.mxu0 0
  %799 = vmatpush1.bf16.msra.mxu0 %v553
  %800 = vmatprep.subr.bf16.mxu0 0
  %801 = vmatpush1.bf16.msra.mxu0 %v554
  %802 = vmatprep.subr.bf16.mxu0 0
  %803 = vmatpush1.bf16.msra.mxu0 %v555
  %804 = vmatprep.subr.bf16.mxu0 0
  %805 = vmatpush1.bf16.msra.mxu0 0
  %806 = vmatprep.subr.bf16.mxu0 0
  %807 = vmatpush1.bf16.msra.mxu0 0
  %808 = vmatprep.subr.bf16.mxu0 0
  %809 = vmatpush1.bf16.msra.mxu0 0
  %810 = vmatprep.subr.bf16.mxu0 0
  %811 = vmatpush1.bf16.msra.mxu0 0
  %812 = vmatprep.subr.bf16.mxu0 0
  %813 = vmatpush1.bf16.msra.mxu0 0
  %814 = vmatprep.subr.bf16.mxu0 0
  %815 = vmatpush1.bf16.msra.mxu0 0
  %816 = vmatprep.subr.bf16.mxu0 0
  %817 = vmatpush1.bf16.msra.mxu0 0
  %818 = vmatprep.subr.bf16.mxu0 0
  %819 = vmatpush1.bf16.msra.mxu0 0
  %820 = vmatprep.mubr.bf16.mxu0 0
  %821 = vmatmul.mubr.bf16.gmra.mrb[0].mxu0 %v186
  %v822 = vpop.f32.mrb[0].mxu0
  %v823 = vadd.f32 %v783, %v822
  %v824 = vpop.f32.mrb[0].mxu0
  %v825 = vpop.f32.mrb[0].mxu0
  %v826 = vpop.f32.mrb[0].mxu0
  %827 = vdwg.mxu0
  %v828 = vpack.c.bf16 %v823, %v823
  %829 = vst [vmem:[%s2] sm:$0xf] %v828
  %v830 = vrot.slane %v823, 4
  %v831 = vadd.f32 %v823, %v830
  %v832 = vrot.slane %v831, 2
  %v833 = vadd.f32 %v831, %v832
  %v834 = vrot.slane %v833, 1
  %v835 = vadd.f32 %v833, %v834
  %v836 = vmul.f32 %v823, %v823
  %v837 = vrot.slane %v836, 4
  %v838 = vadd.f32 %v836, %v837
  %v839 = vrot.slane %v838, 2
  %v840 = vadd.f32 %v838, %v839
  %v841 = vrot.slane %v840, 1
  %v842 = vadd.f32 %v840, %v841
  %843 = vst [vmem:[%s3] sm:$0xff] %v835
  %844 = vst [vmem:[%s4] sm:$0xff] %v842
  // Predicated region
  $region10: #{pose_resnet_forward.121} parent=0 // pred_check
    _
  $region11: #{pose_resnet_forward.121} parent=0 // pred_check_branch
    %846 = sbr.rel (0) target = $region13
  $region12: #{pose_resnet_forward.121} parent=0 // pred_region
    _
  $region13: #{pose_resnet_forward.121} parent=0 // pred_fallthru
    _
  // Predicated region
  $region14: #{pose_resnet_forward.121} parent=0 // pred_check
    _
  $region15: #{pose_resnet_forward.121} parent=0 // pred_check_branch
    %848 = sbr.rel (0) target = $region17
  $region16: #{pose_resnet_forward.121} parent=0 // pred_region
    _
  $region17: #{pose_resnet_forward.121} parent=0 // pred_fallthru
    _
  // Predicated region
  $region18: #{pose_resnet_forward.121} parent=0 // pred_check
    _
  $region19: #{pose_resnet_forward.121} parent=0 // pred_check_branch
    %850 = sbr.rel (0) target = $region21
  $region20: #{pose_resnet_forward.121} parent=0 // pred_region
    _
  $region21: #{pose_resnet_forward.121} parent=0 // pred_fallthru
    _
  // Predicated region
  $region22: #{pose_resnet_forward.121} parent=0 // pred_check
    _
  $region23: #{pose_resnet_forward.121} parent=0 // pred_check_branch
    %852 = sbr.rel (0) target = $region25
  $region24: #{pose_resnet_forward.121} parent=0 // pred_region
    _
  $region25: #{pose_resnet_forward.121} parent=0 // pred_fallthru
    _
  // Predicated region
  $region26: #{pose_resnet_forward.121} parent=0 // pred_check
    _
  $region27: #{pose_resnet_forward.121} parent=0 // pred_check_branch
    %854 = sbr.rel (0) target = $region29
  $region28: #{pose_resnet_forward.121} parent=0 // pred_region
    _
  $region29: #{pose_resnet_forward.121} parent=0 // pred_fallthru
    _
  // Predicated region
  $region30: #{pose_resnet_forward.121} parent=0 // pred_check
    _
  $region31: #{pose_resnet_forward.121} parent=0 // pred_check_branch
    %856 = sbr.rel (0) target = $region33
  $region32: #{pose_resnet_forward.121} parent=0 // pred_region
    _
  $region33: #{pose_resnet_forward.121} parent=0 // pred_fallthru
    _

// kernel: pose_resnet_forward.176
$region0: #{pose_resnet_forward.176}
  #allocation0 [shape = 'u32[]', space=smem, size = 0x4, offset = 0x4, fixed_abs, tag = 'smem constant byte address 0x4 - core index']
  #allocation1 [shape = 'u32[144,128]{1,0:T(1,128)}', space=vmem, size = 0x12000, scoped, tag = 'internal scratch']
  %s0 = inlined_call_operand.vmem [shape: bf16[8,256], index: 0, kind: input, shape index: {}]
  %s1 = inlined_call_operand.vmem [shape: bf16[8,256], index: 1, kind: input, shape index: {}]
  %s2 = inlined_call_operand.vmem [shape: f32[1,256], index: 2, kind: input, shape index: {}]
  %s3 = inlined_call_operand.vmem [shape: f32[1,256], index: 3, kind: input, shape index: {}]
  %s4 = inlined_call_operand.vmem [shape: f32[1,256], index: 4, kind: input, shape index: {}]
  %s5 = inlined_call_operand.vmem [shape: f32[1,256], index: 5, kind: input, shape index: {}]
  %s6 = inlined_call_operand.vmem [shape: bf16[8,256], index: 6, kind: output, shape index: {}]
  %s7 = sld [smem:[#allocation0]]
  $region34: #{pose_resnet_forward.176} parent=0
    _
  %s9 = ssub.s32 1, %s7
  %s10 = scalar_select 0, %s9, %s7
  // Predicated region
  $region2: #{pose_resnet_forward.176} parent=0 // pred_check
    _
  $region3: #{pose_resnet_forward.176} parent=0 // pred_check_branch
    %12 = sbr.rel (0) target = $region5
  $region4: #{pose_resnet_forward.176} parent=0 // pred_region
    _
  $region5: #{pose_resnet_forward.176} parent=0 // pred_fallthru
    _
  // Predicated region
  $region6: #{pose_resnet_forward.176} parent=0 // pred_check
    _
  $region7: #{pose_resnet_forward.176} parent=0 // pred_check_branch
    %14 = sbr.rel (0) target = $region9
  $region8: #{pose_resnet_forward.176} parent=0 // pred_region
    _
  $region9: #{pose_resnet_forward.176} parent=0 // pred_fallthru
    _
  // Predicated region
  $region10: #{pose_resnet_forward.176} parent=0 // pred_check
    _
  $region11: #{pose_resnet_forward.176} parent=0 // pred_check_branch
    %16 = sbr.rel (0) target = $region13
  $region12: #{pose_resnet_forward.176} parent=0 // pred_region
    _
  $region13: #{pose_resnet_forward.176} parent=0 // pred_fallthru
    _
  // Predicated region
  $region14: #{pose_resnet_forward.176} parent=0 // pred_check
    _
  $region15: #{pose_resnet_forward.176} parent=0 // pred_check_branch
    %18 = sbr.rel (0) target = $region17
  $region16: #{pose_resnet_forward.176} parent=0 // pred_region
    _
  $region17: #{pose_resnet_forward.176} parent=0 // pred_fallthru
    _
  // Predicated region
  $region18: #{pose_resnet_forward.176} parent=0 // pred_check
    _
  $region19: #{pose_resnet_forward.176} parent=0 // pred_check_branch
    %20 = sbr.rel (0) target = $region21
  $region20: #{pose_resnet_forward.176} parent=0 // pred_region
    _
  $region21: #{pose_resnet_forward.176} parent=0 // pred_fallthru
    _
  // Predicated region
  $region22: #{pose_resnet_forward.176} parent=0 // pred_check
    _
  $region23: #{pose_resnet_forward.176} parent=0 // pred_check_branch
    %22 = sbr.rel (0) target = $region25
  $region24: #{pose_resnet_forward.176} parent=0 // pred_region
    _
  $region25: #{pose_resnet_forward.176} parent=0 // pred_fallthru
    _
  %v23 = vld [vmem:[%s0] sm:$0xff]
  %v24 = vunpack.c.l.bf16 %v23
  %v25 = vunpack.c.h.bf16 %v23
  %v26 = vld [vmem:[%s2] sm:$0x3]
  %v28 = vlaneseq
  %v29 = vshrl.u32 %v28, 7
  %v30 = vsub.s32 0, %v29
  %v31 = vrot.slane %v26, %v30
  %v32 = vlaneseq
  %v33 = vshrl.u32 %v32, 7
  %v34 = vsub.s32 1, %v33
  %v35 = vrot.slane %v26, %v34
  %v38 = vmul.f32 %v24, %v31
  %v39 = vmul.f32 %v25, %v35
  %v40 = vld [vmem:[%s3] sm:$0x3]
  %v42 = vlaneseq
  %v43 = vshrl.u32 %v42, 7
  %v44 = vsub.s32 0, %v43
  %v45 = vrot.slane %v40, %v44
  %v46 = vlaneseq
  %v47 = vshrl.u32 %v46, 7
  %v48 = vsub.s32 1, %v47
  %v49 = vrot.slane %v40, %v48
  %v52 = vadd.f32 %v38, %v45
  %v53 = vadd.f32 %v39, %v49
  %v54 = vld [vmem:[%s1] sm:$0xff]
  %v55 = vunpack.c.l.bf16 %v54
  %v56 = vunpack.c.h.bf16 %v54
  %v57 = vld [vmem:[%s4] sm:$0x3]
  %v59 = vlaneseq
  %v60 = vshrl.u32 %v59, 7
  %v61 = vsub.s32 0, %v60
  %v62 = vrot.slane %v57, %v61
  %v63 = vlaneseq
  %v64 = vshrl.u32 %v63, 7
  %v65 = vsub.s32 1, %v64
  %v66 = vrot.slane %v57, %v65
  %v69 = vmul.f32 %v55, %v62
  %v70 = vmul.f32 %v56, %v66
  %v71 = vadd.f32 %v52, %v69
  %v72 = vadd.f32 %v53, %v70
  %v73 = vld [vmem:[%s5] sm:$0x3]
  %v75 = vlaneseq
  %v76 = vshrl.u32 %v75, 7
  %v77 = vsub.s32 0, %v76
  %v78 = vrot.slane %v73, %v77
  %v79 = vlaneseq
  %v80 = vshrl.u32 %v79, 7
  %v81 = vsub.s32 1, %v80
  %v82 = vrot.slane %v73, %v81
  %v85 = vadd.f32 %v71, %v78
  %v86 = vadd.f32 %v72, %v82
  %v87 = vmax.f32 %v85, 0.0
  %v88 = vmax.f32 %v86, 0.0
  %v89 = vpack.c.bf16 %v87, %v87
  %v90 = vpack.c.bf16 %v88, %v88
  %v93 = vunpack.c.l.b16 %v89
  %v94 = vunpack.c.l.b16 %v90
  %v95 = vpack.c.b16 %v94, %v93
  %97 = vst [vmem:[%s6] sm:$0xff] %v95
  // Predicated region
  $region26: #{pose_resnet_forward.176} parent=0 // pred_check
    _
  $region27: #{pose_resnet_forward.176} parent=0 // pred_check_branch
    %99 = sbr.rel (0) target = $region29
  $region28: #{pose_resnet_forward.176} parent=0 // pred_region
    _
  $region29: #{pose_resnet_forward.176} parent=0 // pred_fallthru
    _
  // Predicated region
  $region30: #{pose_resnet_forward.176} parent=0 // pred_check
    _
  $region31: #{pose_resnet_forward.176} parent=0 // pred_check_branch
    %101 = sbr.rel (0) target = $region33
  $region32: #{pose_resnet_forward.176} parent=0 // pred_region
    _
  $region33: #{pose_resnet_forward.176} parent=0 // pred_fallthru
    _

// kernel: pose_resnet_forward.143
$region0: #{pose_resnet_forward.143}
  #allocation0 [shape = 'u32[]', space=smem, size = 0x4, offset = 0x4, fixed_abs, tag = 'smem constant byte address 0x4 - core index']
  #allocation1 [shape = 'u32[144,128]{1,0:T(1,128)}', space=vmem, size = 0x12000, scoped, tag = 'internal scratch']
  %s0 = inlined_call_operand.vmem [shape: bf16[8,128], index: 0, kind: input, shape index: {}]
  %s1 = inlined_call_operand.vmem [shape: bf16[128,128], index: 1, kind: input, shape index: {}]
  %s2 = inlined_call_operand.vmem [shape: f32[1,128], index: 2, kind: input, shape index: {}]
  %s3 = inlined_call_operand.vmem [shape: f32[1,128], index: 3, kind: input, shape index: {}]
  %s4 = inlined_call_operand.vmem [shape: bf16[8,128], index: 4, kind: output, shape index: {0}]
  %s5 = inlined_call_operand.vmem [shape: f32[8,128], index: 5, kind: output, shape index: {1}]
  %s6 = inlined_call_operand.vmem [shape: f32[8,128], index: 6, kind: output, shape index: {2}]
  %7 = xla_tuple %s4, %s5, %s6
  %s8 = sld [smem:[#allocation0]]
  $region42: #{pose_resnet_forward.143} parent=0
    _
  %s10 = ssub.s32 1, %s8
  %s11 = scalar_select 0, %s10, %s8
  // Predicated region
  $region2: #{pose_resnet_forward.143} parent=0 // pred_check
    _
  $region3: #{pose_resnet_forward.143} parent=0 // pred_check_branch
    %13 = sbr.rel (0) target = $region5
  $region4: #{pose_resnet_forward.143} parent=0 // pred_region
    _
  $region5: #{pose_resnet_forward.143} parent=0 // pred_fallthru
    _
  // Predicated region
  $region6: #{pose_resnet_forward.143} parent=0 // pred_check
    _
  $region7: #{pose_resnet_forward.143} parent=0 // pred_check_branch
    %15 = sbr.rel (0) target = $region9
  $region8: #{pose_resnet_forward.143} parent=0 // pred_region
    _
  $region9: #{pose_resnet_forward.143} parent=0 // pred_fallthru
    _
  // Predicated region
  $region10: #{pose_resnet_forward.143} parent=0 // pred_check
    _
  $region11: #{pose_resnet_forward.143} parent=0 // pred_check_branch
    %17 = sbr.rel (0) target = $region13
  $region12: #{pose_resnet_forward.143} parent=0 // pred_region
    _
  $region13: #{pose_resnet_forward.143} parent=0 // pred_fallthru
    _
  // Predicated region
  $region14: #{pose_resnet_forward.143} parent=0 // pred_check
    _
  $region15: #{pose_resnet_forward.143} parent=0 // pred_check_branch
    %19 = sbr.rel (0) target = $region17
  $region16: #{pose_resnet_forward.143} parent=0 // pred_region
    _
  $region17: #{pose_resnet_forward.143} parent=0 // pred_fallthru
    _
  %v21 = vld [vmem:[%s0] sm:$0xf]
  %v22 = vunpack.c.l.bf16 %v21
  %v23 = vld [vmem:[%s2] sm:$0x1]
  %v25 = vlaneseq
  %v26 = vshrl.u32 %v25, 7
  %v27 = vsub.s32 0, %v26
  %v28 = vrot.slane %v23, %v27
  %v30 = vmul.f32 %v22, %v28
  %v31 = vld [vmem:[%s3] sm:$0x1]
  %v33 = vlaneseq
  %v34 = vshrl.u32 %v33, 7
  %v35 = vsub.s32 0, %v34
  %v36 = vrot.slane %v31, %v35
  %v38 = vadd.f32 %v30, %v36
  %v39 = vmax.f32 %v38, 0.0
  %s40 = smul.u32 0, 8
  %v41 = vlaneseq
  %v42 = vshrl.u32 %v41, 7
  %v43 = vstv %s40
  %v44 = vadd.s32 %v43, %v42
  %vm45 = vcmp.lt.s32.totalorder %v44, 2
  %v46 = vsel %vm45, 1, 0
  %vm47 = vcmp.eq.s32.totalorder %v46, 1
  %v48 = vsel %vm47, %v39, 0.0
  %v49 = vpack.c.bf16 %v48, %v48
  %v50 = vld [vmem:[%s1] sm:$0xf]
  %v51 = vld [vmem:[%s1 + $0x4] sm:$0xf]
  %v52 = vld [vmem:[%s1 + $0x8] sm:$0xf]
  %v53 = vld [vmem:[%s1 + $0xc] sm:$0xf]
  %v54 = vld [vmem:[%s1 + $0x10] sm:$0xf]
  %v55 = vld [vmem:[%s1 + $0x14] sm:$0xf]
  %v56 = vld [vmem:[%s1 + $0x18] sm:$0xf]
  %v57 = vld [vmem:[%s1 + $0x1c] sm:$0xf]
  %v58 = vld [vmem:[%s1 + $0x20] sm:$0xf]
  %v59 = vld [vmem:[%s1 + $0x24] sm:$0xf]
  %v60 = vld [vmem:[%s1 + $0x28] sm:$0xf]
  %v61 = vld [vmem:[%s1 + $0x2c] sm:$0xf]
  %v62 = vld [vmem:[%s1 + $0x30] sm:$0xf]
  %v63 = vld [vmem:[%s1 + $0x34] sm:$0xf]
  %v64 = vld [vmem:[%s1 + $0x38] sm:$0xf]
  %v65 = vld [vmem:[%s1 + $0x3c] sm:$0xf]
  %v82 = vunpack.c.l.b16 %v50
  %v83 = vunpack.c.l.b16 %v51
  %v84 = vunpack.c.l.b16 %v52
  %v85 = vunpack.c.l.b16 %v53
  %v86 = vunpack.c.l.b16 %v54
  %v87 = vunpack.c.l.b16 %v55
  %v88 = vunpack.c.l.b16 %v56
  %v89 = vunpack.c.l.b16 %v57
  %v90 = vunpack.c.l.b16 %v58
  %v91 = vunpack.c.l.b16 %v59
  %v92 = vunpack.c.l.b16 %v60
  %v93 = vunpack.c.l.b16 %v61
  %v94 = vunpack.c.l.b16 %v62
  %v95 = vunpack.c.l.b16 %v63
  %v96 = vunpack.c.l.b16 %v64
  %v97 = vunpack.c.l.b16 %v65
  %v98 = vpack.c.b16 %v83, %v82
  %v99 = vpack.c.b16 %v85, %v84
  %v100 = vpack.c.b16 %v87, %v86
  %v101 = vpack.c.b16 %v89, %v88
  %v102 = vpack.c.b16 %v91, %v90
  %v103 = vpack.c.b16 %v93, %v92
  %v104 = vpack.c.b16 %v95, %v94
  %v105 = vpack.c.b16 %v97, %v96
  %114 = vmatprep.subr.bf16.mxu0 0
  %115 = vmatpush1.bf16.msra.mxu0 %v98
  %116 = vmatprep.subr.bf16.mxu0 0
  %117 = vmatpush1.bf16.msra.mxu0 %v99
  %118 = vmatprep.subr.bf16.mxu0 0
  %119 = vmatpush1.bf16.msra.mxu0 %v100
  %120 = vmatprep.subr.bf16.mxu0 0
  %121 = vmatpush1.bf16.msra.mxu0 %v101
  %122 = vmatprep.subr.bf16.mxu0 0
  %123 = vmatpush1.bf16.msra.mxu0 %v102
  %124 = vmatprep.subr.bf16.mxu0 0
  %125 = vmatpush1.bf16.msra.mxu0 %v103
  %126 = vmatprep.subr.bf16.mxu0 0
  %127 = vmatpush1.bf16.msra.mxu0 %v104
  %128 = vmatprep.subr.bf16.mxu0 0
  %129 = vmatpush1.bf16.msra.mxu0 %v105
  %130 = vmatprep.subr.bf16.mxu0 0
  %131 = vmatpush1.bf16.msra.mxu0 0
  %132 = vmatprep.subr.bf16.mxu0 0
  %133 = vmatpush1.bf16.msra.mxu0 0
  %134 = vmatprep.subr.bf16.mxu0 0
  %135 = vmatpush1.bf16.msra.mxu0 0
  %136 = vmatprep.subr.bf16.mxu0 0
  %137 = vmatpush1.bf16.msra.mxu0 0
  %138 = vmatprep.subr.bf16.mxu0 0
  %139 = vmatpush1.bf16.msra.mxu0 0
  %140 = vmatprep.subr.bf16.mxu0 0
  %141 = vmatpush1.bf16.msra.mxu0 0
  %142 = vmatprep.subr.bf16.mxu0 0
  %143 = vmatpush1.bf16.msra.mxu0 0
  %144 = vmatprep.subr.bf16.mxu0 0
  %145 = vmatpush1.bf16.msra.mxu0 0
  %146 = vmatprep.mubr.bf16.mxu0 0
  %147 = vmatmul.mubr.bf16.gmra.mrb[0].mxu0 %v49
  %v148 = vpop.f32.mrb[0].mxu0
  %v149 = vadd.f32 0.0, %v148
  %v150 = vpop.f32.mrb[0].mxu0
  %v151 = vpop.f32.mrb[0].mxu0
  %v152 = vpop.f32.mrb[0].mxu0
  %153 = vdwg.mxu0
  %v154 = vpack.c.bf16 %v149, %v149
  %155 = vst [vmem:[%s4] sm:$0xf] %v154
  %v156 = vrot.slane %v149, 4
  %v157 = vadd.f32 %v149, %v156
  %v158 = vrot.slane %v157, 2
  %v159 = vadd.f32 %v157, %v158
  %v160 = vrot.slane %v159, 1
  %v161 = vadd.f32 %v159, %v160
  %v162 = vmul.f32 %v149, %v149
  %v163 = vrot.slane %v162, 4
  %v164 = vadd.f32 %v162, %v163
  %v165 = vrot.slane %v164, 2
  %v166 = vadd.f32 %v164, %v165
  %v167 = vrot.slane %v166, 1
  %v168 = vadd.f32 %v166, %v167
  %169 = vst [vmem:[%s5] sm:$0xff] %v161
  %170 = vst [vmem:[%s6] sm:$0xff] %v168
  // Predicated region
  $region18: #{pose_resnet_forward.143} parent=0 // pred_check
    _
  $region19: #{pose_resnet_forward.143} parent=0 // pred_check_branch
    %172 = sbr.rel (0) target = $region21
  $region20: #{pose_resnet_forward.143} parent=0 // pred_region
    _
  $region21: #{pose_resnet_forward.143} parent=0 // pred_fallthru
    _
  // Predicated region
  $region22: #{pose_resnet_forward.143} parent=0 // pred_check
    _
  $region23: #{pose_resnet_forward.143} parent=0 // pred_check_branch
    %174 = sbr.rel (0) target = $region25
  $region24: #{pose_resnet_forward.143} parent=0 // pred_region
    _
  $region25: #{pose_resnet_forward.143} parent=0 // pred_fallthru
    _
  // Predicated region
  $region26: #{pose_resnet_forward.143} parent=0 // pred_check
    _
  $region27: #{pose_resnet_forward.143} parent=0 // pred_check_branch
    %176 = sbr.rel (0) target = $region29
  $region28: #{pose_resnet_forward.143} parent=0 // pred_region
    _
  $region29: #{pose_resnet_forward.143} parent=0 // pred_fallthru
    _
  // Predicated region
  $region30: #{pose_resnet_forward.143} parent=0 // pred_check
    _
  $region31: #{pose_resnet_forward.143} parent=0 // pred_check_branch
    %178 = sbr.rel (0) target = $region33
  $region32: #{pose_resnet_forward.143} parent=0 // pred_region
    _
  $region33: #{pose_resnet_forward.143} parent=0 // pred_fallthru
    _
  // Predicated region
  $region34: #{pose_resnet_forward.143} parent=0 // pred_check
    _
  $region35: #{pose_resnet_forward.143} parent=0 // pred_check_branch
    %180 = sbr.rel (0) target = $region37
  $region36: #{pose_resnet_forward.143} parent=0 // pred_region
    _
  $region37: #{pose_resnet_forward.143} parent=0 // pred_fallthru
    _
  // Predicated region
  $region38: #{pose_resnet_forward.143} parent=0 // pred_check
    _
  $region39: #{pose_resnet_forward.143} parent=0 // pred_check_branch
    %182 = sbr.rel (0) target = $region41
  $region40: #{pose_resnet_forward.143} parent=0 // pred_region
    _
  $region41: #{pose_resnet_forward.143} parent=0 // pred_fallthru
    _

// kernel: pose_resnet_forward.175
$region0: #{pose_resnet_forward.175}
  #allocation0 [shape = 'u32[]', space=smem, size = 0x4, offset = 0x4, fixed_abs, tag = 'smem constant byte address 0x4 - core index']
  #allocation1 [shape = 'u32[144,128]{1,0:T(1,128)}', space=vmem, size = 0x12000, scoped, tag = 'internal scratch']
  %s0 = inlined_call_operand.vmem [shape: bf16[8,128], index: 0, kind: input, shape index: {}]
  %s1 = inlined_call_operand.vmem [shape: bf16[128,256], index: 1, kind: input, shape index: {}]
  %s2 = inlined_call_operand.vmem [shape: bf16[8,256], index: 2, kind: output, shape index: {0}]
  %s3 = inlined_call_operand.vmem [shape: f32[8,256], index: 3, kind: output, shape index: {1}]
  %s4 = inlined_call_operand.vmem [shape: f32[8,256], index: 4, kind: output, shape index: {2}]
  %5 = xla_tuple %s2, %s3, %s4
  %s6 = sld [smem:[#allocation0]]
  $region34: #{pose_resnet_forward.175} parent=0
    _
  %s8 = ssub.s32 1, %s6
  %s9 = scalar_select 0, %s8, %s6
  // Predicated region
  $region2: #{pose_resnet_forward.175} parent=0 // pred_check
    _
  $region3: #{pose_resnet_forward.175} parent=0 // pred_check_branch
    %11 = sbr.rel (0) target = $region5
  $region4: #{pose_resnet_forward.175} parent=0 // pred_region
    _
  $region5: #{pose_resnet_forward.175} parent=0 // pred_fallthru
    _
  // Predicated region
  $region6: #{pose_resnet_forward.175} parent=0 // pred_check
    _
  $region7: #{pose_resnet_forward.175} parent=0 // pred_check_branch
    %13 = sbr.rel (0) target = $region9
  $region8: #{pose_resnet_forward.175} parent=0 // pred_region
    _
  $region9: #{pose_resnet_forward.175} parent=0 // pred_fallthru
    _
  %v15 = vld [vmem:[%s0] sm:$0xf]
  %v16 = vld [vmem:[%s1] sm:$0xff]
  %v17 = vld [vmem:[%s1 + $0x8] sm:$0xff]
  %v18 = vld [vmem:[%s1 + $0x10] sm:$0xff]
  %v19 = vld [vmem:[%s1 + $0x18] sm:$0xff]
  %v20 = vld [vmem:[%s1 + $0x20] sm:$0xff]
  %v21 = vld [vmem:[%s1 + $0x28] sm:$0xff]
  %v22 = vld [vmem:[%s1 + $0x30] sm:$0xff]
  %v23 = vld [vmem:[%s1 + $0x38] sm:$0xff]
  %v24 = vld [vmem:[%s1 + $0x40] sm:$0xff]
  %v25 = vld [vmem:[%s1 + $0x48] sm:$0xff]
  %v26 = vld [vmem:[%s1 + $0x50] sm:$0xff]
  %v27 = vld [vmem:[%s1 + $0x58] sm:$0xff]
  %v28 = vld [vmem:[%s1 + $0x60] sm:$0xff]
  %v29 = vld [vmem:[%s1 + $0x68] sm:$0xff]
  %v30 = vld [vmem:[%s1 + $0x70] sm:$0xff]
  %v31 = vld [vmem:[%s1 + $0x78] sm:$0xff]
  %v48 = vunpack.c.l.b16 %v16
  %v49 = vunpack.c.h.b16 %v16
  %v50 = vunpack.c.l.b16 %v17
  %v51 = vunpack.c.h.b16 %v17
  %v52 = vunpack.c.l.b16 %v18
  %v53 = vunpack.c.h.b16 %v18
  %v54 = vunpack.c.l.b16 %v19
  %v55 = vunpack.c.h.b16 %v19
  %v56 = vunpack.c.l.b16 %v20
  %v57 = vunpack.c.h.b16 %v20
  %v58 = vunpack.c.l.b16 %v21
  %v59 = vunpack.c.h.b16 %v21
  %v60 = vunpack.c.l.b16 %v22
  %v61 = vunpack.c.h.b16 %v22
  %v62 = vunpack.c.l.b16 %v23
  %v63 = vunpack.c.h.b16 %v23
  %v64 = vunpack.c.l.b16 %v24
  %v65 = vunpack.c.h.b16 %v24
  %v66 = vunpack.c.l.b16 %v25
  %v67 = vunpack.c.h.b16 %v25
  %v68 = vunpack.c.l.b16 %v26
  %v69 = vunpack.c.h.b16 %v26
  %v70 = vunpack.c.l.b16 %v27
  %v71 = vunpack.c.h.b16 %v27
  %v72 = vunpack.c.l.b16 %v28
  %v73 = vunpack.c.h.b16 %v28
  %v74 = vunpack.c.l.b16 %v29
  %v75 = vunpack.c.h.b16 %v29
  %v76 = vunpack.c.l.b16 %v30
  %v77 = vunpack.c.h.b16 %v30
  %v78 = vunpack.c.l.b16 %v31
  %v79 = vunpack.c.h.b16 %v31
  %v80 = vpack.c.b16 %v50, %v48
  %v81 = vpack.c.b16 %v51, %v49
  %v82 = vpack.c.b16 %v54, %v52
  %v83 = vpack.c.b16 %v55, %v53
  %v84 = vpack.c.b16 %v58, %v56
  %v85 = vpack.c.b16 %v59, %v57
  %v86 = vpack.c.b16 %v62, %v60
  %v87 = vpack.c.b16 %v63, %v61
  %v88 = vpack.c.b16 %v66, %v64
  %v89 = vpack.c.b16 %v67, %v65
  %v90 = vpack.c.b16 %v70, %v68
  %v91 = vpack.c.b16 %v71, %v69
  %v92 = vpack.c.b16 %v74, %v72
  %v93 = vpack.c.b16 %v75, %v73
  %v94 = vpack.c.b16 %v78, %v76
  %v95 = vpack.c.b16 %v79, %v77
  %112 = vmatprep.subr.bf16.mxu0 %v81
  %113 = vmatpush1.bf16.msra.mxu0 %v80
  %114 = vmatprep.subr.bf16.mxu0 %v83
  %115 = vmatpush1.bf16.msra.mxu0 %v82
  %116 = vmatprep.subr.bf16.mxu0 %v85
  %117 = vmatpush1.bf16.msra.mxu0 %v84
  %118 = vmatprep.subr.bf16.mxu0 %v87
  %119 = vmatpush1.bf16.msra.mxu0 %v86
  %120 = vmatprep.subr.bf16.mxu0 %v89
  %121 = vmatpush1.bf16.msra.mxu0 %v88
  %122 = vmatprep.subr.bf16.mxu0 %v91
  %123 = vmatpush1.bf16.msra.mxu0 %v90
  %124 = vmatprep.subr.bf16.mxu0 %v93
  %125 = vmatpush1.bf16.msra.mxu0 %v92
  %126 = vmatprep.subr.bf16.mxu0 %v95
  %127 = vmatpush1.bf16.msra.mxu0 %v94
  %128 = vmatprep.subr.bf16.mxu0 0
  %129 = vmatpush1.bf16.msra.mxu0 0
  %130 = vmatprep.subr.bf16.mxu0 0
  %131 = vmatpush1.bf16.msra.mxu0 0
  %132 = vmatprep.subr.bf16.mxu0 0
  %133 = vmatpush1.bf16.msra.mxu0 0
  %134 = vmatprep.subr.bf16.mxu0 0
  %135 = vmatpush1.bf16.msra.mxu0 0
  %136 = vmatprep.subr.bf16.mxu0 0
  %137 = vmatpush1.bf16.msra.mxu0 0
  %138 = vmatprep.subr.bf16.mxu0 0
  %139 = vmatpush1.bf16.msra.mxu0 0
  %140 = vmatprep.subr.bf16.mxu0 0
  %141 = vmatpush1.bf16.msra.mxu0 0
  %142 = vmatprep.subr.bf16.mxu0 0
  %143 = vmatpush1.bf16.msra.mxu0 0
  %144 = vmatprep.mubr.bf16.mxu0 0
  %145 = vmatmul.mubr.bf16.gmra.mrb[0].mxu0 %v15
  %v146 = vpop.f32.mrb[0].mxu0
  %v147 = vadd.f32 0.0, %v146
  %v148 = vpop.f32.mrb[0].mxu0
  %v149 = vadd.f32 0.0, %v148
  %v150 = vpop.f32.mrb[0].mxu0
  %v151 = vpop.f32.mrb[0].mxu0
  %152 = vdwg.mxu0
  %v153 = vpack.c.bf16 %v147, %v147
  %v154 = vpack.c.bf16 %v149, %v149
  %v157 = vunpack.c.l.b16 %v153
  %v158 = vunpack.c.l.b16 %v154
  %v159 = vpack.c.b16 %v158, %v157
  %161 = vst [vmem:[%s2] sm:$0xff] %v159
  %v162 = vrot.slane %v147, 4
  %v163 = vadd.f32 %v147, %v162
  %v164 = vrot.slane %v163, 2
  %v165 = vadd.f32 %v163, %v164
  %v166 = vrot.slane %v165, 1
  %v167 = vadd.f32 %v165, %v166
  %v168 = vrot.slane %v149, 4
  %v169 = vadd.f32 %v149, %v168
  %v170 = vrot.slane %v169, 2
  %v171 = vadd.f32 %v169, %v170
  %v172 = vrot.slane %v171, 1
  %v173 = vadd.f32 %v171, %v172
  %v174 = vmul.f32 %v147, %v147
  %v175 = vmul.f32 %v149, %v149
  %v176 = vrot.slane %v174, 4
  %v177 = vadd.f32 %v174, %v176
  %v178 = vrot.slane %v177, 2
  %v179 = vadd.f32 %v177, %v178
  %v180 = vrot.slane %v179, 1
  %v181 = vadd.f32 %v179, %v180
  %v182 = vrot.slane %v175, 4
  %v183 = vadd.f32 %v175, %v182
  %v184 = vrot.slane %v183, 2
  %v185 = vadd.f32 %v183, %v184
  %v186 = vrot.slane %v185, 1
  %v187 = vadd.f32 %v185, %v186
  %188 = vst [vmem:[%s3] sm:$0xff] %v167
  %189 = vst [vmem:[%s3 + $0x8] sm:$0xff] %v173
  %190 = vst [vmem:[%s4] sm:$0xff] %v181
  %191 = vst [vmem:[%s4 + $0x8] sm:$0xff] %v187
  // Predicated region
  $region10: #{pose_resnet_forward.175} parent=0 // pred_check
    _
  $region11: #{pose_resnet_forward.175} parent=0 // pred_check_branch
    %193 = sbr.rel (0) target = $region13
  $region12: #{pose_resnet_forward.175} parent=0 // pred_region
    _
  $region13: #{pose_resnet_forward.175} parent=0 // pred_fallthru
    _
  // Predicated region
  $region14: #{pose_resnet_forward.175} parent=0 // pred_check
    _
  $region15: #{pose_resnet_forward.175} parent=0 // pred_check_branch
    %195 = sbr.rel (0) target = $region17
  $region16: #{pose_resnet_forward.175} parent=0 // pred_region
    _
  $region17: #{pose_resnet_forward.175} parent=0 // pred_fallthru
    _
  // Predicated region
  $region18: #{pose_resnet_forward.175} parent=0 // pred_check
    _
  $region19: #{pose_resnet_forward.175} parent=0 // pred_check_branch
    %197 = sbr.rel (0) target = $region21
  $region20: #{pose_resnet_forward.175} parent=0 // pred_region
    _
  $region21: #{pose_resnet_forward.175} parent=0 // pred_fallthru
    _
  // Predicated region
  $region22: #{pose_resnet_forward.175} parent=0 // pred_check
    _
  $region23: #{pose_resnet_forward.175} parent=0 // pred_check_branch
    %199 = sbr.rel (0) target = $region25
  $region24: #{pose_resnet_forward.175} parent=0 // pred_region
    _
  $region25: #{pose_resnet_forward.175} parent=0 // pred_fallthru
    _
  // Predicated region
  $region26: #{pose_resnet_forward.175} parent=0 // pred_check
    _
  $region27: #{pose_resnet_forward.175} parent=0 // pred_check_branch
    %201 = sbr.rel (0) target = $region29
  $region28: #{pose_resnet_forward.175} parent=0 // pred_region
    _
  $region29: #{pose_resnet_forward.175} parent=0 // pred_fallthru
    _
  // Predicated region
  $region30: #{pose_resnet_forward.175} parent=0 // pred_check
    _
  $region31: #{pose_resnet_forward.175} parent=0 // pred_check_branch
    %203 = sbr.rel (0) target = $region33
  $region32: #{pose_resnet_forward.175} parent=0 // pred_region
    _
  $region33: #{pose_resnet_forward.175} parent=0 // pred_fallthru
    _

// kernel: pose_resnet_forward.174
$region0: #{pose_resnet_forward.174}
  #allocation0 [shape = 'u32[]', space=smem, size = 0x4, offset = 0x4, fixed_abs, tag = 'smem constant byte address 0x4 - core index']
  #allocation1 [shape = 'u32[144,128]{1,0:T(1,128)}', space=vmem, size = 0x12000, scoped, tag = 'internal scratch']
  %s0 = inlined_call_operand.vmem [shape: bf16[8,128], index: 0, kind: input, shape index: {}]
  %s1 = inlined_call_operand.vmem [shape: bf16[128,256], index: 1, kind: input, shape index: {}]
  %s2 = inlined_call_operand.vmem [shape: f32[1,128], index: 2, kind: input, shape index: {}]
  %s3 = inlined_call_operand.vmem [shape: f32[1,128], index: 3, kind: input, shape index: {}]
  %s4 = inlined_call_operand.vmem [shape: bf16[8,256], index: 4, kind: output, shape index: {0}]
  %s5 = inlined_call_operand.vmem [shape: f32[8,256], index: 5, kind: output, shape index: {1}]
  %s6 = inlined_call_operand.vmem [shape: f32[8,256], index: 6, kind: output, shape index: {2}]
  %7 = xla_tuple %s4, %s5, %s6
  %s8 = sld [smem:[#allocation0]]
  $region42: #{pose_resnet_forward.174} parent=0
    _
  %s10 = ssub.s32 1, %s8
  %s11 = scalar_select 0, %s10, %s8
  // Predicated region
  $region2: #{pose_resnet_forward.174} parent=0 // pred_check
    _
  $region3: #{pose_resnet_forward.174} parent=0 // pred_check_branch
    %13 = sbr.rel (0) target = $region5
  $region4: #{pose_resnet_forward.174} parent=0 // pred_region
    _
  $region5: #{pose_resnet_forward.174} parent=0 // pred_fallthru
    _
  // Predicated region
  $region6: #{pose_resnet_forward.174} parent=0 // pred_check
    _
  $region7: #{pose_resnet_forward.174} parent=0 // pred_check_branch
    %15 = sbr.rel (0) target = $region9
  $region8: #{pose_resnet_forward.174} parent=0 // pred_region
    _
  $region9: #{pose_resnet_forward.174} parent=0 // pred_fallthru
    _
  // Predicated region
  $region10: #{pose_resnet_forward.174} parent=0 // pred_check
    _
  $region11: #{pose_resnet_forward.174} parent=0 // pred_check_branch
    %17 = sbr.rel (0) target = $region13
  $region12: #{pose_resnet_forward.174} parent=0 // pred_region
    _
  $region13: #{pose_resnet_forward.174} parent=0 // pred_fallthru
    _
  // Predicated region
  $region14: #{pose_resnet_forward.174} parent=0 // pred_check
    _
  $region15: #{pose_resnet_forward.174} parent=0 // pred_check_branch
    %19 = sbr.rel (0) target = $region17
  $region16: #{pose_resnet_forward.174} parent=0 // pred_region
    _
  $region17: #{pose_resnet_forward.174} parent=0 // pred_fallthru
    _
  %v21 = vld [vmem:[%s0] sm:$0xf]
  %v22 = vunpack.c.l.bf16 %v21
  %v23 = vld [vmem:[%s2] sm:$0x1]
  %v25 = vlaneseq
  %v26 = vshrl.u32 %v25, 7
  %v27 = vsub.s32 0, %v26
  %v28 = vrot.slane %v23, %v27
  %v30 = vmul.f32 %v22, %v28
  %v31 = vld [vmem:[%s3] sm:$0x1]
  %v33 = vlaneseq
  %v34 = vshrl.u32 %v33, 7
  %v35 = vsub.s32 0, %v34
  %v36 = vrot.slane %v31, %v35
  %v38 = vadd.f32 %v30, %v36
  %v39 = vmax.f32 %v38, 0.0
  %s40 = smul.u32 0, 8
  %v41 = vlaneseq
  %v42 = vshrl.u32 %v41, 7
  %v43 = vstv %s40
  %v44 = vadd.s32 %v43, %v42
  %vm45 = vcmp.lt.s32.totalorder %v44, 2
  %v46 = vsel %vm45, 1, 0
  %vm47 = vcmp.eq.s32.totalorder %v46, 1
  %v48 = vsel %vm47, %v39, 0.0
  %v49 = vpack.c.bf16 %v48, %v48
  %v50 = vld [vmem:[%s1] sm:$0xff]
  %v51 = vld [vmem:[%s1 + $0x8] sm:$0xff]
  %v52 = vld [vmem:[%s1 + $0x10] sm:$0xff]
  %v53 = vld [vmem:[%s1 + $0x18] sm:$0xff]
  %v54 = vld [vmem:[%s1 + $0x20] sm:$0xff]
  %v55 = vld [vmem:[%s1 + $0x28] sm:$0xff]
  %v56 = vld [vmem:[%s1 + $0x30] sm:$0xff]
  %v57 = vld [vmem:[%s1 + $0x38] sm:$0xff]
  %v58 = vld [vmem:[%s1 + $0x40] sm:$0xff]
  %v59 = vld [vmem:[%s1 + $0x48] sm:$0xff]
  %v60 = vld [vmem:[%s1 + $0x50] sm:$0xff]
  %v61 = vld [vmem:[%s1 + $0x58] sm:$0xff]
  %v62 = vld [vmem:[%s1 + $0x60] sm:$0xff]
  %v63 = vld [vmem:[%s1 + $0x68] sm:$0xff]
  %v64 = vld [vmem:[%s1 + $0x70] sm:$0xff]
  %v65 = vld [vmem:[%s1 + $0x78] sm:$0xff]
  %v82 = vunpack.c.l.b16 %v50
  %v83 = vunpack.c.h.b16 %v50
  %v84 = vunpack.c.l.b16 %v51
  %v85 = vunpack.c.h.b16 %v51
  %v86 = vunpack.c.l.b16 %v52
  %v87 = vunpack.c.h.b16 %v52
  %v88 = vunpack.c.l.b16 %v53
  %v89 = vunpack.c.h.b16 %v53
  %v90 = vunpack.c.l.b16 %v54
  %v91 = vunpack.c.h.b16 %v54
  %v92 = vunpack.c.l.b16 %v55
  %v93 = vunpack.c.h.b16 %v55
  %v94 = vunpack.c.l.b16 %v56
  %v95 = vunpack.c.h.b16 %v56
  %v96 = vunpack.c.l.b16 %v57
  %v97 = vunpack.c.h.b16 %v57
  %v98 = vunpack.c.l.b16 %v58
  %v99 = vunpack.c.h.b16 %v58
  %v100 = vunpack.c.l.b16 %v59
  %v101 = vunpack.c.h.b16 %v59
  %v102 = vunpack.c.l.b16 %v60
  %v103 = vunpack.c.h.b16 %v60
  %v104 = vunpack.c.l.b16 %v61
  %v105 = vunpack.c.h.b16 %v61
  %v106 = vunpack.c.l.b16 %v62
  %v107 = vunpack.c.h.b16 %v62
  %v108 = vunpack.c.l.b16 %v63
  %v109 = vunpack.c.h.b16 %v63
  %v110 = vunpack.c.l.b16 %v64
  %v111 = vunpack.c.h.b16 %v64
  %v112 = vunpack.c.l.b16 %v65
  %v113 = vunpack.c.h.b16 %v65
  %v114 = vpack.c.b16 %v84, %v82
  %v115 = vpack.c.b16 %v85, %v83
  %v116 = vpack.c.b16 %v88, %v86
  %v117 = vpack.c.b16 %v89, %v87
  %v118 = vpack.c.b16 %v92, %v90
  %v119 = vpack.c.b16 %v93, %v91
  %v120 = vpack.c.b16 %v96, %v94
  %v121 = vpack.c.b16 %v97, %v95
  %v122 = vpack.c.b16 %v100, %v98
  %v123 = vpack.c.b16 %v101, %v99
  %v124 = vpack.c.b16 %v104, %v102
  %v125 = vpack.c.b16 %v105, %v103
  %v126 = vpack.c.b16 %v108, %v106
  %v127 = vpack.c.b16 %v109, %v107
  %v128 = vpack.c.b16 %v112, %v110
  %v129 = vpack.c.b16 %v113, %v111
  %146 = vmatprep.subr.bf16.mxu0 %v115
  %147 = vmatpush1.bf16.msra.mxu0 %v114
  %148 = vmatprep.subr.bf16.mxu0 %v117
  %149 = vmatpush1.bf16.msra.mxu0 %v116
  %150 = vmatprep.subr.bf16.mxu0 %v119
  %151 = vmatpush1.bf16.msra.mxu0 %v118
  %152 = vmatprep.subr.bf16.mxu0 %v121
  %153 = vmatpush1.bf16.msra.mxu0 %v120
  %154 = vmatprep.subr.bf16.mxu0 %v123
  %155 = vmatpush1.bf16.msra.mxu0 %v122
  %156 = vmatprep.subr.bf16.mxu0 %v125
  %157 = vmatpush1.bf16.msra.mxu0 %v124
  %158 = vmatprep.subr.bf16.mxu0 %v127
  %159 = vmatpush1.bf16.msra.mxu0 %v126
  %160 = vmatprep.subr.bf16.mxu0 %v129
  %161 = vmatpush1.bf16.msra.mxu0 %v128
  %162 = vmatprep.subr.bf16.mxu0 0
  %163 = vmatpush1.bf16.msra.mxu0 0
  %164 = vmatprep.subr.bf16.mxu0 0
  %165 = vmatpush1.bf16.msra.mxu0 0
  %166 = vmatprep.subr.bf16.mxu0 0
  %167 = vmatpush1.bf16.msra.mxu0 0
  %168 = vmatprep.subr.bf16.mxu0 0
  %169 = vmatpush1.bf16.msra.mxu0 0
  %170 = vmatprep.subr.bf16.mxu0 0
  %171 = vmatpush1.bf16.msra.mxu0 0
  %172 = vmatprep.subr.bf16.mxu0 0
  %173 = vmatpush1.bf16.msra.mxu0 0
  %174 = vmatprep.subr.bf16.mxu0 0
  %175 = vmatpush1.bf16.msra.mxu0 0
  %176 = vmatprep.subr.bf16.mxu0 0
  %177 = vmatpush1.bf16.msra.mxu0 0
  %178 = vmatprep.mubr.bf16.mxu0 0
  %179 = vmatmul.mubr.bf16.gmra.mrb[0].mxu0 %v49
  %v180 = vpop.f32.mrb[0].mxu0
  %v181 = vadd.f32 0.0, %v180
  %v182 = vpop.f32.mrb[0].mxu0
  %v183 = vadd.f32 0.0, %v182
  %v184 = vpop.f32.mrb[0].mxu0
  %v185 = vpop.f32.mrb[0].mxu0
  %186 = vdwg.mxu0
  %v187 = vpack.c.bf16 %v181, %v181
  %v188 = vpack.c.bf16 %v183, %v183
  %v191 = vunpack.c.l.b16 %v187
  %v192 = vunpack.c.l.b16 %v188
  %v193 = vpack.c.b16 %v192, %v191
  %195 = vst [vmem:[%s4] sm:$0xff] %v193
  %v196 = vrot.slane %v181, 4
  %v197 = vadd.f32 %v181, %v196
  %v198 = vrot.slane %v197, 2
  %v199 = vadd.f32 %v197, %v198
  %v200 = vrot.slane %v199, 1
  %v201 = vadd.f32 %v199, %v200
  %v202 = vrot.slane %v183, 4
  %v203 = vadd.f32 %v183, %v202
  %v204 = vrot.slane %v203, 2
  %v205 = vadd.f32 %v203, %v204
  %v206 = vrot.slane %v205, 1
  %v207 = vadd.f32 %v205, %v206
  %v208 = vmul.f32 %v181, %v181
  %v209 = vmul.f32 %v183, %v183
  %v210 = vrot.slane %v208, 4
  %v211 = vadd.f32 %v208, %v210
  %v212 = vrot.slane %v211, 2
  %v213 = vadd.f32 %v211, %v212
  %v214 = vrot.slane %v213, 1
  %v215 = vadd.f32 %v213, %v214
  %v216 = vrot.slane %v209, 4
  %v217 = vadd.f32 %v209, %v216
  %v218 = vrot.slane %v217, 2
  %v219 = vadd.f32 %v217, %v218
  %v220 = vrot.slane %v219, 1
  %v221 = vadd.f32 %v219, %v220
  %222 = vst [vmem:[%s5] sm:$0xff] %v201
  %223 = vst [vmem:[%s5 + $0x8] sm:$0xff] %v207
  %224 = vst [vmem:[%s6] sm:$0xff] %v215
  %225 = vst [vmem:[%s6 + $0x8] sm:$0xff] %v221
  // Predicated region
  $region18: #{pose_resnet_forward.174} parent=0 // pred_check
    _
  $region19: #{pose_resnet_forward.174} parent=0 // pred_check_branch
    %227 = sbr.rel (0) target = $region21
  $region20: #{pose_resnet_forward.174} parent=0 // pred_region
    _
  $region21: #{pose_resnet_forward.174} parent=0 // pred_fallthru
    _
  // Predicated region
  $region22: #{pose_resnet_forward.174} parent=0 // pred_check
    _
  $region23: #{pose_resnet_forward.174} parent=0 // pred_check_branch
    %229 = sbr.rel (0) target = $region25
  $region24: #{pose_resnet_forward.174} parent=0 // pred_region
    _
  $region25: #{pose_resnet_forward.174} parent=0 // pred_fallthru
    _
  // Predicated region
  $region26: #{pose_resnet_forward.174} parent=0 // pred_check
    _
  $region27: #{pose_resnet_forward.174} parent=0 // pred_check_branch
    %231 = sbr.rel (0) target = $region29
  $region28: #{pose_resnet_forward.174} parent=0 // pred_region
    _
  $region29: #{pose_resnet_forward.174} parent=0 // pred_fallthru
    _
  // Predicated region
  $region30: #{pose_resnet_forward.174} parent=0 // pred_check
    _
  $region31: #{pose_resnet_forward.174} parent=0 // pred_check_branch
    %233 = sbr.rel (0) target = $region33
  $region32: #{pose_resnet_forward.174} parent=0 // pred_region
    _
  $region33: #{pose_resnet_forward.174} parent=0 // pred_fallthru
    _
  // Predicated region
  $region34: #{pose_resnet_forward.174} parent=0 // pred_check
    _
  $region35: #{pose_resnet_forward.174} parent=0 // pred_check_branch
    %235 = sbr.rel (0) target = $region37
  $region36: #{pose_resnet_forward.174} parent=0 // pred_region
    _
  $region37: #{pose_resnet_forward.174} parent=0 // pred_fallthru
    _
  // Predicated region
  $region38: #{pose_resnet_forward.174} parent=0 // pred_check
    _
  $region39: #{pose_resnet_forward.174} parent=0 // pred_check_branch
    %237 = sbr.rel (0) target = $region41
  $region40: #{pose_resnet_forward.174} parent=0 // pred_region
    _
  $region41: #{pose_resnet_forward.174} parent=0 // pred_fallthru
    _

// kernel: pose_resnet_forward.177
$region0: #{pose_resnet_forward.177}
  #allocation0 [shape = 'u32[]', space=smem, size = 0x4, offset = 0x4, fixed_abs, tag = 'smem constant byte address 0x4 - core index']
  #allocation1 [shape = 'u32[144,128]{1,0:T(1,128)}', space=vmem, size = 0x12000, scoped, tag = 'internal scratch']
  %s0 = inlined_call_operand.vmem [shape: bf16[8,256], index: 0, kind: input, shape index: {}]
  %s1 = inlined_call_operand.vmem [shape: bf16[256,128], index: 1, kind: input, shape index: {}]
  %s2 = inlined_call_operand.vmem [shape: bf16[8,128], index: 2, kind: output, shape index: {0}]
  %s3 = inlined_call_operand.vmem [shape: f32[8,128], index: 3, kind: output, shape index: {1}]
  %s4 = inlined_call_operand.vmem [shape: f32[8,128], index: 4, kind: output, shape index: {2}]
  %5 = xla_tuple %s2, %s3, %s4
  %s6 = sld [smem:[#allocation0]]
  $region34: #{pose_resnet_forward.177} parent=0
    _
  %s8 = ssub.s32 1, %s6
  %s9 = scalar_select 0, %s8, %s6
  // Predicated region
  $region2: #{pose_resnet_forward.177} parent=0 // pred_check
    _
  $region3: #{pose_resnet_forward.177} parent=0 // pred_check_branch
    %11 = sbr.rel (0) target = $region5
  $region4: #{pose_resnet_forward.177} parent=0 // pred_region
    _
  $region5: #{pose_resnet_forward.177} parent=0 // pred_fallthru
    _
  // Predicated region
  $region6: #{pose_resnet_forward.177} parent=0 // pred_check
    _
  $region7: #{pose_resnet_forward.177} parent=0 // pred_check_branch
    %13 = sbr.rel (0) target = $region9
  $region8: #{pose_resnet_forward.177} parent=0 // pred_region
    _
  $region9: #{pose_resnet_forward.177} parent=0 // pred_fallthru
    _
  %v15 = vld [vmem:[%s0] sm:$0xff]
  %v16 = vld [vmem:[%s1] sm:$0xf]
  %v17 = vld [vmem:[%s1 + $0x4] sm:$0xf]
  %v18 = vld [vmem:[%s1 + $0x8] sm:$0xf]
  %v19 = vld [vmem:[%s1 + $0xc] sm:$0xf]
  %v20 = vld [vmem:[%s1 + $0x10] sm:$0xf]
  %v21 = vld [vmem:[%s1 + $0x14] sm:$0xf]
  %v22 = vld [vmem:[%s1 + $0x18] sm:$0xf]
  %v23 = vld [vmem:[%s1 + $0x1c] sm:$0xf]
  %v24 = vld [vmem:[%s1 + $0x20] sm:$0xf]
  %v25 = vld [vmem:[%s1 + $0x24] sm:$0xf]
  %v26 = vld [vmem:[%s1 + $0x28] sm:$0xf]
  %v27 = vld [vmem:[%s1 + $0x2c] sm:$0xf]
  %v28 = vld [vmem:[%s1 + $0x30] sm:$0xf]
  %v29 = vld [vmem:[%s1 + $0x34] sm:$0xf]
  %v30 = vld [vmem:[%s1 + $0x38] sm:$0xf]
  %v31 = vld [vmem:[%s1 + $0x3c] sm:$0xf]
  %v32 = vld [vmem:[%s1 + $0x40] sm:$0xf]
  %v33 = vld [vmem:[%s1 + $0x44] sm:$0xf]
  %v34 = vld [vmem:[%s1 + $0x48] sm:$0xf]
  %v35 = vld [vmem:[%s1 + $0x4c] sm:$0xf]
  %v36 = vld [vmem:[%s1 + $0x50] sm:$0xf]
  %v37 = vld [vmem:[%s1 + $0x54] sm:$0xf]
  %v38 = vld [vmem:[%s1 + $0x58] sm:$0xf]
  %v39 = vld [vmem:[%s1 + $0x5c] sm:$0xf]
  %v40 = vld [vmem:[%s1 + $0x60] sm:$0xf]
  %v41 = vld [vmem:[%s1 + $0x64] sm:$0xf]
  %v42 = vld [vmem:[%s1 + $0x68] sm:$0xf]
  %v43 = vld [vmem:[%s1 + $0x6c] sm:$0xf]
  %v44 = vld [vmem:[%s1 + $0x70] sm:$0xf]
  %v45 = vld [vmem:[%s1 + $0x74] sm:$0xf]
  %v46 = vld [vmem:[%s1 + $0x78] sm:$0xf]
  %v47 = vld [vmem:[%s1 + $0x7c] sm:$0xf]
  %v49 = vunpack.c.l.b16 %v15
  %v50 = vunpack.c.h.b16 %v15
  %v51 = vpack.c.b16 %v49, %v49
  %v52 = vpack.c.b16 %v50, %v50
  %v87 = vunpack.c.l.b16 %v16
  %v88 = vunpack.c.l.b16 %v17
  %v89 = vunpack.c.l.b16 %v18
  %v90 = vunpack.c.l.b16 %v19
  %v91 = vunpack.c.l.b16 %v20
  %v92 = vunpack.c.l.b16 %v21
  %v93 = vunpack.c.l.b16 %v22
  %v94 = vunpack.c.l.b16 %v23
  %v95 = vunpack.c.l.b16 %v24
  %v96 = vunpack.c.l.b16 %v25
  %v97 = vunpack.c.l.b16 %v26
  %v98 = vunpack.c.l.b16 %v27
  %v99 = vunpack.c.l.b16 %v28
  %v100 = vunpack.c.l.b16 %v29
  %v101 = vunpack.c.l.b16 %v30
  %v102 = vunpack.c.l.b16 %v31
  %v103 = vunpack.c.l.b16 %v32
  %v104 = vunpack.c.l.b16 %v33
  %v105 = vunpack.c.l.b16 %v34
  %v106 = vunpack.c.l.b16 %v35
  %v107 = vunpack.c.l.b16 %v36
  %v108 = vunpack.c.l.b16 %v37
  %v109 = vunpack.c.l.b16 %v38
  %v110 = vunpack.c.l.b16 %v39
  %v111 = vunpack.c.l.b16 %v40
  %v112 = vunpack.c.l.b16 %v41
  %v113 = vunpack.c.l.b16 %v42
  %v114 = vunpack.c.l.b16 %v43
  %v115 = vunpack.c.l.b16 %v44
  %v116 = vunpack.c.l.b16 %v45
  %v117 = vunpack.c.l.b16 %v46
  %v118 = vunpack.c.l.b16 %v47
  %v119 = vpack.c.b16 %v88, %v87
  %v120 = vpack.c.b16 %v90, %v89
  %v121 = vpack.c.b16 %v92, %v91
  %v122 = vpack.c.b16 %v94, %v93
  %v123 = vpack.c.b16 %v96, %v95
  %v124 = vpack.c.b16 %v98, %v97
  %v125 = vpack.c.b16 %v100, %v99
  %v126 = vpack.c.b16 %v102, %v101
  %v127 = vpack.c.b16 %v104, %v103
  %v128 = vpack.c.b16 %v106, %v105
  %v129 = vpack.c.b16 %v108, %v107
  %v130 = vpack.c.b16 %v110, %v109
  %v131 = vpack.c.b16 %v112, %v111
  %v132 = vpack.c.b16 %v114, %v113
  %v133 = vpack.c.b16 %v116, %v115
  %v134 = vpack.c.b16 %v118, %v117
  %151 = vmatprep.subr.bf16.mxu0 0
  %152 = vmatpush1.bf16.msra.mxu0 %v119
  %153 = vmatprep.subr.bf16.mxu0 0
  %154 = vmatpush1.bf16.msra.mxu0 %v120
  %155 = vmatprep.subr.bf16.mxu0 0
  %156 = vmatpush1.bf16.msra.mxu0 %v121
  %157 = vmatprep.subr.bf16.mxu0 0
  %158 = vmatpush1.bf16.msra.mxu0 %v122
  %159 = vmatprep.subr.bf16.mxu0 0
  %160 = vmatpush1.bf16.msra.mxu0 %v123
  %161 = vmatprep.subr.bf16.mxu0 0
  %162 = vmatpush1.bf16.msra.mxu0 %v124
  %163 = vmatprep.subr.bf16.mxu0 0
  %164 = vmatpush1.bf16.msra.mxu0 %v125
  %165 = vmatprep.subr.bf16.mxu0 0
  %166 = vmatpush1.bf16.msra.mxu0 %v126
  %167 = vmatprep.subr.bf16.mxu0 0
  %168 = vmatpush1.bf16.msra.mxu0 %v127
  %169 = vmatprep.subr.bf16.mxu0 0
  %170 = vmatpush1.bf16.msra.mxu0 %v128
  %171 = vmatprep.subr.bf16.mxu0 0
  %172 = vmatpush1.bf16.msra.mxu0 %v129
  %173 = vmatprep.subr.bf16.mxu0 0
  %174 = vmatpush1.bf16.msra.mxu0 %v130
  %175 = vmatprep.subr.bf16.mxu0 0
  %176 = vmatpush1.bf16.msra.mxu0 %v131
  %177 = vmatprep.subr.bf16.mxu0 0
  %178 = vmatpush1.bf16.msra.mxu0 %v132
  %179 = vmatprep.subr.bf16.mxu0 0
  %180 = vmatpush1.bf16.msra.mxu0 %v133
  %181 = vmatprep.subr.bf16.mxu0 0
  %182 = vmatpush1.bf16.msra.mxu0 %v134
  %183 = vmatprep.mubr.bf16.mxu0 %v52
  %184 = vmatmul.mubr.bf16.gmra.mrb[0].mxu0 %v51
  %v185 = vpop.f32.mrb[0].mxu0
  %v186 = vadd.f32 0.0, %v185
  %v187 = vpop.f32.mrb[0].mxu0
  %v188 = vpop.f32.mrb[0].mxu0
  %v189 = vpop.f32.mrb[0].mxu0
  %190 = vdwg.mxu0
  %v191 = vpack.c.bf16 %v186, %v186
  %192 = vst [vmem:[%s2] sm:$0xf] %v191
  %v193 = vrot.slane %v186, 4
  %v194 = vadd.f32 %v186, %v193
  %v195 = vrot.slane %v194, 2
  %v196 = vadd.f32 %v194, %v195
  %v197 = vrot.slane %v196, 1
  %v198 = vadd.f32 %v196, %v197
  %v199 = vmul.f32 %v186, %v186
  %v200 = vrot.slane %v199, 4
  %v201 = vadd.f32 %v199, %v200
  %v202 = vrot.slane %v201, 2
  %v203 = vadd.f32 %v201, %v202
  %v204 = vrot.slane %v203, 1
  %v205 = vadd.f32 %v203, %v204
  %206 = vst [vmem:[%s3] sm:$0xff] %v198
  %207 = vst [vmem:[%s4] sm:$0xff] %v205
  // Predicated region
  $region10: #{pose_resnet_forward.177} parent=0 // pred_check
    _
  $region11: #{pose_resnet_forward.177} parent=0 // pred_check_branch
    %209 = sbr.rel (0) target = $region13
  $region12: #{pose_resnet_forward.177} parent=0 // pred_region
    _
  $region13: #{pose_resnet_forward.177} parent=0 // pred_fallthru
    _
  // Predicated region
  $region14: #{pose_resnet_forward.177} parent=0 // pred_check
    _
  $region15: #{pose_resnet_forward.177} parent=0 // pred_check_branch
    %211 = sbr.rel (0) target = $region17
  $region16: #{pose_resnet_forward.177} parent=0 // pred_region
    _
  $region17: #{pose_resnet_forward.177} parent=0 // pred_fallthru
    _
  // Predicated region
  $region18: #{pose_resnet_forward.177} parent=0 // pred_check
    _
  $region19: #{pose_resnet_forward.177} parent=0 // pred_check_branch
    %213 = sbr.rel (0) target = $region21
  $region20: #{pose_resnet_forward.177} parent=0 // pred_region
    _
  $region21: #{pose_resnet_forward.177} parent=0 // pred_fallthru
    _
  // Predicated region
  $region22: #{pose_resnet_forward.177} parent=0 // pred_check
    _
  $region23: #{pose_resnet_forward.177} parent=0 // pred_check_branch
    %215 = sbr.rel (0) target = $region25
  $region24: #{pose_resnet_forward.177} parent=0 // pred_region
    _
  $region25: #{pose_resnet_forward.177} parent=0 // pred_fallthru
    _
  // Predicated region
  $region26: #{pose_resnet_forward.177} parent=0 // pred_check
    _
  $region27: #{pose_resnet_forward.177} parent=0 // pred_check_branch
    %217 = sbr.rel (0) target = $region29
  $region28: #{pose_resnet_forward.177} parent=0 // pred_region
    _
  $region29: #{pose_resnet_forward.177} parent=0 // pred_fallthru
    _
  // Predicated region
  $region30: #{pose_resnet_forward.177} parent=0 // pred_check
    _
  $region31: #{pose_resnet_forward.177} parent=0 // pred_check_branch
    %219 = sbr.rel (0) target = $region33
  $region32: #{pose_resnet_forward.177} parent=0 // pred_region
    _
  $region33: #{pose_resnet_forward.177} parent=0 // pred_fallthru
    _

// kernel: pose_resnet_forward.188
$region0: #{pose_resnet_forward.188}
  #allocation0 [shape = 'u32[]', space=smem, size = 0x4, offset = 0x4, fixed_abs, tag = 'smem constant byte address 0x4 - core index']
  #allocation1 [shape = 'u32[144,128]{1,0:T(1,128)}', space=vmem, size = 0x12000, scoped, tag = 'internal scratch']
  %s0 = inlined_call_operand.vmem [shape: bf16[8,256], index: 0, kind: input, shape index: {}]
  %s1 = inlined_call_operand.vmem [shape: bf16[8,256], index: 1, kind: input, shape index: {}]
  %s2 = inlined_call_operand.vmem [shape: bf16[256,128], index: 2, kind: input, shape index: {}]
  %s3 = inlined_call_operand.vmem [shape: bf16[256,128], index: 3, kind: input, shape index: {}]
  %s4 = inlined_call_operand.vmem [shape: bf16[8,128], index: 4, kind: output, shape index: {0}]
  %s5 = inlined_call_operand.vmem [shape: f32[8,128], index: 5, kind: output, shape index: {1}]
  %s6 = inlined_call_operand.vmem [shape: f32[8,128], index: 6, kind: output, shape index: {2}]
  %7 = xla_tuple %s4, %s5, %s6
  %s8 = sld [smem:[#allocation0]]
  $region42: #{pose_resnet_forward.188} parent=0
    _
  %s10 = ssub.s32 1, %s8
  %s11 = scalar_select 0, %s10, %s8
  // Predicated region
  $region2: #{pose_resnet_forward.188} parent=0 // pred_check
    _
  $region3: #{pose_resnet_forward.188} parent=0 // pred_check_branch
    %13 = sbr.rel (0) target = $region5
  $region4: #{pose_resnet_forward.188} parent=0 // pred_region
    _
  $region5: #{pose_resnet_forward.188} parent=0 // pred_fallthru
    _
  // Predicated region
  $region6: #{pose_resnet_forward.188} parent=0 // pred_check
    _
  $region7: #{pose_resnet_forward.188} parent=0 // pred_check_branch
    %15 = sbr.rel (0) target = $region9
  $region8: #{pose_resnet_forward.188} parent=0 // pred_region
    _
  $region9: #{pose_resnet_forward.188} parent=0 // pred_fallthru
    _
  // Predicated region
  $region10: #{pose_resnet_forward.188} parent=0 // pred_check
    _
  $region11: #{pose_resnet_forward.188} parent=0 // pred_check_branch
    %17 = sbr.rel (0) target = $region13
  $region12: #{pose_resnet_forward.188} parent=0 // pred_region
    _
  $region13: #{pose_resnet_forward.188} parent=0 // pred_fallthru
    _
  // Predicated region
  $region14: #{pose_resnet_forward.188} parent=0 // pred_check
    _
  $region15: #{pose_resnet_forward.188} parent=0 // pred_check_branch
    %19 = sbr.rel (0) target = $region17
  $region16: #{pose_resnet_forward.188} parent=0 // pred_region
    _
  $region17: #{pose_resnet_forward.188} parent=0 // pred_fallthru
    _
  %v21 = vld [vmem:[%s0] sm:$0xff]
  %v22 = vld [vmem:[%s2] sm:$0xf]
  %v23 = vld [vmem:[%s2 + $0x4] sm:$0xf]
  %v24 = vld [vmem:[%s2 + $0x8] sm:$0xf]
  %v25 = vld [vmem:[%s2 + $0xc] sm:$0xf]
  %v26 = vld [vmem:[%s2 + $0x10] sm:$0xf]
  %v27 = vld [vmem:[%s2 + $0x14] sm:$0xf]
  %v28 = vld [vmem:[%s2 + $0x18] sm:$0xf]
  %v29 = vld [vmem:[%s2 + $0x1c] sm:$0xf]
  %v30 = vld [vmem:[%s2 + $0x20] sm:$0xf]
  %v31 = vld [vmem:[%s2 + $0x24] sm:$0xf]
  %v32 = vld [vmem:[%s2 + $0x28] sm:$0xf]
  %v33 = vld [vmem:[%s2 + $0x2c] sm:$0xf]
  %v34 = vld [vmem:[%s2 + $0x30] sm:$0xf]
  %v35 = vld [vmem:[%s2 + $0x34] sm:$0xf]
  %v36 = vld [vmem:[%s2 + $0x38] sm:$0xf]
  %v37 = vld [vmem:[%s2 + $0x3c] sm:$0xf]
  %v38 = vld [vmem:[%s2 + $0x40] sm:$0xf]
  %v39 = vld [vmem:[%s2 + $0x44] sm:$0xf]
  %v40 = vld [vmem:[%s2 + $0x48] sm:$0xf]
  %v41 = vld [vmem:[%s2 + $0x4c] sm:$0xf]
  %v42 = vld [vmem:[%s2 + $0x50] sm:$0xf]
  %v43 = vld [vmem:[%s2 + $0x54] sm:$0xf]
  %v44 = vld [vmem:[%s2 + $0x58] sm:$0xf]
  %v45 = vld [vmem:[%s2 + $0x5c] sm:$0xf]
  %v46 = vld [vmem:[%s2 + $0x60] sm:$0xf]
  %v47 = vld [vmem:[%s2 + $0x64] sm:$0xf]
  %v48 = vld [vmem:[%s2 + $0x68] sm:$0xf]
  %v49 = vld [vmem:[%s2 + $0x6c] sm:$0xf]
  %v50 = vld [vmem:[%s2 + $0x70] sm:$0xf]
  %v51 = vld [vmem:[%s2 + $0x74] sm:$0xf]
  %v52 = vld [vmem:[%s2 + $0x78] sm:$0xf]
  %v53 = vld [vmem:[%s2 + $0x7c] sm:$0xf]
  %v54 = vld [vmem:[%s1] sm:$0xff]
  %v55 = vld [vmem:[%s3] sm:$0xf]
  %v56 = vld [vmem:[%s3 + $0x4] sm:$0xf]
  %v57 = vld [vmem:[%s3 + $0x8] sm:$0xf]
  %v58 = vld [vmem:[%s3 + $0xc] sm:$0xf]
  %v59 = vld [vmem:[%s3 + $0x10] sm:$0xf]
  %v60 = vld [vmem:[%s3 + $0x14] sm:$0xf]
  %v61 = vld [vmem:[%s3 + $0x18] sm:$0xf]
  %v62 = vld [vmem:[%s3 + $0x1c] sm:$0xf]
  %v63 = vld [vmem:[%s3 + $0x20] sm:$0xf]
  %v64 = vld [vmem:[%s3 + $0x24] sm:$0xf]
  %v65 = vld [vmem:[%s3 + $0x28] sm:$0xf]
  %v66 = vld [vmem:[%s3 + $0x2c] sm:$0xf]
  %v67 = vld [vmem:[%s3 + $0x30] sm:$0xf]
  %v68 = vld [vmem:[%s3 + $0x34] sm:$0xf]
  %v69 = vld [vmem:[%s3 + $0x38] sm:$0xf]
  %v70 = vld [vmem:[%s3 + $0x3c] sm:$0xf]
  %v71 = vld [vmem:[%s3 + $0x40] sm:$0xf]
  %v72 = vld [vmem:[%s3 + $0x44] sm:$0xf]
  %v73 = vld [vmem:[%s3 + $0x48] sm:$0xf]
  %v74 = vld [vmem:[%s3 + $0x4c] sm:$0xf]
  %v75 = vld [vmem:[%s3 + $0x50] sm:$0xf]
  %v76 = vld [vmem:[%s3 + $0x54] sm:$0xf]
  %v77 = vld [vmem:[%s3 + $0x58] sm:$0xf]
  %v78 = vld [vmem:[%s3 + $0x5c] sm:$0xf]
  %v79 = vld [vmem:[%s3 + $0x60] sm:$0xf]
  %v80 = vld [vmem:[%s3 + $0x64] sm:$0xf]
  %v81 = vld [vmem:[%s3 + $0x68] sm:$0xf]
  %v82 = vld [vmem:[%s3 + $0x6c] sm:$0xf]
  %v83 = vld [vmem:[%s3 + $0x70] sm:$0xf]
  %v84 = vld [vmem:[%s3 + $0x74] sm:$0xf]
  %v85 = vld [vmem:[%s3 + $0x78] sm:$0xf]
  %v86 = vld [vmem:[%s3 + $0x7c] sm:$0xf]
  %v88 = vunpack.c.l.b16 %v54
  %v89 = vunpack.c.h.b16 %v54
  %v90 = vpack.c.b16 %v88, %v88
  %v91 = vpack.c.b16 %v89, %v89
  %v126 = vunpack.c.l.b16 %v55
  %v127 = vunpack.c.l.b16 %v56
  %v128 = vunpack.c.l.b16 %v57
  %v129 = vunpack.c.l.b16 %v58
  %v130 = vunpack.c.l.b16 %v59
  %v131 = vunpack.c.l.b16 %v60
  %v132 = vunpack.c.l.b16 %v61
  %v133 = vunpack.c.l.b16 %v62
  %v134 = vunpack.c.l.b16 %v63
  %v135 = vunpack.c.l.b16 %v64
  %v136 = vunpack.c.l.b16 %v65
  %v137 = vunpack.c.l.b16 %v66
  %v138 = vunpack.c.l.b16 %v67
  %v139 = vunpack.c.l.b16 %v68
  %v140 = vunpack.c.l.b16 %v69
  %v141 = vunpack.c.l.b16 %v70
  %v142 = vunpack.c.l.b16 %v71
  %v143 = vunpack.c.l.b16 %v72
  %v144 = vunpack.c.l.b16 %v73
  %v145 = vunpack.c.l.b16 %v74
  %v146 = vunpack.c.l.b16 %v75
  %v147 = vunpack.c.l.b16 %v76
  %v148 = vunpack.c.l.b16 %v77
  %v149 = vunpack.c.l.b16 %v78
  %v150 = vunpack.c.l.b16 %v79
  %v151 = vunpack.c.l.b16 %v80
  %v152 = vunpack.c.l.b16 %v81
  %v153 = vunpack.c.l.b16 %v82
  %v154 = vunpack.c.l.b16 %v83
  %v155 = vunpack.c.l.b16 %v84
  %v156 = vunpack.c.l.b16 %v85
  %v157 = vunpack.c.l.b16 %v86
  %v158 = vpack.c.b16 %v127, %v126
  %v159 = vpack.c.b16 %v129, %v128
  %v160 = vpack.c.b16 %v131, %v130
  %v161 = vpack.c.b16 %v133, %v132
  %v162 = vpack.c.b16 %v135, %v134
  %v163 = vpack.c.b16 %v137, %v136
  %v164 = vpack.c.b16 %v139, %v138
  %v165 = vpack.c.b16 %v141, %v140
  %v166 = vpack.c.b16 %v143, %v142
  %v167 = vpack.c.b16 %v145, %v144
  %v168 = vpack.c.b16 %v147, %v146
  %v169 = vpack.c.b16 %v149, %v148
  %v170 = vpack.c.b16 %v151, %v150
  %v171 = vpack.c.b16 %v153, %v152
  %v172 = vpack.c.b16 %v155, %v154
  %v173 = vpack.c.b16 %v157, %v156
  %190 = vmatprep.subr.bf16.mxu0 0
  %191 = vmatpush1.bf16.msra.mxu0 %v158
  %192 = vmatprep.subr.bf16.mxu0 0
  %193 = vmatpush1.bf16.msra.mxu0 %v159
  %194 = vmatprep.subr.bf16.mxu0 0
  %195 = vmatpush1.bf16.msra.mxu0 %v160
  %196 = vmatprep.subr.bf16.mxu0 0
  %197 = vmatpush1.bf16.msra.mxu0 %v161
  %198 = vmatprep.subr.bf16.mxu0 0
  %199 = vmatpush1.bf16.msra.mxu0 %v162
  %200 = vmatprep.subr.bf16.mxu0 0
  %201 = vmatpush1.bf16.msra.mxu0 %v163
  %202 = vmatprep.subr.bf16.mxu0 0
  %203 = vmatpush1.bf16.msra.mxu0 %v164
  %204 = vmatprep.subr.bf16.mxu0 0
  %205 = vmatpush1.bf16.msra.mxu0 %v165
  %206 = vmatprep.subr.bf16.mxu0 0
  %207 = vmatpush1.bf16.msra.mxu0 %v166
  %208 = vmatprep.subr.bf16.mxu0 0
  %209 = vmatpush1.bf16.msra.mxu0 %v167
  %210 = vmatprep.subr.bf16.mxu0 0
  %211 = vmatpush1.bf16.msra.mxu0 %v168
  %212 = vmatprep.subr.bf16.mxu0 0
  %213 = vmatpush1.bf16.msra.mxu0 %v169
  %214 = vmatprep.subr.bf16.mxu0 0
  %215 = vmatpush1.bf16.msra.mxu0 %v170
  %216 = vmatprep.subr.bf16.mxu0 0
  %217 = vmatpush1.bf16.msra.mxu0 %v171
  %218 = vmatprep.subr.bf16.mxu0 0
  %219 = vmatpush1.bf16.msra.mxu0 %v172
  %220 = vmatprep.subr.bf16.mxu0 0
  %221 = vmatpush1.bf16.msra.mxu0 %v173
  %222 = vmatprep.mubr.bf16.mxu0 %v91
  %223 = vmatmul.mubr.bf16.gmra.mrb[0].mxu0 %v90
  %v224 = vpop.f32.mrb[0].mxu0
  %v225 = vadd.f32 0.0, %v224
  %v226 = vpop.f32.mrb[0].mxu0
  %v227 = vpop.f32.mrb[0].mxu0
  %v228 = vpop.f32.mrb[0].mxu0
  %229 = vdwg.mxu0
  %v231 = vunpack.c.l.b16 %v21
  %v232 = vunpack.c.h.b16 %v21
  %v233 = vpack.c.b16 %v231, %v231
  %v234 = vpack.c.b16 %v232, %v232
  %v269 = vunpack.c.l.b16 %v22
  %v270 = vunpack.c.l.b16 %v23
  %v271 = vunpack.c.l.b16 %v24
  %v272 = vunpack.c.l.b16 %v25
  %v273 = vunpack.c.l.b16 %v26
  %v274 = vunpack.c.l.b16 %v27
  %v275 = vunpack.c.l.b16 %v28
  %v276 = vunpack.c.l.b16 %v29
  %v277 = vunpack.c.l.b16 %v30
  %v278 = vunpack.c.l.b16 %v31
  %v279 = vunpack.c.l.b16 %v32
  %v280 = vunpack.c.l.b16 %v33
  %v281 = vunpack.c.l.b16 %v34
  %v282 = vunpack.c.l.b16 %v35
  %v283 = vunpack.c.l.b16 %v36
  %v284 = vunpack.c.l.b16 %v37
  %v285 = vunpack.c.l.b16 %v38
  %v286 = vunpack.c.l.b16 %v39
  %v287 = vunpack.c.l.b16 %v40
  %v288 = vunpack.c.l.b16 %v41
  %v289 = vunpack.c.l.b16 %v42
  %v290 = vunpack.c.l.b16 %v43
  %v291 = vunpack.c.l.b16 %v44
  %v292 = vunpack.c.l.b16 %v45
  %v293 = vunpack.c.l.b16 %v46
  %v294 = vunpack.c.l.b16 %v47
  %v295 = vunpack.c.l.b16 %v48
  %v296 = vunpack.c.l.b16 %v49
  %v297 = vunpack.c.l.b16 %v50
  %v298 = vunpack.c.l.b16 %v51
  %v299 = vunpack.c.l.b16 %v52
  %v300 = vunpack.c.l.b16 %v53
  %v301 = vpack.c.b16 %v270, %v269
  %v302 = vpack.c.b16 %v272, %v271
  %v303 = vpack.c.b16 %v274, %v273
  %v304 = vpack.c.b16 %v276, %v275
  %v305 = vpack.c.b16 %v278, %v277
  %v306 = vpack.c.b16 %v280, %v279
  %v307 = vpack.c.b16 %v282, %v281
  %v308 = vpack.c.b16 %v284, %v283
  %v309 = vpack.c.b16 %v286, %v285
  %v310 = vpack.c.b16 %v288, %v287
  %v311 = vpack.c.b16 %v290, %v289
  %v312 = vpack.c.b16 %v292, %v291
  %v313 = vpack.c.b16 %v294, %v293
  %v314 = vpack.c.b16 %v296, %v295
  %v315 = vpack.c.b16 %v298, %v297
  %v316 = vpack.c.b16 %v300, %v299
  %333 = vmatprep.subr.bf16.mxu0 0
  %334 = vmatpush1.bf16.msra.mxu0 %v301
  %335 = vmatprep.subr.bf16.mxu0 0
  %336 = vmatpush1.bf16.msra.mxu0 %v302
  %337 = vmatprep.subr.bf16.mxu0 0
  %338 = vmatpush1.bf16.msra.mxu0 %v303
  %339 = vmatprep.subr.bf16.mxu0 0
  %340 = vmatpush1.bf16.msra.mxu0 %v304
  %341 = vmatprep.subr.bf16.mxu0 0
  %342 = vmatpush1.bf16.msra.mxu0 %v305
  %343 = vmatprep.subr.bf16.mxu0 0
  %344 = vmatpush1.bf16.msra.mxu0 %v306
  %345 = vmatprep.subr.bf16.mxu0 0
  %346 = vmatpush1.bf16.msra.mxu0 %v307
  %347 = vmatprep.subr.bf16.mxu0 0
  %348 = vmatpush1.bf16.msra.mxu0 %v308
  %349 = vmatprep.subr.bf16.mxu0 0
  %350 = vmatpush1.bf16.msra.mxu0 %v309
  %351 = vmatprep.subr.bf16.mxu0 0
  %352 = vmatpush1.bf16.msra.mxu0 %v310
  %353 = vmatprep.subr.bf16.mxu0 0
  %354 = vmatpush1.bf16.msra.mxu0 %v311
  %355 = vmatprep.subr.bf16.mxu0 0
  %356 = vmatpush1.bf16.msra.mxu0 %v312
  %357 = vmatprep.subr.bf16.mxu0 0
  %358 = vmatpush1.bf16.msra.mxu0 %v313
  %359 = vmatprep.subr.bf16.mxu0 0
  %360 = vmatpush1.bf16.msra.mxu0 %v314
  %361 = vmatprep.subr.bf16.mxu0 0
  %362 = vmatpush1.bf16.msra.mxu0 %v315
  %363 = vmatprep.subr.bf16.mxu0 0
  %364 = vmatpush1.bf16.msra.mxu0 %v316
  %365 = vmatprep.mubr.bf16.mxu0 %v234
  %366 = vmatmul.mubr.bf16.gmra.mrb[0].mxu0 %v233
  %v367 = vpop.f32.mrb[0].mxu0
  %v368 = vadd.f32 %v225, %v367
  %v369 = vpop.f32.mrb[0].mxu0
  %v370 = vpop.f32.mrb[0].mxu0
  %v371 = vpop.f32.mrb[0].mxu0
  %372 = vdwg.mxu0
  %v373 = vpack.c.bf16 %v368, %v368
  %374 = vst [vmem:[%s4] sm:$0xf] %v373
  %v375 = vrot.slane %v368, 4
  %v376 = vadd.f32 %v368, %v375
  %v377 = vrot.slane %v376, 2
  %v378 = vadd.f32 %v376, %v377
  %v379 = vrot.slane %v378, 1
  %v380 = vadd.f32 %v378, %v379
  %v381 = vmul.f32 %v368, %v368
  %v382 = vrot.slane %v381, 4
  %v383 = vadd.f32 %v381, %v382
  %v384 = vrot.slane %v383, 2
  %v385 = vadd.f32 %v383, %v384
  %v386 = vrot.slane %v385, 1
  %v387 = vadd.f32 %v385, %v386
  %388 = vst [vmem:[%s5] sm:$0xff] %v380
  %389 = vst [vmem:[%s6] sm:$0xff] %v387
  // Predicated region
  $region18: #{pose_resnet_forward.188} parent=0 // pred_check
    _
  $region19: #{pose_resnet_forward.188} parent=0 // pred_check_branch
    %391 = sbr.rel (0) target = $region21
  $region20: #{pose_resnet_forward.188} parent=0 // pred_region
    _
  $region21: #{pose_resnet_forward.188} parent=0 // pred_fallthru
    _
  // Predicated region
  $region22: #{pose_resnet_forward.188} parent=0 // pred_check
    _
  $region23: #{pose_resnet_forward.188} parent=0 // pred_check_branch
    %393 = sbr.rel (0) target = $region25
  $region24: #{pose_resnet_forward.188} parent=0 // pred_region
    _
  $region25: #{pose_resnet_forward.188} parent=0 // pred_fallthru
    _
  // Predicated region
  $region26: #{pose_resnet_forward.188} parent=0 // pred_check
    _
  $region27: #{pose_resnet_forward.188} parent=0 // pred_check_branch
    %395 = sbr.rel (0) target = $region29
  $region28: #{pose_resnet_forward.188} parent=0 // pred_region
    _
  $region29: #{pose_resnet_forward.188} parent=0 // pred_fallthru
    _
  // Predicated region
  $region30: #{pose_resnet_forward.188} parent=0 // pred_check
    _
  $region31: #{pose_resnet_forward.188} parent=0 // pred_check_branch
    %397 = sbr.rel (0) target = $region33
  $region32: #{pose_resnet_forward.188} parent=0 // pred_region
    _
  $region33: #{pose_resnet_forward.188} parent=0 // pred_fallthru
    _
  // Predicated region
  $region34: #{pose_resnet_forward.188} parent=0 // pred_check
    _
  $region35: #{pose_resnet_forward.188} parent=0 // pred_check_branch
    %399 = sbr.rel (0) target = $region37
  $region36: #{pose_resnet_forward.188} parent=0 // pred_region
    _
  $region37: #{pose_resnet_forward.188} parent=0 // pred_fallthru
    _
  // Predicated region
  $region38: #{pose_resnet_forward.188} parent=0 // pred_check
    _
  $region39: #{pose_resnet_forward.188} parent=0 // pred_check_branch
    %401 = sbr.rel (0) target = $region41
  $region40: #{pose_resnet_forward.188} parent=0 // pred_region
    _
  $region41: #{pose_resnet_forward.188} parent=0 // pred_fallthru
    _

// kernel: pose_resnet_forward.190
$region0: #{pose_resnet_forward.190}
  #allocation0 [shape = 'u32[]', space=smem, size = 0x4, offset = 0x4, fixed_abs, tag = 'smem constant byte address 0x4 - core index']
  #allocation1 [shape = 'u32[144,128]{1,0:T(1,128)}', space=vmem, size = 0x12000, scoped, tag = 'internal scratch']
  %s0 = inlined_call_operand.vmem [shape: bf16[8,256], index: 0, kind: input, shape index: {}, may-alias: {0,1,2}]
  %s1 = inlined_call_operand.vmem [shape: bf16[8,256], index: 1, kind: input, shape index: {}, may-alias: {0,1,2}]
  %s2 = inlined_call_operand.vmem [shape: bf16[8,256], index: 2, kind: input, shape index: {}, may-alias: {0,1,2}]
  %s3 = inlined_call_operand.vmem [shape: bf16[8,256], index: 3, kind: input, shape index: {}]
  %s4 = inlined_call_operand.vmem [shape: bf16[256,128], index: 4, kind: input, shape index: {}]
  %s5 = inlined_call_operand.vmem [shape: bf16[256,128], index: 5, kind: input, shape index: {}]
  %s6 = inlined_call_operand.vmem [shape: bf16[256,128], index: 6, kind: input, shape index: {}]
  %s7 = inlined_call_operand.vmem [shape: bf16[256,128], index: 7, kind: input, shape index: {}]
  %s8 = inlined_call_operand.vmem [shape: bf16[8,128], index: 8, kind: output, shape index: {0}]
  %s9 = inlined_call_operand.vmem [shape: f32[8,128], index: 9, kind: output, shape index: {1}]
  %s10 = inlined_call_operand.vmem [shape: f32[8,128], index: 10, kind: output, shape index: {2}]
  %11 = xla_tuple %s8, %s9, %s10
  %s12 = sld [smem:[#allocation0]]
  $region58: #{pose_resnet_forward.190} parent=0
    _
  %s14 = ssub.s32 1, %s12
  %s15 = scalar_select 0, %s14, %s12
  // Predicated region
  $region2: #{pose_resnet_forward.190} parent=0 // pred_check
    _
  $region3: #{pose_resnet_forward.190} parent=0 // pred_check_branch
    %17 = sbr.rel (0) target = $region5
  $region4: #{pose_resnet_forward.190} parent=0 // pred_region
    _
  $region5: #{pose_resnet_forward.190} parent=0 // pred_fallthru
    _
  // Predicated region
  $region6: #{pose_resnet_forward.190} parent=0 // pred_check
    _
  $region7: #{pose_resnet_forward.190} parent=0 // pred_check_branch
    %19 = sbr.rel (0) target = $region9
  $region8: #{pose_resnet_forward.190} parent=0 // pred_region
    _
  $region9: #{pose_resnet_forward.190} parent=0 // pred_fallthru
    _
  // Predicated region
  $region10: #{pose_resnet_forward.190} parent=0 // pred_check
    _
  $region11: #{pose_resnet_forward.190} parent=0 // pred_check_branch
    %21 = sbr.rel (0) target = $region13
  $region12: #{pose_resnet_forward.190} parent=0 // pred_region
    _
  $region13: #{pose_resnet_forward.190} parent=0 // pred_fallthru
    _
  // Predicated region
  $region14: #{pose_resnet_forward.190} parent=0 // pred_check
    _
  $region15: #{pose_resnet_forward.190} parent=0 // pred_check_branch
    %23 = sbr.rel (0) target = $region17
  $region16: #{pose_resnet_forward.190} parent=0 // pred_region
    _
  $region17: #{pose_resnet_forward.190} parent=0 // pred_fallthru
    _
  // Predicated region
  $region18: #{pose_resnet_forward.190} parent=0 // pred_check
    _
  $region19: #{pose_resnet_forward.190} parent=0 // pred_check_branch
    %25 = sbr.rel (0) target = $region21
  $region20: #{pose_resnet_forward.190} parent=0 // pred_region
    _
  $region21: #{pose_resnet_forward.190} parent=0 // pred_fallthru
    _
  // Predicated region
  $region22: #{pose_resnet_forward.190} parent=0 // pred_check
    _
  $region23: #{pose_resnet_forward.190} parent=0 // pred_check_branch
    %27 = sbr.rel (0) target = $region25
  $region24: #{pose_resnet_forward.190} parent=0 // pred_region
    _
  $region25: #{pose_resnet_forward.190} parent=0 // pred_fallthru
    _
  // Predicated region
  $region26: #{pose_resnet_forward.190} parent=0 // pred_check
    _
  $region27: #{pose_resnet_forward.190} parent=0 // pred_check_branch
    %29 = sbr.rel (0) target = $region29
  $region28: #{pose_resnet_forward.190} parent=0 // pred_region
    _
  $region29: #{pose_resnet_forward.190} parent=0 // pred_fallthru
    _
  // Predicated region
  $region30: #{pose_resnet_forward.190} parent=0 // pred_check
    _
  $region31: #{pose_resnet_forward.190} parent=0 // pred_check_branch
    %31 = sbr.rel (0) target = $region33
  $region32: #{pose_resnet_forward.190} parent=0 // pred_region
    _
  $region33: #{pose_resnet_forward.190} parent=0 // pred_fallthru
    _
  %v33 = vld [vmem:[%s0] sm:$0xff]
  %v34 = vld [vmem:[%s4] sm:$0xf]
  %v35 = vld [vmem:[%s4 + $0x4] sm:$0xf]
  %v36 = vld [vmem:[%s4 + $0x8] sm:$0xf]
  %v37 = vld [vmem:[%s4 + $0xc] sm:$0xf]
  %v38 = vld [vmem:[%s4 + $0x10] sm:$0xf]
  %v39 = vld [vmem:[%s4 + $0x14] sm:$0xf]
  %v40 = vld [vmem:[%s4 + $0x18] sm:$0xf]
  %v41 = vld [vmem:[%s4 + $0x1c] sm:$0xf]
  %v42 = vld [vmem:[%s4 + $0x20] sm:$0xf]
  %v43 = vld [vmem:[%s4 + $0x24] sm:$0xf]
  %v44 = vld [vmem:[%s4 + $0x28] sm:$0xf]
  %v45 = vld [vmem:[%s4 + $0x2c] sm:$0xf]
  %v46 = vld [vmem:[%s4 + $0x30] sm:$0xf]
  %v47 = vld [vmem:[%s4 + $0x34] sm:$0xf]
  %v48 = vld [vmem:[%s4 + $0x38] sm:$0xf]
  %v49 = vld [vmem:[%s4 + $0x3c] sm:$0xf]
  %v50 = vld [vmem:[%s4 + $0x40] sm:$0xf]
  %v51 = vld [vmem:[%s4 + $0x44] sm:$0xf]
  %v52 = vld [vmem:[%s4 + $0x48] sm:$0xf]
  %v53 = vld [vmem:[%s4 + $0x4c] sm:$0xf]
  %v54 = vld [vmem:[%s4 + $0x50] sm:$0xf]
  %v55 = vld [vmem:[%s4 + $0x54] sm:$0xf]
  %v56 = vld [vmem:[%s4 + $0x58] sm:$0xf]
  %v57 = vld [vmem:[%s4 + $0x5c] sm:$0xf]
  %v58 = vld [vmem:[%s4 + $0x60] sm:$0xf]
  %v59 = vld [vmem:[%s4 + $0x64] sm:$0xf]
  %v60 = vld [vmem:[%s4 + $0x68] sm:$0xf]
  %v61 = vld [vmem:[%s4 + $0x6c] sm:$0xf]
  %v62 = vld [vmem:[%s4 + $0x70] sm:$0xf]
  %v63 = vld [vmem:[%s4 + $0x74] sm:$0xf]
  %v64 = vld [vmem:[%s4 + $0x78] sm:$0xf]
  %v65 = vld [vmem:[%s4 + $0x7c] sm:$0xf]
  %v66 = vld [vmem:[%s1] sm:$0xff]
  %v67 = vld [vmem:[%s5] sm:$0xf]
  %v68 = vld [vmem:[%s5 + $0x4] sm:$0xf]
  %v69 = vld [vmem:[%s5 + $0x8] sm:$0xf]
  %v70 = vld [vmem:[%s5 + $0xc] sm:$0xf]
  %v71 = vld [vmem:[%s5 + $0x10] sm:$0xf]
  %v72 = vld [vmem:[%s5 + $0x14] sm:$0xf]
  %v73 = vld [vmem:[%s5 + $0x18] sm:$0xf]
  %v74 = vld [vmem:[%s5 + $0x1c] sm:$0xf]
  %v75 = vld [vmem:[%s5 + $0x20] sm:$0xf]
  %v76 = vld [vmem:[%s5 + $0x24] sm:$0xf]
  %v77 = vld [vmem:[%s5 + $0x28] sm:$0xf]
  %v78 = vld [vmem:[%s5 + $0x2c] sm:$0xf]
  %v79 = vld [vmem:[%s5 + $0x30] sm:$0xf]
  %v80 = vld [vmem:[%s5 + $0x34] sm:$0xf]
  %v81 = vld [vmem:[%s5 + $0x38] sm:$0xf]
  %v82 = vld [vmem:[%s5 + $0x3c] sm:$0xf]
  %v83 = vld [vmem:[%s5 + $0x40] sm:$0xf]
  %v84 = vld [vmem:[%s5 + $0x44] sm:$0xf]
  %v85 = vld [vmem:[%s5 + $0x48] sm:$0xf]
  %v86 = vld [vmem:[%s5 + $0x4c] sm:$0xf]
  %v87 = vld [vmem:[%s5 + $0x50] sm:$0xf]
  %v88 = vld [vmem:[%s5 + $0x54] sm:$0xf]
  %v89 = vld [vmem:[%s5 + $0x58] sm:$0xf]
  %v90 = vld [vmem:[%s5 + $0x5c] sm:$0xf]
  %v91 = vld [vmem:[%s5 + $0x60] sm:$0xf]
  %v92 = vld [vmem:[%s5 + $0x64] sm:$0xf]
  %v93 = vld [vmem:[%s5 + $0x68] sm:$0xf]
  %v94 = vld [vmem:[%s5 + $0x6c] sm:$0xf]
  %v95 = vld [vmem:[%s5 + $0x70] sm:$0xf]
  %v96 = vld [vmem:[%s5 + $0x74] sm:$0xf]
  %v97 = vld [vmem:[%s5 + $0x78] sm:$0xf]
  %v98 = vld [vmem:[%s5 + $0x7c] sm:$0xf]
  %v100 = vunpack.c.l.b16 %v66
  %v101 = vunpack.c.h.b16 %v66
  %v102 = vpack.c.b16 %v100, %v100
  %v103 = vpack.c.b16 %v101, %v101
  %v138 = vunpack.c.l.b16 %v67
  %v139 = vunpack.c.l.b16 %v68
  %v140 = vunpack.c.l.b16 %v69
  %v141 = vunpack.c.l.b16 %v70
  %v142 = vunpack.c.l.b16 %v71
  %v143 = vunpack.c.l.b16 %v72
  %v144 = vunpack.c.l.b16 %v73
  %v145 = vunpack.c.l.b16 %v74
  %v146 = vunpack.c.l.b16 %v75
  %v147 = vunpack.c.l.b16 %v76
  %v148 = vunpack.c.l.b16 %v77
  %v149 = vunpack.c.l.b16 %v78
  %v150 = vunpack.c.l.b16 %v79
  %v151 = vunpack.c.l.b16 %v80
  %v152 = vunpack.c.l.b16 %v81
  %v153 = vunpack.c.l.b16 %v82
  %v154 = vunpack.c.l.b16 %v83
  %v155 = vunpack.c.l.b16 %v84
  %v156 = vunpack.c.l.b16 %v85
  %v157 = vunpack.c.l.b16 %v86
  %v158 = vunpack.c.l.b16 %v87
  %v159 = vunpack.c.l.b16 %v88
  %v160 = vunpack.c.l.b16 %v89
  %v161 = vunpack.c.l.b16 %v90
  %v162 = vunpack.c.l.b16 %v91
  %v163 = vunpack.c.l.b16 %v92
  %v164 = vunpack.c.l.b16 %v93
  %v165 = vunpack.c.l.b16 %v94
  %v166 = vunpack.c.l.b16 %v95
  %v167 = vunpack.c.l.b16 %v96
  %v168 = vunpack.c.l.b16 %v97
  %v169 = vunpack.c.l.b16 %v98
  %v170 = vpack.c.b16 %v139, %v138
  %v171 = vpack.c.b16 %v141, %v140
  %v172 = vpack.c.b16 %v143, %v142
  %v173 = vpack.c.b16 %v145, %v144
  %v174 = vpack.c.b16 %v147, %v146
  %v175 = vpack.c.b16 %v149, %v148
  %v176 = vpack.c.b16 %v151, %v150
  %v177 = vpack.c.b16 %v153, %v152
  %v178 = vpack.c.b16 %v155, %v154
  %v179 = vpack.c.b16 %v157, %v156
  %v180 = vpack.c.b16 %v159, %v158
  %v181 = vpack.c.b16 %v161, %v160
  %v182 = vpack.c.b16 %v163, %v162
  %v183 = vpack.c.b16 %v165, %v164
  %v184 = vpack.c.b16 %v167, %v166
  %v185 = vpack.c.b16 %v169, %v168
  %202 = vmatprep.subr.bf16.mxu0 0
  %203 = vmatpush1.bf16.msra.mxu0 %v170
  %204 = vmatprep.subr.bf16.mxu0 0
  %205 = vmatpush1.bf16.msra.mxu0 %v171
  %206 = vmatprep.subr.bf16.mxu0 0
  %207 = vmatpush1.bf16.msra.mxu0 %v172
  %208 = vmatprep.subr.bf16.mxu0 0
  %209 = vmatpush1.bf16.msra.mxu0 %v173
  %210 = vmatprep.subr.bf16.mxu0 0
  %211 = vmatpush1.bf16.msra.mxu0 %v174
  %212 = vmatprep.subr.bf16.mxu0 0
  %213 = vmatpush1.bf16.msra.mxu0 %v175
  %214 = vmatprep.subr.bf16.mxu0 0
  %215 = vmatpush1.bf16.msra.mxu0 %v176
  %216 = vmatprep.subr.bf16.mxu0 0
  %217 = vmatpush1.bf16.msra.mxu0 %v177
  %218 = vmatprep.subr.bf16.mxu0 0
  %219 = vmatpush1.bf16.msra.mxu0 %v178
  %220 = vmatprep.subr.bf16.mxu0 0
  %221 = vmatpush1.bf16.msra.mxu0 %v179
  %222 = vmatprep.subr.bf16.mxu0 0
  %223 = vmatpush1.bf16.msra.mxu0 %v180
  %224 = vmatprep.subr.bf16.mxu0 0
  %225 = vmatpush1.bf16.msra.mxu0 %v181
  %226 = vmatprep.subr.bf16.mxu0 0
  %227 = vmatpush1.bf16.msra.mxu0 %v182
  %228 = vmatprep.subr.bf16.mxu0 0
  %229 = vmatpush1.bf16.msra.mxu0 %v183
  %230 = vmatprep.subr.bf16.mxu0 0
  %231 = vmatpush1.bf16.msra.mxu0 %v184
  %232 = vmatprep.subr.bf16.mxu0 0
  %233 = vmatpush1.bf16.msra.mxu0 %v185
  %234 = vmatprep.mubr.bf16.mxu0 %v103
  %235 = vmatmul.mubr.bf16.gmra.mrb[0].mxu0 %v102
  %v236 = vpop.f32.mrb[0].mxu0
  %v237 = vadd.f32 0.0, %v236
  %v238 = vpop.f32.mrb[0].mxu0
  %v239 = vpop.f32.mrb[0].mxu0
  %v240 = vpop.f32.mrb[0].mxu0
  %241 = vdwg.mxu0
  %v243 = vunpack.c.l.b16 %v33
  %v244 = vunpack.c.h.b16 %v33
  %v245 = vpack.c.b16 %v243, %v243
  %v246 = vpack.c.b16 %v244, %v244
  %v281 = vunpack.c.l.b16 %v34
  %v282 = vunpack.c.l.b16 %v35
  %v283 = vunpack.c.l.b16 %v36
  %v284 = vunpack.c.l.b16 %v37
  %v285 = vunpack.c.l.b16 %v38
  %v286 = vunpack.c.l.b16 %v39
  %v287 = vunpack.c.l.b16 %v40
  %v288 = vunpack.c.l.b16 %v41
  %v289 = vunpack.c.l.b16 %v42
  %v290 = vunpack.c.l.b16 %v43
  %v291 = vunpack.c.l.b16 %v44
  %v292 = vunpack.c.l.b16 %v45
  %v293 = vunpack.c.l.b16 %v46
  %v294 = vunpack.c.l.b16 %v47
  %v295 = vunpack.c.l.b16 %v48
  %v296 = vunpack.c.l.b16 %v49
  %v297 = vunpack.c.l.b16 %v50
  %v298 = vunpack.c.l.b16 %v51
  %v299 = vunpack.c.l.b16 %v52
  %v300 = vunpack.c.l.b16 %v53
  %v301 = vunpack.c.l.b16 %v54
  %v302 = vunpack.c.l.b16 %v55
  %v303 = vunpack.c.l.b16 %v56
  %v304 = vunpack.c.l.b16 %v57
  %v305 = vunpack.c.l.b16 %v58
  %v306 = vunpack.c.l.b16 %v59
  %v307 = vunpack.c.l.b16 %v60
  %v308 = vunpack.c.l.b16 %v61
  %v309 = vunpack.c.l.b16 %v62
  %v310 = vunpack.c.l.b16 %v63
  %v311 = vunpack.c.l.b16 %v64
  %v312 = vunpack.c.l.b16 %v65
  %v313 = vpack.c.b16 %v282, %v281
  %v314 = vpack.c.b16 %v284, %v283
  %v315 = vpack.c.b16 %v286, %v285
  %v316 = vpack.c.b16 %v288, %v287
  %v317 = vpack.c.b16 %v290, %v289
  %v318 = vpack.c.b16 %v292, %v291
  %v319 = vpack.c.b16 %v294, %v293
  %v320 = vpack.c.b16 %v296, %v295
  %v321 = vpack.c.b16 %v298, %v297
  %v322 = vpack.c.b16 %v300, %v299
  %v323 = vpack.c.b16 %v302, %v301
  %v324 = vpack.c.b16 %v304, %v303
  %v325 = vpack.c.b16 %v306, %v305
  %v326 = vpack.c.b16 %v308, %v307
  %v327 = vpack.c.b16 %v310, %v309
  %v328 = vpack.c.b16 %v312, %v311
  %345 = vmatprep.subr.bf16.mxu0 0
  %346 = vmatpush1.bf16.msra.mxu0 %v313
  %347 = vmatprep.subr.bf16.mxu0 0
  %348 = vmatpush1.bf16.msra.mxu0 %v314
  %349 = vmatprep.subr.bf16.mxu0 0
  %350 = vmatpush1.bf16.msra.mxu0 %v315
  %351 = vmatprep.subr.bf16.mxu0 0
  %352 = vmatpush1.bf16.msra.mxu0 %v316
  %353 = vmatprep.subr.bf16.mxu0 0
  %354 = vmatpush1.bf16.msra.mxu0 %v317
  %355 = vmatprep.subr.bf16.mxu0 0
  %356 = vmatpush1.bf16.msra.mxu0 %v318
  %357 = vmatprep.subr.bf16.mxu0 0
  %358 = vmatpush1.bf16.msra.mxu0 %v319
  %359 = vmatprep.subr.bf16.mxu0 0
  %360 = vmatpush1.bf16.msra.mxu0 %v320
  %361 = vmatprep.subr.bf16.mxu0 0
  %362 = vmatpush1.bf16.msra.mxu0 %v321
  %363 = vmatprep.subr.bf16.mxu0 0
  %364 = vmatpush1.bf16.msra.mxu0 %v322
  %365 = vmatprep.subr.bf16.mxu0 0
  %366 = vmatpush1.bf16.msra.mxu0 %v323
  %367 = vmatprep.subr.bf16.mxu0 0
  %368 = vmatpush1.bf16.msra.mxu0 %v324
  %369 = vmatprep.subr.bf16.mxu0 0
  %370 = vmatpush1.bf16.msra.mxu0 %v325
  %371 = vmatprep.subr.bf16.mxu0 0
  %372 = vmatpush1.bf16.msra.mxu0 %v326
  %373 = vmatprep.subr.bf16.mxu0 0
  %374 = vmatpush1.bf16.msra.mxu0 %v327
  %375 = vmatprep.subr.bf16.mxu0 0
  %376 = vmatpush1.bf16.msra.mxu0 %v328
  %377 = vmatprep.mubr.bf16.mxu0 %v246
  %378 = vmatmul.mubr.bf16.gmra.mrb[0].mxu0 %v245
  %v379 = vpop.f32.mrb[0].mxu0
  %v380 = vadd.f32 %v237, %v379
  %v381 = vpop.f32.mrb[0].mxu0
  %v382 = vpop.f32.mrb[0].mxu0
  %v383 = vpop.f32.mrb[0].mxu0
  %384 = vdwg.mxu0
  %v385 = vld [vmem:[%s2] sm:$0xff]
  %v386 = vld [vmem:[%s6] sm:$0xf]
  %v387 = vld [vmem:[%s6 + $0x4] sm:$0xf]
  %v388 = vld [vmem:[%s6 + $0x8] sm:$0xf]
  %v389 = vld [vmem:[%s6 + $0xc] sm:$0xf]
  %v390 = vld [vmem:[%s6 + $0x10] sm:$0xf]
  %v391 = vld [vmem:[%s6 + $0x14] sm:$0xf]
  %v392 = vld [vmem:[%s6 + $0x18] sm:$0xf]
  %v393 = vld [vmem:[%s6 + $0x1c] sm:$0xf]
  %v394 = vld [vmem:[%s6 + $0x20] sm:$0xf]
  %v395 = vld [vmem:[%s6 + $0x24] sm:$0xf]
  %v396 = vld [vmem:[%s6 + $0x28] sm:$0xf]
  %v397 = vld [vmem:[%s6 + $0x2c] sm:$0xf]
  %v398 = vld [vmem:[%s6 + $0x30] sm:$0xf]
  %v399 = vld [vmem:[%s6 + $0x34] sm:$0xf]
  %v400 = vld [vmem:[%s6 + $0x38] sm:$0xf]
  %v401 = vld [vmem:[%s6 + $0x3c] sm:$0xf]
  %v402 = vld [vmem:[%s6 + $0x40] sm:$0xf]
  %v403 = vld [vmem:[%s6 + $0x44] sm:$0xf]
  %v404 = vld [vmem:[%s6 + $0x48] sm:$0xf]
  %v405 = vld [vmem:[%s6 + $0x4c] sm:$0xf]
  %v406 = vld [vmem:[%s6 + $0x50] sm:$0xf]
  %v407 = vld [vmem:[%s6 + $0x54] sm:$0xf]
  %v408 = vld [vmem:[%s6 + $0x58] sm:$0xf]
  %v409 = vld [vmem:[%s6 + $0x5c] sm:$0xf]
  %v410 = vld [vmem:[%s6 + $0x60] sm:$0xf]
  %v411 = vld [vmem:[%s6 + $0x64] sm:$0xf]
  %v412 = vld [vmem:[%s6 + $0x68] sm:$0xf]
  %v413 = vld [vmem:[%s6 + $0x6c] sm:$0xf]
  %v414 = vld [vmem:[%s6 + $0x70] sm:$0xf]
  %v415 = vld [vmem:[%s6 + $0x74] sm:$0xf]
  %v416 = vld [vmem:[%s6 + $0x78] sm:$0xf]
  %v417 = vld [vmem:[%s6 + $0x7c] sm:$0xf]
  %v419 = vunpack.c.l.b16 %v385
  %v420 = vunpack.c.h.b16 %v385
  %v421 = vpack.c.b16 %v419, %v419
  %v422 = vpack.c.b16 %v420, %v420
  %v457 = vunpack.c.l.b16 %v386
  %v458 = vunpack.c.l.b16 %v387
  %v459 = vunpack.c.l.b16 %v388
  %v460 = vunpack.c.l.b16 %v389
  %v461 = vunpack.c.l.b16 %v390
  %v462 = vunpack.c.l.b16 %v391
  %v463 = vunpack.c.l.b16 %v392
  %v464 = vunpack.c.l.b16 %v393
  %v465 = vunpack.c.l.b16 %v394
  %v466 = vunpack.c.l.b16 %v395
  %v467 = vunpack.c.l.b16 %v396
  %v468 = vunpack.c.l.b16 %v397
  %v469 = vunpack.c.l.b16 %v398
  %v470 = vunpack.c.l.b16 %v399
  %v471 = vunpack.c.l.b16 %v400
  %v472 = vunpack.c.l.b16 %v401
  %v473 = vunpack.c.l.b16 %v402
  %v474 = vunpack.c.l.b16 %v403
  %v475 = vunpack.c.l.b16 %v404
  %v476 = vunpack.c.l.b16 %v405
  %v477 = vunpack.c.l.b16 %v406
  %v478 = vunpack.c.l.b16 %v407
  %v479 = vunpack.c.l.b16 %v408
  %v480 = vunpack.c.l.b16 %v409
  %v481 = vunpack.c.l.b16 %v410
  %v482 = vunpack.c.l.b16 %v411
  %v483 = vunpack.c.l.b16 %v412
  %v484 = vunpack.c.l.b16 %v413
  %v485 = vunpack.c.l.b16 %v414
  %v486 = vunpack.c.l.b16 %v415
  %v487 = vunpack.c.l.b16 %v416
  %v488 = vunpack.c.l.b16 %v417
  %v489 = vpack.c.b16 %v458, %v457
  %v490 = vpack.c.b16 %v460, %v459
  %v491 = vpack.c.b16 %v462, %v461
  %v492 = vpack.c.b16 %v464, %v463
  %v493 = vpack.c.b16 %v466, %v465
  %v494 = vpack.c.b16 %v468, %v467
  %v495 = vpack.c.b16 %v470, %v469
  %v496 = vpack.c.b16 %v472, %v471
  %v497 = vpack.c.b16 %v474, %v473
  %v498 = vpack.c.b16 %v476, %v475
  %v499 = vpack.c.b16 %v478, %v477
  %v500 = vpack.c.b16 %v480, %v479
  %v501 = vpack.c.b16 %v482, %v481
  %v502 = vpack.c.b16 %v484, %v483
  %v503 = vpack.c.b16 %v486, %v485
  %v504 = vpack.c.b16 %v488, %v487
  %521 = vmatprep.subr.bf16.mxu0 0
  %522 = vmatpush1.bf16.msra.mxu0 %v489
  %523 = vmatprep.subr.bf16.mxu0 0
  %524 = vmatpush1.bf16.msra.mxu0 %v490
  %525 = vmatprep.subr.bf16.mxu0 0
  %526 = vmatpush1.bf16.msra.mxu0 %v491
  %527 = vmatprep.subr.bf16.mxu0 0
  %528 = vmatpush1.bf16.msra.mxu0 %v492
  %529 = vmatprep.subr.bf16.mxu0 0
  %530 = vmatpush1.bf16.msra.mxu0 %v493
  %531 = vmatprep.subr.bf16.mxu0 0
  %532 = vmatpush1.bf16.msra.mxu0 %v494
  %533 = vmatprep.subr.bf16.mxu0 0
  %534 = vmatpush1.bf16.msra.mxu0 %v495
  %535 = vmatprep.subr.bf16.mxu0 0
  %536 = vmatpush1.bf16.msra.mxu0 %v496
  %537 = vmatprep.subr.bf16.mxu0 0
  %538 = vmatpush1.bf16.msra.mxu0 %v497
  %539 = vmatprep.subr.bf16.mxu0 0
  %540 = vmatpush1.bf16.msra.mxu0 %v498
  %541 = vmatprep.subr.bf16.mxu0 0
  %542 = vmatpush1.bf16.msra.mxu0 %v499
  %543 = vmatprep.subr.bf16.mxu0 0
  %544 = vmatpush1.bf16.msra.mxu0 %v500
  %545 = vmatprep.subr.bf16.mxu0 0
  %546 = vmatpush1.bf16.msra.mxu0 %v501
  %547 = vmatprep.subr.bf16.mxu0 0
  %548 = vmatpush1.bf16.msra.mxu0 %v502
  %549 = vmatprep.subr.bf16.mxu0 0
  %550 = vmatpush1.bf16.msra.mxu0 %v503
  %551 = vmatprep.subr.bf16.mxu0 0
  %552 = vmatpush1.bf16.msra.mxu0 %v504
  %553 = vmatprep.mubr.bf16.mxu0 %v422
  %554 = vmatmul.mubr.bf16.gmra.mrb[0].mxu0 %v421
  %v555 = vpop.f32.mrb[0].mxu0
  %v556 = vadd.f32 0.0, %v555
  %v557 = vpop.f32.mrb[0].mxu0
  %v558 = vpop.f32.mrb[0].mxu0
  %v559 = vpop.f32.mrb[0].mxu0
  %560 = vdwg.mxu0
  %v561 = vadd.f32 %v380, %v556
  %v562 = vld [vmem:[%s3] sm:$0xff]
  %v563 = vld [vmem:[%s7] sm:$0xf]
  %v564 = vld [vmem:[%s7 + $0x4] sm:$0xf]
  %v565 = vld [vmem:[%s7 + $0x8] sm:$0xf]
  %v566 = vld [vmem:[%s7 + $0xc] sm:$0xf]
  %v567 = vld [vmem:[%s7 + $0x10] sm:$0xf]
  %v568 = vld [vmem:[%s7 + $0x14] sm:$0xf]
  %v569 = vld [vmem:[%s7 + $0x18] sm:$0xf]
  %v570 = vld [vmem:[%s7 + $0x1c] sm:$0xf]
  %v571 = vld [vmem:[%s7 + $0x20] sm:$0xf]
  %v572 = vld [vmem:[%s7 + $0x24] sm:$0xf]
  %v573 = vld [vmem:[%s7 + $0x28] sm:$0xf]
  %v574 = vld [vmem:[%s7 + $0x2c] sm:$0xf]
  %v575 = vld [vmem:[%s7 + $0x30] sm:$0xf]
  %v576 = vld [vmem:[%s7 + $0x34] sm:$0xf]
  %v577 = vld [vmem:[%s7 + $0x38] sm:$0xf]
  %v578 = vld [vmem:[%s7 + $0x3c] sm:$0xf]
  %v579 = vld [vmem:[%s7 + $0x40] sm:$0xf]
  %v580 = vld [vmem:[%s7 + $0x44] sm:$0xf]
  %v581 = vld [vmem:[%s7 + $0x48] sm:$0xf]
  %v582 = vld [vmem:[%s7 + $0x4c] sm:$0xf]
  %v583 = vld [vmem:[%s7 + $0x50] sm:$0xf]
  %v584 = vld [vmem:[%s7 + $0x54] sm:$0xf]
  %v585 = vld [vmem:[%s7 + $0x58] sm:$0xf]
  %v586 = vld [vmem:[%s7 + $0x5c] sm:$0xf]
  %v587 = vld [vmem:[%s7 + $0x60] sm:$0xf]
  %v588 = vld [vmem:[%s7 + $0x64] sm:$0xf]
  %v589 = vld [vmem:[%s7 + $0x68] sm:$0xf]
  %v590 = vld [vmem:[%s7 + $0x6c] sm:$0xf]
  %v591 = vld [vmem:[%s7 + $0x70] sm:$0xf]
  %v592 = vld [vmem:[%s7 + $0x74] sm:$0xf]
  %v593 = vld [vmem:[%s7 + $0x78] sm:$0xf]
  %v594 = vld [vmem:[%s7 + $0x7c] sm:$0xf]
  %v596 = vunpack.c.l.b16 %v562
  %v597 = vunpack.c.h.b16 %v562
  %v598 = vpack.c.b16 %v596, %v596
  %v599 = vpack.c.b16 %v597, %v597
  %v634 = vunpack.c.l.b16 %v563
  %v635 = vunpack.c.l.b16 %v564
  %v636 = vunpack.c.l.b16 %v565
  %v637 = vunpack.c.l.b16 %v566
  %v638 = vunpack.c.l.b16 %v567
  %v639 = vunpack.c.l.b16 %v568
  %v640 = vunpack.c.l.b16 %v569
  %v641 = vunpack.c.l.b16 %v570
  %v642 = vunpack.c.l.b16 %v571
  %v643 = vunpack.c.l.b16 %v572
  %v644 = vunpack.c.l.b16 %v573
  %v645 = vunpack.c.l.b16 %v574
  %v646 = vunpack.c.l.b16 %v575
  %v647 = vunpack.c.l.b16 %v576
  %v648 = vunpack.c.l.b16 %v577
  %v649 = vunpack.c.l.b16 %v578
  %v650 = vunpack.c.l.b16 %v579
  %v651 = vunpack.c.l.b16 %v580
  %v652 = vunpack.c.l.b16 %v581
  %v653 = vunpack.c.l.b16 %v582
  %v654 = vunpack.c.l.b16 %v583
  %v655 = vunpack.c.l.b16 %v584
  %v656 = vunpack.c.l.b16 %v585
  %v657 = vunpack.c.l.b16 %v586
  %v658 = vunpack.c.l.b16 %v587
  %v659 = vunpack.c.l.b16 %v588
  %v660 = vunpack.c.l.b16 %v589
  %v661 = vunpack.c.l.b16 %v590
  %v662 = vunpack.c.l.b16 %v591
  %v663 = vunpack.c.l.b16 %v592
  %v664 = vunpack.c.l.b16 %v593
  %v665 = vunpack.c.l.b16 %v594
  %v666 = vpack.c.b16 %v635, %v634
  %v667 = vpack.c.b16 %v637, %v636
  %v668 = vpack.c.b16 %v639, %v638
  %v669 = vpack.c.b16 %v641, %v640
  %v670 = vpack.c.b16 %v643, %v642
  %v671 = vpack.c.b16 %v645, %v644
  %v672 = vpack.c.b16 %v647, %v646
  %v673 = vpack.c.b16 %v649, %v648
  %v674 = vpack.c.b16 %v651, %v650
  %v675 = vpack.c.b16 %v653, %v652
  %v676 = vpack.c.b16 %v655, %v654
  %v677 = vpack.c.b16 %v657, %v656
  %v678 = vpack.c.b16 %v659, %v658
  %v679 = vpack.c.b16 %v661, %v660
  %v680 = vpack.c.b16 %v663, %v662
  %v681 = vpack.c.b16 %v665, %v664
  %698 = vmatprep.subr.bf16.mxu0 0
  %699 = vmatpush1.bf16.msra.mxu0 %v666
  %700 = vmatprep.subr.bf16.mxu0 0
  %701 = vmatpush1.bf16.msra.mxu0 %v667
  %702 = vmatprep.subr.bf16.mxu0 0
  %703 = vmatpush1.bf16.msra.mxu0 %v668
  %704 = vmatprep.subr.bf16.mxu0 0
  %705 = vmatpush1.bf16.msra.mxu0 %v669
  %706 = vmatprep.subr.bf16.mxu0 0
  %707 = vmatpush1.bf16.msra.mxu0 %v670
  %708 = vmatprep.subr.bf16.mxu0 0
  %709 = vmatpush1.bf16.msra.mxu0 %v671
  %710 = vmatprep.subr.bf16.mxu0 0
  %711 = vmatpush1.bf16.msra.mxu0 %v672
  %712 = vmatprep.subr.bf16.mxu0 0
  %713 = vmatpush1.bf16.msra.mxu0 %v673
  %714 = vmatprep.subr.bf16.mxu0 0
  %715 = vmatpush1.bf16.msra.mxu0 %v674
  %716 = vmatprep.subr.bf16.mxu0 0
  %717 = vmatpush1.bf16.msra.mxu0 %v675
  %718 = vmatprep.subr.bf16.mxu0 0
  %719 = vmatpush1.bf16.msra.mxu0 %v676
  %720 = vmatprep.subr.bf16.mxu0 0
  %721 = vmatpush1.bf16.msra.mxu0 %v677
  %722 = vmatprep.subr.bf16.mxu0 0
  %723 = vmatpush1.bf16.msra.mxu0 %v678
  %724 = vmatprep.subr.bf16.mxu0 0
  %725 = vmatpush1.bf16.msra.mxu0 %v679
  %726 = vmatprep.subr.bf16.mxu0 0
  %727 = vmatpush1.bf16.msra.mxu0 %v680
  %728 = vmatprep.subr.bf16.mxu0 0
  %729 = vmatpush1.bf16.msra.mxu0 %v681
  %730 = vmatprep.mubr.bf16.mxu0 %v599
  %731 = vmatmul.mubr.bf16.gmra.mrb[0].mxu0 %v598
  %v732 = vpop.f32.mrb[0].mxu0
  %v733 = vadd.f32 0.0, %v732
  %v734 = vpop.f32.mrb[0].mxu0
  %v735 = vpop.f32.mrb[0].mxu0
  %v736 = vpop.f32.mrb[0].mxu0
  %737 = vdwg.mxu0
  %v738 = vadd.f32 %v561, %v733
  %v739 = vpack.c.bf16 %v738, %v738
  %740 = vst [vmem:[%s8] sm:$0xf] %v739
  %v741 = vrot.slane %v738, 4
  %v742 = vadd.f32 %v738, %v741
  %v743 = vrot.slane %v742, 2
  %v744 = vadd.f32 %v742, %v743
  %v745 = vrot.slane %v744, 1
  %v746 = vadd.f32 %v744, %v745
  %v747 = vmul.f32 %v738, %v738
  %v748 = vrot.slane %v747, 4
  %v749 = vadd.f32 %v747, %v748
  %v750 = vrot.slane %v749, 2
  %v751 = vadd.f32 %v749, %v750
  %v752 = vrot.slane %v751, 1
  %v753 = vadd.f32 %v751, %v752
  %754 = vst [vmem:[%s9] sm:$0xff] %v746
  %755 = vst [vmem:[%s10] sm:$0xff] %v753
  // Predicated region
  $region34: #{pose_resnet_forward.190} parent=0 // pred_check
    _
  $region35: #{pose_resnet_forward.190} parent=0 // pred_check_branch
    %757 = sbr.rel (0) target = $region37
  $region36: #{pose_resnet_forward.190} parent=0 // pred_region
    _
  $region37: #{pose_resnet_forward.190} parent=0 // pred_fallthru
    _
  // Predicated region
  $region38: #{pose_resnet_forward.190} parent=0 // pred_check
    _
  $region39: #{pose_resnet_forward.190} parent=0 // pred_check_branch
    %759 = sbr.rel (0) target = $region41
  $region40: #{pose_resnet_forward.190} parent=0 // pred_region
    _
  $region41: #{pose_resnet_forward.190} parent=0 // pred_fallthru
    _
  // Predicated region
  $region42: #{pose_resnet_forward.190} parent=0 // pred_check
    _
  $region43: #{pose_resnet_forward.190} parent=0 // pred_check_branch
    %761 = sbr.rel (0) target = $region45
  $region44: #{pose_resnet_forward.190} parent=0 // pred_region
    _
  $region45: #{pose_resnet_forward.190} parent=0 // pred_fallthru
    _
  // Predicated region
  $region46: #{pose_resnet_forward.190} parent=0 // pred_check
    _
  $region47: #{pose_resnet_forward.190} parent=0 // pred_check_branch
    %763 = sbr.rel (0) target = $region49
  $region48: #{pose_resnet_forward.190} parent=0 // pred_region
    _
  $region49: #{pose_resnet_forward.190} parent=0 // pred_fallthru
    _
  // Predicated region
  $region50: #{pose_resnet_forward.190} parent=0 // pred_check
    _
  $region51: #{pose_resnet_forward.190} parent=0 // pred_check_branch
    %765 = sbr.rel (0) target = $region53
  $region52: #{pose_resnet_forward.190} parent=0 // pred_region
    _
  $region53: #{pose_resnet_forward.190} parent=0 // pred_fallthru
    _
  // Predicated region
  $region54: #{pose_resnet_forward.190} parent=0 // pred_check
    _
  $region55: #{pose_resnet_forward.190} parent=0 // pred_check_branch
    %767 = sbr.rel (0) target = $region57
  $region56: #{pose_resnet_forward.190} parent=0 // pred_region
    _
  $region57: #{pose_resnet_forward.190} parent=0 // pred_fallthru
    _

// kernel: pose_resnet_forward.195
$region0: #{pose_resnet_forward.195}
  #allocation0 [shape = 'u32[]', space=smem, size = 0x4, offset = 0x4, fixed_abs, tag = 'smem constant byte address 0x4 - core index']
  #allocation1 [shape = 'u32[144,128]{1,0:T(1,128)}', space=vmem, size = 0x12000, scoped, tag = 'internal scratch']
  %s0 = inlined_call_operand.vmem [shape: bf16[8,128], index: 0, kind: input, shape index: {}]
  %s1 = inlined_call_operand.vmem [shape: bf16[8,128], index: 1, kind: input, shape index: {}]
  %s2 = inlined_call_operand.vmem [shape: bf16[8,128], index: 2, kind: input, shape index: {}]
  %s3 = inlined_call_operand.vmem [shape: bf16[8,128], index: 3, kind: input, shape index: {}]
  %s4 = inlined_call_operand.vmem [shape: bf16[128,128], index: 4, kind: input, shape index: {}]
  %s5 = inlined_call_operand.vmem [shape: bf16[128,128], index: 5, kind: input, shape index: {}]
  %s6 = inlined_call_operand.vmem [shape: bf16[128,128], index: 6, kind: input, shape index: {}]
  %s7 = inlined_call_operand.vmem [shape: bf16[128,128], index: 7, kind: input, shape index: {}]
  %s8 = inlined_call_operand.vmem [shape: bf16[8,128], index: 8, kind: output, shape index: {0}]
  %s9 = inlined_call_operand.vmem [shape: f32[8,128], index: 9, kind: output, shape index: {1}]
  %s10 = inlined_call_operand.vmem [shape: f32[8,128], index: 10, kind: output, shape index: {2}]
  %11 = xla_tuple %s8, %s9, %s10
  %s12 = sld [smem:[#allocation0]]
  $region58: #{pose_resnet_forward.195} parent=0
    _
  %s14 = ssub.s32 1, %s12
  %s15 = scalar_select 0, %s14, %s12
  // Predicated region
  $region2: #{pose_resnet_forward.195} parent=0 // pred_check
    _
  $region3: #{pose_resnet_forward.195} parent=0 // pred_check_branch
    %17 = sbr.rel (0) target = $region5
  $region4: #{pose_resnet_forward.195} parent=0 // pred_region
    _
  $region5: #{pose_resnet_forward.195} parent=0 // pred_fallthru
    _
  // Predicated region
  $region6: #{pose_resnet_forward.195} parent=0 // pred_check
    _
  $region7: #{pose_resnet_forward.195} parent=0 // pred_check_branch
    %19 = sbr.rel (0) target = $region9
  $region8: #{pose_resnet_forward.195} parent=0 // pred_region
    _
  $region9: #{pose_resnet_forward.195} parent=0 // pred_fallthru
    _
  // Predicated region
  $region10: #{pose_resnet_forward.195} parent=0 // pred_check
    _
  $region11: #{pose_resnet_forward.195} parent=0 // pred_check_branch
    %21 = sbr.rel (0) target = $region13
  $region12: #{pose_resnet_forward.195} parent=0 // pred_region
    _
  $region13: #{pose_resnet_forward.195} parent=0 // pred_fallthru
    _
  // Predicated region
  $region14: #{pose_resnet_forward.195} parent=0 // pred_check
    _
  $region15: #{pose_resnet_forward.195} parent=0 // pred_check_branch
    %23 = sbr.rel (0) target = $region17
  $region16: #{pose_resnet_forward.195} parent=0 // pred_region
    _
  $region17: #{pose_resnet_forward.195} parent=0 // pred_fallthru
    _
  // Predicated region
  $region18: #{pose_resnet_forward.195} parent=0 // pred_check
    _
  $region19: #{pose_resnet_forward.195} parent=0 // pred_check_branch
    %25 = sbr.rel (0) target = $region21
  $region20: #{pose_resnet_forward.195} parent=0 // pred_region
    _
  $region21: #{pose_resnet_forward.195} parent=0 // pred_fallthru
    _
  // Predicated region
  $region22: #{pose_resnet_forward.195} parent=0 // pred_check
    _
  $region23: #{pose_resnet_forward.195} parent=0 // pred_check_branch
    %27 = sbr.rel (0) target = $region25
  $region24: #{pose_resnet_forward.195} parent=0 // pred_region
    _
  $region25: #{pose_resnet_forward.195} parent=0 // pred_fallthru
    _
  // Predicated region
  $region26: #{pose_resnet_forward.195} parent=0 // pred_check
    _
  $region27: #{pose_resnet_forward.195} parent=0 // pred_check_branch
    %29 = sbr.rel (0) target = $region29
  $region28: #{pose_resnet_forward.195} parent=0 // pred_region
    _
  $region29: #{pose_resnet_forward.195} parent=0 // pred_fallthru
    _
  // Predicated region
  $region30: #{pose_resnet_forward.195} parent=0 // pred_check
    _
  $region31: #{pose_resnet_forward.195} parent=0 // pred_check_branch
    %31 = sbr.rel (0) target = $region33
  $region32: #{pose_resnet_forward.195} parent=0 // pred_region
    _
  $region33: #{pose_resnet_forward.195} parent=0 // pred_fallthru
    _
  %v33 = vld [vmem:[%s0] sm:$0xf]
  %v34 = vld [vmem:[%s4] sm:$0xf]
  %v35 = vld [vmem:[%s4 + $0x4] sm:$0xf]
  %v36 = vld [vmem:[%s4 + $0x8] sm:$0xf]
  %v37 = vld [vmem:[%s4 + $0xc] sm:$0xf]
  %v38 = vld [vmem:[%s4 + $0x10] sm:$0xf]
  %v39 = vld [vmem:[%s4 + $0x14] sm:$0xf]
  %v40 = vld [vmem:[%s4 + $0x18] sm:$0xf]
  %v41 = vld [vmem:[%s4 + $0x1c] sm:$0xf]
  %v42 = vld [vmem:[%s4 + $0x20] sm:$0xf]
  %v43 = vld [vmem:[%s4 + $0x24] sm:$0xf]
  %v44 = vld [vmem:[%s4 + $0x28] sm:$0xf]
  %v45 = vld [vmem:[%s4 + $0x2c] sm:$0xf]
  %v46 = vld [vmem:[%s4 + $0x30] sm:$0xf]
  %v47 = vld [vmem:[%s4 + $0x34] sm:$0xf]
  %v48 = vld [vmem:[%s4 + $0x38] sm:$0xf]
  %v49 = vld [vmem:[%s4 + $0x3c] sm:$0xf]
  %v50 = vld [vmem:[%s1] sm:$0xf]
  %v51 = vld [vmem:[%s5] sm:$0xf]
  %v52 = vld [vmem:[%s5 + $0x4] sm:$0xf]
  %v53 = vld [vmem:[%s5 + $0x8] sm:$0xf]
  %v54 = vld [vmem:[%s5 + $0xc] sm:$0xf]
  %v55 = vld [vmem:[%s5 + $0x10] sm:$0xf]
  %v56 = vld [vmem:[%s5 + $0x14] sm:$0xf]
  %v57 = vld [vmem:[%s5 + $0x18] sm:$0xf]
  %v58 = vld [vmem:[%s5 + $0x1c] sm:$0xf]
  %v59 = vld [vmem:[%s5 + $0x20] sm:$0xf]
  %v60 = vld [vmem:[%s5 + $0x24] sm:$0xf]
  %v61 = vld [vmem:[%s5 + $0x28] sm:$0xf]
  %v62 = vld [vmem:[%s5 + $0x2c] sm:$0xf]
  %v63 = vld [vmem:[%s5 + $0x30] sm:$0xf]
  %v64 = vld [vmem:[%s5 + $0x34] sm:$0xf]
  %v65 = vld [vmem:[%s5 + $0x38] sm:$0xf]
  %v66 = vld [vmem:[%s5 + $0x3c] sm:$0xf]
  %v83 = vunpack.c.l.b16 %v51
  %v84 = vunpack.c.l.b16 %v52
  %v85 = vunpack.c.l.b16 %v53
  %v86 = vunpack.c.l.b16 %v54
  %v87 = vunpack.c.l.b16 %v55
  %v88 = vunpack.c.l.b16 %v56
  %v89 = vunpack.c.l.b16 %v57
  %v90 = vunpack.c.l.b16 %v58
  %v91 = vunpack.c.l.b16 %v59
  %v92 = vunpack.c.l.b16 %v60
  %v93 = vunpack.c.l.b16 %v61
  %v94 = vunpack.c.l.b16 %v62
  %v95 = vunpack.c.l.b16 %v63
  %v96 = vunpack.c.l.b16 %v64
  %v97 = vunpack.c.l.b16 %v65
  %v98 = vunpack.c.l.b16 %v66
  %v99 = vpack.c.b16 %v84, %v83
  %v100 = vpack.c.b16 %v86, %v85
  %v101 = vpack.c.b16 %v88, %v87
  %v102 = vpack.c.b16 %v90, %v89
  %v103 = vpack.c.b16 %v92, %v91
  %v104 = vpack.c.b16 %v94, %v93
  %v105 = vpack.c.b16 %v96, %v95
  %v106 = vpack.c.b16 %v98, %v97
  %115 = vmatprep.subr.bf16.mxu0 0
  %116 = vmatpush1.bf16.msra.mxu0 %v99
  %117 = vmatprep.subr.bf16.mxu0 0
  %118 = vmatpush1.bf16.msra.mxu0 %v100
  %119 = vmatprep.subr.bf16.mxu0 0
  %120 = vmatpush1.bf16.msra.mxu0 %v101
  %121 = vmatprep.subr.bf16.mxu0 0
  %122 = vmatpush1.bf16.msra.mxu0 %v102
  %123 = vmatprep.subr.bf16.mxu0 0
  %124 = vmatpush1.bf16.msra.mxu0 %v103
  %125 = vmatprep.subr.bf16.mxu0 0
  %126 = vmatpush1.bf16.msra.mxu0 %v104
  %127 = vmatprep.subr.bf16.mxu0 0
  %128 = vmatpush1.bf16.msra.mxu0 %v105
  %129 = vmatprep.subr.bf16.mxu0 0
  %130 = vmatpush1.bf16.msra.mxu0 %v106
  %131 = vmatprep.subr.bf16.mxu0 0
  %132 = vmatpush1.bf16.msra.mxu0 0
  %133 = vmatprep.subr.bf16.mxu0 0
  %134 = vmatpush1.bf16.msra.mxu0 0
  %135 = vmatprep.subr.bf16.mxu0 0
  %136 = vmatpush1.bf16.msra.mxu0 0
  %137 = vmatprep.subr.bf16.mxu0 0
  %138 = vmatpush1.bf16.msra.mxu0 0
  %139 = vmatprep.subr.bf16.mxu0 0
  %140 = vmatpush1.bf16.msra.mxu0 0
  %141 = vmatprep.subr.bf16.mxu0 0
  %142 = vmatpush1.bf16.msra.mxu0 0
  %143 = vmatprep.subr.bf16.mxu0 0
  %144 = vmatpush1.bf16.msra.mxu0 0
  %145 = vmatprep.subr.bf16.mxu0 0
  %146 = vmatpush1.bf16.msra.mxu0 0
  %147 = vmatprep.mubr.bf16.mxu0 0
  %148 = vmatmul.mubr.bf16.gmra.mrb[0].mxu0 %v50
  %v149 = vpop.f32.mrb[0].mxu0
  %v150 = vadd.f32 0.0, %v149
  %v151 = vpop.f32.mrb[0].mxu0
  %v152 = vpop.f32.mrb[0].mxu0
  %v153 = vpop.f32.mrb[0].mxu0
  %154 = vdwg.mxu0
  %v171 = vunpack.c.l.b16 %v34
  %v172 = vunpack.c.l.b16 %v35
  %v173 = vunpack.c.l.b16 %v36
  %v174 = vunpack.c.l.b16 %v37
  %v175 = vunpack.c.l.b16 %v38
  %v176 = vunpack.c.l.b16 %v39
  %v177 = vunpack.c.l.b16 %v40
  %v178 = vunpack.c.l.b16 %v41
  %v179 = vunpack.c.l.b16 %v42
  %v180 = vunpack.c.l.b16 %v43
  %v181 = vunpack.c.l.b16 %v44
  %v182 = vunpack.c.l.b16 %v45
  %v183 = vunpack.c.l.b16 %v46
  %v184 = vunpack.c.l.b16 %v47
  %v185 = vunpack.c.l.b16 %v48
  %v186 = vunpack.c.l.b16 %v49
  %v187 = vpack.c.b16 %v172, %v171
  %v188 = vpack.c.b16 %v174, %v173
  %v189 = vpack.c.b16 %v176, %v175
  %v190 = vpack.c.b16 %v178, %v177
  %v191 = vpack.c.b16 %v180, %v179
  %v192 = vpack.c.b16 %v182, %v181
  %v193 = vpack.c.b16 %v184, %v183
  %v194 = vpack.c.b16 %v186, %v185
  %203 = vmatprep.subr.bf16.mxu0 0
  %204 = vmatpush1.bf16.msra.mxu0 %v187
  %205 = vmatprep.subr.bf16.mxu0 0
  %206 = vmatpush1.bf16.msra.mxu0 %v188
  %207 = vmatprep.subr.bf16.mxu0 0
  %208 = vmatpush1.bf16.msra.mxu0 %v189
  %209 = vmatprep.subr.bf16.mxu0 0
  %210 = vmatpush1.bf16.msra.mxu0 %v190
  %211 = vmatprep.subr.bf16.mxu0 0
  %212 = vmatpush1.bf16.msra.mxu0 %v191
  %213 = vmatprep.subr.bf16.mxu0 0
  %214 = vmatpush1.bf16.msra.mxu0 %v192
  %215 = vmatprep.subr.bf16.mxu0 0
  %216 = vmatpush1.bf16.msra.mxu0 %v193
  %217 = vmatprep.subr.bf16.mxu0 0
  %218 = vmatpush1.bf16.msra.mxu0 %v194
  %219 = vmatprep.subr.bf16.mxu0 0
  %220 = vmatpush1.bf16.msra.mxu0 0
  %221 = vmatprep.subr.bf16.mxu0 0
  %222 = vmatpush1.bf16.msra.mxu0 0
  %223 = vmatprep.subr.bf16.mxu0 0
  %224 = vmatpush1.bf16.msra.mxu0 0
  %225 = vmatprep.subr.bf16.mxu0 0
  %226 = vmatpush1.bf16.msra.mxu0 0
  %227 = vmatprep.subr.bf16.mxu0 0
  %228 = vmatpush1.bf16.msra.mxu0 0
  %229 = vmatprep.subr.bf16.mxu0 0
  %230 = vmatpush1.bf16.msra.mxu0 0
  %231 = vmatprep.subr.bf16.mxu0 0
  %232 = vmatpush1.bf16.msra.mxu0 0
  %233 = vmatprep.subr.bf16.mxu0 0
  %234 = vmatpush1.bf16.msra.mxu0 0
  %235 = vmatprep.mubr.bf16.mxu0 0
  %236 = vmatmul.mubr.bf16.gmra.mrb[0].mxu0 %v33
  %v237 = vpop.f32.mrb[0].mxu0
  %v238 = vadd.f32 %v150, %v237
  %v239 = vpop.f32.mrb[0].mxu0
  %v240 = vpop.f32.mrb[0].mxu0
  %v241 = vpop.f32.mrb[0].mxu0
  %242 = vdwg.mxu0
  %v243 = vld [vmem:[%s2] sm:$0xf]
  %v244 = vld [vmem:[%s6] sm:$0xf]
  %v245 = vld [vmem:[%s6 + $0x4] sm:$0xf]
  %v246 = vld [vmem:[%s6 + $0x8] sm:$0xf]
  %v247 = vld [vmem:[%s6 + $0xc] sm:$0xf]
  %v248 = vld [vmem:[%s6 + $0x10] sm:$0xf]
  %v249 = vld [vmem:[%s6 + $0x14] sm:$0xf]
  %v250 = vld [vmem:[%s6 + $0x18] sm:$0xf]
  %v251 = vld [vmem:[%s6 + $0x1c] sm:$0xf]
  %v252 = vld [vmem:[%s6 + $0x20] sm:$0xf]
  %v253 = vld [vmem:[%s6 + $0x24] sm:$0xf]
  %v254 = vld [vmem:[%s6 + $0x28] sm:$0xf]
  %v255 = vld [vmem:[%s6 + $0x2c] sm:$0xf]
  %v256 = vld [vmem:[%s6 + $0x30] sm:$0xf]
  %v257 = vld [vmem:[%s6 + $0x34] sm:$0xf]
  %v258 = vld [vmem:[%s6 + $0x38] sm:$0xf]
  %v259 = vld [vmem:[%s6 + $0x3c] sm:$0xf]
  %v276 = vunpack.c.l.b16 %v244
  %v277 = vunpack.c.l.b16 %v245
  %v278 = vunpack.c.l.b16 %v246
  %v279 = vunpack.c.l.b16 %v247
  %v280 = vunpack.c.l.b16 %v248
  %v281 = vunpack.c.l.b16 %v249
  %v282 = vunpack.c.l.b16 %v250
  %v283 = vunpack.c.l.b16 %v251
  %v284 = vunpack.c.l.b16 %v252
  %v285 = vunpack.c.l.b16 %v253
  %v286 = vunpack.c.l.b16 %v254
  %v287 = vunpack.c.l.b16 %v255
  %v288 = vunpack.c.l.b16 %v256
  %v289 = vunpack.c.l.b16 %v257
  %v290 = vunpack.c.l.b16 %v258
  %v291 = vunpack.c.l.b16 %v259
  %v292 = vpack.c.b16 %v277, %v276
  %v293 = vpack.c.b16 %v279, %v278
  %v294 = vpack.c.b16 %v281, %v280
  %v295 = vpack.c.b16 %v283, %v282
  %v296 = vpack.c.b16 %v285, %v284
  %v297 = vpack.c.b16 %v287, %v286
  %v298 = vpack.c.b16 %v289, %v288
  %v299 = vpack.c.b16 %v291, %v290
  %308 = vmatprep.subr.bf16.mxu0 0
  %309 = vmatpush1.bf16.msra.mxu0 %v292
  %310 = vmatprep.subr.bf16.mxu0 0
  %311 = vmatpush1.bf16.msra.mxu0 %v293
  %312 = vmatprep.subr.bf16.mxu0 0
  %313 = vmatpush1.bf16.msra.mxu0 %v294
  %314 = vmatprep.subr.bf16.mxu0 0
  %315 = vmatpush1.bf16.msra.mxu0 %v295
  %316 = vmatprep.subr.bf16.mxu0 0
  %317 = vmatpush1.bf16.msra.mxu0 %v296
  %318 = vmatprep.subr.bf16.mxu0 0
  %319 = vmatpush1.bf16.msra.mxu0 %v297
  %320 = vmatprep.subr.bf16.mxu0 0
  %321 = vmatpush1.bf16.msra.mxu0 %v298
  %322 = vmatprep.subr.bf16.mxu0 0
  %323 = vmatpush1.bf16.msra.mxu0 %v299
  %324 = vmatprep.subr.bf16.mxu0 0
  %325 = vmatpush1.bf16.msra.mxu0 0
  %326 = vmatprep.subr.bf16.mxu0 0
  %327 = vmatpush1.bf16.msra.mxu0 0
  %328 = vmatprep.subr.bf16.mxu0 0
  %329 = vmatpush1.bf16.msra.mxu0 0
  %330 = vmatprep.subr.bf16.mxu0 0
  %331 = vmatpush1.bf16.msra.mxu0 0
  %332 = vmatprep.subr.bf16.mxu0 0
  %333 = vmatpush1.bf16.msra.mxu0 0
  %334 = vmatprep.subr.bf16.mxu0 0
  %335 = vmatpush1.bf16.msra.mxu0 0
  %336 = vmatprep.subr.bf16.mxu0 0
  %337 = vmatpush1.bf16.msra.mxu0 0
  %338 = vmatprep.subr.bf16.mxu0 0
  %339 = vmatpush1.bf16.msra.mxu0 0
  %340 = vmatprep.mubr.bf16.mxu0 0
  %341 = vmatmul.mubr.bf16.gmra.mrb[0].mxu0 %v243
  %v342 = vpop.f32.mrb[0].mxu0
  %v343 = vadd.f32 0.0, %v342
  %v344 = vpop.f32.mrb[0].mxu0
  %v345 = vpop.f32.mrb[0].mxu0
  %v346 = vpop.f32.mrb[0].mxu0
  %347 = vdwg.mxu0
  %v348 = vadd.f32 %v238, %v343
  %v349 = vld [vmem:[%s3] sm:$0xf]
  %v350 = vld [vmem:[%s7] sm:$0xf]
  %v351 = vld [vmem:[%s7 + $0x4] sm:$0xf]
  %v352 = vld [vmem:[%s7 + $0x8] sm:$0xf]
  %v353 = vld [vmem:[%s7 + $0xc] sm:$0xf]
  %v354 = vld [vmem:[%s7 + $0x10] sm:$0xf]
  %v355 = vld [vmem:[%s7 + $0x14] sm:$0xf]
  %v356 = vld [vmem:[%s7 + $0x18] sm:$0xf]
  %v357 = vld [vmem:[%s7 + $0x1c] sm:$0xf]
  %v358 = vld [vmem:[%s7 + $0x20] sm:$0xf]
  %v359 = vld [vmem:[%s7 + $0x24] sm:$0xf]
  %v360 = vld [vmem:[%s7 + $0x28] sm:$0xf]
  %v361 = vld [vmem:[%s7 + $0x2c] sm:$0xf]
  %v362 = vld [vmem:[%s7 + $0x30] sm:$0xf]
  %v363 = vld [vmem:[%s7 + $0x34] sm:$0xf]
  %v364 = vld [vmem:[%s7 + $0x38] sm:$0xf]
  %v365 = vld [vmem:[%s7 + $0x3c] sm:$0xf]
  %v382 = vunpack.c.l.b16 %v350
  %v383 = vunpack.c.l.b16 %v351
  %v384 = vunpack.c.l.b16 %v352
  %v385 = vunpack.c.l.b16 %v353
  %v386 = vunpack.c.l.b16 %v354
  %v387 = vunpack.c.l.b16 %v355
  %v388 = vunpack.c.l.b16 %v356
  %v389 = vunpack.c.l.b16 %v357
  %v390 = vunpack.c.l.b16 %v358
  %v391 = vunpack.c.l.b16 %v359
  %v392 = vunpack.c.l.b16 %v360
  %v393 = vunpack.c.l.b16 %v361
  %v394 = vunpack.c.l.b16 %v362
  %v395 = vunpack.c.l.b16 %v363
  %v396 = vunpack.c.l.b16 %v364
  %v397 = vunpack.c.l.b16 %v365
  %v398 = vpack.c.b16 %v383, %v382
  %v399 = vpack.c.b16 %v385, %v384
  %v400 = vpack.c.b16 %v387, %v386
  %v401 = vpack.c.b16 %v389, %v388
  %v402 = vpack.c.b16 %v391, %v390
  %v403 = vpack.c.b16 %v393, %v392
  %v404 = vpack.c.b16 %v395, %v394
  %v405 = vpack.c.b16 %v397, %v396
  %414 = vmatprep.subr.bf16.mxu0 0
  %415 = vmatpush1.bf16.msra.mxu0 %v398
  %416 = vmatprep.subr.bf16.mxu0 0
  %417 = vmatpush1.bf16.msra.mxu0 %v399
  %418 = vmatprep.subr.bf16.mxu0 0
  %419 = vmatpush1.bf16.msra.mxu0 %v400
  %420 = vmatprep.subr.bf16.mxu0 0
  %421 = vmatpush1.bf16.msra.mxu0 %v401
  %422 = vmatprep.subr.bf16.mxu0 0
  %423 = vmatpush1.bf16.msra.mxu0 %v402
  %424 = vmatprep.subr.bf16.mxu0 0
  %425 = vmatpush1.bf16.msra.mxu0 %v403
  %426 = vmatprep.subr.bf16.mxu0 0
  %427 = vmatpush1.bf16.msra.mxu0 %v404
  %428 = vmatprep.subr.bf16.mxu0 0
  %429 = vmatpush1.bf16.msra.mxu0 %v405
  %430 = vmatprep.subr.bf16.mxu0 0
  %431 = vmatpush1.bf16.msra.mxu0 0
  %432 = vmatprep.subr.bf16.mxu0 0
  %433 = vmatpush1.bf16.msra.mxu0 0
  %434 = vmatprep.subr.bf16.mxu0 0
  %435 = vmatpush1.bf16.msra.mxu0 0
  %436 = vmatprep.subr.bf16.mxu0 0
  %437 = vmatpush1.bf16.msra.mxu0 0
  %438 = vmatprep.subr.bf16.mxu0 0
  %439 = vmatpush1.bf16.msra.mxu0 0
  %440 = vmatprep.subr.bf16.mxu0 0
  %441 = vmatpush1.bf16.msra.mxu0 0
  %442 = vmatprep.subr.bf16.mxu0 0
  %443 = vmatpush1.bf16.msra.mxu0 0
  %444 = vmatprep.subr.bf16.mxu0 0
  %445 = vmatpush1.bf16.msra.mxu0 0
  %446 = vmatprep.mubr.bf16.mxu0 0
  %447 = vmatmul.mubr.bf16.gmra.mrb[0].mxu0 %v349
  %v448 = vpop.f32.mrb[0].mxu0
  %v449 = vadd.f32 0.0, %v448
  %v450 = vpop.f32.mrb[0].mxu0
  %v451 = vpop.f32.mrb[0].mxu0
  %v452 = vpop.f32.mrb[0].mxu0
  %453 = vdwg.mxu0
  %v454 = vadd.f32 %v348, %v449
  %v455 = vpack.c.bf16 %v454, %v454
  %456 = vst [vmem:[%s8] sm:$0xf] %v455
  %v457 = vrot.slane %v454, 4
  %v458 = vadd.f32 %v454, %v457
  %v459 = vrot.slane %v458, 2
  %v460 = vadd.f32 %v458, %v459
  %v461 = vrot.slane %v460, 1
  %v462 = vadd.f32 %v460, %v461
  %v463 = vmul.f32 %v454, %v454
  %v464 = vrot.slane %v463, 4
  %v465 = vadd.f32 %v463, %v464
  %v466 = vrot.slane %v465, 2
  %v467 = vadd.f32 %v465, %v466
  %v468 = vrot.slane %v467, 1
  %v469 = vadd.f32 %v467, %v468
  %470 = vst [vmem:[%s9] sm:$0xff] %v462
  %471 = vst [vmem:[%s10] sm:$0xff] %v469
  // Predicated region
  $region34: #{pose_resnet_forward.195} parent=0 // pred_check
    _
  $region35: #{pose_resnet_forward.195} parent=0 // pred_check_branch
    %473 = sbr.rel (0) target = $region37
  $region36: #{pose_resnet_forward.195} parent=0 // pred_region
    _
  $region37: #{pose_resnet_forward.195} parent=0 // pred_fallthru
    _
  // Predicated region
  $region38: #{pose_resnet_forward.195} parent=0 // pred_check
    _
  $region39: #{pose_resnet_forward.195} parent=0 // pred_check_branch
    %475 = sbr.rel (0) target = $region41
  $region40: #{pose_resnet_forward.195} parent=0 // pred_region
    _
  $region41: #{pose_resnet_forward.195} parent=0 // pred_fallthru
    _
  // Predicated region
  $region42: #{pose_resnet_forward.195} parent=0 // pred_check
    _
  $region43: #{pose_resnet_forward.195} parent=0 // pred_check_branch
    %477 = sbr.rel (0) target = $region45
  $region44: #{pose_resnet_forward.195} parent=0 // pred_region
    _
  $region45: #{pose_resnet_forward.195} parent=0 // pred_fallthru
    _
  // Predicated region
  $region46: #{pose_resnet_forward.195} parent=0 // pred_check
    _
  $region47: #{pose_resnet_forward.195} parent=0 // pred_check_branch
    %479 = sbr.rel (0) target = $region49
  $region48: #{pose_resnet_forward.195} parent=0 // pred_region
    _
  $region49: #{pose_resnet_forward.195} parent=0 // pred_fallthru
    _
  // Predicated region
  $region50: #{pose_resnet_forward.195} parent=0 // pred_check
    _
  $region51: #{pose_resnet_forward.195} parent=0 // pred_check_branch
    %481 = sbr.rel (0) target = $region53
  $region52: #{pose_resnet_forward.195} parent=0 // pred_region
    _
  $region53: #{pose_resnet_forward.195} parent=0 // pred_fallthru
    _
  // Predicated region
  $region54: #{pose_resnet_forward.195} parent=0 // pred_check
    _
  $region55: #{pose_resnet_forward.195} parent=0 // pred_check_branch
    %483 = sbr.rel (0) target = $region57
  $region56: #{pose_resnet_forward.195} parent=0 // pred_region
    _
  $region57: #{pose_resnet_forward.195} parent=0 // pred_fallthru
    _

// kernel: pose_resnet_forward.194
$region0: #{pose_resnet_forward.194}
  #allocation0 [shape = 'u32[]', space=smem, size = 0x4, offset = 0x4, fixed_abs, tag = 'smem constant byte address 0x4 - core index']
  #allocation1 [shape = 'u32[144,128]{1,0:T(1,128)}', space=vmem, size = 0x12000, scoped, tag = 'internal scratch']
  %s0 = inlined_call_operand.vmem [shape: bf16[8,128], index: 0, kind: input, shape index: {}]
  %s1 = inlined_call_operand.vmem [shape: bf16[8,128], index: 1, kind: input, shape index: {}]
  %s2 = inlined_call_operand.vmem [shape: bf16[128,128], index: 2, kind: input, shape index: {}]
  %s3 = inlined_call_operand.vmem [shape: bf16[128,128], index: 3, kind: input, shape index: {}]
  %s4 = inlined_call_operand.vmem [shape: bf16[8,128], index: 4, kind: output, shape index: {0}]
  %s5 = inlined_call_operand.vmem [shape: f32[8,128], index: 5, kind: output, shape index: {1}]
  %s6 = inlined_call_operand.vmem [shape: f32[8,128], index: 6, kind: output, shape index: {2}]
  %7 = xla_tuple %s4, %s5, %s6
  %s8 = sld [smem:[#allocation0]]
  $region42: #{pose_resnet_forward.194} parent=0
    _
  %s10 = ssub.s32 1, %s8
  %s11 = scalar_select 0, %s10, %s8
  // Predicated region
  $region2: #{pose_resnet_forward.194} parent=0 // pred_check
    _
  $region3: #{pose_resnet_forward.194} parent=0 // pred_check_branch
    %13 = sbr.rel (0) target = $region5
  $region4: #{pose_resnet_forward.194} parent=0 // pred_region
    _
  $region5: #{pose_resnet_forward.194} parent=0 // pred_fallthru
    _
  // Predicated region
  $region6: #{pose_resnet_forward.194} parent=0 // pred_check
    _
  $region7: #{pose_resnet_forward.194} parent=0 // pred_check_branch
    %15 = sbr.rel (0) target = $region9
  $region8: #{pose_resnet_forward.194} parent=0 // pred_region
    _
  $region9: #{pose_resnet_forward.194} parent=0 // pred_fallthru
    _
  // Predicated region
  $region10: #{pose_resnet_forward.194} parent=0 // pred_check
    _
  $region11: #{pose_resnet_forward.194} parent=0 // pred_check_branch
    %17 = sbr.rel (0) target = $region13
  $region12: #{pose_resnet_forward.194} parent=0 // pred_region
    _
  $region13: #{pose_resnet_forward.194} parent=0 // pred_fallthru
    _
  // Predicated region
  $region14: #{pose_resnet_forward.194} parent=0 // pred_check
    _
  $region15: #{pose_resnet_forward.194} parent=0 // pred_check_branch
    %19 = sbr.rel (0) target = $region17
  $region16: #{pose_resnet_forward.194} parent=0 // pred_region
    _
  $region17: #{pose_resnet_forward.194} parent=0 // pred_fallthru
    _
  %v21 = vld [vmem:[%s0] sm:$0xf]
  %v22 = vld [vmem:[%s2] sm:$0xf]
  %v23 = vld [vmem:[%s2 + $0x4] sm:$0xf]
  %v24 = vld [vmem:[%s2 + $0x8] sm:$0xf]
  %v25 = vld [vmem:[%s2 + $0xc] sm:$0xf]
  %v26 = vld [vmem:[%s2 + $0x10] sm:$0xf]
  %v27 = vld [vmem:[%s2 + $0x14] sm:$0xf]
  %v28 = vld [vmem:[%s2 + $0x18] sm:$0xf]
  %v29 = vld [vmem:[%s2 + $0x1c] sm:$0xf]
  %v30 = vld [vmem:[%s2 + $0x20] sm:$0xf]
  %v31 = vld [vmem:[%s2 + $0x24] sm:$0xf]
  %v32 = vld [vmem:[%s2 + $0x28] sm:$0xf]
  %v33 = vld [vmem:[%s2 + $0x2c] sm:$0xf]
  %v34 = vld [vmem:[%s2 + $0x30] sm:$0xf]
  %v35 = vld [vmem:[%s2 + $0x34] sm:$0xf]
  %v36 = vld [vmem:[%s2 + $0x38] sm:$0xf]
  %v37 = vld [vmem:[%s2 + $0x3c] sm:$0xf]
  %v38 = vld [vmem:[%s1] sm:$0xf]
  %v39 = vld [vmem:[%s3] sm:$0xf]
  %v40 = vld [vmem:[%s3 + $0x4] sm:$0xf]
  %v41 = vld [vmem:[%s3 + $0x8] sm:$0xf]
  %v42 = vld [vmem:[%s3 + $0xc] sm:$0xf]
  %v43 = vld [vmem:[%s3 + $0x10] sm:$0xf]
  %v44 = vld [vmem:[%s3 + $0x14] sm:$0xf]
  %v45 = vld [vmem:[%s3 + $0x18] sm:$0xf]
  %v46 = vld [vmem:[%s3 + $0x1c] sm:$0xf]
  %v47 = vld [vmem:[%s3 + $0x20] sm:$0xf]
  %v48 = vld [vmem:[%s3 + $0x24] sm:$0xf]
  %v49 = vld [vmem:[%s3 + $0x28] sm:$0xf]
  %v50 = vld [vmem:[%s3 + $0x2c] sm:$0xf]
  %v51 = vld [vmem:[%s3 + $0x30] sm:$0xf]
  %v52 = vld [vmem:[%s3 + $0x34] sm:$0xf]
  %v53 = vld [vmem:[%s3 + $0x38] sm:$0xf]
  %v54 = vld [vmem:[%s3 + $0x3c] sm:$0xf]
  %v71 = vunpack.c.l.b16 %v39
  %v72 = vunpack.c.l.b16 %v40
  %v73 = vunpack.c.l.b16 %v41
  %v74 = vunpack.c.l.b16 %v42
  %v75 = vunpack.c.l.b16 %v43
  %v76 = vunpack.c.l.b16 %v44
  %v77 = vunpack.c.l.b16 %v45
  %v78 = vunpack.c.l.b16 %v46
  %v79 = vunpack.c.l.b16 %v47
  %v80 = vunpack.c.l.b16 %v48
  %v81 = vunpack.c.l.b16 %v49
  %v82 = vunpack.c.l.b16 %v50
  %v83 = vunpack.c.l.b16 %v51
  %v84 = vunpack.c.l.b16 %v52
  %v85 = vunpack.c.l.b16 %v53
  %v86 = vunpack.c.l.b16 %v54
  %v87 = vpack.c.b16 %v72, %v71
  %v88 = vpack.c.b16 %v74, %v73
  %v89 = vpack.c.b16 %v76, %v75
  %v90 = vpack.c.b16 %v78, %v77
  %v91 = vpack.c.b16 %v80, %v79
  %v92 = vpack.c.b16 %v82, %v81
  %v93 = vpack.c.b16 %v84, %v83
  %v94 = vpack.c.b16 %v86, %v85
  %103 = vmatprep.subr.bf16.mxu0 0
  %104 = vmatpush1.bf16.msra.mxu0 %v87
  %105 = vmatprep.subr.bf16.mxu0 0
  %106 = vmatpush1.bf16.msra.mxu0 %v88
  %107 = vmatprep.subr.bf16.mxu0 0
  %108 = vmatpush1.bf16.msra.mxu0 %v89
  %109 = vmatprep.subr.bf16.mxu0 0
  %110 = vmatpush1.bf16.msra.mxu0 %v90
  %111 = vmatprep.subr.bf16.mxu0 0
  %112 = vmatpush1.bf16.msra.mxu0 %v91
  %113 = vmatprep.subr.bf16.mxu0 0
  %114 = vmatpush1.bf16.msra.mxu0 %v92
  %115 = vmatprep.subr.bf16.mxu0 0
  %116 = vmatpush1.bf16.msra.mxu0 %v93
  %117 = vmatprep.subr.bf16.mxu0 0
  %118 = vmatpush1.bf16.msra.mxu0 %v94
  %119 = vmatprep.subr.bf16.mxu0 0
  %120 = vmatpush1.bf16.msra.mxu0 0
  %121 = vmatprep.subr.bf16.mxu0 0
  %122 = vmatpush1.bf16.msra.mxu0 0
  %123 = vmatprep.subr.bf16.mxu0 0
  %124 = vmatpush1.bf16.msra.mxu0 0
  %125 = vmatprep.subr.bf16.mxu0 0
  %126 = vmatpush1.bf16.msra.mxu0 0
  %127 = vmatprep.subr.bf16.mxu0 0
  %128 = vmatpush1.bf16.msra.mxu0 0
  %129 = vmatprep.subr.bf16.mxu0 0
  %130 = vmatpush1.bf16.msra.mxu0 0
  %131 = vmatprep.subr.bf16.mxu0 0
  %132 = vmatpush1.bf16.msra.mxu0 0
  %133 = vmatprep.subr.bf16.mxu0 0
  %134 = vmatpush1.bf16.msra.mxu0 0
  %135 = vmatprep.mubr.bf16.mxu0 0
  %136 = vmatmul.mubr.bf16.gmra.mrb[0].mxu0 %v38
  %v137 = vpop.f32.mrb[0].mxu0
  %v138 = vadd.f32 0.0, %v137
  %v139 = vpop.f32.mrb[0].mxu0
  %v140 = vpop.f32.mrb[0].mxu0
  %v141 = vpop.f32.mrb[0].mxu0
  %142 = vdwg.mxu0
  %v159 = vunpack.c.l.b16 %v22
  %v160 = vunpack.c.l.b16 %v23
  %v161 = vunpack.c.l.b16 %v24
  %v162 = vunpack.c.l.b16 %v25
  %v163 = vunpack.c.l.b16 %v26
  %v164 = vunpack.c.l.b16 %v27
  %v165 = vunpack.c.l.b16 %v28
  %v166 = vunpack.c.l.b16 %v29
  %v167 = vunpack.c.l.b16 %v30
  %v168 = vunpack.c.l.b16 %v31
  %v169 = vunpack.c.l.b16 %v32
  %v170 = vunpack.c.l.b16 %v33
  %v171 = vunpack.c.l.b16 %v34
  %v172 = vunpack.c.l.b16 %v35
  %v173 = vunpack.c.l.b16 %v36
  %v174 = vunpack.c.l.b16 %v37
  %v175 = vpack.c.b16 %v160, %v159
  %v176 = vpack.c.b16 %v162, %v161
  %v177 = vpack.c.b16 %v164, %v163
  %v178 = vpack.c.b16 %v166, %v165
  %v179 = vpack.c.b16 %v168, %v167
  %v180 = vpack.c.b16 %v170, %v169
  %v181 = vpack.c.b16 %v172, %v171
  %v182 = vpack.c.b16 %v174, %v173
  %191 = vmatprep.subr.bf16.mxu0 0
  %192 = vmatpush1.bf16.msra.mxu0 %v175
  %193 = vmatprep.subr.bf16.mxu0 0
  %194 = vmatpush1.bf16.msra.mxu0 %v176
  %195 = vmatprep.subr.bf16.mxu0 0
  %196 = vmatpush1.bf16.msra.mxu0 %v177
  %197 = vmatprep.subr.bf16.mxu0 0
  %198 = vmatpush1.bf16.msra.mxu0 %v178
  %199 = vmatprep.subr.bf16.mxu0 0
  %200 = vmatpush1.bf16.msra.mxu0 %v179
  %201 = vmatprep.subr.bf16.mxu0 0
  %202 = vmatpush1.bf16.msra.mxu0 %v180
  %203 = vmatprep.subr.bf16.mxu0 0
  %204 = vmatpush1.bf16.msra.mxu0 %v181
  %205 = vmatprep.subr.bf16.mxu0 0
  %206 = vmatpush1.bf16.msra.mxu0 %v182
  %207 = vmatprep.subr.bf16.mxu0 0
  %208 = vmatpush1.bf16.msra.mxu0 0
  %209 = vmatprep.subr.bf16.mxu0 0
  %210 = vmatpush1.bf16.msra.mxu0 0
  %211 = vmatprep.subr.bf16.mxu0 0
  %212 = vmatpush1.bf16.msra.mxu0 0
  %213 = vmatprep.subr.bf16.mxu0 0
  %214 = vmatpush1.bf16.msra.mxu0 0
  %215 = vmatprep.subr.bf16.mxu0 0
  %216 = vmatpush1.bf16.msra.mxu0 0
  %217 = vmatprep.subr.bf16.mxu0 0
  %218 = vmatpush1.bf16.msra.mxu0 0
  %219 = vmatprep.subr.bf16.mxu0 0
  %220 = vmatpush1.bf16.msra.mxu0 0
  %221 = vmatprep.subr.bf16.mxu0 0
  %222 = vmatpush1.bf16.msra.mxu0 0
  %223 = vmatprep.mubr.bf16.mxu0 0
  %224 = vmatmul.mubr.bf16.gmra.mrb[0].mxu0 %v21
  %v225 = vpop.f32.mrb[0].mxu0
  %v226 = vadd.f32 %v138, %v225
  %v227 = vpop.f32.mrb[0].mxu0
  %v228 = vpop.f32.mrb[0].mxu0
  %v229 = vpop.f32.mrb[0].mxu0
  %230 = vdwg.mxu0
  %v231 = vpack.c.bf16 %v226, %v226
  %232 = vst [vmem:[%s4] sm:$0xf] %v231
  %v233 = vrot.slane %v226, 4
  %v234 = vadd.f32 %v226, %v233
  %v235 = vrot.slane %v234, 2
  %v236 = vadd.f32 %v234, %v235
  %v237 = vrot.slane %v236, 1
  %v238 = vadd.f32 %v236, %v237
  %v239 = vmul.f32 %v226, %v226
  %v240 = vrot.slane %v239, 4
  %v241 = vadd.f32 %v239, %v240
  %v242 = vrot.slane %v241, 2
  %v243 = vadd.f32 %v241, %v242
  %v244 = vrot.slane %v243, 1
  %v245 = vadd.f32 %v243, %v244
  %246 = vst [vmem:[%s5] sm:$0xff] %v238
  %247 = vst [vmem:[%s6] sm:$0xff] %v245
  // Predicated region
  $region18: #{pose_resnet_forward.194} parent=0 // pred_check
    _
  $region19: #{pose_resnet_forward.194} parent=0 // pred_check_branch
    %249 = sbr.rel (0) target = $region21
  $region20: #{pose_resnet_forward.194} parent=0 // pred_region
    _
  $region21: #{pose_resnet_forward.194} parent=0 // pred_fallthru
    _
  // Predicated region
  $region22: #{pose_resnet_forward.194} parent=0 // pred_check
    _
  $region23: #{pose_resnet_forward.194} parent=0 // pred_check_branch
    %251 = sbr.rel (0) target = $region25
  $region24: #{pose_resnet_forward.194} parent=0 // pred_region
    _
  $region25: #{pose_resnet_forward.194} parent=0 // pred_fallthru
    _
  // Predicated region
  $region26: #{pose_resnet_forward.194} parent=0 // pred_check
    _
  $region27: #{pose_resnet_forward.194} parent=0 // pred_check_branch
    %253 = sbr.rel (0) target = $region29
  $region28: #{pose_resnet_forward.194} parent=0 // pred_region
    _
  $region29: #{pose_resnet_forward.194} parent=0 // pred_fallthru
    _
  // Predicated region
  $region30: #{pose_resnet_forward.194} parent=0 // pred_check
    _
  $region31: #{pose_resnet_forward.194} parent=0 // pred_check_branch
    %255 = sbr.rel (0) target = $region33
  $region32: #{pose_resnet_forward.194} parent=0 // pred_region
    _
  $region33: #{pose_resnet_forward.194} parent=0 // pred_fallthru
    _
  // Predicated region
  $region34: #{pose_resnet_forward.194} parent=0 // pred_check
    _
  $region35: #{pose_resnet_forward.194} parent=0 // pred_check_branch
    %257 = sbr.rel (0) target = $region37
  $region36: #{pose_resnet_forward.194} parent=0 // pred_region
    _
  $region37: #{pose_resnet_forward.194} parent=0 // pred_fallthru
    _
  // Predicated region
  $region38: #{pose_resnet_forward.194} parent=0 // pred_check
    _
  $region39: #{pose_resnet_forward.194} parent=0 // pred_check_branch
    %259 = sbr.rel (0) target = $region41
  $region40: #{pose_resnet_forward.194} parent=0 // pred_region
    _
  $region41: #{pose_resnet_forward.194} parent=0 // pred_fallthru
    _

// kernel: pose_resnet_forward.199
$region0: #{pose_resnet_forward.199}
  #allocation0 [shape = 'u32[]', space=smem, size = 0x4, offset = 0x4, fixed_abs, tag = 'smem constant byte address 0x4 - core index']
  #allocation1 [shape = 'u32[144,128]{1,0:T(1,128)}', space=vmem, size = 0x12000, scoped, tag = 'internal scratch']
  %s0 = inlined_call_operand.vmem [shape: bf16[32,128], index: 0, kind: input, shape index: {}]
  %s1 = inlined_call_operand.vmem [shape: bf16[32,128], index: 1, kind: input, shape index: {}]
  %s2 = inlined_call_operand.vmem [shape: bf16[128,128], index: 2, kind: input, shape index: {}]
  %s3 = inlined_call_operand.vmem [shape: bf16[128,128], index: 3, kind: input, shape index: {}]
  %s4 = inlined_call_operand.vmem [shape: bf16[32,128], index: 4, kind: output, shape index: {0}]
  %s5 = inlined_call_operand.vmem [shape: f32[8,128], index: 5, kind: output, shape index: {1}]
  %s6 = inlined_call_operand.vmem [shape: f32[8,128], index: 6, kind: output, shape index: {2}]
  %7 = xla_tuple %s4, %s5, %s6
  %s8 = sld [smem:[#allocation0]]
  $region42: #{pose_resnet_forward.199} parent=0
    _
  %s10 = ssub.s32 1, %s8
  %s11 = scalar_select 0, %s10, %s8
  // Predicated region
  $region2: #{pose_resnet_forward.199} parent=0 // pred_check
    _
  $region3: #{pose_resnet_forward.199} parent=0 // pred_check_branch
    %13 = sbr.rel (0) target = $region5
  $region4: #{pose_resnet_forward.199} parent=0 // pred_region
    _
  $region5: #{pose_resnet_forward.199} parent=0 // pred_fallthru
    _
  // Predicated region
  $region6: #{pose_resnet_forward.199} parent=0 // pred_check
    _
  $region7: #{pose_resnet_forward.199} parent=0 // pred_check_branch
    %15 = sbr.rel (0) target = $region9
  $region8: #{pose_resnet_forward.199} parent=0 // pred_region
    _
  $region9: #{pose_resnet_forward.199} parent=0 // pred_fallthru
    _
  // Predicated region
  $region10: #{pose_resnet_forward.199} parent=0 // pred_check
    _
  $region11: #{pose_resnet_forward.199} parent=0 // pred_check_branch
    %17 = sbr.rel (0) target = $region13
  $region12: #{pose_resnet_forward.199} parent=0 // pred_region
    _
  $region13: #{pose_resnet_forward.199} parent=0 // pred_fallthru
    _
  // Predicated region
  $region14: #{pose_resnet_forward.199} parent=0 // pred_check
    _
  $region15: #{pose_resnet_forward.199} parent=0 // pred_check_branch
    %19 = sbr.rel (0) target = $region17
  $region16: #{pose_resnet_forward.199} parent=0 // pred_region
    _
  $region17: #{pose_resnet_forward.199} parent=0 // pred_fallthru
    _
  %v21 = vld [vmem:[%s0] sm:$0xf]
  %v22 = vld [vmem:[%s0 + $0x4] sm:$0xf]
  %v23 = vld [vmem:[%s0 + $0x8] sm:$0xf]
  %v24 = vld [vmem:[%s0 + $0xc] sm:$0xf]
  %v25 = vld [vmem:[%s2] sm:$0xf]
  %v26 = vld [vmem:[%s2 + $0x4] sm:$0xf]
  %v27 = vld [vmem:[%s2 + $0x8] sm:$0xf]
  %v28 = vld [vmem:[%s2 + $0xc] sm:$0xf]
  %v29 = vld [vmem:[%s2 + $0x10] sm:$0xf]
  %v30 = vld [vmem:[%s2 + $0x14] sm:$0xf]
  %v31 = vld [vmem:[%s2 + $0x18] sm:$0xf]
  %v32 = vld [vmem:[%s2 + $0x1c] sm:$0xf]
  %v33 = vld [vmem:[%s2 + $0x20] sm:$0xf]
  %v34 = vld [vmem:[%s2 + $0x24] sm:$0xf]
  %v35 = vld [vmem:[%s2 + $0x28] sm:$0xf]
  %v36 = vld [vmem:[%s2 + $0x2c] sm:$0xf]
  %v37 = vld [vmem:[%s2 + $0x30] sm:$0xf]
  %v38 = vld [vmem:[%s2 + $0x34] sm:$0xf]
  %v39 = vld [vmem:[%s2 + $0x38] sm:$0xf]
  %v40 = vld [vmem:[%s2 + $0x3c] sm:$0xf]
  %v41 = vld [vmem:[%s1] sm:$0xf]
  %v42 = vld [vmem:[%s1 + $0x4] sm:$0xf]
  %v43 = vld [vmem:[%s1 + $0x8] sm:$0xf]
  %v44 = vld [vmem:[%s1 + $0xc] sm:$0xf]
  %v45 = vld [vmem:[%s3] sm:$0xf]
  %v46 = vld [vmem:[%s3 + $0x4] sm:$0xf]
  %v47 = vld [vmem:[%s3 + $0x8] sm:$0xf]
  %v48 = vld [vmem:[%s3 + $0xc] sm:$0xf]
  %v49 = vld [vmem:[%s3 + $0x10] sm:$0xf]
  %v50 = vld [vmem:[%s3 + $0x14] sm:$0xf]
  %v51 = vld [vmem:[%s3 + $0x18] sm:$0xf]
  %v52 = vld [vmem:[%s3 + $0x1c] sm:$0xf]
  %v53 = vld [vmem:[%s3 + $0x20] sm:$0xf]
  %v54 = vld [vmem:[%s3 + $0x24] sm:$0xf]
  %v55 = vld [vmem:[%s3 + $0x28] sm:$0xf]
  %v56 = vld [vmem:[%s3 + $0x2c] sm:$0xf]
  %v57 = vld [vmem:[%s3 + $0x30] sm:$0xf]
  %v58 = vld [vmem:[%s3 + $0x34] sm:$0xf]
  %v59 = vld [vmem:[%s3 + $0x38] sm:$0xf]
  %v60 = vld [vmem:[%s3 + $0x3c] sm:$0xf]
  %v65 = vunpack.c.l.b16 %v41
  %v66 = vunpack.c.l.b16 %v42
  %v67 = vunpack.c.l.b16 %v43
  %v68 = vunpack.c.l.b16 %v44
  %v69 = vpack.c.b16 %v66, %v65
  %v70 = vpack.c.b16 %v68, %v67
  %v89 = vunpack.c.l.b16 %v45
  %v90 = vunpack.c.l.b16 %v46
  %v91 = vunpack.c.l.b16 %v47
  %v92 = vunpack.c.l.b16 %v48
  %v93 = vunpack.c.l.b16 %v49
  %v94 = vunpack.c.l.b16 %v50
  %v95 = vunpack.c.l.b16 %v51
  %v96 = vunpack.c.l.b16 %v52
  %v97 = vunpack.c.l.b16 %v53
  %v98 = vunpack.c.l.b16 %v54
  %v99 = vunpack.c.l.b16 %v55
  %v100 = vunpack.c.l.b16 %v56
  %v101 = vunpack.c.l.b16 %v57
  %v102 = vunpack.c.l.b16 %v58
  %v103 = vunpack.c.l.b16 %v59
  %v104 = vunpack.c.l.b16 %v60
  %v105 = vpack.c.b16 %v90, %v89
  %v106 = vpack.c.b16 %v92, %v91
  %v107 = vpack.c.b16 %v94, %v93
  %v108 = vpack.c.b16 %v96, %v95
  %v109 = vpack.c.b16 %v98, %v97
  %v110 = vpack.c.b16 %v100, %v99
  %v111 = vpack.c.b16 %v102, %v101
  %v112 = vpack.c.b16 %v104, %v103
  %121 = vmatprep.subr.bf16.mxu0 0
  %122 = vmatpush1.bf16.msra.mxu0 %v105
  %123 = vmatprep.subr.bf16.mxu0 0
  %124 = vmatpush1.bf16.msra.mxu0 %v106
  %125 = vmatprep.subr.bf16.mxu0 0
  %126 = vmatpush1.bf16.msra.mxu0 %v107
  %127 = vmatprep.subr.bf16.mxu0 0
  %128 = vmatpush1.bf16.msra.mxu0 %v108
  %129 = vmatprep.subr.bf16.mxu0 0
  %130 = vmatpush1.bf16.msra.mxu0 %v109
  %131 = vmatprep.subr.bf16.mxu0 0
  %132 = vmatpush1.bf16.msra.mxu0 %v110
  %133 = vmatprep.subr.bf16.mxu0 0
  %134 = vmatpush1.bf16.msra.mxu0 %v111
  %135 = vmatprep.subr.bf16.mxu0 0
  %136 = vmatpush1.bf16.msra.mxu0 %v112
  %137 = vmatprep.subr.bf16.mxu0 0
  %138 = vmatpush1.bf16.msra.mxu0 0
  %139 = vmatprep.subr.bf16.mxu0 0
  %140 = vmatpush1.bf16.msra.mxu0 0
  %141 = vmatprep.subr.bf16.mxu0 0
  %142 = vmatpush1.bf16.msra.mxu0 0
  %143 = vmatprep.subr.bf16.mxu0 0
  %144 = vmatpush1.bf16.msra.mxu0 0
  %145 = vmatprep.subr.bf16.mxu0 0
  %146 = vmatpush1.bf16.msra.mxu0 0
  %147 = vmatprep.subr.bf16.mxu0 0
  %148 = vmatpush1.bf16.msra.mxu0 0
  %149 = vmatprep.subr.bf16.mxu0 0
  %150 = vmatpush1.bf16.msra.mxu0 0
  %151 = vmatprep.subr.bf16.mxu0 0
  %152 = vmatpush1.bf16.msra.mxu0 0
  %153 = vmatprep.mubr.bf16.mxu0 0
  %154 = vmatmul.mubr.bf16.gmra.mrb[0].mxu0 %v69
  %v155 = vpop.f32.mrb[0].mxu0
  %v156 = vadd.f32 0.0, %v155
  %v157 = vpop.f32.mrb[0].mxu0
  %v158 = vpop.f32.mrb[0].mxu0
  %v159 = vadd.f32 0.0, %v158
  %v160 = vpop.f32.mrb[0].mxu0
  %161 = vmatprep.mubr.bf16.mxu0 0
  %162 = vmatmul.mubr.bf16.gmra.mrb[0].mxu0 %v70
  %v163 = vpop.f32.mrb[0].mxu0
  %v164 = vadd.f32 0.0, %v163
  %v165 = vpop.f32.mrb[0].mxu0
  %v166 = vpop.f32.mrb[0].mxu0
  %v167 = vadd.f32 0.0, %v166
  %v168 = vpop.f32.mrb[0].mxu0
  %169 = vdwg.mxu0
  %v174 = vunpack.c.l.b16 %v21
  %v175 = vunpack.c.l.b16 %v22
  %v176 = vunpack.c.l.b16 %v23
  %v177 = vunpack.c.l.b16 %v24
  %v178 = vpack.c.b16 %v175, %v174
  %v179 = vpack.c.b16 %v177, %v176
  %v198 = vunpack.c.l.b16 %v25
  %v199 = vunpack.c.l.b16 %v26
  %v200 = vunpack.c.l.b16 %v27
  %v201 = vunpack.c.l.b16 %v28
  %v202 = vunpack.c.l.b16 %v29
  %v203 = vunpack.c.l.b16 %v30
  %v204 = vunpack.c.l.b16 %v31
  %v205 = vunpack.c.l.b16 %v32
  %v206 = vunpack.c.l.b16 %v33
  %v207 = vunpack.c.l.b16 %v34
  %v208 = vunpack.c.l.b16 %v35
  %v209 = vunpack.c.l.b16 %v36
  %v210 = vunpack.c.l.b16 %v37
  %v211 = vunpack.c.l.b16 %v38
  %v212 = vunpack.c.l.b16 %v39
  %v213 = vunpack.c.l.b16 %v40
  %v214 = vpack.c.b16 %v199, %v198
  %v215 = vpack.c.b16 %v201, %v200
  %v216 = vpack.c.b16 %v203, %v202
  %v217 = vpack.c.b16 %v205, %v204
  %v218 = vpack.c.b16 %v207, %v206
  %v219 = vpack.c.b16 %v209, %v208
  %v220 = vpack.c.b16 %v211, %v210
  %v221 = vpack.c.b16 %v213, %v212
  %230 = vmatprep.subr.bf16.mxu0 0
  %231 = vmatpush1.bf16.msra.mxu0 %v214
  %232 = vmatprep.subr.bf16.mxu0 0
  %233 = vmatpush1.bf16.msra.mxu0 %v215
  %234 = vmatprep.subr.bf16.mxu0 0
  %235 = vmatpush1.bf16.msra.mxu0 %v216
  %236 = vmatprep.subr.bf16.mxu0 0
  %237 = vmatpush1.bf16.msra.mxu0 %v217
  %238 = vmatprep.subr.bf16.mxu0 0
  %239 = vmatpush1.bf16.msra.mxu0 %v218
  %240 = vmatprep.subr.bf16.mxu0 0
  %241 = vmatpush1.bf16.msra.mxu0 %v219
  %242 = vmatprep.subr.bf16.mxu0 0
  %243 = vmatpush1.bf16.msra.mxu0 %v220
  %244 = vmatprep.subr.bf16.mxu0 0
  %245 = vmatpush1.bf16.msra.mxu0 %v221
  %246 = vmatprep.subr.bf16.mxu0 0
  %247 = vmatpush1.bf16.msra.mxu0 0
  %248 = vmatprep.subr.bf16.mxu0 0
  %249 = vmatpush1.bf16.msra.mxu0 0
  %250 = vmatprep.subr.bf16.mxu0 0
  %251 = vmatpush1.bf16.msra.mxu0 0
  %252 = vmatprep.subr.bf16.mxu0 0
  %253 = vmatpush1.bf16.msra.mxu0 0
  %254 = vmatprep.subr.bf16.mxu0 0
  %255 = vmatpush1.bf16.msra.mxu0 0
  %256 = vmatprep.subr.bf16.mxu0 0
  %257 = vmatpush1.bf16.msra.mxu0 0
  %258 = vmatprep.subr.bf16.mxu0 0
  %259 = vmatpush1.bf16.msra.mxu0 0
  %260 = vmatprep.subr.bf16.mxu0 0
  %261 = vmatpush1.bf16.msra.mxu0 0
  %262 = vmatprep.mubr.bf16.mxu0 0
  %263 = vmatmul.mubr.bf16.gmra.mrb[0].mxu0 %v178
  %v264 = vpop.f32.mrb[0].mxu0
  %v265 = vadd.f32 %v156, %v264
  %v266 = vpop.f32.mrb[0].mxu0
  %v267 = vpop.f32.mrb[0].mxu0
  %v268 = vadd.f32 %v159, %v267
  %v269 = vpop.f32.mrb[0].mxu0
  %270 = vmatprep.mubr.bf16.mxu0 0
  %271 = vmatmul.mubr.bf16.gmra.mrb[0].mxu0 %v179
  %v272 = vpop.f32.mrb[0].mxu0
  %v273 = vadd.f32 %v164, %v272
  %v274 = vpop.f32.mrb[0].mxu0
  %v275 = vpop.f32.mrb[0].mxu0
  %v276 = vadd.f32 %v167, %v275
  %v277 = vpop.f32.mrb[0].mxu0
  %278 = vdwg.mxu0
  %v279 = vpack.c.bf16 %v268, %v265
  %v280 = vpack.c.bf16 %v276, %v273
  %v283 = vunpack.c.l.b16 %v279
  %v284 = vunpack.c.h.b16 %v279
  %v285 = vunpack.c.l.b16 %v280
  %v286 = vunpack.c.h.b16 %v280
  %v287 = vpack.c.b16 %v283, %v283
  %v288 = vpack.c.b16 %v284, %v284
  %v289 = vpack.c.b16 %v285, %v285
  %v290 = vpack.c.b16 %v286, %v286
  %295 = vst [vmem:[%s4] sm:$0xf] %v287
  %296 = vst [vmem:[%s4 + $0x4] sm:$0xf] %v288
  %297 = vst [vmem:[%s4 + $0x8] sm:$0xf] %v289
  %298 = vst [vmem:[%s4 + $0xc] sm:$0xf] %v290
  %v299 = vadd.f32 %v265, %v268
  %v300 = vadd.f32 %v299, %v273
  %v301 = vadd.f32 %v300, %v276
  %v302 = vrot.slane %v301, 4
  %v303 = vadd.f32 %v301, %v302
  %v304 = vrot.slane %v303, 2
  %v305 = vadd.f32 %v303, %v304
  %v306 = vrot.slane %v305, 1
  %v307 = vadd.f32 %v305, %v306
  %v308 = vmul.f32 %v265, %v265
  %v309 = vmul.f32 %v268, %v268
  %v310 = vmul.f32 %v273, %v273
  %v311 = vmul.f32 %v276, %v276
  %v312 = vadd.f32 %v308, %v309
  %v313 = vadd.f32 %v312, %v310
  %v314 = vadd.f32 %v313, %v311
  %v315 = vrot.slane %v314, 4
  %v316 = vadd.f32 %v314, %v315
  %v317 = vrot.slane %v316, 2
  %v318 = vadd.f32 %v316, %v317
  %v319 = vrot.slane %v318, 1
  %v320 = vadd.f32 %v318, %v319
  %321 = vst [vmem:[%s5] sm:$0xff] %v307
  %322 = vst [vmem:[%s6] sm:$0xff] %v320
  // Predicated region
  $region18: #{pose_resnet_forward.199} parent=0 // pred_check
    _
  $region19: #{pose_resnet_forward.199} parent=0 // pred_check_branch
    %324 = sbr.rel (0) target = $region21
  $region20: #{pose_resnet_forward.199} parent=0 // pred_region
    _
  $region21: #{pose_resnet_forward.199} parent=0 // pred_fallthru
    _
  // Predicated region
  $region22: #{pose_resnet_forward.199} parent=0 // pred_check
    _
  $region23: #{pose_resnet_forward.199} parent=0 // pred_check_branch
    %326 = sbr.rel (0) target = $region25
  $region24: #{pose_resnet_forward.199} parent=0 // pred_region
    _
  $region25: #{pose_resnet_forward.199} parent=0 // pred_fallthru
    _
  // Predicated region
  $region26: #{pose_resnet_forward.199} parent=0 // pred_check
    _
  $region27: #{pose_resnet_forward.199} parent=0 // pred_check_branch
    %328 = sbr.rel (0) target = $region29
  $region28: #{pose_resnet_forward.199} parent=0 // pred_region
    _
  $region29: #{pose_resnet_forward.199} parent=0 // pred_fallthru
    _
  // Predicated region
  $region30: #{pose_resnet_forward.199} parent=0 // pred_check
    _
  $region31: #{pose_resnet_forward.199} parent=0 // pred_check_branch
    %330 = sbr.rel (0) target = $region33
  $region32: #{pose_resnet_forward.199} parent=0 // pred_region
    _
  $region33: #{pose_resnet_forward.199} parent=0 // pred_fallthru
    _
  // Predicated region
  $region34: #{pose_resnet_forward.199} parent=0 // pred_check
    _
  $region35: #{pose_resnet_forward.199} parent=0 // pred_check_branch
    %332 = sbr.rel (0) target = $region37
  $region36: #{pose_resnet_forward.199} parent=0 // pred_region
    _
  $region37: #{pose_resnet_forward.199} parent=0 // pred_fallthru
    _
  // Predicated region
  $region38: #{pose_resnet_forward.199} parent=0 // pred_check
    _
  $region39: #{pose_resnet_forward.199} parent=0 // pred_check_branch
    %334 = sbr.rel (0) target = $region41
  $region40: #{pose_resnet_forward.199} parent=0 // pred_region
    _
  $region41: #{pose_resnet_forward.199} parent=0 // pred_fallthru
    _

// kernel: pose_resnet_forward.200
$region0: #{pose_resnet_forward.200}
  #allocation0 [shape = 'u32[]', space=smem, size = 0x4, offset = 0x4, fixed_abs, tag = 'smem constant byte address 0x4 - core index']
  #allocation1 [shape = 'u32[144,128]{1,0:T(1,128)}', space=vmem, size = 0x12000, scoped, tag = 'internal scratch']
  %s0 = inlined_call_operand.vmem [shape: bf16[32,128], index: 0, kind: input, shape index: {}]
  %s1 = inlined_call_operand.vmem [shape: bf16[32,128], index: 1, kind: input, shape index: {}]
  %s2 = inlined_call_operand.vmem [shape: bf16[32,128], index: 2, kind: input, shape index: {}]
  %s3 = inlined_call_operand.vmem [shape: bf16[32,128], index: 3, kind: input, shape index: {}]
  %s4 = inlined_call_operand.vmem [shape: bf16[128,128], index: 4, kind: input, shape index: {}]
  %s5 = inlined_call_operand.vmem [shape: bf16[128,128], index: 5, kind: input, shape index: {}]
  %s6 = inlined_call_operand.vmem [shape: bf16[128,128], index: 6, kind: input, shape index: {}]
  %s7 = inlined_call_operand.vmem [shape: bf16[128,128], index: 7, kind: input, shape index: {}]
  %s8 = inlined_call_operand.vmem [shape: bf16[32,128], index: 8, kind: output, shape index: {0}]
  %s9 = inlined_call_operand.vmem [shape: f32[8,128], index: 9, kind: output, shape index: {1}]
  %s10 = inlined_call_operand.vmem [shape: f32[8,128], index: 10, kind: output, shape index: {2}]
  %11 = xla_tuple %s8, %s9, %s10
  %s12 = sld [smem:[#allocation0]]
  $region58: #{pose_resnet_forward.200} parent=0
    _
  %s14 = ssub.s32 1, %s12
  %s15 = scalar_select 0, %s14, %s12
  // Predicated region
  $region2: #{pose_resnet_forward.200} parent=0 // pred_check
    _
  $region3: #{pose_resnet_forward.200} parent=0 // pred_check_branch
    %17 = sbr.rel (0) target = $region5
  $region4: #{pose_resnet_forward.200} parent=0 // pred_region
    _
  $region5: #{pose_resnet_forward.200} parent=0 // pred_fallthru
    _
  // Predicated region
  $region6: #{pose_resnet_forward.200} parent=0 // pred_check
    _
  $region7: #{pose_resnet_forward.200} parent=0 // pred_check_branch
    %19 = sbr.rel (0) target = $region9
  $region8: #{pose_resnet_forward.200} parent=0 // pred_region
    _
  $region9: #{pose_resnet_forward.200} parent=0 // pred_fallthru
    _
  // Predicated region
  $region10: #{pose_resnet_forward.200} parent=0 // pred_check
    _
  $region11: #{pose_resnet_forward.200} parent=0 // pred_check_branch
    %21 = sbr.rel (0) target = $region13
  $region12: #{pose_resnet_forward.200} parent=0 // pred_region
    _
  $region13: #{pose_resnet_forward.200} parent=0 // pred_fallthru
    _
  // Predicated region
  $region14: #{pose_resnet_forward.200} parent=0 // pred_check
    _
  $region15: #{pose_resnet_forward.200} parent=0 // pred_check_branch
    %23 = sbr.rel (0) target = $region17
  $region16: #{pose_resnet_forward.200} parent=0 // pred_region
    _
  $region17: #{pose_resnet_forward.200} parent=0 // pred_fallthru
    _
  // Predicated region
  $region18: #{pose_resnet_forward.200} parent=0 // pred_check
    _
  $region19: #{pose_resnet_forward.200} parent=0 // pred_check_branch
    %25 = sbr.rel (0) target = $region21
  $region20: #{pose_resnet_forward.200} parent=0 // pred_region
    _
  $region21: #{pose_resnet_forward.200} parent=0 // pred_fallthru
    _
  // Predicated region
  $region22: #{pose_resnet_forward.200} parent=0 // pred_check
    _
  $region23: #{pose_resnet_forward.200} parent=0 // pred_check_branch
    %27 = sbr.rel (0) target = $region25
  $region24: #{pose_resnet_forward.200} parent=0 // pred_region
    _
  $region25: #{pose_resnet_forward.200} parent=0 // pred_fallthru
    _
  // Predicated region
  $region26: #{pose_resnet_forward.200} parent=0 // pred_check
    _
  $region27: #{pose_resnet_forward.200} parent=0 // pred_check_branch
    %29 = sbr.rel (0) target = $region29
  $region28: #{pose_resnet_forward.200} parent=0 // pred_region
    _
  $region29: #{pose_resnet_forward.200} parent=0 // pred_fallthru
    _
  // Predicated region
  $region30: #{pose_resnet_forward.200} parent=0 // pred_check
    _
  $region31: #{pose_resnet_forward.200} parent=0 // pred_check_branch
    %31 = sbr.rel (0) target = $region33
  $region32: #{pose_resnet_forward.200} parent=0 // pred_region
    _
  $region33: #{pose_resnet_forward.200} parent=0 // pred_fallthru
    _
  %v33 = vld [vmem:[%s0] sm:$0xf]
  %v34 = vld [vmem:[%s0 + $0x4] sm:$0xf]
  %v35 = vld [vmem:[%s0 + $0x8] sm:$0xf]
  %v36 = vld [vmem:[%s0 + $0xc] sm:$0xf]
  %v37 = vld [vmem:[%s4] sm:$0xf]
  %v38 = vld [vmem:[%s4 + $0x4] sm:$0xf]
  %v39 = vld [vmem:[%s4 + $0x8] sm:$0xf]
  %v40 = vld [vmem:[%s4 + $0xc] sm:$0xf]
  %v41 = vld [vmem:[%s4 + $0x10] sm:$0xf]
  %v42 = vld [vmem:[%s4 + $0x14] sm:$0xf]
  %v43 = vld [vmem:[%s4 + $0x18] sm:$0xf]
  %v44 = vld [vmem:[%s4 + $0x1c] sm:$0xf]
  %v45 = vld [vmem:[%s4 + $0x20] sm:$0xf]
  %v46 = vld [vmem:[%s4 + $0x24] sm:$0xf]
  %v47 = vld [vmem:[%s4 + $0x28] sm:$0xf]
  %v48 = vld [vmem:[%s4 + $0x2c] sm:$0xf]
  %v49 = vld [vmem:[%s4 + $0x30] sm:$0xf]
  %v50 = vld [vmem:[%s4 + $0x34] sm:$0xf]
  %v51 = vld [vmem:[%s4 + $0x38] sm:$0xf]
  %v52 = vld [vmem:[%s4 + $0x3c] sm:$0xf]
  %v53 = vld [vmem:[%s1] sm:$0xf]
  %v54 = vld [vmem:[%s1 + $0x4] sm:$0xf]
  %v55 = vld [vmem:[%s1 + $0x8] sm:$0xf]
  %v56 = vld [vmem:[%s1 + $0xc] sm:$0xf]
  %v57 = vld [vmem:[%s5] sm:$0xf]
  %v58 = vld [vmem:[%s5 + $0x4] sm:$0xf]
  %v59 = vld [vmem:[%s5 + $0x8] sm:$0xf]
  %v60 = vld [vmem:[%s5 + $0xc] sm:$0xf]
  %v61 = vld [vmem:[%s5 + $0x10] sm:$0xf]
  %v62 = vld [vmem:[%s5 + $0x14] sm:$0xf]
  %v63 = vld [vmem:[%s5 + $0x18] sm:$0xf]
  %v64 = vld [vmem:[%s5 + $0x1c] sm:$0xf]
  %v65 = vld [vmem:[%s5 + $0x20] sm:$0xf]
  %v66 = vld [vmem:[%s5 + $0x24] sm:$0xf]
  %v67 = vld [vmem:[%s5 + $0x28] sm:$0xf]
  %v68 = vld [vmem:[%s5 + $0x2c] sm:$0xf]
  %v69 = vld [vmem:[%s5 + $0x30] sm:$0xf]
  %v70 = vld [vmem:[%s5 + $0x34] sm:$0xf]
  %v71 = vld [vmem:[%s5 + $0x38] sm:$0xf]
  %v72 = vld [vmem:[%s5 + $0x3c] sm:$0xf]
  %v77 = vunpack.c.l.b16 %v53
  %v78 = vunpack.c.l.b16 %v54
  %v79 = vunpack.c.l.b16 %v55
  %v80 = vunpack.c.l.b16 %v56
  %v81 = vpack.c.b16 %v78, %v77
  %v82 = vpack.c.b16 %v80, %v79
  %v101 = vunpack.c.l.b16 %v57
  %v102 = vunpack.c.l.b16 %v58
  %v103 = vunpack.c.l.b16 %v59
  %v104 = vunpack.c.l.b16 %v60
  %v105 = vunpack.c.l.b16 %v61
  %v106 = vunpack.c.l.b16 %v62
  %v107 = vunpack.c.l.b16 %v63
  %v108 = vunpack.c.l.b16 %v64
  %v109 = vunpack.c.l.b16 %v65
  %v110 = vunpack.c.l.b16 %v66
  %v111 = vunpack.c.l.b16 %v67
  %v112 = vunpack.c.l.b16 %v68
  %v113 = vunpack.c.l.b16 %v69
  %v114 = vunpack.c.l.b16 %v70
  %v115 = vunpack.c.l.b16 %v71
  %v116 = vunpack.c.l.b16 %v72
  %v117 = vpack.c.b16 %v102, %v101
  %v118 = vpack.c.b16 %v104, %v103
  %v119 = vpack.c.b16 %v106, %v105
  %v120 = vpack.c.b16 %v108, %v107
  %v121 = vpack.c.b16 %v110, %v109
  %v122 = vpack.c.b16 %v112, %v111
  %v123 = vpack.c.b16 %v114, %v113
  %v124 = vpack.c.b16 %v116, %v115
  %133 = vmatprep.subr.bf16.mxu0 0
  %134 = vmatpush1.bf16.msra.mxu0 %v117
  %135 = vmatprep.subr.bf16.mxu0 0
  %136 = vmatpush1.bf16.msra.mxu0 %v118
  %137 = vmatprep.subr.bf16.mxu0 0
  %138 = vmatpush1.bf16.msra.mxu0 %v119
  %139 = vmatprep.subr.bf16.mxu0 0
  %140 = vmatpush1.bf16.msra.mxu0 %v120
  %141 = vmatprep.subr.bf16.mxu0 0
  %142 = vmatpush1.bf16.msra.mxu0 %v121
  %143 = vmatprep.subr.bf16.mxu0 0
  %144 = vmatpush1.bf16.msra.mxu0 %v122
  %145 = vmatprep.subr.bf16.mxu0 0
  %146 = vmatpush1.bf16.msra.mxu0 %v123
  %147 = vmatprep.subr.bf16.mxu0 0
  %148 = vmatpush1.bf16.msra.mxu0 %v124
  %149 = vmatprep.subr.bf16.mxu0 0
  %150 = vmatpush1.bf16.msra.mxu0 0
  %151 = vmatprep.subr.bf16.mxu0 0
  %152 = vmatpush1.bf16.msra.mxu0 0
  %153 = vmatprep.subr.bf16.mxu0 0
  %154 = vmatpush1.bf16.msra.mxu0 0
  %155 = vmatprep.subr.bf16.mxu0 0
  %156 = vmatpush1.bf16.msra.mxu0 0
  %157 = vmatprep.subr.bf16.mxu0 0
  %158 = vmatpush1.bf16.msra.mxu0 0
  %159 = vmatprep.subr.bf16.mxu0 0
  %160 = vmatpush1.bf16.msra.mxu0 0
  %161 = vmatprep.subr.bf16.mxu0 0
  %162 = vmatpush1.bf16.msra.mxu0 0
  %163 = vmatprep.subr.bf16.mxu0 0
  %164 = vmatpush1.bf16.msra.mxu0 0
  %165 = vmatprep.mubr.bf16.mxu0 0
  %166 = vmatmul.mubr.bf16.gmra.mrb[0].mxu0 %v81
  %v167 = vpop.f32.mrb[0].mxu0
  %v168 = vadd.f32 0.0, %v167
  %v169 = vpop.f32.mrb[0].mxu0
  %v170 = vpop.f32.mrb[0].mxu0
  %v171 = vadd.f32 0.0, %v170
  %v172 = vpop.f32.mrb[0].mxu0
  %173 = vmatprep.mubr.bf16.mxu0 0
  %174 = vmatmul.mubr.bf16.gmra.mrb[0].mxu0 %v82
  %v175 = vpop.f32.mrb[0].mxu0
  %v176 = vadd.f32 0.0, %v175
  %v177 = vpop.f32.mrb[0].mxu0
  %v178 = vpop.f32.mrb[0].mxu0
  %v179 = vadd.f32 0.0, %v178
  %v180 = vpop.f32.mrb[0].mxu0
  %181 = vdwg.mxu0
  %v186 = vunpack.c.l.b16 %v33
  %v187 = vunpack.c.l.b16 %v34
  %v188 = vunpack.c.l.b16 %v35
  %v189 = vunpack.c.l.b16 %v36
  %v190 = vpack.c.b16 %v187, %v186
  %v191 = vpack.c.b16 %v189, %v188
  %v210 = vunpack.c.l.b16 %v37
  %v211 = vunpack.c.l.b16 %v38
  %v212 = vunpack.c.l.b16 %v39
  %v213 = vunpack.c.l.b16 %v40
  %v214 = vunpack.c.l.b16 %v41
  %v215 = vunpack.c.l.b16 %v42
  %v216 = vunpack.c.l.b16 %v43
  %v217 = vunpack.c.l.b16 %v44
  %v218 = vunpack.c.l.b16 %v45
  %v219 = vunpack.c.l.b16 %v46
  %v220 = vunpack.c.l.b16 %v47
  %v221 = vunpack.c.l.b16 %v48
  %v222 = vunpack.c.l.b16 %v49
  %v223 = vunpack.c.l.b16 %v50
  %v224 = vunpack.c.l.b16 %v51
  %v225 = vunpack.c.l.b16 %v52
  %v226 = vpack.c.b16 %v211, %v210
  %v227 = vpack.c.b16 %v213, %v212
  %v228 = vpack.c.b16 %v215, %v214
  %v229 = vpack.c.b16 %v217, %v216
  %v230 = vpack.c.b16 %v219, %v218
  %v231 = vpack.c.b16 %v221, %v220
  %v232 = vpack.c.b16 %v223, %v222
  %v233 = vpack.c.b16 %v225, %v224
  %242 = vmatprep.subr.bf16.mxu0 0
  %243 = vmatpush1.bf16.msra.mxu0 %v226
  %244 = vmatprep.subr.bf16.mxu0 0
  %245 = vmatpush1.bf16.msra.mxu0 %v227
  %246 = vmatprep.subr.bf16.mxu0 0
  %247 = vmatpush1.bf16.msra.mxu0 %v228
  %248 = vmatprep.subr.bf16.mxu0 0
  %249 = vmatpush1.bf16.msra.mxu0 %v229
  %250 = vmatprep.subr.bf16.mxu0 0
  %251 = vmatpush1.bf16.msra.mxu0 %v230
  %252 = vmatprep.subr.bf16.mxu0 0
  %253 = vmatpush1.bf16.msra.mxu0 %v231
  %254 = vmatprep.subr.bf16.mxu0 0
  %255 = vmatpush1.bf16.msra.mxu0 %v232
  %256 = vmatprep.subr.bf16.mxu0 0
  %257 = vmatpush1.bf16.msra.mxu0 %v233
  %258 = vmatprep.subr.bf16.mxu0 0
  %259 = vmatpush1.bf16.msra.mxu0 0
  %260 = vmatprep.subr.bf16.mxu0 0
  %261 = vmatpush1.bf16.msra.mxu0 0
  %262 = vmatprep.subr.bf16.mxu0 0
  %263 = vmatpush1.bf16.msra.mxu0 0
  %264 = vmatprep.subr.bf16.mxu0 0
  %265 = vmatpush1.bf16.msra.mxu0 0
  %266 = vmatprep.subr.bf16.mxu0 0
  %267 = vmatpush1.bf16.msra.mxu0 0
  %268 = vmatprep.subr.bf16.mxu0 0
  %269 = vmatpush1.bf16.msra.mxu0 0
  %270 = vmatprep.subr.bf16.mxu0 0
  %271 = vmatpush1.bf16.msra.mxu0 0
  %272 = vmatprep.subr.bf16.mxu0 0
  %273 = vmatpush1.bf16.msra.mxu0 0
  %274 = vmatprep.mubr.bf16.mxu0 0
  %275 = vmatmul.mubr.bf16.gmra.mrb[0].mxu0 %v190
  %v276 = vpop.f32.mrb[0].mxu0
  %v277 = vadd.f32 %v168, %v276
  %v278 = vpop.f32.mrb[0].mxu0
  %v279 = vpop.f32.mrb[0].mxu0
  %v280 = vadd.f32 %v171, %v279
  %v281 = vpop.f32.mrb[0].mxu0
  %282 = vmatprep.mubr.bf16.mxu0 0
  %283 = vmatmul.mubr.bf16.gmra.mrb[0].mxu0 %v191
  %v284 = vpop.f32.mrb[0].mxu0
  %v285 = vadd.f32 %v176, %v284
  %v286 = vpop.f32.mrb[0].mxu0
  %v287 = vpop.f32.mrb[0].mxu0
  %v288 = vadd.f32 %v179, %v287
  %v289 = vpop.f32.mrb[0].mxu0
  %290 = vdwg.mxu0
  %v291 = vld [vmem:[%s2] sm:$0xf]
  %v292 = vld [vmem:[%s2 + $0x4] sm:$0xf]
  %v293 = vld [vmem:[%s2 + $0x8] sm:$0xf]
  %v294 = vld [vmem:[%s2 + $0xc] sm:$0xf]
  %v295 = vld [vmem:[%s6] sm:$0xf]
  %v296 = vld [vmem:[%s6 + $0x4] sm:$0xf]
  %v297 = vld [vmem:[%s6 + $0x8] sm:$0xf]
  %v298 = vld [vmem:[%s6 + $0xc] sm:$0xf]
  %v299 = vld [vmem:[%s6 + $0x10] sm:$0xf]
  %v300 = vld [vmem:[%s6 + $0x14] sm:$0xf]
  %v301 = vld [vmem:[%s6 + $0x18] sm:$0xf]
  %v302 = vld [vmem:[%s6 + $0x1c] sm:$0xf]
  %v303 = vld [vmem:[%s6 + $0x20] sm:$0xf]
  %v304 = vld [vmem:[%s6 + $0x24] sm:$0xf]
  %v305 = vld [vmem:[%s6 + $0x28] sm:$0xf]
  %v306 = vld [vmem:[%s6 + $0x2c] sm:$0xf]
  %v307 = vld [vmem:[%s6 + $0x30] sm:$0xf]
  %v308 = vld [vmem:[%s6 + $0x34] sm:$0xf]
  %v309 = vld [vmem:[%s6 + $0x38] sm:$0xf]
  %v310 = vld [vmem:[%s6 + $0x3c] sm:$0xf]
  %v315 = vunpack.c.l.b16 %v291
  %v316 = vunpack.c.l.b16 %v292
  %v317 = vunpack.c.l.b16 %v293
  %v318 = vunpack.c.l.b16 %v294
  %v319 = vpack.c.b16 %v316, %v315
  %v320 = vpack.c.b16 %v318, %v317
  %v339 = vunpack.c.l.b16 %v295
  %v340 = vunpack.c.l.b16 %v296
  %v341 = vunpack.c.l.b16 %v297
  %v342 = vunpack.c.l.b16 %v298
  %v343 = vunpack.c.l.b16 %v299
  %v344 = vunpack.c.l.b16 %v300
  %v345 = vunpack.c.l.b16 %v301
  %v346 = vunpack.c.l.b16 %v302
  %v347 = vunpack.c.l.b16 %v303
  %v348 = vunpack.c.l.b16 %v304
  %v349 = vunpack.c.l.b16 %v305
  %v350 = vunpack.c.l.b16 %v306
  %v351 = vunpack.c.l.b16 %v307
  %v352 = vunpack.c.l.b16 %v308
  %v353 = vunpack.c.l.b16 %v309
  %v354 = vunpack.c.l.b16 %v310
  %v355 = vpack.c.b16 %v340, %v339
  %v356 = vpack.c.b16 %v342, %v341
  %v357 = vpack.c.b16 %v344, %v343
  %v358 = vpack.c.b16 %v346, %v345
  %v359 = vpack.c.b16 %v348, %v347
  %v360 = vpack.c.b16 %v350, %v349
  %v361 = vpack.c.b16 %v352, %v351
  %v362 = vpack.c.b16 %v354, %v353
  %371 = vmatprep.subr.bf16.mxu0 0
  %372 = vmatpush1.bf16.msra.mxu0 %v355
  %373 = vmatprep.subr.bf16.mxu0 0
  %374 = vmatpush1.bf16.msra.mxu0 %v356
  %375 = vmatprep.subr.bf16.mxu0 0
  %376 = vmatpush1.bf16.msra.mxu0 %v357
  %377 = vmatprep.subr.bf16.mxu0 0
  %378 = vmatpush1.bf16.msra.mxu0 %v358
  %379 = vmatprep.subr.bf16.mxu0 0
  %380 = vmatpush1.bf16.msra.mxu0 %v359
  %381 = vmatprep.subr.bf16.mxu0 0
  %382 = vmatpush1.bf16.msra.mxu0 %v360
  %383 = vmatprep.subr.bf16.mxu0 0
  %384 = vmatpush1.bf16.msra.mxu0 %v361
  %385 = vmatprep.subr.bf16.mxu0 0
  %386 = vmatpush1.bf16.msra.mxu0 %v362
  %387 = vmatprep.subr.bf16.mxu0 0
  %388 = vmatpush1.bf16.msra.mxu0 0
  %389 = vmatprep.subr.bf16.mxu0 0
  %390 = vmatpush1.bf16.msra.mxu0 0
  %391 = vmatprep.subr.bf16.mxu0 0
  %392 = vmatpush1.bf16.msra.mxu0 0
  %393 = vmatprep.subr.bf16.mxu0 0
  %394 = vmatpush1.bf16.msra.mxu0 0
  %395 = vmatprep.subr.bf16.mxu0 0
  %396 = vmatpush1.bf16.msra.mxu0 0
  %397 = vmatprep.subr.bf16.mxu0 0
  %398 = vmatpush1.bf16.msra.mxu0 0
  %399 = vmatprep.subr.bf16.mxu0 0
  %400 = vmatpush1.bf16.msra.mxu0 0
  %401 = vmatprep.subr.bf16.mxu0 0
  %402 = vmatpush1.bf16.msra.mxu0 0
  %403 = vmatprep.mubr.bf16.mxu0 0
  %404 = vmatmul.mubr.bf16.gmra.mrb[0].mxu0 %v319
  %v405 = vpop.f32.mrb[0].mxu0
  %v406 = vadd.f32 0.0, %v405
  %v407 = vpop.f32.mrb[0].mxu0
  %v408 = vpop.f32.mrb[0].mxu0
  %v409 = vadd.f32 0.0, %v408
  %v410 = vpop.f32.mrb[0].mxu0
  %411 = vmatprep.mubr.bf16.mxu0 0
  %412 = vmatmul.mubr.bf16.gmra.mrb[0].mxu0 %v320
  %v413 = vpop.f32.mrb[0].mxu0
  %v414 = vadd.f32 0.0, %v413
  %v415 = vpop.f32.mrb[0].mxu0
  %v416 = vpop.f32.mrb[0].mxu0
  %v417 = vadd.f32 0.0, %v416
  %v418 = vpop.f32.mrb[0].mxu0
  %419 = vdwg.mxu0
  %v420 = vadd.f32 %v277, %v406
  %v421 = vadd.f32 %v280, %v409
  %v422 = vadd.f32 %v285, %v414
  %v423 = vadd.f32 %v288, %v417
  %v424 = vld [vmem:[%s3] sm:$0xf]
  %v425 = vld [vmem:[%s3 + $0x4] sm:$0xf]
  %v426 = vld [vmem:[%s3 + $0x8] sm:$0xf]
  %v427 = vld [vmem:[%s3 + $0xc] sm:$0xf]
  %v428 = vld [vmem:[%s7] sm:$0xf]
  %v429 = vld [vmem:[%s7 + $0x4] sm:$0xf]
  %v430 = vld [vmem:[%s7 + $0x8] sm:$0xf]
  %v431 = vld [vmem:[%s7 + $0xc] sm:$0xf]
  %v432 = vld [vmem:[%s7 + $0x10] sm:$0xf]
  %v433 = vld [vmem:[%s7 + $0x14] sm:$0xf]
  %v434 = vld [vmem:[%s7 + $0x18] sm:$0xf]
  %v435 = vld [vmem:[%s7 + $0x1c] sm:$0xf]
  %v436 = vld [vmem:[%s7 + $0x20] sm:$0xf]
  %v437 = vld [vmem:[%s7 + $0x24] sm:$0xf]
  %v438 = vld [vmem:[%s7 + $0x28] sm:$0xf]
  %v439 = vld [vmem:[%s7 + $0x2c] sm:$0xf]
  %v440 = vld [vmem:[%s7 + $0x30] sm:$0xf]
  %v441 = vld [vmem:[%s7 + $0x34] sm:$0xf]
  %v442 = vld [vmem:[%s7 + $0x38] sm:$0xf]
  %v443 = vld [vmem:[%s7 + $0x3c] sm:$0xf]
  %v448 = vunpack.c.l.b16 %v424
  %v449 = vunpack.c.l.b16 %v425
  %v450 = vunpack.c.l.b16 %v426
  %v451 = vunpack.c.l.b16 %v427
  %v452 = vpack.c.b16 %v449, %v448
  %v453 = vpack.c.b16 %v451, %v450
  %v472 = vunpack.c.l.b16 %v428
  %v473 = vunpack.c.l.b16 %v429
  %v474 = vunpack.c.l.b16 %v430
  %v475 = vunpack.c.l.b16 %v431
  %v476 = vunpack.c.l.b16 %v432
  %v477 = vunpack.c.l.b16 %v433
  %v478 = vunpack.c.l.b16 %v434
  %v479 = vunpack.c.l.b16 %v435
  %v480 = vunpack.c.l.b16 %v436
  %v481 = vunpack.c.l.b16 %v437
  %v482 = vunpack.c.l.b16 %v438
  %v483 = vunpack.c.l.b16 %v439
  %v484 = vunpack.c.l.b16 %v440
  %v485 = vunpack.c.l.b16 %v441
  %v486 = vunpack.c.l.b16 %v442
  %v487 = vunpack.c.l.b16 %v443
  %v488 = vpack.c.b16 %v473, %v472
  %v489 = vpack.c.b16 %v475, %v474
  %v490 = vpack.c.b16 %v477, %v476
  %v491 = vpack.c.b16 %v479, %v478
  %v492 = vpack.c.b16 %v481, %v480
  %v493 = vpack.c.b16 %v483, %v482
  %v494 = vpack.c.b16 %v485, %v484
  %v495 = vpack.c.b16 %v487, %v486
  %504 = vmatprep.subr.bf16.mxu0 0
  %505 = vmatpush1.bf16.msra.mxu0 %v488
  %506 = vmatprep.subr.bf16.mxu0 0
  %507 = vmatpush1.bf16.msra.mxu0 %v489
  %508 = vmatprep.subr.bf16.mxu0 0
  %509 = vmatpush1.bf16.msra.mxu0 %v490
  %510 = vmatprep.subr.bf16.mxu0 0
  %511 = vmatpush1.bf16.msra.mxu0 %v491
  %512 = vmatprep.subr.bf16.mxu0 0
  %513 = vmatpush1.bf16.msra.mxu0 %v492
  %514 = vmatprep.subr.bf16.mxu0 0
  %515 = vmatpush1.bf16.msra.mxu0 %v493
  %516 = vmatprep.subr.bf16.mxu0 0
  %517 = vmatpush1.bf16.msra.mxu0 %v494
  %518 = vmatprep.subr.bf16.mxu0 0
  %519 = vmatpush1.bf16.msra.mxu0 %v495
  %520 = vmatprep.subr.bf16.mxu0 0
  %521 = vmatpush1.bf16.msra.mxu0 0
  %522 = vmatprep.subr.bf16.mxu0 0
  %523 = vmatpush1.bf16.msra.mxu0 0
  %524 = vmatprep.subr.bf16.mxu0 0
  %525 = vmatpush1.bf16.msra.mxu0 0
  %526 = vmatprep.subr.bf16.mxu0 0
  %527 = vmatpush1.bf16.msra.mxu0 0
  %528 = vmatprep.subr.bf16.mxu0 0
  %529 = vmatpush1.bf16.msra.mxu0 0
  %530 = vmatprep.subr.bf16.mxu0 0
  %531 = vmatpush1.bf16.msra.mxu0 0
  %532 = vmatprep.subr.bf16.mxu0 0
  %533 = vmatpush1.bf16.msra.mxu0 0
  %534 = vmatprep.subr.bf16.mxu0 0
  %535 = vmatpush1.bf16.msra.mxu0 0
  %536 = vmatprep.mubr.bf16.mxu0 0
  %537 = vmatmul.mubr.bf16.gmra.mrb[0].mxu0 %v452
  %v538 = vpop.f32.mrb[0].mxu0
  %v539 = vadd.f32 0.0, %v538
  %v540 = vpop.f32.mrb[0].mxu0
  %v541 = vpop.f32.mrb[0].mxu0
  %v542 = vadd.f32 0.0, %v541
  %v543 = vpop.f32.mrb[0].mxu0
  %544 = vmatprep.mubr.bf16.mxu0 0
  %545 = vmatmul.mubr.bf16.gmra.mrb[0].mxu0 %v453
  %v546 = vpop.f32.mrb[0].mxu0
  %v547 = vadd.f32 0.0, %v546
  %v548 = vpop.f32.mrb[0].mxu0
  %v549 = vpop.f32.mrb[0].mxu0
  %v550 = vadd.f32 0.0, %v549
  %v551 = vpop.f32.mrb[0].mxu0
  %552 = vdwg.mxu0
  %v553 = vadd.f32 %v420, %v539
  %v554 = vadd.f32 %v421, %v542
  %v555 = vadd.f32 %v422, %v547
  %v556 = vadd.f32 %v423, %v550
  %v557 = vpack.c.bf16 %v554, %v553
  %v558 = vpack.c.bf16 %v556, %v555
  %v561 = vunpack.c.l.b16 %v557
  %v562 = vunpack.c.h.b16 %v557
  %v563 = vunpack.c.l.b16 %v558
  %v564 = vunpack.c.h.b16 %v558
  %v565 = vpack.c.b16 %v561, %v561
  %v566 = vpack.c.b16 %v562, %v562
  %v567 = vpack.c.b16 %v563, %v563
  %v568 = vpack.c.b16 %v564, %v564
  %573 = vst [vmem:[%s8] sm:$0xf] %v565
  %574 = vst [vmem:[%s8 + $0x4] sm:$0xf] %v566
  %575 = vst [vmem:[%s8 + $0x8] sm:$0xf] %v567
  %576 = vst [vmem:[%s8 + $0xc] sm:$0xf] %v568
  %v577 = vadd.f32 %v553, %v554
  %v578 = vadd.f32 %v577, %v555
  %v579 = vadd.f32 %v578, %v556
  %v580 = vrot.slane %v579, 4
  %v581 = vadd.f32 %v579, %v580
  %v582 = vrot.slane %v581, 2
  %v583 = vadd.f32 %v581, %v582
  %v584 = vrot.slane %v583, 1
  %v585 = vadd.f32 %v583, %v584
  %v586 = vmul.f32 %v553, %v553
  %v587 = vmul.f32 %v554, %v554
  %v588 = vmul.f32 %v555, %v555
  %v589 = vmul.f32 %v556, %v556
  %v590 = vadd.f32 %v586, %v587
  %v591 = vadd.f32 %v590, %v588
  %v592 = vadd.f32 %v591, %v589
  %v593 = vrot.slane %v592, 4
  %v594 = vadd.f32 %v592, %v593
  %v595 = vrot.slane %v594, 2
  %v596 = vadd.f32 %v594, %v595
  %v597 = vrot.slane %v596, 1
  %v598 = vadd.f32 %v596, %v597
  %599 = vst [vmem:[%s9] sm:$0xff] %v585
  %600 = vst [vmem:[%s10] sm:$0xff] %v598
  // Predicated region
  $region34: #{pose_resnet_forward.200} parent=0 // pred_check
    _
  $region35: #{pose_resnet_forward.200} parent=0 // pred_check_branch
    %602 = sbr.rel (0) target = $region37
  $region36: #{pose_resnet_forward.200} parent=0 // pred_region
    _
  $region37: #{pose_resnet_forward.200} parent=0 // pred_fallthru
    _
  // Predicated region
  $region38: #{pose_resnet_forward.200} parent=0 // pred_check
    _
  $region39: #{pose_resnet_forward.200} parent=0 // pred_check_branch
    %604 = sbr.rel (0) target = $region41
  $region40: #{pose_resnet_forward.200} parent=0 // pred_region
    _
  $region41: #{pose_resnet_forward.200} parent=0 // pred_fallthru
    _
  // Predicated region
  $region42: #{pose_resnet_forward.200} parent=0 // pred_check
    _
  $region43: #{pose_resnet_forward.200} parent=0 // pred_check_branch
    %606 = sbr.rel (0) target = $region45
  $region44: #{pose_resnet_forward.200} parent=0 // pred_region
    _
  $region45: #{pose_resnet_forward.200} parent=0 // pred_fallthru
    _
  // Predicated region
  $region46: #{pose_resnet_forward.200} parent=0 // pred_check
    _
  $region47: #{pose_resnet_forward.200} parent=0 // pred_check_branch
    %608 = sbr.rel (0) target = $region49
  $region48: #{pose_resnet_forward.200} parent=0 // pred_region
    _
  $region49: #{pose_resnet_forward.200} parent=0 // pred_fallthru
    _
  // Predicated region
  $region50: #{pose_resnet_forward.200} parent=0 // pred_check
    _
  $region51: #{pose_resnet_forward.200} parent=0 // pred_check_branch
    %610 = sbr.rel (0) target = $region53
  $region52: #{pose_resnet_forward.200} parent=0 // pred_region
    _
  $region53: #{pose_resnet_forward.200} parent=0 // pred_fallthru
    _
  // Predicated region
  $region54: #{pose_resnet_forward.200} parent=0 // pred_check
    _
  $region55: #{pose_resnet_forward.200} parent=0 // pred_check_branch
    %612 = sbr.rel (0) target = $region57
  $region56: #{pose_resnet_forward.200} parent=0 // pred_region
    _
  $region57: #{pose_resnet_forward.200} parent=0 // pred_fallthru
    _

// kernel: pose_resnet_forward.201
$region0: #{pose_resnet_forward.201}
  #allocation0 [shape = 'u32[]', space=smem, size = 0x4, offset = 0x4, fixed_abs, tag = 'smem constant byte address 0x4 - core index']
  #allocation1 [shape = 'u32[144,128]{1,0:T(1,128)}', space=vmem, size = 0x12000, scoped, tag = 'internal scratch']
  %s0 = inlined_call_operand.vmem [shape: bf16[128,128], index: 0, kind: input, shape index: {}]
  %s1 = inlined_call_operand.vmem [shape: bf16[128,128], index: 1, kind: input, shape index: {}]
  %s2 = inlined_call_operand.vmem [shape: f32[1,128], index: 2, kind: input, shape index: {}]
  %s3 = inlined_call_operand.vmem [shape: f32[1,128], index: 3, kind: input, shape index: {}]
  %s4 = inlined_call_operand.vmem [shape: f32[1,128], index: 4, kind: input, shape index: {}]
  %s5 = inlined_call_operand.vmem [shape: f32[128,128], index: 5, kind: output, shape index: {}]
  %s6 = sld [smem:[#allocation0]]
  $region30: #{pose_resnet_forward.201} parent=0
    _
  %s8 = ssub.s32 1, %s6
  %s9 = scalar_select 0, %s8, %s6
  // Predicated region
  $region2: #{pose_resnet_forward.201} parent=0 // pred_check
    _
  $region3: #{pose_resnet_forward.201} parent=0 // pred_check_branch
    %11 = sbr.rel (0) target = $region5
  $region4: #{pose_resnet_forward.201} parent=0 // pred_region
    _
  $region5: #{pose_resnet_forward.201} parent=0 // pred_fallthru
    _
  // Predicated region
  $region6: #{pose_resnet_forward.201} parent=0 // pred_check
    _
  $region7: #{pose_resnet_forward.201} parent=0 // pred_check_branch
    %13 = sbr.rel (0) target = $region9
  $region8: #{pose_resnet_forward.201} parent=0 // pred_region
    _
  $region9: #{pose_resnet_forward.201} parent=0 // pred_fallthru
    _
  // Predicated region
  $region10: #{pose_resnet_forward.201} parent=0 // pred_check
    _
  $region11: #{pose_resnet_forward.201} parent=0 // pred_check_branch
    %15 = sbr.rel (0) target = $region13
  $region12: #{pose_resnet_forward.201} parent=0 // pred_region
    _
  $region13: #{pose_resnet_forward.201} parent=0 // pred_fallthru
    _
  // Predicated region
  $region14: #{pose_resnet_forward.201} parent=0 // pred_check
    _
  $region15: #{pose_resnet_forward.201} parent=0 // pred_check_branch
    %17 = sbr.rel (0) target = $region17
  $region16: #{pose_resnet_forward.201} parent=0 // pred_region
    _
  $region17: #{pose_resnet_forward.201} parent=0 // pred_fallthru
    _
  // Predicated region
  $region18: #{pose_resnet_forward.201} parent=0 // pred_check
    _
  $region19: #{pose_resnet_forward.201} parent=0 // pred_check_branch
    %19 = sbr.rel (0) target = $region21
  $region20: #{pose_resnet_forward.201} parent=0 // pred_region
    _
  $region21: #{pose_resnet_forward.201} parent=0 // pred_fallthru
    _
  %v21 = vld [vmem:[%s0] sm:$0xf]
  %v22 = vld [vmem:[%s0 + $0x4] sm:$0xf]
  %v23 = vld [vmem:[%s0 + $0x8] sm:$0xf]
  %v24 = vld [vmem:[%s0 + $0xc] sm:$0xf]
  %v25 = vld [vmem:[%s0 + $0x10] sm:$0xf]
  %v26 = vld [vmem:[%s0 + $0x14] sm:$0xf]
  %v27 = vld [vmem:[%s0 + $0x18] sm:$0xf]
  %v28 = vld [vmem:[%s0 + $0x1c] sm:$0xf]
  %v29 = vld [vmem:[%s0 + $0x20] sm:$0xf]
  %v30 = vld [vmem:[%s0 + $0x24] sm:$0xf]
  %v31 = vld [vmem:[%s0 + $0x28] sm:$0xf]
  %v32 = vld [vmem:[%s0 + $0x2c] sm:$0xf]
  %v33 = vld [vmem:[%s0 + $0x30] sm:$0xf]
  %v34 = vld [vmem:[%s0 + $0x34] sm:$0xf]
  %v35 = vld [vmem:[%s0 + $0x38] sm:$0xf]
  %v36 = vld [vmem:[%s0 + $0x3c] sm:$0xf]
  %v37 = vunpack.c.l.bf16 %v21
  %v38 = vunpack.c.l.bf16 %v22
  %v39 = vunpack.c.l.bf16 %v23
  %v40 = vunpack.c.l.bf16 %v24
  %v41 = vunpack.c.l.bf16 %v25
  %v42 = vunpack.c.l.bf16 %v26
  %v43 = vunpack.c.l.bf16 %v27
  %v44 = vunpack.c.l.bf16 %v28
  %v45 = vunpack.c.l.bf16 %v29
  %v46 = vunpack.c.l.bf16 %v30
  %v47 = vunpack.c.l.bf16 %v31
  %v48 = vunpack.c.l.bf16 %v32
  %v49 = vunpack.c.l.bf16 %v33
  %v50 = vunpack.c.l.bf16 %v34
  %v51 = vunpack.c.l.bf16 %v35
  %v52 = vunpack.c.l.bf16 %v36
  %v53 = vld [vmem:[%s2] sm:$0x1]
  %v55 = vlaneseq
  %v56 = vshrl.u32 %v55, 7
  %v57 = vsub.s32 0, %v56
  %v58 = vrot.slane %v53, %v57
  %v60 = vmul.f32 %v37, %v58
  %v61 = vmul.f32 %v38, %v58
  %v62 = vmul.f32 %v39, %v58
  %v63 = vmul.f32 %v40, %v58
  %v64 = vmul.f32 %v41, %v58
  %v65 = vmul.f32 %v42, %v58
  %v66 = vmul.f32 %v43, %v58
  %v67 = vmul.f32 %v44, %v58
  %v68 = vmul.f32 %v45, %v58
  %v69 = vmul.f32 %v46, %v58
  %v70 = vmul.f32 %v47, %v58
  %v71 = vmul.f32 %v48, %v58
  %v72 = vmul.f32 %v49, %v58
  %v73 = vmul.f32 %v50, %v58
  %v74 = vmul.f32 %v51, %v58
  %v75 = vmul.f32 %v52, %v58
  %v76 = vld [vmem:[%s3] sm:$0x1]
  %v78 = vlaneseq
  %v79 = vshrl.u32 %v78, 7
  %v80 = vsub.s32 0, %v79
  %v81 = vrot.slane %v76, %v80
  %v83 = vadd.f32 %v60, %v81
  %v84 = vadd.f32 %v61, %v81
  %v85 = vadd.f32 %v62, %v81
  %v86 = vadd.f32 %v63, %v81
  %v87 = vadd.f32 %v64, %v81
  %v88 = vadd.f32 %v65, %v81
  %v89 = vadd.f32 %v66, %v81
  %v90 = vadd.f32 %v67, %v81
  %v91 = vadd.f32 %v68, %v81
  %v92 = vadd.f32 %v69, %v81
  %v93 = vadd.f32 %v70, %v81
  %v94 = vadd.f32 %v71, %v81
  %v95 = vadd.f32 %v72, %v81
  %v96 = vadd.f32 %v73, %v81
  %v97 = vadd.f32 %v74, %v81
  %v98 = vadd.f32 %v75, %v81
  %v99 = vmax.f32 %v83, 0.0
  %v100 = vmax.f32 %v84, 0.0
  %v101 = vmax.f32 %v85, 0.0
  %v102 = vmax.f32 %v86, 0.0
  %v103 = vmax.f32 %v87, 0.0
  %v104 = vmax.f32 %v88, 0.0
  %v105 = vmax.f32 %v89, 0.0
  %v106 = vmax.f32 %v90, 0.0
  %v107 = vmax.f32 %v91, 0.0
  %v108 = vmax.f32 %v92, 0.0
  %v109 = vmax.f32 %v93, 0.0
  %v110 = vmax.f32 %v94, 0.0
  %v111 = vmax.f32 %v95, 0.0
  %v112 = vmax.f32 %v96, 0.0
  %v113 = vmax.f32 %v97, 0.0
  %v114 = vmax.f32 %v98, 0.0
  %v115 = vpack.c.bf16 %v100, %v99
  %v116 = vpack.c.bf16 %v102, %v101
  %v117 = vpack.c.bf16 %v104, %v103
  %v118 = vpack.c.bf16 %v106, %v105
  %v119 = vpack.c.bf16 %v108, %v107
  %v120 = vpack.c.bf16 %v110, %v109
  %v121 = vpack.c.bf16 %v112, %v111
  %v122 = vpack.c.bf16 %v114, %v113
  %v123 = vld [vmem:[%s1] sm:$0xf]
  %v124 = vld [vmem:[%s1 + $0x4] sm:$0xf]
  %v125 = vld [vmem:[%s1 + $0x8] sm:$0xf]
  %v126 = vld [vmem:[%s1 + $0xc] sm:$0xf]
  %v127 = vld [vmem:[%s1 + $0x10] sm:$0xf]
  %v128 = vld [vmem:[%s1 + $0x14] sm:$0xf]
  %v129 = vld [vmem:[%s1 + $0x18] sm:$0xf]
  %v130 = vld [vmem:[%s1 + $0x1c] sm:$0xf]
  %v131 = vld [vmem:[%s1 + $0x20] sm:$0xf]
  %v132 = vld [vmem:[%s1 + $0x24] sm:$0xf]
  %v133 = vld [vmem:[%s1 + $0x28] sm:$0xf]
  %v134 = vld [vmem:[%s1 + $0x2c] sm:$0xf]
  %v135 = vld [vmem:[%s1 + $0x30] sm:$0xf]
  %v136 = vld [vmem:[%s1 + $0x34] sm:$0xf]
  %v137 = vld [vmem:[%s1 + $0x38] sm:$0xf]
  %v138 = vld [vmem:[%s1 + $0x3c] sm:$0xf]
  %v139 = vld [vmem:[%s4] sm:$0x1]
  %v141 = vlaneseq
  %v142 = vshrl.u32 %v141, 7
  %v143 = vsub.s32 0, %v142
  %v144 = vrot.slane %v139, %v143
  %v162 = vunpack.c.l.b16 %v123
  %v163 = vunpack.c.l.b16 %v124
  %v164 = vunpack.c.l.b16 %v125
  %v165 = vunpack.c.l.b16 %v126
  %v166 = vunpack.c.l.b16 %v127
  %v167 = vunpack.c.l.b16 %v128
  %v168 = vunpack.c.l.b16 %v129
  %v169 = vunpack.c.l.b16 %v130
  %v170 = vunpack.c.l.b16 %v131
  %v171 = vunpack.c.l.b16 %v132
  %v172 = vunpack.c.l.b16 %v133
  %v173 = vunpack.c.l.b16 %v134
  %v174 = vunpack.c.l.b16 %v135
  %v175 = vunpack.c.l.b16 %v136
  %v176 = vunpack.c.l.b16 %v137
  %v177 = vunpack.c.l.b16 %v138
  %v178 = vpack.c.b16 %v163, %v162
  %v179 = vpack.c.b16 %v165, %v164
  %v180 = vpack.c.b16 %v167, %v166
  %v181 = vpack.c.b16 %v169, %v168
  %v182 = vpack.c.b16 %v171, %v170
  %v183 = vpack.c.b16 %v173, %v172
  %v184 = vpack.c.b16 %v175, %v174
  %v185 = vpack.c.b16 %v177, %v176
  %194 = vmatprep.subr.bf16.mxu0 0
  %195 = vmatpush1.bf16.msra.mxu0 %v178
  %196 = vmatprep.subr.bf16.mxu0 0
  %197 = vmatpush1.bf16.msra.mxu0 %v179
  %198 = vmatprep.subr.bf16.mxu0 0
  %199 = vmatpush1.bf16.msra.mxu0 %v180
  %200 = vmatprep.subr.bf16.mxu0 0
  %201 = vmatpush1.bf16.msra.mxu0 %v181
  %202 = vmatprep.subr.bf16.mxu0 0
  %203 = vmatpush1.bf16.msra.mxu0 %v182
  %204 = vmatprep.subr.bf16.mxu0 0
  %205 = vmatpush1.bf16.msra.mxu0 %v183
  %206 = vmatprep.subr.bf16.mxu0 0
  %207 = vmatpush1.bf16.msra.mxu0 %v184
  %208 = vmatprep.subr.bf16.mxu0 0
  %209 = vmatpush1.bf16.msra.mxu0 %v185
  %210 = vmatprep.subr.bf16.mxu0 0
  %211 = vmatpush1.bf16.msra.mxu0 0
  %212 = vmatprep.subr.bf16.mxu0 0
  %213 = vmatpush1.bf16.msra.mxu0 0
  %214 = vmatprep.subr.bf16.mxu0 0
  %215 = vmatpush1.bf16.msra.mxu0 0
  %216 = vmatprep.subr.bf16.mxu0 0
  %217 = vmatpush1.bf16.msra.mxu0 0
  %218 = vmatprep.subr.bf16.mxu0 0
  %219 = vmatpush1.bf16.msra.mxu0 0
  %220 = vmatprep.subr.bf16.mxu0 0
  %221 = vmatpush1.bf16.msra.mxu0 0
  %222 = vmatprep.subr.bf16.mxu0 0
  %223 = vmatpush1.bf16.msra.mxu0 0
  %224 = vmatprep.subr.bf16.mxu0 0
  %225 = vmatpush1.bf16.msra.mxu0 0
  %226 = vmatprep.mubr.bf16.mxu0 0
  %227 = vmatmul.mubr.bf16.gmra.mrb[0].mxu0 %v115
  %v228 = vpop.f32.mrb[0].mxu0
  %v229 = vadd.f32 %v144, %v228
  %v230 = vpop.f32.mrb[0].mxu0
  %v231 = vpop.f32.mrb[0].mxu0
  %v232 = vadd.f32 %v144, %v231
  %v233 = vpop.f32.mrb[0].mxu0
  %234 = vmatprep.mubr.bf16.mxu0 0
  %235 = vmatmul.mubr.bf16.gmra.mrb[0].mxu0 %v116
  %v236 = vpop.f32.mrb[0].mxu0
  %v237 = vadd.f32 %v144, %v236
  %v238 = vpop.f32.mrb[0].mxu0
  %v239 = vpop.f32.mrb[0].mxu0
  %v240 = vadd.f32 %v144, %v239
  %v241 = vpop.f32.mrb[0].mxu0
  %242 = vmatprep.mubr.bf16.mxu0 0
  %243 = vmatmul.mubr.bf16.gmra.mrb[0].mxu0 %v117
  %v244 = vpop.f32.mrb[0].mxu0
  %v245 = vadd.f32 %v144, %v244
  %v246 = vpop.f32.mrb[0].mxu0
  %v247 = vpop.f32.mrb[0].mxu0
  %v248 = vadd.f32 %v144, %v247
  %v249 = vpop.f32.mrb[0].mxu0
  %250 = vmatprep.mubr.bf16.mxu0 0
  %251 = vmatmul.mubr.bf16.gmra.mrb[0].mxu0 %v118
  %v252 = vpop.f32.mrb[0].mxu0
  %v253 = vadd.f32 %v144, %v252
  %v254 = vpop.f32.mrb[0].mxu0
  %v255 = vpop.f32.mrb[0].mxu0
  %v256 = vadd.f32 %v144, %v255
  %v257 = vpop.f32.mrb[0].mxu0
  %258 = vmatprep.mubr.bf16.mxu0 0
  %259 = vmatmul.mubr.bf16.gmra.mrb[0].mxu0 %v119
  %v260 = vpop.f32.mrb[0].mxu0
  %v261 = vadd.f32 %v144, %v260
  %v262 = vpop.f32.mrb[0].mxu0
  %v263 = vpop.f32.mrb[0].mxu0
  %v264 = vadd.f32 %v144, %v263
  %v265 = vpop.f32.mrb[0].mxu0
  %266 = vmatprep.mubr.bf16.mxu0 0
  %267 = vmatmul.mubr.bf16.gmra.mrb[0].mxu0 %v120
  %v268 = vpop.f32.mrb[0].mxu0
  %v269 = vadd.f32 %v144, %v268
  %v270 = vpop.f32.mrb[0].mxu0
  %v271 = vpop.f32.mrb[0].mxu0
  %v272 = vadd.f32 %v144, %v271
  %v273 = vpop.f32.mrb[0].mxu0
  %274 = vmatprep.mubr.bf16.mxu0 0
  %275 = vmatmul.mubr.bf16.gmra.mrb[0].mxu0 %v121
  %v276 = vpop.f32.mrb[0].mxu0
  %v277 = vadd.f32 %v144, %v276
  %v278 = vpop.f32.mrb[0].mxu0
  %v279 = vpop.f32.mrb[0].mxu0
  %v280 = vadd.f32 %v144, %v279
  %v281 = vpop.f32.mrb[0].mxu0
  %282 = vmatprep.mubr.bf16.mxu0 0
  %283 = vmatmul.mubr.bf16.gmra.mrb[0].mxu0 %v122
  %v284 = vpop.f32.mrb[0].mxu0
  %v285 = vadd.f32 %v144, %v284
  %v286 = vpop.f32.mrb[0].mxu0
  %v287 = vpop.f32.mrb[0].mxu0
  %v288 = vadd.f32 %v144, %v287
  %v289 = vpop.f32.mrb[0].mxu0
  %290 = vdwg.mxu0
  %291 = vst [vmem:[%s5] sm:$0xff] %v229
  %292 = vst [vmem:[%s5 + $0x8] sm:$0xff] %v232
  %293 = vst [vmem:[%s5 + $0x10] sm:$0xff] %v237
  %294 = vst [vmem:[%s5 + $0x18] sm:$0xff] %v240
  %295 = vst [vmem:[%s5 + $0x20] sm:$0xff] %v245
  %296 = vst [vmem:[%s5 + $0x28] sm:$0xff] %v248
  %297 = vst [vmem:[%s5 + $0x30] sm:$0xff] %v253
  %298 = vst [vmem:[%s5 + $0x38] sm:$0xff] %v256
  %299 = vst [vmem:[%s5 + $0x40] sm:$0xff] %v261
  %300 = vst [vmem:[%s5 + $0x48] sm:$0xff] %v264
  %301 = vst [vmem:[%s5 + $0x50] sm:$0xff] %v269
  %302 = vst [vmem:[%s5 + $0x58] sm:$0xff] %v272
  %303 = vst [vmem:[%s5 + $0x60] sm:$0xff] %v277
  %304 = vst [vmem:[%s5 + $0x68] sm:$0xff] %v280
  %305 = vst [vmem:[%s5 + $0x70] sm:$0xff] %v285
  %306 = vst [vmem:[%s5 + $0x78] sm:$0xff] %v288
  // Predicated region
  $region22: #{pose_resnet_forward.201} parent=0 // pred_check
    _
  $region23: #{pose_resnet_forward.201} parent=0 // pred_check_branch
    %308 = sbr.rel (0) target = $region25
  $region24: #{pose_resnet_forward.201} parent=0 // pred_region
    _
  $region25: #{pose_resnet_forward.201} parent=0 // pred_fallthru
    _
  // Predicated region
  $region26: #{pose_resnet_forward.201} parent=0 // pred_check
    _
  $region27: #{pose_resnet_forward.201} parent=0 // pred_check_branch
    %310 = sbr.rel (0) target = $region29
  $region28: #{pose_resnet_forward.201} parent=0 // pred_region
    _
  $region29: #{pose_resnet_forward.201} parent=0 // pred_fallthru
    _

</llo_original>
